<compile_context>
chip_gen: v7x
topology: tpu7x:2x2x1
jax: 0.10.0
libtpu: 0.0.40
codegen_flags: <defaults>
</compile_context>

<pallas_src>
import functools

import jax
import jax.numpy as jnp
from jax.experimental import pallas as pl
from jax.experimental.pallas import tpu as pltpu

# ------------------- configuration (MPPI.__init__ arguments) -------------------
HORIZON = 8        # T
NUM_SAMPLES = 64   # K
DIM_STATE = 8      # S
DIM_CONTROL = 4    # C
LAMBDA = 1.0       # temperature
EXPLORATION = 0.0  # default exploration rate
DT = 0.1           # dynamics time step

# Full-f32 matmuls in both the kernel and the pure-JAX reference (see header).
MM_PRECISION = jax.lax.Precision.HIGHEST


def _round_up8(n: int) -> int:
    return -(-n // 8) * 8


# ------------------------- fixed injected callables ----------------------------
def _dynamics(x, a, A, B):
    # x: (N, S), a: (N, C) -> (N, S)
    return x + DT * (jnp.dot(x, A, precision=MM_PRECISION,
                             preferred_element_type=jnp.float32)
                     + jnp.dot(a, B, precision=MM_PRECISION,
                               preferred_element_type=jnp.float32))


def _cost(x, a, goal):
    # (N, S), (N, C) -> (N,)
    d = x - goal
    return jnp.sum(d * d, axis=-1) + 0.1 * jnp.sum(a * a, axis=-1)


# --------------------------------- kernel --------------------------------------
def mppi_kernel(packed_ref, pert_ref, out_ref, acts_ref, aB_ref, *,
                horizon, dim_state, dim_control):
    T, S, C = horizon, dim_state, dim_control
    K = pert_ref.shape[0]
    TC, TS = T * C, T * S
    a_row0 = 8                        # A starts on a sublane-tile boundary
    b_row0 = a_row0 + _round_up8(S)   # block-diagonal B on the next boundary

    # ---- unpack the single parameter tile (2 input DMAs total) ----
    state_row = packed_ref[0:1, 0:S]            # (1, S)
    goal_row = packed_ref[1:2, 0:S]             # (1, S)
    u_min_row = packed_ref[2:3, 0:TC]           # (1, T*C) tiled control bounds
    u_max_row = packed_ref[3:4, 0:TC]
    a_max_c = packed_ref[4:5, 0:C]              # (1, C)
    mean0 = packed_ref[5:6, 0:C]                # (1, C) previous action[0]
    A_mat = packed_ref[a_row0:a_row0 + S, 0:S]            # (S, S)
    B_blk = packed_ref[b_row0:b_row0 + TC, 0:TS]          # (T*C, T*S) block-diag B

    # ---- control limits: ONE batched clip over the whole (K, T*C) slab ----
    pert_c = jnp.clip(pert_ref[...], u_min_row, u_max_row)

    # ---- acceleration limits (serial cumsum over T); actions staged into VMEM
    #      scratch so no per-step (K, C) arrays stay live in vregs ----
    u_min_c = u_min_row[:, 0:C]
    u_max_c = u_max_row[:, 0:C]
    neg_a_max_c = -a_max_c
    prev = jnp.broadcast_to(mean0, (K, C))
    running = prev
    for t in range(T):
        a_raw = pert_c[:, t * C:(t + 1) * C]
        delta = jnp.clip(a_raw - prev, neg_a_max_c, a_max_c)
        prev = a_raw
        running = running + delta
        acts_ref[:, t * C:(t + 1) * C] = jnp.clip(running, u_min_c, u_max_c)

    # ---- all T a_t @ B in ONE batched MXU matmul via the block-diagonal B ----
    acts_all = acts_ref[...]                                       # (K, T*C)
    aB_ref[...] = jnp.dot(acts_all, B_blk, precision=MM_PRECISION,
                          preferred_element_type=jnp.float32)      # (K, T*S)
    act_cost = 0.1 * jnp.sum(acts_all * acts_all, axis=-1, keepdims=True)  # (K, 1)

    # ---- sample rollouts: componentwise squared state-cost accumulation,
    #      per-step serial chain is a single x @ A (MXU) + axpy (VPU) ----
    goal_b = jnp.broadcast_to(goal_row, (K, S))
    x = jnp.broadcast_to(state_row, (K, S))
    sq_acc = jnp.zeros((K, S), jnp.float32)
    for t in range(T):
        d = x - goal_b
        sq_acc = sq_acc + d * d
        x = x + DT * (jnp.dot(x, A_mat, precision=MM_PRECISION,
                              preferred_element_type=jnp.float32)
                      + aB_ref[:, t * S:(t + 1) * S])
    d = x - goal_b
    sq_acc = sq_acc + d * d                                        # terminal cost

    # two lane reduces total for all stage + terminal costs
    total = jnp.sum(sq_acc, axis=-1, keepdims=True) + act_cost     # (K, 1)

    # ---- exact softmax over samples (path-integral averaging) ----
    logits = total * (-1.0 / LAMBDA)
    m = jnp.max(logits, axis=0, keepdims=True)
    e = jnp.exp(logits - m)
    w = e / jnp.sum(e, axis=0, keepdims=True)                      # (K, 1), sum(w) == 1

    # ---- optimal action sequence: ONE fused weighted reduction over samples,
    #      single lane-dense store ----
    a_opt = jnp.sum(w * acts_ref[...], axis=0, keepdims=True)      # (1, T*C)
    out_ref[0:1, 0:TC] = a_opt

    # ---- optimal state rollout, re-derived from a_opt with the reference math
    #      (a_opt @ B for all steps in one matmul, then a short serial x @ A chain)
    aoB = jnp.dot(a_opt, B_blk, precision=MM_PRECISION,
                  preferred_element_type=jnp.float32)              # (1, T*S)
    xo = state_row
    out_ref[0:1, TC:TC + S] = xo
    for t in range(T):
        xo = xo + DT * (jnp.dot(xo, A_mat, precision=MM_PRECISION,
                                preferred_element_type=jnp.float32)
                        + aoB[:, t * S:(t + 1) * S])
        out_ref[0:1, TC + (t + 1) * S:TC + (t + 2) * S] = xo


# -------------------------------- wrapper --------------------------------------
@jax.jit
def mppi_forward(state, prev_action_seq, noise, u_min, u_max, a_max, A, B, goal):
    """Equivalent of MPPI.forward(state). Returns (optimal_action_seq, optimal_state_seq)."""
    K, T, C = noise.shape
    S = state.shape[0]
    threshold = int(K * (1 - EXPLORATION))
    # inherited samples get the previous mean added, the rest are pure noise
    pert_raw = jnp.concatenate(
        [prev_action_seq[None] + noise[:threshold], noise[threshold:]], axis=0)
    pert2d = pert_raw.reshape(K, T * C).astype(jnp.float32)   # lane-contiguous steps

    # -------- single packed parameter tile: small vectors + A + blockdiag(B) ----
    W = max(S, T * C, T * S)

    def row(v):
        v = jnp.asarray(v, jnp.float32).reshape(-1)
        return jnp.pad(v, (0, W - v.shape[0]))[None, :]

    params_rows = jnp.concatenate([
        row(state), row(goal),
        row(jnp.tile(u_min, T)), row(jnp.tile(u_max, T)),
        row(a_max), row(prev_action_seq[0]),
        jnp.zeros((2, W), jnp.float32)], axis=0)                       # (8, W)
    A_pad = jnp.pad(A.astype(jnp.float32),
                    ((0, _round_up8(S) - S), (0, W - S)))              # (ceil8(S), W)
    B_blk = jnp.kron(jnp.eye(T, dtype=jnp.float32), B.astype(jnp.float32))  # (T*C, T*S)
    B_pad = jnp.pad(B_blk, ((0, 0), (0, W - T * S)))                   # (T*C, W)
    packed = jnp.concatenate([params_rows, A_pad, B_pad], axis=0)      # (8+ceil8(S)+T*C, W)

    vmem = pl.BlockSpec(memory_space=pltpu.MemorySpace.VMEM)
    n_out = T * C + (T + 1) * S
    cost = pl.CostEstimate(
        flops=2 * K * T * S * (S + C) + 20 * K * T * (S + C),
        transcendentals=K,
        bytes_accessed=4 * (packed.size + pert2d.size + n_out))

    out = pl.pallas_call(
        functools.partial(mppi_kernel, horizon=T, dim_state=S, dim_control=C),
        out_shape=jax.ShapeDtypeStruct((1, n_out), jnp.float32),
        in_specs=[vmem, vmem],
        out_specs=vmem,
        scratch_shapes=[pltpu.VMEM((K, T * C), jnp.float32),   # staged actions
                        pltpu.VMEM((K, T * S), jnp.float32)],  # staged a @ B terms
        cost_estimate=cost,
    )(packed, pert2d)

    opt_act = out[0, :T * C].reshape(T, C)
    opt_states = out[0, T * C:n_out].reshape(T + 1, S)[None, :, :]
    return opt_act, opt_states


# ------------------------------ pure-JAX mirror --------------------------------
def mppi_reference(state, prev_action_seq, noise, u_min, u_max, a_max, A, B, goal):
    """Pure-JAX mirror of the PyTorch forward (for numerical verification)."""
    K, T, C = noise.shape
    S = state.shape[0]
    threshold = int(K * (1 - EXPLORATION))
    pert = jnp.concatenate([prev_action_seq[None] + noise[:threshold], noise[threshold:]], 0)
    pert = jnp.clip(pert, u_min, u_max)
    cur = prev_action_seq[0]
    ext = jnp.concatenate([jnp.broadcast_to(cur, (K, 1, C)), pert], axis=1)
    deltas = jnp.clip(jnp.diff(ext, axis=1), -a_max, a_max)
    pert = jnp.clip(cur + jnp.cumsum(deltas, axis=1), u_min, u_max)

    xs = [jnp.broadcast_to(state, (K, S))]
    for t in range(T):
        xs.append(_dynamics(xs[-1], pert[:, t], A, B))
    costs = jnp.zeros((K,), jnp.float32)
    for t in range(T):
        costs = costs + _cost(xs[t], pert[:, t], goal[None, :])
    costs = costs + _cost(xs[T], jnp.zeros((K, C), jnp.float32), goal[None, :])
    w = jax.nn.softmax(-costs / LAMBDA)
    opt_act = jnp.sum(w[:, None, None] * pert, axis=0)

    ys = [state[None, :]]
    for t in range(T):
        ys.append(_dynamics(ys[-1], opt_act[t][None, :], A, B))
    return opt_act, jnp.concatenate(ys, axis=0)[None, :, :]


if __name__ == "__main__":
    key = jax.random.PRNGKey(0)
    k1, k2, k3, k4 = jax.random.split(key, 4)

    sigmas = jnp.array([0.5, 0.4, 0.3, 0.2], jnp.float32)          # per-dim noise std
    u_min = -jnp.ones((DIM_CONTROL,), jnp.float32)
    u_max = jnp.ones((DIM_CONTROL,), jnp.float32)
    a_max = 0.25 * jnp.ones((DIM_CONTROL,), jnp.float32)

    # MultivariateNormal(0, diag(sigmas^2)).rsample((K,)) per horizon step
    noise = jax.random.normal(k1, (NUM_SAMPLES, HORIZON, DIM_CONTROL), jnp.float32) * sigmas
    state = jax.random.normal(k2, (DIM_STATE,), jnp.float32)
    A = 0.1 * jax.random.normal(k3, (DIM_STATE, DIM_STATE), jnp.float32)
    B = jax.random.normal(k4, (DIM_CONTROL, DIM_STATE), jnp.float32)
    goal = jnp.zeros((DIM_STATE,), jnp.float32)
    prev_action_seq = jnp.zeros((HORIZON, DIM_CONTROL), jnp.float32)  # after reset()

    act, states = mppi_forward(state, prev_action_seq, noise, u_min, u_max, a_max, A, B, goal)
    jax.block_until_ready((act, states))

    ref_act, ref_states = mppi_reference(state, prev_action_seq, noise,
                                         u_min, u_max, a_max, A, B, goal)
    assert act.shape == (HORIZON, DIM_CONTROL)
    assert states.shape == (1, HORIZON + 1, DIM_STATE)
    act_err = float(jnp.max(jnp.abs(act - ref_act)))
    st_err = float(jnp.max(jnp.abs(states - ref_states)))
    assert jnp.allclose(act, ref_act, atol=2e-3, rtol=2e-3), f"action mismatch {act_err}"
    assert jnp.allclose(states, ref_states, atol=5e-3, rtol=5e-3), f"state mismatch {st_err}"
    print("KERNEL_OK")
</pallas_src>

<mosaic_0001>
module attributes {stable_mosaic.version = 11 : i64} {
  func.func @mppi_kernel(%arg0: memref<48x64xf32, #tpu.memory_space<vmem>>, %arg1: memref<64x32xf32, #tpu.memory_space<vmem>>, %arg2: memref<1x104xf32, #tpu.memory_space<vmem>>, %arg3: memref<64x32xf32, #tpu.memory_space<vmem>>, %arg4: memref<64x64xf32, #tpu.memory_space<vmem>>) attributes {dimension_semantics = [], scalar_prefetch = 0 : i64, scratch_operands = 2 : i64, tpu.core_type = #tpu.core_type<tc>} {
    %c0 = arith.constant 0 : index
    %c0_0 = arith.constant 0 : index
    %0 = vector.load %arg0[%c0, %c0_0] : memref<48x64xf32, #tpu.memory_space<vmem>>, vector<1x8xf32>
    %c1 = arith.constant 1 : index
    %c0_1 = arith.constant 0 : index
    %1 = vector.load %arg0[%c1, %c0_1] : memref<48x64xf32, #tpu.memory_space<vmem>>, vector<1x8xf32>
    %c2 = arith.constant 2 : index
    %c0_2 = arith.constant 0 : index
    %2 = vector.load %arg0[%c2, %c0_2] : memref<48x64xf32, #tpu.memory_space<vmem>>, vector<1x32xf32>
    %c3 = arith.constant 3 : index
    %c0_3 = arith.constant 0 : index
    %3 = vector.load %arg0[%c3, %c0_3] : memref<48x64xf32, #tpu.memory_space<vmem>>, vector<1x32xf32>
    %c4 = arith.constant 4 : index
    %c0_4 = arith.constant 0 : index
    %4 = vector.load %arg0[%c4, %c0_4] : memref<48x64xf32, #tpu.memory_space<vmem>>, vector<1x4xf32>
    %c5 = arith.constant 5 : index
    %c0_5 = arith.constant 0 : index
    %5 = vector.load %arg0[%c5, %c0_5] : memref<48x64xf32, #tpu.memory_space<vmem>>, vector<1x4xf32>
    %c8 = arith.constant 8 : index
    %c0_6 = arith.constant 0 : index
    %6 = vector.load %arg0[%c8, %c0_6] : memref<48x64xf32, #tpu.memory_space<vmem>>, vector<8x8xf32>
    %c16 = arith.constant 16 : index
    %c0_7 = arith.constant 0 : index
    %7 = vector.load %arg0[%c16, %c0_7] : memref<48x64xf32, #tpu.memory_space<vmem>>, vector<32x64xf32>
    %c0_8 = arith.constant 0 : index
    %c0_9 = arith.constant 0 : index
    %8 = vector.load %arg1[%c0_8, %c0_9] : memref<64x32xf32, #tpu.memory_space<vmem>>, vector<64x32xf32>
    %9 = vector.broadcast %2 : vector<1x32xf32> to vector<64x32xf32>
    %10 = arith.maximumf %9, %8 : vector<64x32xf32>
    %11 = vector.broadcast %3 : vector<1x32xf32> to vector<64x32xf32>
    %12 = arith.minimumf %11, %10 : vector<64x32xf32>
    %13 = vector.extract_strided_slice %2 {offsets = [0, 0], sizes = [1, 4], strides = [1, 1]} : vector<1x32xf32> to vector<1x4xf32>
    %14 = vector.extract_strided_slice %3 {offsets = [0, 0], sizes = [1, 4], strides = [1, 1]} : vector<1x32xf32> to vector<1x4xf32>
    %cst = arith.constant 0.000000e+00 : f32
    %15 = vector.broadcast %cst : f32 to vector<1x4xf32>
    %16 = arith.subf %15, %4 : vector<1x4xf32>
    %17 = vector.shape_cast %5 : vector<1x4xf32> to vector<1x4xf32>
    %18 = vector.broadcast %17 : vector<1x4xf32> to vector<64x4xf32>
    %19 = vector.extract_strided_slice %12 {offsets = [0, 0], sizes = [64, 4], strides = [1, 1]} : vector<64x32xf32> to vector<64x4xf32>
    %20 = arith.subf %19, %18 : vector<64x4xf32>
    %21 = vector.broadcast %16 : vector<1x4xf32> to vector<64x4xf32>
    %22 = arith.maximumf %21, %20 : vector<64x4xf32>
    %23 = vector.broadcast %4 : vector<1x4xf32> to vector<64x4xf32>
    %24 = arith.minimumf %23, %22 : vector<64x4xf32>
    %25 = arith.addf %18, %24 : vector<64x4xf32>
    %26 = vector.broadcast %13 : vector<1x4xf32> to vector<64x4xf32>
    %27 = arith.maximumf %26, %25 : vector<64x4xf32>
    %28 = vector.broadcast %14 : vector<1x4xf32> to vector<64x4xf32>
    %29 = arith.minimumf %28, %27 : vector<64x4xf32>
    %c0_10 = arith.constant 0 : index
    %c0_11 = arith.constant 0 : index
    %30 = vector.load %arg3[%c0_10, %c0_11] : memref<64x32xf32, #tpu.memory_space<vmem>>, vector<64x4xf32>
    tpu.vector_store %arg3[%c0_10, %c0_11], %29 {strides = array<i32>} : memref<64x32xf32, #tpu.memory_space<vmem>>, vector<64x4xf32>,
    %31 = vector.extract_strided_slice %12 {offsets = [0, 4], sizes = [64, 4], strides = [1, 1]} : vector<64x32xf32> to vector<64x4xf32>
    %32 = arith.subf %31, %19 : vector<64x4xf32>
    %33 = vector.broadcast %16 : vector<1x4xf32> to vector<64x4xf32>
    %34 = arith.maximumf %33, %32 : vector<64x4xf32>
    %35 = vector.broadcast %4 : vector<1x4xf32> to vector<64x4xf32>
    %36 = arith.minimumf %35, %34 : vector<64x4xf32>
    %37 = arith.addf %25, %36 : vector<64x4xf32>
    %38 = vector.broadcast %13 : vector<1x4xf32> to vector<64x4xf32>
    %39 = arith.maximumf %38, %37 : vector<64x4xf32>
    %40 = vector.broadcast %14 : vector<1x4xf32> to vector<64x4xf32>
    %41 = arith.minimumf %40, %39 : vector<64x4xf32>
    %c0_12 = arith.constant 0 : index
    %c4_13 = arith.constant 4 : index
    %42 = vector.load %arg3[%c0_12, %c4_13] : memref<64x32xf32, #tpu.memory_space<vmem>>, vector<64x4xf32>
    tpu.vector_store %arg3[%c0_12, %c4_13], %41 {strides = array<i32>} : memref<64x32xf32, #tpu.memory_space<vmem>>, vector<64x4xf32>,
    %43 = vector.extract_strided_slice %12 {offsets = [0, 8], sizes = [64, 4], strides = [1, 1]} : vector<64x32xf32> to vector<64x4xf32>
    %44 = arith.subf %43, %31 : vector<64x4xf32>
    %45 = vector.broadcast %16 : vector<1x4xf32> to vector<64x4xf32>
    %46 = arith.maximumf %45, %44 : vector<64x4xf32>
    %47 = vector.broadcast %4 : vector<1x4xf32> to vector<64x4xf32>
    %48 = arith.minimumf %47, %46 : vector<64x4xf32>
    %49 = arith.addf %37, %48 : vector<64x4xf32>
    %50 = vector.broadcast %13 : vector<1x4xf32> to vector<64x4xf32>
    %51 = arith.maximumf %50, %49 : vector<64x4xf32>
    %52 = vector.broadcast %14 : vector<1x4xf32> to vector<64x4xf32>
    %53 = arith.minimumf %52, %51 : vector<64x4xf32>
    %c0_14 = arith.constant 0 : index
    %c8_15 = arith.constant 8 : index
    %54 = vector.load %arg3[%c0_14, %c8_15] : memref<64x32xf32, #tpu.memory_space<vmem>>, vector<64x4xf32>
    tpu.vector_store %arg3[%c0_14, %c8_15], %53 {strides = array<i32>} : memref<64x32xf32, #tpu.memory_space<vmem>>, vector<64x4xf32>,
    %55 = vector.extract_strided_slice %12 {offsets = [0, 12], sizes = [64, 4], strides = [1, 1]} : vector<64x32xf32> to vector<64x4xf32>
    %56 = arith.subf %55, %43 : vector<64x4xf32>
    %57 = vector.broadcast %16 : vector<1x4xf32> to vector<64x4xf32>
    %58 = arith.maximumf %57, %56 : vector<64x4xf32>
    %59 = vector.broadcast %4 : vector<1x4xf32> to vector<64x4xf32>
    %60 = arith.minimumf %59, %58 : vector<64x4xf32>
    %61 = arith.addf %49, %60 : vector<64x4xf32>
    %62 = vector.broadcast %13 : vector<1x4xf32> to vector<64x4xf32>
    %63 = arith.maximumf %62, %61 : vector<64x4xf32>
    %64 = vector.broadcast %14 : vector<1x4xf32> to vector<64x4xf32>
    %65 = arith.minimumf %64, %63 : vector<64x4xf32>
    %c0_16 = arith.constant 0 : index
    %c12 = arith.constant 12 : index
    %66 = vector.load %arg3[%c0_16, %c12] : memref<64x32xf32, #tpu.memory_space<vmem>>, vector<64x4xf32>
    tpu.vector_store %arg3[%c0_16, %c12], %65 {strides = array<i32>} : memref<64x32xf32, #tpu.memory_space<vmem>>, vector<64x4xf32>,
    %67 = vector.extract_strided_slice %12 {offsets = [0, 16], sizes = [64, 4], strides = [1, 1]} : vector<64x32xf32> to vector<64x4xf32>
    %68 = arith.subf %67, %55 : vector<64x4xf32>
    %69 = vector.broadcast %16 : vector<1x4xf32> to vector<64x4xf32>
    %70 = arith.maximumf %69, %68 : vector<64x4xf32>
    %71 = vector.broadcast %4 : vector<1x4xf32> to vector<64x4xf32>
    %72 = arith.minimumf %71, %70 : vector<64x4xf32>
    %73 = arith.addf %61, %72 : vector<64x4xf32>
    %74 = vector.broadcast %13 : vector<1x4xf32> to vector<64x4xf32>
    %75 = arith.maximumf %74, %73 : vector<64x4xf32>
    %76 = vector.broadcast %14 : vector<1x4xf32> to vector<64x4xf32>
    %77 = arith.minimumf %76, %75 : vector<64x4xf32>
    %c0_17 = arith.constant 0 : index
    %c16_18 = arith.constant 16 : index
    %78 = vector.load %arg3[%c0_17, %c16_18] : memref<64x32xf32, #tpu.memory_space<vmem>>, vector<64x4xf32>
    tpu.vector_store %arg3[%c0_17, %c16_18], %77 {strides = array<i32>} : memref<64x32xf32, #tpu.memory_space<vmem>>, vector<64x4xf32>,
    %79 = vector.extract_strided_slice %12 {offsets = [0, 20], sizes = [64, 4], strides = [1, 1]} : vector<64x32xf32> to vector<64x4xf32>
    %80 = arith.subf %79, %67 : vector<64x4xf32>
    %81 = vector.broadcast %16 : vector<1x4xf32> to vector<64x4xf32>
    %82 = arith.maximumf %81, %80 : vector<64x4xf32>
    %83 = vector.broadcast %4 : vector<1x4xf32> to vector<64x4xf32>
    %84 = arith.minimumf %83, %82 : vector<64x4xf32>
    %85 = arith.addf %73, %84 : vector<64x4xf32>
    %86 = vector.broadcast %13 : vector<1x4xf32> to vector<64x4xf32>
    %87 = arith.maximumf %86, %85 : vector<64x4xf32>
    %88 = vector.broadcast %14 : vector<1x4xf32> to vector<64x4xf32>
    %89 = arith.minimumf %88, %87 : vector<64x4xf32>
    %c0_19 = arith.constant 0 : index
    %c20 = arith.constant 20 : index
    %90 = vector.load %arg3[%c0_19, %c20] : memref<64x32xf32, #tpu.memory_space<vmem>>, vector<64x4xf32>
    tpu.vector_store %arg3[%c0_19, %c20], %89 {strides = array<i32>} : memref<64x32xf32, #tpu.memory_space<vmem>>, vector<64x4xf32>,
    %91 = vector.extract_strided_slice %12 {offsets = [0, 24], sizes = [64, 4], strides = [1, 1]} : vector<64x32xf32> to vector<64x4xf32>
    %92 = arith.subf %91, %79 : vector<64x4xf32>
    %93 = vector.broadcast %16 : vector<1x4xf32> to vector<64x4xf32>
    %94 = arith.maximumf %93, %92 : vector<64x4xf32>
    %95 = vector.broadcast %4 : vector<1x4xf32> to vector<64x4xf32>
    %96 = arith.minimumf %95, %94 : vector<64x4xf32>
    %97 = arith.addf %85, %96 : vector<64x4xf32>
    %98 = vector.broadcast %13 : vector<1x4xf32> to vector<64x4xf32>
    %99 = arith.maximumf %98, %97 : vector<64x4xf32>
    %100 = vector.broadcast %14 : vector<1x4xf32> to vector<64x4xf32>
    %101 = arith.minimumf %100, %99 : vector<64x4xf32>
    %c0_20 = arith.constant 0 : index
    %c24 = arith.constant 24 : index
    %102 = vector.load %arg3[%c0_20, %c24] : memref<64x32xf32, #tpu.memory_space<vmem>>, vector<64x4xf32>
    tpu.vector_store %arg3[%c0_20, %c24], %101 {strides = array<i32>} : memref<64x32xf32, #tpu.memory_space<vmem>>, vector<64x4xf32>,
    %103 = vector.extract_strided_slice %12 {offsets = [0, 28], sizes = [64, 4], strides = [1, 1]} : vector<64x32xf32> to vector<64x4xf32>
    %104 = arith.subf %103, %91 : vector<64x4xf32>
    %105 = vector.broadcast %16 : vector<1x4xf32> to vector<64x4xf32>
    %106 = arith.maximumf %105, %104 : vector<64x4xf32>
    %107 = vector.broadcast %4 : vector<1x4xf32> to vector<64x4xf32>
    %108 = arith.minimumf %107, %106 : vector<64x4xf32>
    %109 = arith.addf %97, %108 : vector<64x4xf32>
    %110 = vector.broadcast %13 : vector<1x4xf32> to vector<64x4xf32>
    %111 = arith.maximumf %110, %109 : vector<64x4xf32>
    %112 = vector.broadcast %14 : vector<1x4xf32> to vector<64x4xf32>
    %113 = arith.minimumf %112, %111 : vector<64x4xf32>
    %c0_21 = arith.constant 0 : index
    %c28 = arith.constant 28 : index
    %114 = vector.load %arg3[%c0_21, %c28] : memref<64x32xf32, #tpu.memory_space<vmem>>, vector<64x4xf32>
    tpu.vector_store %arg3[%c0_21, %c28], %113 {strides = array<i32>} : memref<64x32xf32, #tpu.memory_space<vmem>>, vector<64x4xf32>,
    %c0_22 = arith.constant 0 : index
    %c0_23 = arith.constant 0 : index
    %115 = vector.load %arg3[%c0_22, %c0_23] : memref<64x32xf32, #tpu.memory_space<vmem>>, vector<64x32xf32>
    %cst_24 = arith.constant dense<0.000000e+00> : vector<64x64xf32>
    %116 = tpu.matmul %115, %7, %cst_24 {dimension_numbers = #tpu.dot_dimension_numbers<[1], [0], [0], [1], [0, 0, 1, 1], [], []>, precision = #tpu.contract_precision<fp32>} : vector<64x32xf32>, vector<32x64xf32>, vector<64x64xf32> -> vector<64x64xf32>
    %c0_25 = arith.constant 0 : index
    %c0_26 = arith.constant 0 : index
    %117 = vector.load %arg4[%c0_25, %c0_26] : memref<64x64xf32, #tpu.memory_space<vmem>>, vector<64x64xf32>
    tpu.vector_store %arg4[%c0_25, %c0_26], %116 {strides = array<i32>} : memref<64x64xf32, #tpu.memory_space<vmem>>, vector<64x64xf32>,
    %118 = arith.mulf %115, %115 : vector<64x32xf32>
    %cst_27 = arith.constant dense<0.000000e+00> : vector<64xf32>
    %119 = vector.multi_reduction <add>, %118, %cst_27 [1] : vector<64x32xf32> to vector<64xf32>
    %120 = vector.shape_cast %119 : vector<64xf32> to vector<64x1xf32>
    %cst_28 = arith.constant 1.000000e-01 : f32
    %121 = vector.broadcast %cst_28 : f32 to vector<64x1xf32>
    %122 = arith.mulf %121, %120 : vector<64x1xf32>
    %123 = vector.shape_cast %1 : vector<1x8xf32> to vector<1x8xf32>
    %124 = vector.broadcast %123 : vector<1x8xf32> to vector<64x8xf32>
    %125 = vector.shape_cast %0 : vector<1x8xf32> to vector<1x8xf32>
    %126 = vector.broadcast %125 : vector<1x8xf32> to vector<64x8xf32>
    %cst_29 = arith.constant 0.000000e+00 : f32
    %127 = vector.broadcast %cst_29 : f32 to vector<64x8xf32>
    %128 = arith.subf %126, %124 : vector<64x8xf32>
    %129 = arith.mulf %128, %128 : vector<64x8xf32>
    %130 = arith.addf %127, %129 : vector<64x8xf32>
    %cst_30 = arith.constant dense<0.000000e+00> : vector<64x8xf32>
    %131 = tpu.matmul %126, %6, %cst_30 {dimension_numbers = #tpu.dot_dimension_numbers<[1], [0], [0], [1], [0, 0, 1, 1], [], []>, precision = #tpu.contract_precision<fp32>} : vector<64x8xf32>, vector<8x8xf32>, vector<64x8xf32> -> vector<64x8xf32>
    %c0_31 = arith.constant 0 : index
    %c0_32 = arith.constant 0 : index
    %132 = vector.load %arg4[%c0_31, %c0_32] : memref<64x64xf32, #tpu.memory_space<vmem>>, vector<64x8xf32>
    %133 = arith.addf %131, %132 : vector<64x8xf32>
    %cst_33 = arith.constant 1.000000e-01 : f32
    %134 = vector.broadcast %cst_33 : f32 to vector<64x8xf32>
    %135 = arith.mulf %134, %133 : vector<64x8xf32>
    %136 = arith.addf %126, %135 : vector<64x8xf32>
    %137 = arith.subf %136, %124 : vector<64x8xf32>
    %138 = arith.mulf %137, %137 : vector<64x8xf32>
    %139 = arith.addf %130, %138 : vector<64x8xf32>
    %cst_34 = arith.constant dense<0.000000e+00> : vector<64x8xf32>
    %140 = tpu.matmul %136, %6, %cst_34 {dimension_numbers = #tpu.dot_dimension_numbers<[1], [0], [0], [1], [0, 0, 1, 1], [], []>, precision = #tpu.contract_precision<fp32>} : vector<64x8xf32>, vector<8x8xf32>, vector<64x8xf32> -> vector<64x8xf32>
    %c0_35 = arith.constant 0 : index
    %c8_36 = arith.constant 8 : index
    %141 = vector.load %arg4[%c0_35, %c8_36] : memref<64x64xf32, #tpu.memory_space<vmem>>, vector<64x8xf32>
    %142 = arith.addf %140, %141 : vector<64x8xf32>
    %cst_37 = arith.constant 1.000000e-01 : f32
    %143 = vector.broadcast %cst_37 : f32 to vector<64x8xf32>
    %144 = arith.mulf %143, %142 : vector<64x8xf32>
    %145 = arith.addf %136, %144 : vector<64x8xf32>
    %146 = arith.subf %145, %124 : vector<64x8xf32>
    %147 = arith.mulf %146, %146 : vector<64x8xf32>
    %148 = arith.addf %139, %147 : vector<64x8xf32>
    %cst_38 = arith.constant dense<0.000000e+00> : vector<64x8xf32>
    %149 = tpu.matmul %145, %6, %cst_38 {dimension_numbers = #tpu.dot_dimension_numbers<[1], [0], [0], [1], [0, 0, 1, 1], [], []>, precision = #tpu.contract_precision<fp32>} : vector<64x8xf32>, vector<8x8xf32>, vector<64x8xf32> -> vector<64x8xf32>
    %c0_39 = arith.constant 0 : index
    %c16_40 = arith.constant 16 : index
    %150 = vector.load %arg4[%c0_39, %c16_40] : memref<64x64xf32, #tpu.memory_space<vmem>>, vector<64x8xf32>
    %151 = arith.addf %149, %150 : vector<64x8xf32>
    %cst_41 = arith.constant 1.000000e-01 : f32
    %152 = vector.broadcast %cst_41 : f32 to vector<64x8xf32>
    %153 = arith.mulf %152, %151 : vector<64x8xf32>
    %154 = arith.addf %145, %153 : vector<64x8xf32>
    %155 = arith.subf %154, %124 : vector<64x8xf32>
    %156 = arith.mulf %155, %155 : vector<64x8xf32>
    %157 = arith.addf %148, %156 : vector<64x8xf32>
    %cst_42 = arith.constant dense<0.000000e+00> : vector<64x8xf32>
    %158 = tpu.matmul %154, %6, %cst_42 {dimension_numbers = #tpu.dot_dimension_numbers<[1], [0], [0], [1], [0, 0, 1, 1], [], []>, precision = #tpu.contract_precision<fp32>} : vector<64x8xf32>, vector<8x8xf32>, vector<64x8xf32> -> vector<64x8xf32>
    %c0_43 = arith.constant 0 : index
    %c24_44 = arith.constant 24 : index
    %159 = vector.load %arg4[%c0_43, %c24_44] : memref<64x64xf32, #tpu.memory_space<vmem>>, vector<64x8xf32>
    %160 = arith.addf %158, %159 : vector<64x8xf32>
    %cst_45 = arith.constant 1.000000e-01 : f32
    %161 = vector.broadcast %cst_45 : f32 to vector<64x8xf32>
    %162 = arith.mulf %161, %160 : vector<64x8xf32>
    %163 = arith.addf %154, %162 : vector<64x8xf32>
    %164 = arith.subf %163, %124 : vector<64x8xf32>
    %165 = arith.mulf %164, %164 : vector<64x8xf32>
    %166 = arith.addf %157, %165 : vector<64x8xf32>
    %cst_46 = arith.constant dense<0.000000e+00> : vector<64x8xf32>
    %167 = tpu.matmul %163, %6, %cst_46 {dimension_numbers = #tpu.dot_dimension_numbers<[1], [0], [0], [1], [0, 0, 1, 1], [], []>, precision = #tpu.contract_precision<fp32>} : vector<64x8xf32>, vector<8x8xf32>, vector<64x8xf32> -> vector<64x8xf32>
    %c0_47 = arith.constant 0 : index
    %c32 = arith.constant 32 : index
    %168 = vector.load %arg4[%c0_47, %c32] : memref<64x64xf32, #tpu.memory_space<vmem>>, vector<64x8xf32>
    %169 = arith.addf %167, %168 : vector<64x8xf32>
    %cst_48 = arith.constant 1.000000e-01 : f32
    %170 = vector.broadcast %cst_48 : f32 to vector<64x8xf32>
    %171 = arith.mulf %170, %169 : vector<64x8xf32>
    %172 = arith.addf %163, %171 : vector<64x8xf32>
    %173 = arith.subf %172, %124 : vector<64x8xf32>
    %174 = arith.mulf %173, %173 : vector<64x8xf32>
    %175 = arith.addf %166, %174 : vector<64x8xf32>
    %cst_49 = arith.constant dense<0.000000e+00> : vector<64x8xf32>
    %176 = tpu.matmul %172, %6, %cst_49 {dimension_numbers = #tpu.dot_dimension_numbers<[1], [0], [0], [1], [0, 0, 1, 1], [], []>, precision = #tpu.contract_precision<fp32>} : vector<64x8xf32>, vector<8x8xf32>, vector<64x8xf32> -> vector<64x8xf32>
    %c0_50 = arith.constant 0 : index
    %c40 = arith.constant 40 : index
    %177 = vector.load %arg4[%c0_50, %c40] : memref<64x64xf32, #tpu.memory_space<vmem>>, vector<64x8xf32>
    %178 = arith.addf %176, %177 : vector<64x8xf32>
    %cst_51 = arith.constant 1.000000e-01 : f32
    %179 = vector.broadcast %cst_51 : f32 to vector<64x8xf32>
    %180 = arith.mulf %179, %178 : vector<64x8xf32>
    %181 = arith.addf %172, %180 : vector<64x8xf32>
    %182 = arith.subf %181, %124 : vector<64x8xf32>
    %183 = arith.mulf %182, %182 : vector<64x8xf32>
    %184 = arith.addf %175, %183 : vector<64x8xf32>
    %cst_52 = arith.constant dense<0.000000e+00> : vector<64x8xf32>
    %185 = tpu.matmul %181, %6, %cst_52 {dimension_numbers = #tpu.dot_dimension_numbers<[1], [0], [0], [1], [0, 0, 1, 1], [], []>, precision = #tpu.contract_precision<fp32>} : vector<64x8xf32>, vector<8x8xf32>, vector<64x8xf32> -> vector<64x8xf32>
    %c0_53 = arith.constant 0 : index
    %c48 = arith.constant 48 : index
    %186 = vector.load %arg4[%c0_53, %c48] : memref<64x64xf32, #tpu.memory_space<vmem>>, vector<64x8xf32>
    %187 = arith.addf %185, %186 : vector<64x8xf32>
    %cst_54 = arith.constant 1.000000e-01 : f32
    %188 = vector.broadcast %cst_54 : f32 to vector<64x8xf32>
    %189 = arith.mulf %188, %187 : vector<64x8xf32>
    %190 = arith.addf %181, %189 : vector<64x8xf32>
    %191 = arith.subf %190, %124 : vector<64x8xf32>
    %192 = arith.mulf %191, %191 : vector<64x8xf32>
    %193 = arith.addf %184, %192 : vector<64x8xf32>
    %cst_55 = arith.constant dense<0.000000e+00> : vector<64x8xf32>
    %194 = tpu.matmul %190, %6, %cst_55 {dimension_numbers = #tpu.dot_dimension_numbers<[1], [0], [0], [1], [0, 0, 1, 1], [], []>, precision = #tpu.contract_precision<fp32>} : vector<64x8xf32>, vector<8x8xf32>, vector<64x8xf32> -> vector<64x8xf32>
    %c0_56 = arith.constant 0 : index
    %c56 = arith.constant 56 : index
    %195 = vector.load %arg4[%c0_56, %c56] : memref<64x64xf32, #tpu.memory_space<vmem>>, vector<64x8xf32>
    %196 = arith.addf %194, %195 : vector<64x8xf32>
    %cst_57 = arith.constant 1.000000e-01 : f32
    %197 = vector.broadcast %cst_57 : f32 to vector<64x8xf32>
    %198 = arith.mulf %197, %196 : vector<64x8xf32>
    %199 = arith.addf %190, %198 : vector<64x8xf32>
    %200 = arith.subf %199, %124 : vector<64x8xf32>
    %201 = arith.mulf %200, %200 : vector<64x8xf32>
    %202 = arith.addf %193, %201 : vector<64x8xf32>
    %cst_58 = arith.constant dense<0.000000e+00> : vector<64xf32>
    %203 = vector.multi_reduction <add>, %202, %cst_58 [1] : vector<64x8xf32> to vector<64xf32>
    %204 = vector.shape_cast %203 : vector<64xf32> to vector<64x1xf32>
    %205 = arith.addf %204, %122 : vector<64x1xf32>
    %cst_59 = arith.constant -1.000000e+00 : f32
    %206 = vector.broadcast %cst_59 : f32 to vector<64x1xf32>
    %207 = arith.mulf %205, %206 : vector<64x1xf32>
    %cst_60 = arith.constant dense<0xFF800000> : vector<1xf32>
    %208 = vector.multi_reduction <maximumf>, %207, %cst_60 [0] : vector<64x1xf32> to vector<1xf32>
    %209 = vector.shape_cast %208 : vector<1xf32> to vector<1x1xf32>
    %210 = vector.broadcast %209 : vector<1x1xf32> to vector<64x1xf32>
    %211 = arith.subf %207, %210 : vector<64x1xf32>
    %212 = math.exp %211 : vector<64x1xf32>
    %cst_61 = arith.constant dense<0.000000e+00> : vector<1xf32>
    %213 = vector.multi_reduction <add>, %212, %cst_61 [0] : vector<64x1xf32> to vector<1xf32>
    %214 = vector.shape_cast %213 : vector<1xf32> to vector<1x1xf32>
    %215 = vector.broadcast %214 : vector<1x1xf32> to vector<64x1xf32>
    %216 = arith.divf %212, %215 : vector<64x1xf32>
    %c0_62 = arith.constant 0 : index
    %c0_63 = arith.constant 0 : index
    %217 = vector.load %arg3[%c0_62, %c0_63] : memref<64x32xf32, #tpu.memory_space<vmem>>, vector<64x32xf32>
    %218 = vector.broadcast %216 : vector<64x1xf32> to vector<64x32xf32>
    %219 = arith.mulf %218, %217 : vector<64x32xf32>
    %cst_64 = arith.constant dense<0.000000e+00> : vector<32xf32>
    %220 = vector.multi_reduction <add>, %219, %cst_64 [0] : vector<64x32xf32> to vector<32xf32>
    %221 = vector.shape_cast %220 : vector<32xf32> to vector<1x32xf32>
    %c0_65 = arith.constant 0 : index
    %c0_66 = arith.constant 0 : index
    %222 = vector.load %arg2[%c0_65, %c0_66] : memref<1x104xf32, #tpu.memory_space<vmem>>, vector<1x32xf32>
    tpu.vector_store %arg2[%c0_65, %c0_66], %221 {strides = array<i32>} : memref<1x104xf32, #tpu.memory_space<vmem>>, vector<1x32xf32>,
    %cst_67 = arith.constant dense<0.000000e+00> : vector<1x64xf32>
    %223 = tpu.matmul %221, %7, %cst_67 {dimension_numbers = #tpu.dot_dimension_numbers<[1], [0], [0], [1], [0, 0, 1, 1], [], []>, precision = #tpu.contract_precision<fp32>} : vector<1x32xf32>, vector<32x64xf32>, vector<1x64xf32> -> vector<1x64xf32>
    %c0_68 = arith.constant 0 : index
    %c32_69 = arith.constant 32 : index
    %224 = vector.load %arg2[%c0_68, %c32_69] : memref<1x104xf32, #tpu.memory_space<vmem>>, vector<1x8xf32>
    tpu.vector_store %arg2[%c0_68, %c32_69], %0 {strides = array<i32>} : memref<1x104xf32, #tpu.memory_space<vmem>>, vector<1x8xf32>,
    %cst_70 = arith.constant dense<0.000000e+00> : vector<1x8xf32>
    %225 = tpu.matmul %0, %6, %cst_70 {dimension_numbers = #tpu.dot_dimension_numbers<[1], [0], [0], [1], [0, 0, 1, 1], [], []>, precision = #tpu.contract_precision<fp32>} : vector<1x8xf32>, vector<8x8xf32>, vector<1x8xf32> -> vector<1x8xf32>
    %226 = vector.extract_strided_slice %223 {offsets = [0, 0], sizes = [1, 8], strides = [1, 1]} : vector<1x64xf32> to vector<1x8xf32>
    %227 = arith.addf %225, %226 : vector<1x8xf32>
    %cst_71 = arith.constant 1.000000e-01 : f32
    %228 = vector.broadcast %cst_71 : f32 to vector<1x8xf32>
    %229 = arith.mulf %228, %227 : vector<1x8xf32>
    %230 = arith.addf %0, %229 : vector<1x8xf32>
    %c0_72 = arith.constant 0 : index
    %c40_73 = arith.constant 40 : index
    %231 = vector.load %arg2[%c0_72, %c40_73] : memref<1x104xf32, #tpu.memory_space<vmem>>, vector<1x8xf32>
    tpu.vector_store %arg2[%c0_72, %c40_73], %230 {strides = array<i32>} : memref<1x104xf32, #tpu.memory_space<vmem>>, vector<1x8xf32>,
    %cst_74 = arith.constant dense<0.000000e+00> : vector<1x8xf32>
    %232 = tpu.matmul %230, %6, %cst_74 {dimension_numbers = #tpu.dot_dimension_numbers<[1], [0], [0], [1], [0, 0, 1, 1], [], []>, precision = #tpu.contract_precision<fp32>} : vector<1x8xf32>, vector<8x8xf32>, vector<1x8xf32> -> vector<1x8xf32>
    %233 = vector.extract_strided_slice %223 {offsets = [0, 8], sizes = [1, 8], strides = [1, 1]} : vector<1x64xf32> to vector<1x8xf32>
    %234 = arith.addf %232, %233 : vector<1x8xf32>
    %cst_75 = arith.constant 1.000000e-01 : f32
    %235 = vector.broadcast %cst_75 : f32 to vector<1x8xf32>
    %236 = arith.mulf %235, %234 : vector<1x8xf32>
    %237 = arith.addf %230, %236 : vector<1x8xf32>
    %c0_76 = arith.constant 0 : index
    %c48_77 = arith.constant 48 : index
    %238 = vector.load %arg2[%c0_76, %c48_77] : memref<1x104xf32, #tpu.memory_space<vmem>>, vector<1x8xf32>
    tpu.vector_store %arg2[%c0_76, %c48_77], %237 {strides = array<i32>} : memref<1x104xf32, #tpu.memory_space<vmem>>, vector<1x8xf32>,
    %cst_78 = arith.constant dense<0.000000e+00> : vector<1x8xf32>
    %239 = tpu.matmul %237, %6, %cst_78 {dimension_numbers = #tpu.dot_dimension_numbers<[1], [0], [0], [1], [0, 0, 1, 1], [], []>, precision = #tpu.contract_precision<fp32>} : vector<1x8xf32>, vector<8x8xf32>, vector<1x8xf32> -> vector<1x8xf32>
    %240 = vector.extract_strided_slice %223 {offsets = [0, 16], sizes = [1, 8], strides = [1, 1]} : vector<1x64xf32> to vector<1x8xf32>
    %241 = arith.addf %239, %240 : vector<1x8xf32>
    %cst_79 = arith.constant 1.000000e-01 : f32
    %242 = vector.broadcast %cst_79 : f32 to vector<1x8xf32>
    %243 = arith.mulf %242, %241 : vector<1x8xf32>
    %244 = arith.addf %237, %243 : vector<1x8xf32>
    %c0_80 = arith.constant 0 : index
    %c56_81 = arith.constant 56 : index
    %245 = vector.load %arg2[%c0_80, %c56_81] : memref<1x104xf32, #tpu.memory_space<vmem>>, vector<1x8xf32>
    tpu.vector_store %arg2[%c0_80, %c56_81], %244 {strides = array<i32>} : memref<1x104xf32, #tpu.memory_space<vmem>>, vector<1x8xf32>,
    %cst_82 = arith.constant dense<0.000000e+00> : vector<1x8xf32>
    %246 = tpu.matmul %244, %6, %cst_82 {dimension_numbers = #tpu.dot_dimension_numbers<[1], [0], [0], [1], [0, 0, 1, 1], [], []>, precision = #tpu.contract_precision<fp32>} : vector<1x8xf32>, vector<8x8xf32>, vector<1x8xf32> -> vector<1x8xf32>
    %247 = vector.extract_strided_slice %223 {offsets = [0, 24], sizes = [1, 8], strides = [1, 1]} : vector<1x64xf32> to vector<1x8xf32>
    %248 = arith.addf %246, %247 : vector<1x8xf32>
    %cst_83 = arith.constant 1.000000e-01 : f32
    %249 = vector.broadcast %cst_83 : f32 to vector<1x8xf32>
    %250 = arith.mulf %249, %248 : vector<1x8xf32>
    %251 = arith.addf %244, %250 : vector<1x8xf32>
    %c0_84 = arith.constant 0 : index
    %c64 = arith.constant 64 : index
    %252 = vector.load %arg2[%c0_84, %c64] : memref<1x104xf32, #tpu.memory_space<vmem>>, vector<1x8xf32>
    tpu.vector_store %arg2[%c0_84, %c64], %251 {strides = array<i32>} : memref<1x104xf32, #tpu.memory_space<vmem>>, vector<1x8xf32>,
    %cst_85 = arith.constant dense<0.000000e+00> : vector<1x8xf32>
    %253 = tpu.matmul %251, %6, %cst_85 {dimension_numbers = #tpu.dot_dimension_numbers<[1], [0], [0], [1], [0, 0, 1, 1], [], []>, precision = #tpu.contract_precision<fp32>} : vector<1x8xf32>, vector<8x8xf32>, vector<1x8xf32> -> vector<1x8xf32>
    %254 = vector.extract_strided_slice %223 {offsets = [0, 32], sizes = [1, 8], strides = [1, 1]} : vector<1x64xf32> to vector<1x8xf32>
    %255 = arith.addf %253, %254 : vector<1x8xf32>
    %cst_86 = arith.constant 1.000000e-01 : f32
    %256 = vector.broadcast %cst_86 : f32 to vector<1x8xf32>
    %257 = arith.mulf %256, %255 : vector<1x8xf32>
    %258 = arith.addf %251, %257 : vector<1x8xf32>
    %c0_87 = arith.constant 0 : index
    %c72 = arith.constant 72 : index
    %259 = vector.load %arg2[%c0_87, %c72] : memref<1x104xf32, #tpu.memory_space<vmem>>, vector<1x8xf32>
    tpu.vector_store %arg2[%c0_87, %c72], %258 {strides = array<i32>} : memref<1x104xf32, #tpu.memory_space<vmem>>, vector<1x8xf32>,
    %cst_88 = arith.constant dense<0.000000e+00> : vector<1x8xf32>
    %260 = tpu.matmul %258, %6, %cst_88 {dimension_numbers = #tpu.dot_dimension_numbers<[1], [0], [0], [1], [0, 0, 1, 1], [], []>, precision = #tpu.contract_precision<fp32>} : vector<1x8xf32>, vector<8x8xf32>, vector<1x8xf32> -> vector<1x8xf32>
    %261 = vector.extract_strided_slice %223 {offsets = [0, 40], sizes = [1, 8], strides = [1, 1]} : vector<1x64xf32> to vector<1x8xf32>
    %262 = arith.addf %260, %261 : vector<1x8xf32>
    %cst_89 = arith.constant 1.000000e-01 : f32
    %263 = vector.broadcast %cst_89 : f32 to vector<1x8xf32>
    %264 = arith.mulf %263, %262 : vector<1x8xf32>
    %265 = arith.addf %258, %264 : vector<1x8xf32>
    %c0_90 = arith.constant 0 : index
    %c80 = arith.constant 80 : index
    %266 = vector.load %arg2[%c0_90, %c80] : memref<1x104xf32, #tpu.memory_space<vmem>>, vector<1x8xf32>
    tpu.vector_store %arg2[%c0_90, %c80], %265 {strides = array<i32>} : memref<1x104xf32, #tpu.memory_space<vmem>>, vector<1x8xf32>,
    %cst_91 = arith.constant dense<0.000000e+00> : vector<1x8xf32>
    %267 = tpu.matmul %265, %6, %cst_91 {dimension_numbers = #tpu.dot_dimension_numbers<[1], [0], [0], [1], [0, 0, 1, 1], [], []>, precision = #tpu.contract_precision<fp32>} : vector<1x8xf32>, vector<8x8xf32>, vector<1x8xf32> -> vector<1x8xf32>
    %268 = vector.extract_strided_slice %223 {offsets = [0, 48], sizes = [1, 8], strides = [1, 1]} : vector<1x64xf32> to vector<1x8xf32>
    %269 = arith.addf %267, %268 : vector<1x8xf32>
    %cst_92 = arith.constant 1.000000e-01 : f32
    %270 = vector.broadcast %cst_92 : f32 to vector<1x8xf32>
    %271 = arith.mulf %270, %269 : vector<1x8xf32>
    %272 = arith.addf %265, %271 : vector<1x8xf32>
    %c0_93 = arith.constant 0 : index
    %c88 = arith.constant 88 : index
    %273 = vector.load %arg2[%c0_93, %c88] : memref<1x104xf32, #tpu.memory_space<vmem>>, vector<1x8xf32>
    tpu.vector_store %arg2[%c0_93, %c88], %272 {strides = array<i32>} : memref<1x104xf32, #tpu.memory_space<vmem>>, vector<1x8xf32>,
    %cst_94 = arith.constant dense<0.000000e+00> : vector<1x8xf32>
    %274 = tpu.matmul %272, %6, %cst_94 {dimension_numbers = #tpu.dot_dimension_numbers<[1], [0], [0], [1], [0, 0, 1, 1], [], []>, precision = #tpu.contract_precision<fp32>} : vector<1x8xf32>, vector<8x8xf32>, vector<1x8xf32> -> vector<1x8xf32>
    %275 = vector.extract_strided_slice %223 {offsets = [0, 56], sizes = [1, 8], strides = [1, 1]} : vector<1x64xf32> to vector<1x8xf32>
    %276 = arith.addf %274, %275 : vector<1x8xf32>
    %cst_95 = arith.constant 1.000000e-01 : f32
    %277 = vector.broadcast %cst_95 : f32 to vector<1x8xf32>
    %278 = arith.mulf %277, %276 : vector<1x8xf32>
    %279 = arith.addf %272, %278 : vector<1x8xf32>
    %c0_96 = arith.constant 0 : index
    %c96 = arith.constant 96 : index
    %280 = vector.load %arg2[%c0_96, %c96] : memref<1x104xf32, #tpu.memory_space<vmem>>, vector<1x8xf32>
    tpu.vector_store %arg2[%c0_96, %c96], %279 {strides = array<i32>} : memref<1x104xf32, #tpu.memory_space<vmem>>, vector<1x8xf32>,
    return
  }
}

</mosaic_0001>

<llo_original>
// kernel: tile.13
$region0: #{tile.13}
  #allocation0 [shape = 's32[1]{0}', space=sflag, size = 0x4, scoped, tag = 'scoped memory for tile.13']
  %s0 = inlined_call_operand.vmem [shape: f32[4], index: 0, kind: input, shape index: {}]
  %s1 = inlined_call_operand.vmem [shape: f32[8,4], index: 1, kind: output, shape index: {}]
  // Predicated region
  $region2: #{tile.13} parent=0 // pred_check
    _
  $region3: #{tile.13} parent=0 // pred_check_branch
    %3 = sbr.rel (0) target = $region5
  $region4: #{tile.13} parent=0 // pred_region
    _
  $region5: #{tile.13} parent=0 // pred_fallthru
    _
  %v4 = vld [vmem:[%s0] ss:$0 sm:$0xff]
  %5 = vst [vmem:[%s1] sm:$0xff] %v4

// kernel: tile.14
$region0: #{tile.14}
  %s0 = inlined_call_operand.vmem [shape: f32[8,4], index: 0, kind: input, shape index: {}]
  %s1 = inlined_call_operand.vmem [shape: f32[32], index: 1, kind: output, shape index: {}]
  $region1: #{tile.14} parent=0
    #allocation0 [shape = 'u8[4096]{0}', space=vmem, size = 0x1000, scoped, tag = 'scoped mem for output reshape']
    %v2 = vld [vmem:[%s0] sm:$0x1]
    %vm3 = vcmask 31744
    %4 = vst.msk [vmem:[#allocation0] sm:$0x1] %vm3, %v2
    %s5 = scalar_lea.vmem %s0, 7
    %v6 = vld [vmem:[%s5] sm:$0x1]
    %7 = vrot.lane.b32.xlu0 %v6, 28
    %v8 = vpop.permute.xlu0 %7
    %vm9 = vcmask 261344
    %10 = vst.msk [vmem:[#allocation0] sm:$0x1] %vm9, %v8
    %s11 = scalar_lea.vmem %s0, 6
    %v12 = vld [vmem:[%s11] sm:$0x1]
    %13 = vrot.lane.b32.xlu0 %v12, 24
    %v14 = vpop.permute.xlu0 %13
    %vm15 = vcmask 228544
    %16 = vst.msk [vmem:[#allocation0] sm:$0x1] %vm15, %v14
    %s17 = scalar_lea.vmem %s0, 5
    %v18 = vld [vmem:[%s17] sm:$0x1]
    %19 = vrot.lane.b32.xlu0 %v18, 20
    %v20 = vpop.permute.xlu0 %19
    %vm21 = vcmask 195744
    %22 = vst.msk [vmem:[#allocation0] sm:$0x1] %vm21, %v20
    %s23 = scalar_lea.vmem %s0, 4
    %v24 = vld [vmem:[%s23] sm:$0x1]
    %25 = vrot.lane.b32.xlu0 %v24, 16
    %v26 = vpop.permute.xlu0 %25
    %vm27 = vcmask 162944
    %28 = vst.msk [vmem:[#allocation0] sm:$0x1] %vm27, %v26
    %s29 = scalar_lea.vmem %s0, 3
    %v30 = vld [vmem:[%s29] sm:$0x1]
    %31 = vrot.lane.b32.xlu0 %v30, 12
    %v32 = vpop.permute.xlu0 %31
    %vm33 = vcmask 130144
    %34 = vst.msk [vmem:[#allocation0] sm:$0x1] %vm33, %v32
    %s35 = scalar_lea.vmem %s0, 2
    %v36 = vld [vmem:[%s35] sm:$0x1]
    %37 = vrot.lane.b32.xlu0 %v36, 8
    %v38 = vpop.permute.xlu0 %37
    %vm39 = vcmask 97344
    %40 = vst.msk [vmem:[#allocation0] sm:$0x1] %vm39, %v38
    %s41 = scalar_lea.vmem %s0, 1
    %v42 = vld [vmem:[%s41] sm:$0x1]
    %43 = vrot.lane.b32.xlu0 %v42, 4
    %v44 = vpop.permute.xlu0 %43
    %vm45 = vcmask 64544
    %46 = vst.msk [vmem:[#allocation0] sm:$0x1] %vm45, %v44
    %s48 = sshllo.u32 0, 1
    %v50 = vld [vmem:[#allocation0] sm:%s48]
    %s51 = sshllo.u32 0, 1
    %52 = vst [vmem:[%s1] sm:%s51] %v50

// kernel: squeeze.5
$region0: #{squeeze.5}
  %s0 = inlined_call_operand.vmem [shape: f32[72], index: 0, kind: input, shape index: {}]
  %s1 = inlined_call_operand.vmem [shape: f32[1,9,8], index: 1, kind: output, shape index: {}]
  $region1: #{squeeze.5} parent=0
    #allocation0 [shape = 'u8[4096]{0}', space=vmem, size = 0x1000, scoped, tag = 'scoped mem for input reshape']
    %s3 = sshllo.u32 0, 1
    %v4 = vld [vmem:[%s0] sm:%s3]
    %5 = vst [vmem:[#allocation0] sm:%s3] %v4
    %v6 = vld [vmem:[#allocation0] sm:$0x1]
    %vm7 = vcmask 64512
    %8 = vst.msk [vmem:[%s1] sm:$0x1] %vm7, %v6
    %v9 = vld [vmem:[#allocation0] sm:$0x1]
    %10 = vrot.lane.b32.xlu0 %v9, 120
    %v11 = vpop.permute.xlu0 %10
    %vm12 = vcmask 64512
    %s13 = scalar_lea.vmem %s1, 1
    %14 = vst.msk [vmem:[%s13] sm:$0x1] %vm12, %v11
    %v15 = vld [vmem:[#allocation0] sm:$0x1]
    %16 = vrot.lane.b32.xlu0 %v15, 112
    %v17 = vpop.permute.xlu0 %16
    %vm18 = vcmask 64512
    %s19 = scalar_lea.vmem %s1, 2
    %20 = vst.msk [vmem:[%s19] sm:$0x1] %vm18, %v17
    %v21 = vld [vmem:[#allocation0] sm:$0x1]
    %22 = vrot.lane.b32.xlu0 %v21, 104
    %v23 = vpop.permute.xlu0 %22
    %vm24 = vcmask 64512
    %s25 = scalar_lea.vmem %s1, 3
    %26 = vst.msk [vmem:[%s25] sm:$0x1] %vm24, %v23
    %v27 = vld [vmem:[#allocation0] sm:$0x1]
    %28 = vrot.lane.b32.xlu0 %v27, 96
    %v29 = vpop.permute.xlu0 %28
    %vm30 = vcmask 64512
    %s31 = scalar_lea.vmem %s1, 4
    %32 = vst.msk [vmem:[%s31] sm:$0x1] %vm30, %v29
    %v33 = vld [vmem:[#allocation0] sm:$0x1]
    %34 = vrot.lane.b32.xlu0 %v33, 88
    %v35 = vpop.permute.xlu0 %34
    %vm36 = vcmask 64512
    %s37 = scalar_lea.vmem %s1, 5
    %38 = vst.msk [vmem:[%s37] sm:$0x1] %vm36, %v35
    %v39 = vld [vmem:[#allocation0] sm:$0x1]
    %40 = vrot.lane.b32.xlu0 %v39, 80
    %v41 = vpop.permute.xlu0 %40
    %vm42 = vcmask 64512
    %s43 = scalar_lea.vmem %s1, 6
    %44 = vst.msk [vmem:[%s43] sm:$0x1] %vm42, %v41
    %v45 = vld [vmem:[#allocation0] sm:$0x1]
    %46 = vrot.lane.b32.xlu0 %v45, 72
    %v47 = vpop.permute.xlu0 %46
    %vm48 = vcmask 64512
    %s49 = scalar_lea.vmem %s1, 7
    %50 = vst.msk [vmem:[%s49] sm:$0x1] %vm48, %v47
    %v51 = vld [vmem:[#allocation0] sm:$0x1]
    %52 = vrot.lane.b32.xlu0 %v51, 64
    %v53 = vpop.permute.xlu0 %52
    %vm54 = vcmask 64512
    %s55 = scalar_lea.vmem %s1, 8
    %56 = vst.msk [vmem:[%s55] sm:$0x1] %vm54, %v53

// kernel: squeeze.4
$region0: #{squeeze.4}
  %s0 = inlined_call_operand.vmem [shape: f32[32], index: 0, kind: input, shape index: {}]
  %s1 = inlined_call_operand.vmem [shape: f32[8,4], index: 1, kind: output, shape index: {}]
  $region1: #{squeeze.4} parent=0
    #allocation0 [shape = 'u8[4096]{0}', space=vmem, size = 0x1000, scoped, tag = 'scoped mem for input reshape']
    %s3 = sshllo.u32 0, 1
    %v4 = vld [vmem:[%s0] sm:%s3]
    %5 = vst [vmem:[#allocation0] sm:%s3] %v4
    %v6 = vld [vmem:[#allocation0] sm:$0x1]
    %vm7 = vcmask 31744
    %8 = vst.msk [vmem:[%s1] sm:$0x1] %vm7, %v6
    %v9 = vld [vmem:[#allocation0] sm:$0x1]
    %10 = vrot.lane.b32.xlu0 %v9, 124
    %v11 = vpop.permute.xlu0 %10
    %vm12 = vcmask 31744
    %s13 = scalar_lea.vmem %s1, 1
    %14 = vst.msk [vmem:[%s13] sm:$0x1] %vm12, %v11
    %v15 = vld [vmem:[#allocation0] sm:$0x1]
    %16 = vrot.lane.b32.xlu0 %v15, 120
    %v17 = vpop.permute.xlu0 %16
    %vm18 = vcmask 31744
    %s19 = scalar_lea.vmem %s1, 2
    %20 = vst.msk [vmem:[%s19] sm:$0x1] %vm18, %v17
    %v21 = vld [vmem:[#allocation0] sm:$0x1]
    %22 = vrot.lane.b32.xlu0 %v21, 116
    %v23 = vpop.permute.xlu0 %22
    %vm24 = vcmask 31744
    %s25 = scalar_lea.vmem %s1, 3
    %26 = vst.msk [vmem:[%s25] sm:$0x1] %vm24, %v23
    %v27 = vld [vmem:[#allocation0] sm:$0x1]
    %28 = vrot.lane.b32.xlu0 %v27, 112
    %v29 = vpop.permute.xlu0 %28
    %vm30 = vcmask 31744
    %s31 = scalar_lea.vmem %s1, 4
    %32 = vst.msk [vmem:[%s31] sm:$0x1] %vm30, %v29
    %v33 = vld [vmem:[#allocation0] sm:$0x1]
    %34 = vrot.lane.b32.xlu0 %v33, 108
    %v35 = vpop.permute.xlu0 %34
    %vm36 = vcmask 31744
    %s37 = scalar_lea.vmem %s1, 5
    %38 = vst.msk [vmem:[%s37] sm:$0x1] %vm36, %v35
    %v39 = vld [vmem:[#allocation0] sm:$0x1]
    %40 = vrot.lane.b32.xlu0 %v39, 104
    %v41 = vpop.permute.xlu0 %40
    %vm42 = vcmask 31744
    %s43 = scalar_lea.vmem %s1, 6
    %44 = vst.msk [vmem:[%s43] sm:$0x1] %vm42, %v41
    %v45 = vld [vmem:[#allocation0] sm:$0x1]
    %46 = vrot.lane.b32.xlu0 %v45, 100
    %v47 = vpop.permute.xlu0 %46
    %vm48 = vcmask 31744
    %s49 = scalar_lea.vmem %s1, 7
    %50 = vst.msk [vmem:[%s49] sm:$0x1] %vm48, %v47

// kernel: mppi_forward.1
$region0: #{mppi_forward.1}
  #allocation0 [shape = 'u32[]', space=smem, size = 0x4, offset = 0x4, fixed_abs, tag = 'smem constant byte address 0x4 - core index']
  #allocation1 [shape = 'u32[144,128]{1,0:T(1,128)}', space=vmem, size = 0x12000, scoped, tag = 'internal scratch']
  #allocation2 [shape = 'f32[64,32]{1,0:T(8,128)}', space=vmem, size = 0x8000, scoped, tag = 'scratch operand']
  #allocation3 [shape = 'f32[64,64]{1,0:T(8,128)}', space=vmem, size = 0x8000, scoped, tag = 'scratch operand']
  %s0 = inlined_call_operand.vmem [shape: f32[48,64], index: 0, kind: input, shape index: {}]
  %s1 = inlined_call_operand.vmem [shape: f32[64,32], index: 1, kind: input, shape index: {}]
  %s2 = inlined_call_operand.vmem [shape: f32[1,104], index: 2, kind: output, shape index: {}]
  %s3 = sld [smem:[#allocation0]]
  $region18: #{mppi_forward.1} parent=0
    _
  %s5 = ssub.s32 1, %s3
  %s6 = scalar_select 0, %s5, %s3
  // Predicated region
  $region2: #{mppi_forward.1} parent=0 // pred_check
    _
  $region3: #{mppi_forward.1} parent=0 // pred_check_branch
    %8 = sbr.rel (0) target = $region5
  $region4: #{mppi_forward.1} parent=0 // pred_region
    _
  $region5: #{mppi_forward.1} parent=0 // pred_fallthru
    _
  // Predicated region
  $region6: #{mppi_forward.1} parent=0 // pred_check
    _
  $region7: #{mppi_forward.1} parent=0 // pred_check_branch
    %10 = sbr.rel (0) target = $region9
  $region8: #{mppi_forward.1} parent=0 // pred_region
    _
  $region9: #{mppi_forward.1} parent=0 // pred_fallthru
    _
  %v11 = vld [vmem:[%s0] sm:$0x1]
  %v12 = vld [vmem:[%s0 + $0x1] sm:$0x1]
  %v13 = vld [vmem:[%s0 + $0x2] sm:$0x1]
  %v14 = vld [vmem:[%s0 + $0x3] sm:$0x1]
  %v15 = vld [vmem:[%s0 + $0x4] sm:$0x1]
  %v16 = vld [vmem:[%s0 + $0x5] sm:$0x1]
  %v17 = vld [vmem:[%s0 + $0x8] sm:$0xff]
  %v18 = vld [vmem:[%s0 + $0x10] sm:$0xff]
  %v19 = vld [vmem:[%s0 + $0x18] sm:$0xff]
  %v20 = vld [vmem:[%s0 + $0x20] sm:$0xff]
  %v21 = vld [vmem:[%s0 + $0x28] sm:$0xff]
  %v22 = vld [vmem:[%s1] sm:$0xff]
  %v23 = vld [vmem:[%s1 + $0x8] sm:$0xff]
  %v24 = vld [vmem:[%s1 + $0x10] sm:$0xff]
  %v25 = vld [vmem:[%s1 + $0x18] sm:$0xff]
  %v26 = vld [vmem:[%s1 + $0x20] sm:$0xff]
  %v27 = vld [vmem:[%s1 + $0x28] sm:$0xff]
  %v28 = vld [vmem:[%s1 + $0x30] sm:$0xff]
  %v29 = vld [vmem:[%s1 + $0x38] sm:$0xff]
  %v30 = vlaneseq
  %v31 = vshrl.u32 %v30, 7
  %v32 = vsub.s32 0, %v31
  %v33 = vrot.slane %v13, %v32
  %v34 = vmax.f32 %v33, %v22
  %v35 = vmax.f32 %v33, %v23
  %v36 = vmax.f32 %v33, %v24
  %v37 = vmax.f32 %v33, %v25
  %v38 = vmax.f32 %v33, %v26
  %v39 = vmax.f32 %v33, %v27
  %v40 = vmax.f32 %v33, %v28
  %v41 = vmax.f32 %v33, %v29
  %v42 = vlaneseq
  %v43 = vshrl.u32 %v42, 7
  %v44 = vsub.s32 0, %v43
  %v45 = vrot.slane %v14, %v44
  %v46 = vmin.f32 %v45, %v34
  %v47 = vmin.f32 %v45, %v35
  %v48 = vmin.f32 %v45, %v36
  %v49 = vmin.f32 %v45, %v37
  %v50 = vmin.f32 %v45, %v38
  %v51 = vmin.f32 %v45, %v39
  %v52 = vmin.f32 %v45, %v40
  %v53 = vmin.f32 %v45, %v41
  %v54 = vsub.f32 0.0, %v15
  %v55 = vlaneseq
  %v56 = vshrl.u32 %v55, 7
  %v57 = vsub.s32 0, %v56
  %v58 = vrot.slane %v16, %v57
  %v59 = vsub.f32 %v46, %v58
  %v60 = vsub.f32 %v47, %v58
  %v61 = vsub.f32 %v48, %v58
  %v62 = vsub.f32 %v49, %v58
  %v63 = vsub.f32 %v50, %v58
  %v64 = vsub.f32 %v51, %v58
  %v65 = vsub.f32 %v52, %v58
  %v66 = vsub.f32 %v53, %v58
  %v67 = vlaneseq
  %v68 = vshrl.u32 %v67, 7
  %v69 = vsub.s32 0, %v68
  %v70 = vrot.slane %v54, %v69
  %v71 = vmax.f32 %v70, %v59
  %v72 = vmax.f32 %v70, %v60
  %v73 = vmax.f32 %v70, %v61
  %v74 = vmax.f32 %v70, %v62
  %v75 = vmax.f32 %v70, %v63
  %v76 = vmax.f32 %v70, %v64
  %v77 = vmax.f32 %v70, %v65
  %v78 = vmax.f32 %v70, %v66
  %v79 = vlaneseq
  %v80 = vshrl.u32 %v79, 7
  %v81 = vsub.s32 0, %v80
  %v82 = vrot.slane %v15, %v81
  %v83 = vmin.f32 %v82, %v71
  %v84 = vmin.f32 %v82, %v72
  %v85 = vmin.f32 %v82, %v73
  %v86 = vmin.f32 %v82, %v74
  %v87 = vmin.f32 %v82, %v75
  %v88 = vmin.f32 %v82, %v76
  %v89 = vmin.f32 %v82, %v77
  %v90 = vmin.f32 %v82, %v78
  %v91 = vadd.f32 %v58, %v83
  %v92 = vadd.f32 %v58, %v84
  %v93 = vadd.f32 %v58, %v85
  %v94 = vadd.f32 %v58, %v86
  %v95 = vadd.f32 %v58, %v87
  %v96 = vadd.f32 %v58, %v88
  %v97 = vadd.f32 %v58, %v89
  %v98 = vadd.f32 %v58, %v90
  %v99 = vmax.f32 %v33, %v91
  %v100 = vmax.f32 %v33, %v92
  %v101 = vmax.f32 %v33, %v93
  %v102 = vmax.f32 %v33, %v94
  %v103 = vmax.f32 %v33, %v95
  %v104 = vmax.f32 %v33, %v96
  %v105 = vmax.f32 %v33, %v97
  %v106 = vmax.f32 %v33, %v98
  %v107 = vmin.f32 %v45, %v99
  %v108 = vmin.f32 %v45, %v100
  %v109 = vmin.f32 %v45, %v101
  %v110 = vmin.f32 %v45, %v102
  %v111 = vmin.f32 %v45, %v103
  %v112 = vmin.f32 %v45, %v104
  %v113 = vmin.f32 %v45, %v105
  %v114 = vmin.f32 %v45, %v106
  %vm115 = vcmask 31744
  %116 = vst.msk [vmem:[#allocation2] sm:$0xff] %vm115, %v107
  %117 = vst.msk [vmem:[#allocation2 + $0x8] sm:$0xff] %vm115, %v108
  %118 = vst.msk [vmem:[#allocation2 + $0x10] sm:$0xff] %vm115, %v109
  %119 = vst.msk [vmem:[#allocation2 + $0x18] sm:$0xff] %vm115, %v110
  %120 = vst.msk [vmem:[#allocation2 + $0x20] sm:$0xff] %vm115, %v111
  %121 = vst.msk [vmem:[#allocation2 + $0x28] sm:$0xff] %vm115, %v112
  %122 = vst.msk [vmem:[#allocation2 + $0x30] sm:$0xff] %vm115, %v113
  %123 = vst.msk [vmem:[#allocation2 + $0x38] sm:$0xff] %vm115, %v114
  %132 = vrot.lane.b32.xlu0 %v46, 4
  %v133 = vpop.permute.xlu0 %132
  %134 = vrot.lane.b32.xlu0 %v47, 4
  %v135 = vpop.permute.xlu0 %134
  %136 = vrot.lane.b32.xlu0 %v48, 4
  %v137 = vpop.permute.xlu0 %136
  %138 = vrot.lane.b32.xlu0 %v49, 4
  %v139 = vpop.permute.xlu0 %138
  %140 = vrot.lane.b32.xlu0 %v50, 4
  %v141 = vpop.permute.xlu0 %140
  %142 = vrot.lane.b32.xlu0 %v51, 4
  %v143 = vpop.permute.xlu0 %142
  %144 = vrot.lane.b32.xlu0 %v52, 4
  %v145 = vpop.permute.xlu0 %144
  %146 = vrot.lane.b32.xlu0 %v53, 4
  %v147 = vpop.permute.xlu0 %146
  %v156 = vsub.f32 %v46, %v133
  %v157 = vsub.f32 %v47, %v135
  %v158 = vsub.f32 %v48, %v137
  %v159 = vsub.f32 %v49, %v139
  %v160 = vsub.f32 %v50, %v141
  %v161 = vsub.f32 %v51, %v143
  %v162 = vsub.f32 %v52, %v145
  %v163 = vsub.f32 %v53, %v147
  %172 = vrot.lane.b32.xlu0 %v156, 124
  %v173 = vpop.permute.xlu0 %172
  %174 = vrot.lane.b32.xlu0 %v157, 124
  %v175 = vpop.permute.xlu0 %174
  %176 = vrot.lane.b32.xlu0 %v158, 124
  %v177 = vpop.permute.xlu0 %176
  %178 = vrot.lane.b32.xlu0 %v159, 124
  %v179 = vpop.permute.xlu0 %178
  %180 = vrot.lane.b32.xlu0 %v160, 124
  %v181 = vpop.permute.xlu0 %180
  %182 = vrot.lane.b32.xlu0 %v161, 124
  %v183 = vpop.permute.xlu0 %182
  %184 = vrot.lane.b32.xlu0 %v162, 124
  %v185 = vpop.permute.xlu0 %184
  %186 = vrot.lane.b32.xlu0 %v163, 124
  %v187 = vpop.permute.xlu0 %186
  %v196 = vmax.f32 %v70, %v173
  %v197 = vmax.f32 %v70, %v175
  %v198 = vmax.f32 %v70, %v177
  %v199 = vmax.f32 %v70, %v179
  %v200 = vmax.f32 %v70, %v181
  %v201 = vmax.f32 %v70, %v183
  %v202 = vmax.f32 %v70, %v185
  %v203 = vmax.f32 %v70, %v187
  %v204 = vmin.f32 %v82, %v196
  %v205 = vmin.f32 %v82, %v197
  %v206 = vmin.f32 %v82, %v198
  %v207 = vmin.f32 %v82, %v199
  %v208 = vmin.f32 %v82, %v200
  %v209 = vmin.f32 %v82, %v201
  %v210 = vmin.f32 %v82, %v202
  %v211 = vmin.f32 %v82, %v203
  %v212 = vadd.f32 %v91, %v204
  %v213 = vadd.f32 %v92, %v205
  %v214 = vadd.f32 %v93, %v206
  %v215 = vadd.f32 %v94, %v207
  %v216 = vadd.f32 %v95, %v208
  %v217 = vadd.f32 %v96, %v209
  %v218 = vadd.f32 %v97, %v210
  %v219 = vadd.f32 %v98, %v211
  %v220 = vmax.f32 %v33, %v212
  %v221 = vmax.f32 %v33, %v213
  %v222 = vmax.f32 %v33, %v214
  %v223 = vmax.f32 %v33, %v215
  %v224 = vmax.f32 %v33, %v216
  %v225 = vmax.f32 %v33, %v217
  %v226 = vmax.f32 %v33, %v218
  %v227 = vmax.f32 %v33, %v219
  %v228 = vmin.f32 %v45, %v220
  %v229 = vmin.f32 %v45, %v221
  %v230 = vmin.f32 %v45, %v222
  %v231 = vmin.f32 %v45, %v223
  %v232 = vmin.f32 %v45, %v224
  %v233 = vmin.f32 %v45, %v225
  %v234 = vmin.f32 %v45, %v226
  %v235 = vmin.f32 %v45, %v227
  %244 = vrot.lane.b32.xlu0 %v228, 4
  %v245 = vpop.permute.xlu0 %244
  %246 = vrot.lane.b32.xlu0 %v229, 4
  %v247 = vpop.permute.xlu0 %246
  %248 = vrot.lane.b32.xlu0 %v230, 4
  %v249 = vpop.permute.xlu0 %248
  %250 = vrot.lane.b32.xlu0 %v231, 4
  %v251 = vpop.permute.xlu0 %250
  %252 = vrot.lane.b32.xlu0 %v232, 4
  %v253 = vpop.permute.xlu0 %252
  %254 = vrot.lane.b32.xlu0 %v233, 4
  %v255 = vpop.permute.xlu0 %254
  %256 = vrot.lane.b32.xlu0 %v234, 4
  %v257 = vpop.permute.xlu0 %256
  %258 = vrot.lane.b32.xlu0 %v235, 4
  %v259 = vpop.permute.xlu0 %258
  %vm268 = vcmask 64544
  %269 = vst.msk [vmem:[#allocation2] sm:$0xff] %vm268, %v245
  %270 = vst.msk [vmem:[#allocation2 + $0x8] sm:$0xff] %vm268, %v247
  %271 = vst.msk [vmem:[#allocation2 + $0x10] sm:$0xff] %vm268, %v249
  %272 = vst.msk [vmem:[#allocation2 + $0x18] sm:$0xff] %vm268, %v251
  %273 = vst.msk [vmem:[#allocation2 + $0x20] sm:$0xff] %vm268, %v253
  %274 = vst.msk [vmem:[#allocation2 + $0x28] sm:$0xff] %vm268, %v255
  %275 = vst.msk [vmem:[#allocation2 + $0x30] sm:$0xff] %vm268, %v257
  %276 = vst.msk [vmem:[#allocation2 + $0x38] sm:$0xff] %vm268, %v259
  %277 = vrot.lane.b32.xlu0 %v156, 120
  %v278 = vpop.permute.xlu0 %277
  %279 = vrot.lane.b32.xlu0 %v157, 120
  %v280 = vpop.permute.xlu0 %279
  %281 = vrot.lane.b32.xlu0 %v158, 120
  %v282 = vpop.permute.xlu0 %281
  %283 = vrot.lane.b32.xlu0 %v159, 120
  %v284 = vpop.permute.xlu0 %283
  %285 = vrot.lane.b32.xlu0 %v160, 120
  %v286 = vpop.permute.xlu0 %285
  %287 = vrot.lane.b32.xlu0 %v161, 120
  %v288 = vpop.permute.xlu0 %287
  %289 = vrot.lane.b32.xlu0 %v162, 120
  %v290 = vpop.permute.xlu0 %289
  %291 = vrot.lane.b32.xlu0 %v163, 120
  %v292 = vpop.permute.xlu0 %291
  %v301 = vmax.f32 %v70, %v278
  %v302 = vmax.f32 %v70, %v280
  %v303 = vmax.f32 %v70, %v282
  %v304 = vmax.f32 %v70, %v284
  %v305 = vmax.f32 %v70, %v286
  %v306 = vmax.f32 %v70, %v288
  %v307 = vmax.f32 %v70, %v290
  %v308 = vmax.f32 %v70, %v292
  %v309 = vmin.f32 %v82, %v301
  %v310 = vmin.f32 %v82, %v302
  %v311 = vmin.f32 %v82, %v303
  %v312 = vmin.f32 %v82, %v304
  %v313 = vmin.f32 %v82, %v305
  %v314 = vmin.f32 %v82, %v306
  %v315 = vmin.f32 %v82, %v307
  %v316 = vmin.f32 %v82, %v308
  %v317 = vadd.f32 %v212, %v309
  %v318 = vadd.f32 %v213, %v310
  %v319 = vadd.f32 %v214, %v311
  %v320 = vadd.f32 %v215, %v312
  %v321 = vadd.f32 %v216, %v313
  %v322 = vadd.f32 %v217, %v314
  %v323 = vadd.f32 %v218, %v315
  %v324 = vadd.f32 %v219, %v316
  %v325 = vmax.f32 %v33, %v317
  %v326 = vmax.f32 %v33, %v318
  %v327 = vmax.f32 %v33, %v319
  %v328 = vmax.f32 %v33, %v320
  %v329 = vmax.f32 %v33, %v321
  %v330 = vmax.f32 %v33, %v322
  %v331 = vmax.f32 %v33, %v323
  %v332 = vmax.f32 %v33, %v324
  %v333 = vmin.f32 %v45, %v325
  %v334 = vmin.f32 %v45, %v326
  %v335 = vmin.f32 %v45, %v327
  %v336 = vmin.f32 %v45, %v328
  %v337 = vmin.f32 %v45, %v329
  %v338 = vmin.f32 %v45, %v330
  %v339 = vmin.f32 %v45, %v331
  %v340 = vmin.f32 %v45, %v332
  %349 = vrot.lane.b32.xlu0 %v333, 8
  %v350 = vpop.permute.xlu0 %349
  %351 = vrot.lane.b32.xlu0 %v334, 8
  %v352 = vpop.permute.xlu0 %351
  %353 = vrot.lane.b32.xlu0 %v335, 8
  %v354 = vpop.permute.xlu0 %353
  %355 = vrot.lane.b32.xlu0 %v336, 8
  %v356 = vpop.permute.xlu0 %355
  %357 = vrot.lane.b32.xlu0 %v337, 8
  %v358 = vpop.permute.xlu0 %357
  %359 = vrot.lane.b32.xlu0 %v338, 8
  %v360 = vpop.permute.xlu0 %359
  %361 = vrot.lane.b32.xlu0 %v339, 8
  %v362 = vpop.permute.xlu0 %361
  %363 = vrot.lane.b32.xlu0 %v340, 8
  %v364 = vpop.permute.xlu0 %363
  %vm373 = vcmask 97344
  %374 = vst.msk [vmem:[#allocation2] sm:$0xff] %vm373, %v350
  %375 = vst.msk [vmem:[#allocation2 + $0x8] sm:$0xff] %vm373, %v352
  %376 = vst.msk [vmem:[#allocation2 + $0x10] sm:$0xff] %vm373, %v354
  %377 = vst.msk [vmem:[#allocation2 + $0x18] sm:$0xff] %vm373, %v356
  %378 = vst.msk [vmem:[#allocation2 + $0x20] sm:$0xff] %vm373, %v358
  %379 = vst.msk [vmem:[#allocation2 + $0x28] sm:$0xff] %vm373, %v360
  %380 = vst.msk [vmem:[#allocation2 + $0x30] sm:$0xff] %vm373, %v362
  %381 = vst.msk [vmem:[#allocation2 + $0x38] sm:$0xff] %vm373, %v364
  %382 = vrot.lane.b32.xlu0 %v156, 116
  %v383 = vpop.permute.xlu0 %382
  %384 = vrot.lane.b32.xlu0 %v157, 116
  %v385 = vpop.permute.xlu0 %384
  %386 = vrot.lane.b32.xlu0 %v158, 116
  %v387 = vpop.permute.xlu0 %386
  %388 = vrot.lane.b32.xlu0 %v159, 116
  %v389 = vpop.permute.xlu0 %388
  %390 = vrot.lane.b32.xlu0 %v160, 116
  %v391 = vpop.permute.xlu0 %390
  %392 = vrot.lane.b32.xlu0 %v161, 116
  %v393 = vpop.permute.xlu0 %392
  %394 = vrot.lane.b32.xlu0 %v162, 116
  %v395 = vpop.permute.xlu0 %394
  %396 = vrot.lane.b32.xlu0 %v163, 116
  %v397 = vpop.permute.xlu0 %396
  %v406 = vmax.f32 %v70, %v383
  %v407 = vmax.f32 %v70, %v385
  %v408 = vmax.f32 %v70, %v387
  %v409 = vmax.f32 %v70, %v389
  %v410 = vmax.f32 %v70, %v391
  %v411 = vmax.f32 %v70, %v393
  %v412 = vmax.f32 %v70, %v395
  %v413 = vmax.f32 %v70, %v397
  %v414 = vmin.f32 %v82, %v406
  %v415 = vmin.f32 %v82, %v407
  %v416 = vmin.f32 %v82, %v408
  %v417 = vmin.f32 %v82, %v409
  %v418 = vmin.f32 %v82, %v410
  %v419 = vmin.f32 %v82, %v411
  %v420 = vmin.f32 %v82, %v412
  %v421 = vmin.f32 %v82, %v413
  %v422 = vadd.f32 %v317, %v414
  %v423 = vadd.f32 %v318, %v415
  %v424 = vadd.f32 %v319, %v416
  %v425 = vadd.f32 %v320, %v417
  %v426 = vadd.f32 %v321, %v418
  %v427 = vadd.f32 %v322, %v419
  %v428 = vadd.f32 %v323, %v420
  %v429 = vadd.f32 %v324, %v421
  %v430 = vmax.f32 %v33, %v422
  %v431 = vmax.f32 %v33, %v423
  %v432 = vmax.f32 %v33, %v424
  %v433 = vmax.f32 %v33, %v425
  %v434 = vmax.f32 %v33, %v426
  %v435 = vmax.f32 %v33, %v427
  %v436 = vmax.f32 %v33, %v428
  %v437 = vmax.f32 %v33, %v429
  %v438 = vmin.f32 %v45, %v430
  %v439 = vmin.f32 %v45, %v431
  %v440 = vmin.f32 %v45, %v432
  %v441 = vmin.f32 %v45, %v433
  %v442 = vmin.f32 %v45, %v434
  %v443 = vmin.f32 %v45, %v435
  %v444 = vmin.f32 %v45, %v436
  %v445 = vmin.f32 %v45, %v437
  %454 = vrot.lane.b32.xlu0 %v438, 12
  %v455 = vpop.permute.xlu0 %454
  %456 = vrot.lane.b32.xlu0 %v439, 12
  %v457 = vpop.permute.xlu0 %456
  %458 = vrot.lane.b32.xlu0 %v440, 12
  %v459 = vpop.permute.xlu0 %458
  %460 = vrot.lane.b32.xlu0 %v441, 12
  %v461 = vpop.permute.xlu0 %460
  %462 = vrot.lane.b32.xlu0 %v442, 12
  %v463 = vpop.permute.xlu0 %462
  %464 = vrot.lane.b32.xlu0 %v443, 12
  %v465 = vpop.permute.xlu0 %464
  %466 = vrot.lane.b32.xlu0 %v444, 12
  %v467 = vpop.permute.xlu0 %466
  %468 = vrot.lane.b32.xlu0 %v445, 12
  %v469 = vpop.permute.xlu0 %468
  %vm478 = vcmask 130144
  %479 = vst.msk [vmem:[#allocation2] sm:$0xff] %vm478, %v455
  %480 = vst.msk [vmem:[#allocation2 + $0x8] sm:$0xff] %vm478, %v457
  %481 = vst.msk [vmem:[#allocation2 + $0x10] sm:$0xff] %vm478, %v459
  %482 = vst.msk [vmem:[#allocation2 + $0x18] sm:$0xff] %vm478, %v461
  %483 = vst.msk [vmem:[#allocation2 + $0x20] sm:$0xff] %vm478, %v463
  %484 = vst.msk [vmem:[#allocation2 + $0x28] sm:$0xff] %vm478, %v465
  %485 = vst.msk [vmem:[#allocation2 + $0x30] sm:$0xff] %vm478, %v467
  %486 = vst.msk [vmem:[#allocation2 + $0x38] sm:$0xff] %vm478, %v469
  %487 = vrot.lane.b32.xlu0 %v156, 112
  %v488 = vpop.permute.xlu0 %487
  %489 = vrot.lane.b32.xlu0 %v157, 112
  %v490 = vpop.permute.xlu0 %489
  %491 = vrot.lane.b32.xlu0 %v158, 112
  %v492 = vpop.permute.xlu0 %491
  %493 = vrot.lane.b32.xlu0 %v159, 112
  %v494 = vpop.permute.xlu0 %493
  %495 = vrot.lane.b32.xlu0 %v160, 112
  %v496 = vpop.permute.xlu0 %495
  %497 = vrot.lane.b32.xlu0 %v161, 112
  %v498 = vpop.permute.xlu0 %497
  %499 = vrot.lane.b32.xlu0 %v162, 112
  %v500 = vpop.permute.xlu0 %499
  %501 = vrot.lane.b32.xlu0 %v163, 112
  %v502 = vpop.permute.xlu0 %501
  %v511 = vmax.f32 %v70, %v488
  %v512 = vmax.f32 %v70, %v490
  %v513 = vmax.f32 %v70, %v492
  %v514 = vmax.f32 %v70, %v494
  %v515 = vmax.f32 %v70, %v496
  %v516 = vmax.f32 %v70, %v498
  %v517 = vmax.f32 %v70, %v500
  %v518 = vmax.f32 %v70, %v502
  %v519 = vmin.f32 %v82, %v511
  %v520 = vmin.f32 %v82, %v512
  %v521 = vmin.f32 %v82, %v513
  %v522 = vmin.f32 %v82, %v514
  %v523 = vmin.f32 %v82, %v515
  %v524 = vmin.f32 %v82, %v516
  %v525 = vmin.f32 %v82, %v517
  %v526 = vmin.f32 %v82, %v518
  %v527 = vadd.f32 %v422, %v519
  %v528 = vadd.f32 %v423, %v520
  %v529 = vadd.f32 %v424, %v521
  %v530 = vadd.f32 %v425, %v522
  %v531 = vadd.f32 %v426, %v523
  %v532 = vadd.f32 %v427, %v524
  %v533 = vadd.f32 %v428, %v525
  %v534 = vadd.f32 %v429, %v526
  %v535 = vmax.f32 %v33, %v527
  %v536 = vmax.f32 %v33, %v528
  %v537 = vmax.f32 %v33, %v529
  %v538 = vmax.f32 %v33, %v530
  %v539 = vmax.f32 %v33, %v531
  %v540 = vmax.f32 %v33, %v532
  %v541 = vmax.f32 %v33, %v533
  %v542 = vmax.f32 %v33, %v534
  %v543 = vmin.f32 %v45, %v535
  %v544 = vmin.f32 %v45, %v536
  %v545 = vmin.f32 %v45, %v537
  %v546 = vmin.f32 %v45, %v538
  %v547 = vmin.f32 %v45, %v539
  %v548 = vmin.f32 %v45, %v540
  %v549 = vmin.f32 %v45, %v541
  %v550 = vmin.f32 %v45, %v542
  %559 = vrot.lane.b32.xlu0 %v543, 16
  %v560 = vpop.permute.xlu0 %559
  %561 = vrot.lane.b32.xlu0 %v544, 16
  %v562 = vpop.permute.xlu0 %561
  %563 = vrot.lane.b32.xlu0 %v545, 16
  %v564 = vpop.permute.xlu0 %563
  %565 = vrot.lane.b32.xlu0 %v546, 16
  %v566 = vpop.permute.xlu0 %565
  %567 = vrot.lane.b32.xlu0 %v547, 16
  %v568 = vpop.permute.xlu0 %567
  %569 = vrot.lane.b32.xlu0 %v548, 16
  %v570 = vpop.permute.xlu0 %569
  %571 = vrot.lane.b32.xlu0 %v549, 16
  %v572 = vpop.permute.xlu0 %571
  %573 = vrot.lane.b32.xlu0 %v550, 16
  %v574 = vpop.permute.xlu0 %573
  %vm583 = vcmask 162944
  %584 = vst.msk [vmem:[#allocation2] sm:$0xff] %vm583, %v560
  %585 = vst.msk [vmem:[#allocation2 + $0x8] sm:$0xff] %vm583, %v562
  %586 = vst.msk [vmem:[#allocation2 + $0x10] sm:$0xff] %vm583, %v564
  %587 = vst.msk [vmem:[#allocation2 + $0x18] sm:$0xff] %vm583, %v566
  %588 = vst.msk [vmem:[#allocation2 + $0x20] sm:$0xff] %vm583, %v568
  %589 = vst.msk [vmem:[#allocation2 + $0x28] sm:$0xff] %vm583, %v570
  %590 = vst.msk [vmem:[#allocation2 + $0x30] sm:$0xff] %vm583, %v572
  %591 = vst.msk [vmem:[#allocation2 + $0x38] sm:$0xff] %vm583, %v574
  %592 = vrot.lane.b32.xlu0 %v156, 108
  %v593 = vpop.permute.xlu0 %592
  %594 = vrot.lane.b32.xlu0 %v157, 108
  %v595 = vpop.permute.xlu0 %594
  %596 = vrot.lane.b32.xlu0 %v158, 108
  %v597 = vpop.permute.xlu0 %596
  %598 = vrot.lane.b32.xlu0 %v159, 108
  %v599 = vpop.permute.xlu0 %598
  %600 = vrot.lane.b32.xlu0 %v160, 108
  %v601 = vpop.permute.xlu0 %600
  %602 = vrot.lane.b32.xlu0 %v161, 108
  %v603 = vpop.permute.xlu0 %602
  %604 = vrot.lane.b32.xlu0 %v162, 108
  %v605 = vpop.permute.xlu0 %604
  %606 = vrot.lane.b32.xlu0 %v163, 108
  %v607 = vpop.permute.xlu0 %606
  %v616 = vmax.f32 %v70, %v593
  %v617 = vmax.f32 %v70, %v595
  %v618 = vmax.f32 %v70, %v597
  %v619 = vmax.f32 %v70, %v599
  %v620 = vmax.f32 %v70, %v601
  %v621 = vmax.f32 %v70, %v603
  %v622 = vmax.f32 %v70, %v605
  %v623 = vmax.f32 %v70, %v607
  %v624 = vmin.f32 %v82, %v616
  %v625 = vmin.f32 %v82, %v617
  %v626 = vmin.f32 %v82, %v618
  %v627 = vmin.f32 %v82, %v619
  %v628 = vmin.f32 %v82, %v620
  %v629 = vmin.f32 %v82, %v621
  %v630 = vmin.f32 %v82, %v622
  %v631 = vmin.f32 %v82, %v623
  %v632 = vadd.f32 %v527, %v624
  %v633 = vadd.f32 %v528, %v625
  %v634 = vadd.f32 %v529, %v626
  %v635 = vadd.f32 %v530, %v627
  %v636 = vadd.f32 %v531, %v628
  %v637 = vadd.f32 %v532, %v629
  %v638 = vadd.f32 %v533, %v630
  %v639 = vadd.f32 %v534, %v631
  %v640 = vmax.f32 %v33, %v632
  %v641 = vmax.f32 %v33, %v633
  %v642 = vmax.f32 %v33, %v634
  %v643 = vmax.f32 %v33, %v635
  %v644 = vmax.f32 %v33, %v636
  %v645 = vmax.f32 %v33, %v637
  %v646 = vmax.f32 %v33, %v638
  %v647 = vmax.f32 %v33, %v639
  %v648 = vmin.f32 %v45, %v640
  %v649 = vmin.f32 %v45, %v641
  %v650 = vmin.f32 %v45, %v642
  %v651 = vmin.f32 %v45, %v643
  %v652 = vmin.f32 %v45, %v644
  %v653 = vmin.f32 %v45, %v645
  %v654 = vmin.f32 %v45, %v646
  %v655 = vmin.f32 %v45, %v647
  %664 = vrot.lane.b32.xlu0 %v648, 20
  %v665 = vpop.permute.xlu0 %664
  %666 = vrot.lane.b32.xlu0 %v649, 20
  %v667 = vpop.permute.xlu0 %666
  %668 = vrot.lane.b32.xlu0 %v650, 20
  %v669 = vpop.permute.xlu0 %668
  %670 = vrot.lane.b32.xlu0 %v651, 20
  %v671 = vpop.permute.xlu0 %670
  %672 = vrot.lane.b32.xlu0 %v652, 20
  %v673 = vpop.permute.xlu0 %672
  %674 = vrot.lane.b32.xlu0 %v653, 20
  %v675 = vpop.permute.xlu0 %674
  %676 = vrot.lane.b32.xlu0 %v654, 20
  %v677 = vpop.permute.xlu0 %676
  %678 = vrot.lane.b32.xlu0 %v655, 20
  %v679 = vpop.permute.xlu0 %678
  %vm688 = vcmask 195744
  %689 = vst.msk [vmem:[#allocation2] sm:$0xff] %vm688, %v665
  %690 = vst.msk [vmem:[#allocation2 + $0x8] sm:$0xff] %vm688, %v667
  %691 = vst.msk [vmem:[#allocation2 + $0x10] sm:$0xff] %vm688, %v669
  %692 = vst.msk [vmem:[#allocation2 + $0x18] sm:$0xff] %vm688, %v671
  %693 = vst.msk [vmem:[#allocation2 + $0x20] sm:$0xff] %vm688, %v673
  %694 = vst.msk [vmem:[#allocation2 + $0x28] sm:$0xff] %vm688, %v675
  %695 = vst.msk [vmem:[#allocation2 + $0x30] sm:$0xff] %vm688, %v677
  %696 = vst.msk [vmem:[#allocation2 + $0x38] sm:$0xff] %vm688, %v679
  %697 = vrot.lane.b32.xlu0 %v156, 104
  %v698 = vpop.permute.xlu0 %697
  %699 = vrot.lane.b32.xlu0 %v157, 104
  %v700 = vpop.permute.xlu0 %699
  %701 = vrot.lane.b32.xlu0 %v158, 104
  %v702 = vpop.permute.xlu0 %701
  %703 = vrot.lane.b32.xlu0 %v159, 104
  %v704 = vpop.permute.xlu0 %703
  %705 = vrot.lane.b32.xlu0 %v160, 104
  %v706 = vpop.permute.xlu0 %705
  %707 = vrot.lane.b32.xlu0 %v161, 104
  %v708 = vpop.permute.xlu0 %707
  %709 = vrot.lane.b32.xlu0 %v162, 104
  %v710 = vpop.permute.xlu0 %709
  %711 = vrot.lane.b32.xlu0 %v163, 104
  %v712 = vpop.permute.xlu0 %711
  %v721 = vmax.f32 %v70, %v698
  %v722 = vmax.f32 %v70, %v700
  %v723 = vmax.f32 %v70, %v702
  %v724 = vmax.f32 %v70, %v704
  %v725 = vmax.f32 %v70, %v706
  %v726 = vmax.f32 %v70, %v708
  %v727 = vmax.f32 %v70, %v710
  %v728 = vmax.f32 %v70, %v712
  %v729 = vmin.f32 %v82, %v721
  %v730 = vmin.f32 %v82, %v722
  %v731 = vmin.f32 %v82, %v723
  %v732 = vmin.f32 %v82, %v724
  %v733 = vmin.f32 %v82, %v725
  %v734 = vmin.f32 %v82, %v726
  %v735 = vmin.f32 %v82, %v727
  %v736 = vmin.f32 %v82, %v728
  %v737 = vadd.f32 %v632, %v729
  %v738 = vadd.f32 %v633, %v730
  %v739 = vadd.f32 %v634, %v731
  %v740 = vadd.f32 %v635, %v732
  %v741 = vadd.f32 %v636, %v733
  %v742 = vadd.f32 %v637, %v734
  %v743 = vadd.f32 %v638, %v735
  %v744 = vadd.f32 %v639, %v736
  %v745 = vmax.f32 %v33, %v737
  %v746 = vmax.f32 %v33, %v738
  %v747 = vmax.f32 %v33, %v739
  %v748 = vmax.f32 %v33, %v740
  %v749 = vmax.f32 %v33, %v741
  %v750 = vmax.f32 %v33, %v742
  %v751 = vmax.f32 %v33, %v743
  %v752 = vmax.f32 %v33, %v744
  %v753 = vmin.f32 %v45, %v745
  %v754 = vmin.f32 %v45, %v746
  %v755 = vmin.f32 %v45, %v747
  %v756 = vmin.f32 %v45, %v748
  %v757 = vmin.f32 %v45, %v749
  %v758 = vmin.f32 %v45, %v750
  %v759 = vmin.f32 %v45, %v751
  %v760 = vmin.f32 %v45, %v752
  %769 = vrot.lane.b32.xlu0 %v753, 24
  %v770 = vpop.permute.xlu0 %769
  %771 = vrot.lane.b32.xlu0 %v754, 24
  %v772 = vpop.permute.xlu0 %771
  %773 = vrot.lane.b32.xlu0 %v755, 24
  %v774 = vpop.permute.xlu0 %773
  %775 = vrot.lane.b32.xlu0 %v756, 24
  %v776 = vpop.permute.xlu0 %775
  %777 = vrot.lane.b32.xlu0 %v757, 24
  %v778 = vpop.permute.xlu0 %777
  %779 = vrot.lane.b32.xlu0 %v758, 24
  %v780 = vpop.permute.xlu0 %779
  %781 = vrot.lane.b32.xlu0 %v759, 24
  %v782 = vpop.permute.xlu0 %781
  %783 = vrot.lane.b32.xlu0 %v760, 24
  %v784 = vpop.permute.xlu0 %783
  %vm793 = vcmask 228544
  %794 = vst.msk [vmem:[#allocation2] sm:$0xff] %vm793, %v770
  %795 = vst.msk [vmem:[#allocation2 + $0x8] sm:$0xff] %vm793, %v772
  %796 = vst.msk [vmem:[#allocation2 + $0x10] sm:$0xff] %vm793, %v774
  %797 = vst.msk [vmem:[#allocation2 + $0x18] sm:$0xff] %vm793, %v776
  %798 = vst.msk [vmem:[#allocation2 + $0x20] sm:$0xff] %vm793, %v778
  %799 = vst.msk [vmem:[#allocation2 + $0x28] sm:$0xff] %vm793, %v780
  %800 = vst.msk [vmem:[#allocation2 + $0x30] sm:$0xff] %vm793, %v782
  %801 = vst.msk [vmem:[#allocation2 + $0x38] sm:$0xff] %vm793, %v784
  %802 = vrot.lane.b32.xlu0 %v156, 100
  %v803 = vpop.permute.xlu0 %802
  %804 = vrot.lane.b32.xlu0 %v157, 100
  %v805 = vpop.permute.xlu0 %804
  %806 = vrot.lane.b32.xlu0 %v158, 100
  %v807 = vpop.permute.xlu0 %806
  %808 = vrot.lane.b32.xlu0 %v159, 100
  %v809 = vpop.permute.xlu0 %808
  %810 = vrot.lane.b32.xlu0 %v160, 100
  %v811 = vpop.permute.xlu0 %810
  %812 = vrot.lane.b32.xlu0 %v161, 100
  %v813 = vpop.permute.xlu0 %812
  %814 = vrot.lane.b32.xlu0 %v162, 100
  %v815 = vpop.permute.xlu0 %814
  %816 = vrot.lane.b32.xlu0 %v163, 100
  %v817 = vpop.permute.xlu0 %816
  %v826 = vmax.f32 %v70, %v803
  %v827 = vmax.f32 %v70, %v805
  %v828 = vmax.f32 %v70, %v807
  %v829 = vmax.f32 %v70, %v809
  %v830 = vmax.f32 %v70, %v811
  %v831 = vmax.f32 %v70, %v813
  %v832 = vmax.f32 %v70, %v815
  %v833 = vmax.f32 %v70, %v817
  %v834 = vmin.f32 %v82, %v826
  %v835 = vmin.f32 %v82, %v827
  %v836 = vmin.f32 %v82, %v828
  %v837 = vmin.f32 %v82, %v829
  %v838 = vmin.f32 %v82, %v830
  %v839 = vmin.f32 %v82, %v831
  %v840 = vmin.f32 %v82, %v832
  %v841 = vmin.f32 %v82, %v833
  %v842 = vadd.f32 %v737, %v834
  %v843 = vadd.f32 %v738, %v835
  %v844 = vadd.f32 %v739, %v836
  %v845 = vadd.f32 %v740, %v837
  %v846 = vadd.f32 %v741, %v838
  %v847 = vadd.f32 %v742, %v839
  %v848 = vadd.f32 %v743, %v840
  %v849 = vadd.f32 %v744, %v841
  %v850 = vmax.f32 %v33, %v842
  %v851 = vmax.f32 %v33, %v843
  %v852 = vmax.f32 %v33, %v844
  %v853 = vmax.f32 %v33, %v845
  %v854 = vmax.f32 %v33, %v846
  %v855 = vmax.f32 %v33, %v847
  %v856 = vmax.f32 %v33, %v848
  %v857 = vmax.f32 %v33, %v849
  %v858 = vmin.f32 %v45, %v850
  %v859 = vmin.f32 %v45, %v851
  %v860 = vmin.f32 %v45, %v852
  %v861 = vmin.f32 %v45, %v853
  %v862 = vmin.f32 %v45, %v854
  %v863 = vmin.f32 %v45, %v855
  %v864 = vmin.f32 %v45, %v856
  %v865 = vmin.f32 %v45, %v857
  %874 = vrot.lane.b32.xlu0 %v858, 28
  %v875 = vpop.permute.xlu0 %874
  %876 = vrot.lane.b32.xlu0 %v859, 28
  %v877 = vpop.permute.xlu0 %876
  %878 = vrot.lane.b32.xlu0 %v860, 28
  %v879 = vpop.permute.xlu0 %878
  %880 = vrot.lane.b32.xlu0 %v861, 28
  %v881 = vpop.permute.xlu0 %880
  %882 = vrot.lane.b32.xlu0 %v862, 28
  %v883 = vpop.permute.xlu0 %882
  %884 = vrot.lane.b32.xlu0 %v863, 28
  %v885 = vpop.permute.xlu0 %884
  %886 = vrot.lane.b32.xlu0 %v864, 28
  %v887 = vpop.permute.xlu0 %886
  %888 = vrot.lane.b32.xlu0 %v865, 28
  %v889 = vpop.permute.xlu0 %888
  %vm898 = vcmask 261344
  %899 = vst.msk [vmem:[#allocation2] sm:$0xff] %vm898, %v875
  %900 = vst.msk [vmem:[#allocation2 + $0x8] sm:$0xff] %vm898, %v877
  %901 = vst.msk [vmem:[#allocation2 + $0x10] sm:$0xff] %vm898, %v879
  %902 = vst.msk [vmem:[#allocation2 + $0x18] sm:$0xff] %vm898, %v881
  %903 = vst.msk [vmem:[#allocation2 + $0x20] sm:$0xff] %vm898, %v883
  %904 = vst.msk [vmem:[#allocation2 + $0x28] sm:$0xff] %vm898, %v885
  %905 = vst.msk [vmem:[#allocation2 + $0x30] sm:$0xff] %vm898, %v887
  %906 = vst.msk [vmem:[#allocation2 + $0x38] sm:$0xff] %vm898, %v889
  %v907 = vld [vmem:[#allocation2] sm:$0xff]
  %v908 = vld [vmem:[#allocation2 + $0x8] sm:$0xff]
  %v909 = vld [vmem:[#allocation2 + $0x10] sm:$0xff]
  %v910 = vld [vmem:[#allocation2 + $0x18] sm:$0xff]
  %v911 = vld [vmem:[#allocation2 + $0x20] sm:$0xff]
  %v912 = vld [vmem:[#allocation2 + $0x28] sm:$0xff]
  %v913 = vld [vmem:[#allocation2 + $0x30] sm:$0xff]
  %v914 = vld [vmem:[#allocation2 + $0x38] sm:$0xff]
  %vm915 = vcmask 261120
  %v917 = vsel %vm915, %v907, 0
  %v920 = vsel %vm915, %v908, 0
  %v923 = vsel %vm915, %v909, 0
  %v926 = vsel %vm915, %v910, 0
  %v929 = vsel %vm915, %v911, 0
  %v932 = vsel %vm915, %v912, 0
  %v935 = vsel %vm915, %v913, 0
  %v938 = vsel %vm915, %v914, 0
  %940 = vmatprep.subr.mxu0 0.0
  %v941 = vand.u32 %v18, 4294901760
  %942 = vmatpush1.msra.mxu0 %v941
  %943 = vmatprep.subr.mxu0 0.0
  %v944 = vand.u32 %v19, 4294901760
  %945 = vmatpush1.msra.mxu0 %v944
  %946 = vmatprep.subr.mxu0 0.0
  %v947 = vand.u32 %v20, 4294901760
  %948 = vmatpush1.msra.mxu0 %v947
  %949 = vmatprep.subr.mxu0 0.0
  %v950 = vand.u32 %v21, 4294901760
  %951 = vmatpush1.msra.mxu0 %v950
  %952 = vmatprep.subr.mxu0 0.0
  %953 = vmatpush1.msra.mxu0 0.0
  %954 = vmatprep.subr.mxu0 0.0
  %955 = vmatpush1.msra.mxu0 0.0
  %956 = vmatprep.subr.mxu0 0.0
  %957 = vmatpush1.msra.mxu0 0.0
  %958 = vmatprep.subr.mxu0 0.0
  %959 = vmatpush1.msra.mxu0 0.0
  %960 = vmatprep.subr.mxu0 0.0
  %961 = vmatpush1.msra.mxu0 0.0
  %962 = vmatprep.subr.mxu0 0.0
  %963 = vmatpush1.msra.mxu0 0.0
  %964 = vmatprep.subr.mxu0 0.0
  %965 = vmatpush1.msra.mxu0 0.0
  %966 = vmatprep.subr.mxu0 0.0
  %967 = vmatpush1.msra.mxu0 0.0
  %968 = vmatprep.subr.mxu0 0.0
  %969 = vmatpush1.msra.mxu0 0.0
  %970 = vmatprep.subr.mxu0 0.0
  %971 = vmatpush1.msra.mxu0 0.0
  %972 = vmatprep.subr.mxu0 0.0
  %973 = vmatpush1.msra.mxu0 0.0
  %974 = vmatprep.subr.mxu0 0.0
  %975 = vmatpush1.msra.mxu0 0.0
  %976 = vmatprep.subr.mxu0 0.0
  %977 = vmatpush1.msra.mxu0 0.0
  %978 = vmatprep.subr.mxu0 0.0
  %979 = vmatpush1.msra.mxu0 0.0
  %980 = vmatprep.subr.mxu0 0.0
  %981 = vmatpush1.msra.mxu0 0.0
  %982 = vmatprep.subr.mxu0 0.0
  %983 = vmatpush1.msra.mxu0 0.0
  %984 = vmatprep.subr.mxu0 0.0
  %985 = vmatpush1.msra.mxu0 0.0
  %986 = vmatprep.subr.mxu0 0.0
  %987 = vmatpush1.msra.mxu0 0.0
  %988 = vmatprep.subr.mxu0 0.0
  %989 = vmatpush1.msra.mxu0 0.0
  %990 = vmatprep.subr.mxu0 0.0
  %991 = vmatpush1.msra.mxu0 0.0
  %992 = vmatprep.subr.mxu0 0.0
  %993 = vmatpush1.msra.mxu0 0.0
  %994 = vmatprep.subr.mxu0 0.0
  %995 = vmatpush1.msra.mxu0 0.0
  %996 = vmatprep.subr.mxu0 0.0
  %997 = vmatpush1.msra.mxu0 0.0
  %998 = vmatprep.subr.mxu0 0.0
  %999 = vmatpush1.msra.mxu0 0.0
  %1000 = vmatprep.subr.mxu0 0.0
  %1001 = vmatpush1.msra.mxu0 0.0
  %1002 = vmatprep.subr.mxu0 0.0
  %1003 = vmatpush1.msra.mxu0 0.0
  %1004 = vmatprep.subr.mxu0 0.0
  %1005 = vmatpush1.msra.mxu0 0.0
  %1006 = vmatprep.subr.mxu0 0.0
  %1007 = vmatpush1.msra.mxu0 0.0
  %1008 = vmatprep.mubr.f32.mxu0 0.0
  %v1009 = vand.u32 %v917, 4294901760
  %v1010 = vsub.f32 %v917, %v1009
  %v1011 = vand.u32 %v1010, 4294901760
  %v1012 = vsub.f32 %v1010, %v1011
  %v1013 = vand.u32 %v1012, 4294901760
  %1014 = vmatmul.mubr.f32.gmra.mrb[0].mxu0 %v1013
  %v1015 = vpop.f32.mrb[0].mxu0
  %v1016 = vadd.f32 0.0, %v1015
  %v1017 = vpop.f32.mrb[0].mxu0
  %1018 = vmatprep.mubr.f32.mxu0 0.0
  %v1019 = vand.u32 %v920, 4294901760
  %v1020 = vsub.f32 %v920, %v1019
  %v1021 = vand.u32 %v1020, 4294901760
  %v1022 = vsub.f32 %v1020, %v1021
  %v1023 = vand.u32 %v1022, 4294901760
  %1024 = vmatmul.mubr.f32.gmra.mrb[0].mxu0 %v1023
  %v1025 = vpop.f32.mrb[0].mxu0
  %v1026 = vadd.f32 0.0, %v1025
  %v1027 = vpop.f32.mrb[0].mxu0
  %1028 = vmatprep.mubr.f32.mxu0 0.0
  %v1029 = vand.u32 %v923, 4294901760
  %v1030 = vsub.f32 %v923, %v1029
  %v1031 = vand.u32 %v1030, 4294901760
  %v1032 = vsub.f32 %v1030, %v1031
  %v1033 = vand.u32 %v1032, 4294901760
  %1034 = vmatmul.mubr.f32.gmra.mrb[0].mxu0 %v1033
  %v1035 = vpop.f32.mrb[0].mxu0
  %v1036 = vadd.f32 0.0, %v1035
  %v1037 = vpop.f32.mrb[0].mxu0
  %1038 = vmatprep.mubr.f32.mxu0 0.0
  %v1039 = vand.u32 %v926, 4294901760
  %v1040 = vsub.f32 %v926, %v1039
  %v1041 = vand.u32 %v1040, 4294901760
  %v1042 = vsub.f32 %v1040, %v1041
  %v1043 = vand.u32 %v1042, 4294901760
  %1044 = vmatmul.mubr.f32.gmra.mrb[0].mxu0 %v1043
  %v1045 = vpop.f32.mrb[0].mxu0
  %v1046 = vadd.f32 0.0, %v1045
  %v1047 = vpop.f32.mrb[0].mxu0
  %1048 = vmatprep.mubr.f32.mxu0 0.0
  %v1049 = vand.u32 %v929, 4294901760
  %v1050 = vsub.f32 %v929, %v1049
  %v1051 = vand.u32 %v1050, 4294901760
  %v1052 = vsub.f32 %v1050, %v1051
  %v1053 = vand.u32 %v1052, 4294901760
  %1054 = vmatmul.mubr.f32.gmra.mrb[0].mxu0 %v1053
  %v1055 = vpop.f32.mrb[0].mxu0
  %v1056 = vadd.f32 0.0, %v1055
  %v1057 = vpop.f32.mrb[0].mxu0
  %1058 = vmatprep.mubr.f32.mxu0 0.0
  %v1059 = vand.u32 %v932, 4294901760
  %v1060 = vsub.f32 %v932, %v1059
  %v1061 = vand.u32 %v1060, 4294901760
  %v1062 = vsub.f32 %v1060, %v1061
  %v1063 = vand.u32 %v1062, 4294901760
  %1064 = vmatmul.mubr.f32.gmra.mrb[0].mxu0 %v1063
  %v1065 = vpop.f32.mrb[0].mxu0
  %v1066 = vadd.f32 0.0, %v1065
  %v1067 = vpop.f32.mrb[0].mxu0
  %1068 = vmatprep.mubr.f32.mxu0 0.0
  %v1069 = vand.u32 %v935, 4294901760
  %v1070 = vsub.f32 %v935, %v1069
  %v1071 = vand.u32 %v1070, 4294901760
  %v1072 = vsub.f32 %v1070, %v1071
  %v1073 = vand.u32 %v1072, 4294901760
  %1074 = vmatmul.mubr.f32.gmra.mrb[0].mxu0 %v1073
  %v1075 = vpop.f32.mrb[0].mxu0
  %v1076 = vadd.f32 0.0, %v1075
  %v1077 = vpop.f32.mrb[0].mxu0
  %1078 = vmatprep.mubr.f32.mxu0 0.0
  %v1079 = vand.u32 %v938, 4294901760
  %v1080 = vsub.f32 %v938, %v1079
  %v1081 = vand.u32 %v1080, 4294901760
  %v1082 = vsub.f32 %v1080, %v1081
  %v1083 = vand.u32 %v1082, 4294901760
  %1084 = vmatmul.mubr.f32.gmra.mrb[0].mxu0 %v1083
  %v1085 = vpop.f32.mrb[0].mxu0
  %v1086 = vadd.f32 0.0, %v1085
  %v1087 = vpop.f32.mrb[0].mxu0
  %1088 = vdwg.mxu0
  %1089 = vmatprep.subr.mxu0 0.0
  %v1090 = vand.u32 %v18, 4294901760
  %v1091 = vsub.f32 %v18, %v1090
  %v1092 = vand.u32 %v1091, 4294901760
  %v1093 = vsub.f32 %v1091, %v1092
  %v1094 = vand.u32 %v1093, 4294901760
  %1095 = vmatpush1.msra.mxu0 %v1094
  %1096 = vmatprep.subr.mxu0 0.0
  %v1097 = vand.u32 %v19, 4294901760
  %v1098 = vsub.f32 %v19, %v1097
  %v1099 = vand.u32 %v1098, 4294901760
  %v1100 = vsub.f32 %v1098, %v1099
  %v1101 = vand.u32 %v1100, 4294901760
  %1102 = vmatpush1.msra.mxu0 %v1101
  %1103 = vmatprep.subr.mxu0 0.0
  %v1104 = vand.u32 %v20, 4294901760
  %v1105 = vsub.f32 %v20, %v1104
  %v1106 = vand.u32 %v1105, 4294901760
  %v1107 = vsub.f32 %v1105, %v1106
  %v1108 = vand.u32 %v1107, 4294901760
  %1109 = vmatpush1.msra.mxu0 %v1108
  %1110 = vmatprep.subr.mxu0 0.0
  %v1111 = vand.u32 %v21, 4294901760
  %v1112 = vsub.f32 %v21, %v1111
  %v1113 = vand.u32 %v1112, 4294901760
  %v1114 = vsub.f32 %v1112, %v1113
  %v1115 = vand.u32 %v1114, 4294901760
  %1116 = vmatpush1.msra.mxu0 %v1115
  %1117 = vmatprep.subr.mxu0 0.0
  %1118 = vmatpush1.msra.mxu0 0.0
  %1119 = vmatprep.subr.mxu0 0.0
  %1120 = vmatpush1.msra.mxu0 0.0
  %1121 = vmatprep.subr.mxu0 0.0
  %1122 = vmatpush1.msra.mxu0 0.0
  %1123 = vmatprep.subr.mxu0 0.0
  %1124 = vmatpush1.msra.mxu0 0.0
  %1125 = vmatprep.subr.mxu0 0.0
  %1126 = vmatpush1.msra.mxu0 0.0
  %1127 = vmatprep.subr.mxu0 0.0
  %1128 = vmatpush1.msra.mxu0 0.0
  %1129 = vmatprep.subr.mxu0 0.0
  %1130 = vmatpush1.msra.mxu0 0.0
  %1131 = vmatprep.subr.mxu0 0.0
  %1132 = vmatpush1.msra.mxu0 0.0
  %1133 = vmatprep.subr.mxu0 0.0
  %1134 = vmatpush1.msra.mxu0 0.0
  %1135 = vmatprep.subr.mxu0 0.0
  %1136 = vmatpush1.msra.mxu0 0.0
  %1137 = vmatprep.subr.mxu0 0.0
  %1138 = vmatpush1.msra.mxu0 0.0
  %1139 = vmatprep.subr.mxu0 0.0
  %1140 = vmatpush1.msra.mxu0 0.0
  %1141 = vmatprep.subr.mxu0 0.0
  %1142 = vmatpush1.msra.mxu0 0.0
  %1143 = vmatprep.subr.mxu0 0.0
  %1144 = vmatpush1.msra.mxu0 0.0
  %1145 = vmatprep.subr.mxu0 0.0
  %1146 = vmatpush1.msra.mxu0 0.0
  %1147 = vmatprep.subr.mxu0 0.0
  %1148 = vmatpush1.msra.mxu0 0.0
  %1149 = vmatprep.subr.mxu0 0.0
  %1150 = vmatpush1.msra.mxu0 0.0
  %1151 = vmatprep.subr.mxu0 0.0
  %1152 = vmatpush1.msra.mxu0 0.0
  %1153 = vmatprep.subr.mxu0 0.0
  %1154 = vmatpush1.msra.mxu0 0.0
  %1155 = vmatprep.subr.mxu0 0.0
  %1156 = vmatpush1.msra.mxu0 0.0
  %1157 = vmatprep.subr.mxu0 0.0
  %1158 = vmatpush1.msra.mxu0 0.0
  %1159 = vmatprep.subr.mxu0 0.0
  %1160 = vmatpush1.msra.mxu0 0.0
  %1161 = vmatprep.subr.mxu0 0.0
  %1162 = vmatpush1.msra.mxu0 0.0
  %1163 = vmatprep.subr.mxu0 0.0
  %1164 = vmatpush1.msra.mxu0 0.0
  %1165 = vmatprep.subr.mxu0 0.0
  %1166 = vmatpush1.msra.mxu0 0.0
  %1167 = vmatprep.subr.mxu0 0.0
  %1168 = vmatpush1.msra.mxu0 0.0
  %1169 = vmatprep.subr.mxu0 0.0
  %1170 = vmatpush1.msra.mxu0 0.0
  %1171 = vmatprep.subr.mxu0 0.0
  %1172 = vmatpush1.msra.mxu0 0.0
  %1173 = vmatprep.mubr.f32.mxu0 0.0
  %v1174 = vand.u32 %v917, 4294901760
  %1175 = vmatmul.mubr.f32.gmra.mrb[0].mxu0 %v1174
  %v1176 = vpop.f32.mrb[0].mxu0
  %v1177 = vadd.f32 %v1016, %v1176
  %v1178 = vpop.f32.mrb[0].mxu0
  %1179 = vmatprep.mubr.f32.mxu0 0.0
  %v1180 = vand.u32 %v920, 4294901760
  %1181 = vmatmul.mubr.f32.gmra.mrb[0].mxu0 %v1180
  %v1182 = vpop.f32.mrb[0].mxu0
  %v1183 = vadd.f32 %v1026, %v1182
  %v1184 = vpop.f32.mrb[0].mxu0
  %1185 = vmatprep.mubr.f32.mxu0 0.0
  %v1186 = vand.u32 %v923, 4294901760
  %1187 = vmatmul.mubr.f32.gmra.mrb[0].mxu0 %v1186
  %v1188 = vpop.f32.mrb[0].mxu0
  %v1189 = vadd.f32 %v1036, %v1188
  %v1190 = vpop.f32.mrb[0].mxu0
  %1191 = vmatprep.mubr.f32.mxu0 0.0
  %v1192 = vand.u32 %v926, 4294901760
  %1193 = vmatmul.mubr.f32.gmra.mrb[0].mxu0 %v1192
  %v1194 = vpop.f32.mrb[0].mxu0
  %v1195 = vadd.f32 %v1046, %v1194
  %v1196 = vpop.f32.mrb[0].mxu0
  %1197 = vmatprep.mubr.f32.mxu0 0.0
  %v1198 = vand.u32 %v929, 4294901760
  %1199 = vmatmul.mubr.f32.gmra.mrb[0].mxu0 %v1198
  %v1200 = vpop.f32.mrb[0].mxu0
  %v1201 = vadd.f32 %v1056, %v1200
  %v1202 = vpop.f32.mrb[0].mxu0
  %1203 = vmatprep.mubr.f32.mxu0 0.0
  %v1204 = vand.u32 %v932, 4294901760
  %1205 = vmatmul.mubr.f32.gmra.mrb[0].mxu0 %v1204
  %v1206 = vpop.f32.mrb[0].mxu0
  %v1207 = vadd.f32 %v1066, %v1206
  %v1208 = vpop.f32.mrb[0].mxu0
  %1209 = vmatprep.mubr.f32.mxu0 0.0
  %v1210 = vand.u32 %v935, 4294901760
  %1211 = vmatmul.mubr.f32.gmra.mrb[0].mxu0 %v1210
  %v1212 = vpop.f32.mrb[0].mxu0
  %v1213 = vadd.f32 %v1076, %v1212
  %v1214 = vpop.f32.mrb[0].mxu0
  %1215 = vmatprep.mubr.f32.mxu0 0.0
  %v1216 = vand.u32 %v938, 4294901760
  %1217 = vmatmul.mubr.f32.gmra.mrb[0].mxu0 %v1216
  %v1218 = vpop.f32.mrb[0].mxu0
  %v1219 = vadd.f32 %v1086, %v1218
  %v1220 = vpop.f32.mrb[0].mxu0
  %1221 = vdwg.mxu0
  %1222 = vmatprep.subr.mxu0 0.0
  %v1223 = vand.u32 %v18, 4294901760
  %v1224 = vsub.f32 %v18, %v1223
  %1225 = vmatpush1.msra.mxu0 %v1224
  %1226 = vmatprep.subr.mxu0 0.0
  %v1227 = vand.u32 %v19, 4294901760
  %v1228 = vsub.f32 %v19, %v1227
  %1229 = vmatpush1.msra.mxu0 %v1228
  %1230 = vmatprep.subr.mxu0 0.0
  %v1231 = vand.u32 %v20, 4294901760
  %v1232 = vsub.f32 %v20, %v1231
  %1233 = vmatpush1.msra.mxu0 %v1232
  %1234 = vmatprep.subr.mxu0 0.0
  %v1235 = vand.u32 %v21, 4294901760
  %v1236 = vsub.f32 %v21, %v1235
  %1237 = vmatpush1.msra.mxu0 %v1236
  %1238 = vmatprep.subr.mxu0 0.0
  %1239 = vmatpush1.msra.mxu0 0.0
  %1240 = vmatprep.subr.mxu0 0.0
  %1241 = vmatpush1.msra.mxu0 0.0
  %1242 = vmatprep.subr.mxu0 0.0
  %1243 = vmatpush1.msra.mxu0 0.0
  %1244 = vmatprep.subr.mxu0 0.0
  %1245 = vmatpush1.msra.mxu0 0.0
  %1246 = vmatprep.subr.mxu0 0.0
  %1247 = vmatpush1.msra.mxu0 0.0
  %1248 = vmatprep.subr.mxu0 0.0
  %1249 = vmatpush1.msra.mxu0 0.0
  %1250 = vmatprep.subr.mxu0 0.0
  %1251 = vmatpush1.msra.mxu0 0.0
  %1252 = vmatprep.subr.mxu0 0.0
  %1253 = vmatpush1.msra.mxu0 0.0
  %1254 = vmatprep.subr.mxu0 0.0
  %1255 = vmatpush1.msra.mxu0 0.0
  %1256 = vmatprep.subr.mxu0 0.0
  %1257 = vmatpush1.msra.mxu0 0.0
  %1258 = vmatprep.subr.mxu0 0.0
  %1259 = vmatpush1.msra.mxu0 0.0
  %1260 = vmatprep.subr.mxu0 0.0
  %1261 = vmatpush1.msra.mxu0 0.0
  %1262 = vmatprep.subr.mxu0 0.0
  %1263 = vmatpush1.msra.mxu0 0.0
  %1264 = vmatprep.subr.mxu0 0.0
  %1265 = vmatpush1.msra.mxu0 0.0
  %1266 = vmatprep.subr.mxu0 0.0
  %1267 = vmatpush1.msra.mxu0 0.0
  %1268 = vmatprep.subr.mxu0 0.0
  %1269 = vmatpush1.msra.mxu0 0.0
  %1270 = vmatprep.subr.mxu0 0.0
  %1271 = vmatpush1.msra.mxu0 0.0
  %1272 = vmatprep.subr.mxu0 0.0
  %1273 = vmatpush1.msra.mxu0 0.0
  %1274 = vmatprep.subr.mxu0 0.0
  %1275 = vmatpush1.msra.mxu0 0.0
  %1276 = vmatprep.subr.mxu0 0.0
  %1277 = vmatpush1.msra.mxu0 0.0
  %1278 = vmatprep.subr.mxu0 0.0
  %1279 = vmatpush1.msra.mxu0 0.0
  %1280 = vmatprep.subr.mxu0 0.0
  %1281 = vmatpush1.msra.mxu0 0.0
  %1282 = vmatprep.subr.mxu0 0.0
  %1283 = vmatpush1.msra.mxu0 0.0
  %1284 = vmatprep.subr.mxu0 0.0
  %1285 = vmatpush1.msra.mxu0 0.0
  %1286 = vmatprep.subr.mxu0 0.0
  %1287 = vmatpush1.msra.mxu0 0.0
  %1288 = vmatprep.subr.mxu0 0.0
  %1289 = vmatpush1.msra.mxu0 0.0
  %1290 = vmatprep.subr.mxu0 0.0
  %1291 = vmatpush1.msra.mxu0 0.0
  %1292 = vmatprep.subr.mxu0 0.0
  %1293 = vmatpush1.msra.mxu0 0.0
  %1294 = vmatprep.mubr.f32.mxu0 0.0
  %v1295 = vand.u32 %v917, 4294901760
  %v1296 = vsub.f32 %v917, %v1295
  %1297 = vmatmul.mubr.f32.gmra.mrb[0].mxu0 %v1296
  %v1298 = vpop.f32.mrb[0].mxu0
  %v1299 = vadd.f32 %v1177, %v1298
  %v1300 = vpop.f32.mrb[0].mxu0
  %1301 = vmatprep.mubr.f32.mxu0 0.0
  %v1302 = vand.u32 %v920, 4294901760
  %v1303 = vsub.f32 %v920, %v1302
  %1304 = vmatmul.mubr.f32.gmra.mrb[0].mxu0 %v1303
  %v1305 = vpop.f32.mrb[0].mxu0
  %v1306 = vadd.f32 %v1183, %v1305
  %v1307 = vpop.f32.mrb[0].mxu0
  %1308 = vmatprep.mubr.f32.mxu0 0.0
  %v1309 = vand.u32 %v923, 4294901760
  %v1310 = vsub.f32 %v923, %v1309
  %1311 = vmatmul.mubr.f32.gmra.mrb[0].mxu0 %v1310
  %v1312 = vpop.f32.mrb[0].mxu0
  %v1313 = vadd.f32 %v1189, %v1312
  %v1314 = vpop.f32.mrb[0].mxu0
  %1315 = vmatprep.mubr.f32.mxu0 0.0
  %v1316 = vand.u32 %v926, 4294901760
  %v1317 = vsub.f32 %v926, %v1316
  %1318 = vmatmul.mubr.f32.gmra.mrb[0].mxu0 %v1317
  %v1319 = vpop.f32.mrb[0].mxu0
  %v1320 = vadd.f32 %v1195, %v1319
  %v1321 = vpop.f32.mrb[0].mxu0
  %1322 = vmatprep.mubr.f32.mxu0 0.0
  %v1323 = vand.u32 %v929, 4294901760
  %v1324 = vsub.f32 %v929, %v1323
  %1325 = vmatmul.mubr.f32.gmra.mrb[0].mxu0 %v1324
  %v1326 = vpop.f32.mrb[0].mxu0
  %v1327 = vadd.f32 %v1201, %v1326
  %v1328 = vpop.f32.mrb[0].mxu0
  %1329 = vmatprep.mubr.f32.mxu0 0.0
  %v1330 = vand.u32 %v932, 4294901760
  %v1331 = vsub.f32 %v932, %v1330
  %1332 = vmatmul.mubr.f32.gmra.mrb[0].mxu0 %v1331
  %v1333 = vpop.f32.mrb[0].mxu0
  %v1334 = vadd.f32 %v1207, %v1333
  %v1335 = vpop.f32.mrb[0].mxu0
  %1336 = vmatprep.mubr.f32.mxu0 0.0
  %v1337 = vand.u32 %v935, 4294901760
  %v1338 = vsub.f32 %v935, %v1337
  %1339 = vmatmul.mubr.f32.gmra.mrb[0].mxu0 %v1338
  %v1340 = vpop.f32.mrb[0].mxu0
  %v1341 = vadd.f32 %v1213, %v1340
  %v1342 = vpop.f32.mrb[0].mxu0
  %1343 = vmatprep.mubr.f32.mxu0 0.0
  %v1344 = vand.u32 %v938, 4294901760
  %v1345 = vsub.f32 %v938, %v1344
  %1346 = vmatmul.mubr.f32.gmra.mrb[0].mxu0 %v1345
  %v1347 = vpop.f32.mrb[0].mxu0
  %v1348 = vadd.f32 %v1219, %v1347
  %v1349 = vpop.f32.mrb[0].mxu0
  %1350 = vdwg.mxu0
  %1351 = vmatprep.subr.mxu0 0.0
  %v1352 = vand.u32 %v18, 4294901760
  %1353 = vmatpush1.msra.mxu0 %v1352
  %1354 = vmatprep.subr.mxu0 0.0
  %v1355 = vand.u32 %v19, 4294901760
  %1356 = vmatpush1.msra.mxu0 %v1355
  %1357 = vmatprep.subr.mxu0 0.0
  %v1358 = vand.u32 %v20, 4294901760
  %1359 = vmatpush1.msra.mxu0 %v1358
  %1360 = vmatprep.subr.mxu0 0.0
  %v1361 = vand.u32 %v21, 4294901760
  %1362 = vmatpush1.msra.mxu0 %v1361
  %1363 = vmatprep.subr.mxu0 0.0
  %1364 = vmatpush1.msra.mxu0 0.0
  %1365 = vmatprep.subr.mxu0 0.0
  %1366 = vmatpush1.msra.mxu0 0.0
  %1367 = vmatprep.subr.mxu0 0.0
  %1368 = vmatpush1.msra.mxu0 0.0
  %1369 = vmatprep.subr.mxu0 0.0
  %1370 = vmatpush1.msra.mxu0 0.0
  %1371 = vmatprep.subr.mxu0 0.0
  %1372 = vmatpush1.msra.mxu0 0.0
  %1373 = vmatprep.subr.mxu0 0.0
  %1374 = vmatpush1.msra.mxu0 0.0
  %1375 = vmatprep.subr.mxu0 0.0
  %1376 = vmatpush1.msra.mxu0 0.0
  %1377 = vmatprep.subr.mxu0 0.0
  %1378 = vmatpush1.msra.mxu0 0.0
  %1379 = vmatprep.subr.mxu0 0.0
  %1380 = vmatpush1.msra.mxu0 0.0
  %1381 = vmatprep.subr.mxu0 0.0
  %1382 = vmatpush1.msra.mxu0 0.0
  %1383 = vmatprep.subr.mxu0 0.0
  %1384 = vmatpush1.msra.mxu0 0.0
  %1385 = vmatprep.subr.mxu0 0.0
  %1386 = vmatpush1.msra.mxu0 0.0
  %1387 = vmatprep.subr.mxu0 0.0
  %1388 = vmatpush1.msra.mxu0 0.0
  %1389 = vmatprep.subr.mxu0 0.0
  %1390 = vmatpush1.msra.mxu0 0.0
  %1391 = vmatprep.subr.mxu0 0.0
  %1392 = vmatpush1.msra.mxu0 0.0
  %1393 = vmatprep.subr.mxu0 0.0
  %1394 = vmatpush1.msra.mxu0 0.0
  %1395 = vmatprep.subr.mxu0 0.0
  %1396 = vmatpush1.msra.mxu0 0.0
  %1397 = vmatprep.subr.mxu0 0.0
  %1398 = vmatpush1.msra.mxu0 0.0
  %1399 = vmatprep.subr.mxu0 0.0
  %1400 = vmatpush1.msra.mxu0 0.0
  %1401 = vmatprep.subr.mxu0 0.0
  %1402 = vmatpush1.msra.mxu0 0.0
  %1403 = vmatprep.subr.mxu0 0.0
  %1404 = vmatpush1.msra.mxu0 0.0
  %1405 = vmatprep.subr.mxu0 0.0
  %1406 = vmatpush1.msra.mxu0 0.0
  %1407 = vmatprep.subr.mxu0 0.0
  %1408 = vmatpush1.msra.mxu0 0.0
  %1409 = vmatprep.subr.mxu0 0.0
  %1410 = vmatpush1.msra.mxu0 0.0
  %1411 = vmatprep.subr.mxu0 0.0
  %1412 = vmatpush1.msra.mxu0 0.0
  %1413 = vmatprep.subr.mxu0 0.0
  %1414 = vmatpush1.msra.mxu0 0.0
  %1415 = vmatprep.subr.mxu0 0.0
  %1416 = vmatpush1.msra.mxu0 0.0
  %1417 = vmatprep.subr.mxu0 0.0
  %1418 = vmatpush1.msra.mxu0 0.0
  %1419 = vmatprep.mubr.f32.mxu0 0.0
  %v1420 = vand.u32 %v917, 4294901760
  %v1421 = vsub.f32 %v917, %v1420
  %v1422 = vand.u32 %v1421, 4294901760
  %1423 = vmatmul.mubr.f32.gmra.mrb[0].mxu0 %v1422
  %v1424 = vpop.f32.mrb[0].mxu0
  %v1425 = vadd.f32 %v1299, %v1424
  %v1426 = vpop.f32.mrb[0].mxu0
  %1427 = vmatprep.mubr.f32.mxu0 0.0
  %v1428 = vand.u32 %v920, 4294901760
  %v1429 = vsub.f32 %v920, %v1428
  %v1430 = vand.u32 %v1429, 4294901760
  %1431 = vmatmul.mubr.f32.gmra.mrb[0].mxu0 %v1430
  %v1432 = vpop.f32.mrb[0].mxu0
  %v1433 = vadd.f32 %v1306, %v1432
  %v1434 = vpop.f32.mrb[0].mxu0
  %1435 = vmatprep.mubr.f32.mxu0 0.0
  %v1436 = vand.u32 %v923, 4294901760
  %v1437 = vsub.f32 %v923, %v1436
  %v1438 = vand.u32 %v1437, 4294901760
  %1439 = vmatmul.mubr.f32.gmra.mrb[0].mxu0 %v1438
  %v1440 = vpop.f32.mrb[0].mxu0
  %v1441 = vadd.f32 %v1313, %v1440
  %v1442 = vpop.f32.mrb[0].mxu0
  %1443 = vmatprep.mubr.f32.mxu0 0.0
  %v1444 = vand.u32 %v926, 4294901760
  %v1445 = vsub.f32 %v926, %v1444
  %v1446 = vand.u32 %v1445, 4294901760
  %1447 = vmatmul.mubr.f32.gmra.mrb[0].mxu0 %v1446
  %v1448 = vpop.f32.mrb[0].mxu0
  %v1449 = vadd.f32 %v1320, %v1448
  %v1450 = vpop.f32.mrb[0].mxu0
  %1451 = vmatprep.mubr.f32.mxu0 0.0
  %v1452 = vand.u32 %v929, 4294901760
  %v1453 = vsub.f32 %v929, %v1452
  %v1454 = vand.u32 %v1453, 4294901760
  %1455 = vmatmul.mubr.f32.gmra.mrb[0].mxu0 %v1454
  %v1456 = vpop.f32.mrb[0].mxu0
  %v1457 = vadd.f32 %v1327, %v1456
  %v1458 = vpop.f32.mrb[0].mxu0
  %1459 = vmatprep.mubr.f32.mxu0 0.0
  %v1460 = vand.u32 %v932, 4294901760
  %v1461 = vsub.f32 %v932, %v1460
  %v1462 = vand.u32 %v1461, 4294901760
  %1463 = vmatmul.mubr.f32.gmra.mrb[0].mxu0 %v1462
  %v1464 = vpop.f32.mrb[0].mxu0
  %v1465 = vadd.f32 %v1334, %v1464
  %v1466 = vpop.f32.mrb[0].mxu0
  %1467 = vmatprep.mubr.f32.mxu0 0.0
  %v1468 = vand.u32 %v935, 4294901760
  %v1469 = vsub.f32 %v935, %v1468
  %v1470 = vand.u32 %v1469, 4294901760
  %1471 = vmatmul.mubr.f32.gmra.mrb[0].mxu0 %v1470
  %v1472 = vpop.f32.mrb[0].mxu0
  %v1473 = vadd.f32 %v1341, %v1472
  %v1474 = vpop.f32.mrb[0].mxu0
  %1475 = vmatprep.mubr.f32.mxu0 0.0
  %v1476 = vand.u32 %v938, 4294901760
  %v1477 = vsub.f32 %v938, %v1476
  %v1478 = vand.u32 %v1477, 4294901760
  %1479 = vmatmul.mubr.f32.gmra.mrb[0].mxu0 %v1478
  %v1480 = vpop.f32.mrb[0].mxu0
  %v1481 = vadd.f32 %v1348, %v1480
  %v1482 = vpop.f32.mrb[0].mxu0
  %1483 = vdwg.mxu0
  %1484 = vmatprep.subr.mxu0 0.0
  %v1485 = vand.u32 %v18, 4294901760
  %v1486 = vsub.f32 %v18, %v1485
  %v1487 = vand.u32 %v1486, 4294901760
  %1488 = vmatpush1.msra.mxu0 %v1487
  %1489 = vmatprep.subr.mxu0 0.0
  %v1490 = vand.u32 %v19, 4294901760
  %v1491 = vsub.f32 %v19, %v1490
  %v1492 = vand.u32 %v1491, 4294901760
  %1493 = vmatpush1.msra.mxu0 %v1492
  %1494 = vmatprep.subr.mxu0 0.0
  %v1495 = vand.u32 %v20, 4294901760
  %v1496 = vsub.f32 %v20, %v1495
  %v1497 = vand.u32 %v1496, 4294901760
  %1498 = vmatpush1.msra.mxu0 %v1497
  %1499 = vmatprep.subr.mxu0 0.0
  %v1500 = vand.u32 %v21, 4294901760
  %v1501 = vsub.f32 %v21, %v1500
  %v1502 = vand.u32 %v1501, 4294901760
  %1503 = vmatpush1.msra.mxu0 %v1502
  %1504 = vmatprep.subr.mxu0 0.0
  %1505 = vmatpush1.msra.mxu0 0.0
  %1506 = vmatprep.subr.mxu0 0.0
  %1507 = vmatpush1.msra.mxu0 0.0
  %1508 = vmatprep.subr.mxu0 0.0
  %1509 = vmatpush1.msra.mxu0 0.0
  %1510 = vmatprep.subr.mxu0 0.0
  %1511 = vmatpush1.msra.mxu0 0.0
  %1512 = vmatprep.subr.mxu0 0.0
  %1513 = vmatpush1.msra.mxu0 0.0
  %1514 = vmatprep.subr.mxu0 0.0
  %1515 = vmatpush1.msra.mxu0 0.0
  %1516 = vmatprep.subr.mxu0 0.0
  %1517 = vmatpush1.msra.mxu0 0.0
  %1518 = vmatprep.subr.mxu0 0.0
  %1519 = vmatpush1.msra.mxu0 0.0
  %1520 = vmatprep.subr.mxu0 0.0
  %1521 = vmatpush1.msra.mxu0 0.0
  %1522 = vmatprep.subr.mxu0 0.0
  %1523 = vmatpush1.msra.mxu0 0.0
  %1524 = vmatprep.subr.mxu0 0.0
  %1525 = vmatpush1.msra.mxu0 0.0
  %1526 = vmatprep.subr.mxu0 0.0
  %1527 = vmatpush1.msra.mxu0 0.0
  %1528 = vmatprep.subr.mxu0 0.0
  %1529 = vmatpush1.msra.mxu0 0.0
  %1530 = vmatprep.subr.mxu0 0.0
  %1531 = vmatpush1.msra.mxu0 0.0
  %1532 = vmatprep.subr.mxu0 0.0
  %1533 = vmatpush1.msra.mxu0 0.0
  %1534 = vmatprep.subr.mxu0 0.0
  %1535 = vmatpush1.msra.mxu0 0.0
  %1536 = vmatprep.subr.mxu0 0.0
  %1537 = vmatpush1.msra.mxu0 0.0
  %1538 = vmatprep.subr.mxu0 0.0
  %1539 = vmatpush1.msra.mxu0 0.0
  %1540 = vmatprep.subr.mxu0 0.0
  %1541 = vmatpush1.msra.mxu0 0.0
  %1542 = vmatprep.subr.mxu0 0.0
  %1543 = vmatpush1.msra.mxu0 0.0
  %1544 = vmatprep.subr.mxu0 0.0
  %1545 = vmatpush1.msra.mxu0 0.0
  %1546 = vmatprep.subr.mxu0 0.0
  %1547 = vmatpush1.msra.mxu0 0.0
  %1548 = vmatprep.subr.mxu0 0.0
  %1549 = vmatpush1.msra.mxu0 0.0
  %1550 = vmatprep.subr.mxu0 0.0
  %1551 = vmatpush1.msra.mxu0 0.0
  %1552 = vmatprep.subr.mxu0 0.0
  %1553 = vmatpush1.msra.mxu0 0.0
  %1554 = vmatprep.subr.mxu0 0.0
  %1555 = vmatpush1.msra.mxu0 0.0
  %1556 = vmatprep.subr.mxu0 0.0
  %1557 = vmatpush1.msra.mxu0 0.0
  %1558 = vmatprep.subr.mxu0 0.0
  %1559 = vmatpush1.msra.mxu0 0.0
  %1560 = vmatprep.mubr.f32.mxu0 0.0
  %v1561 = vand.u32 %v917, 4294901760
  %1562 = vmatmul.mubr.f32.gmra.mrb[0].mxu0 %v1561
  %v1563 = vpop.f32.mrb[0].mxu0
  %v1564 = vadd.f32 %v1425, %v1563
  %v1565 = vpop.f32.mrb[0].mxu0
  %1566 = vmatprep.mubr.f32.mxu0 0.0
  %v1567 = vand.u32 %v920, 4294901760
  %1568 = vmatmul.mubr.f32.gmra.mrb[0].mxu0 %v1567
  %v1569 = vpop.f32.mrb[0].mxu0
  %v1570 = vadd.f32 %v1433, %v1569
  %v1571 = vpop.f32.mrb[0].mxu0
  %1572 = vmatprep.mubr.f32.mxu0 0.0
  %v1573 = vand.u32 %v923, 4294901760
  %1574 = vmatmul.mubr.f32.gmra.mrb[0].mxu0 %v1573
  %v1575 = vpop.f32.mrb[0].mxu0
  %v1576 = vadd.f32 %v1441, %v1575
  %v1577 = vpop.f32.mrb[0].mxu0
  %1578 = vmatprep.mubr.f32.mxu0 0.0
  %v1579 = vand.u32 %v926, 4294901760
  %1580 = vmatmul.mubr.f32.gmra.mrb[0].mxu0 %v1579
  %v1581 = vpop.f32.mrb[0].mxu0
  %v1582 = vadd.f32 %v1449, %v1581
  %v1583 = vpop.f32.mrb[0].mxu0
  %1584 = vmatprep.mubr.f32.mxu0 0.0
  %v1585 = vand.u32 %v929, 4294901760
  %1586 = vmatmul.mubr.f32.gmra.mrb[0].mxu0 %v1585
  %v1587 = vpop.f32.mrb[0].mxu0
  %v1588 = vadd.f32 %v1457, %v1587
  %v1589 = vpop.f32.mrb[0].mxu0
  %1590 = vmatprep.mubr.f32.mxu0 0.0
  %v1591 = vand.u32 %v932, 4294901760
  %1592 = vmatmul.mubr.f32.gmra.mrb[0].mxu0 %v1591
  %v1593 = vpop.f32.mrb[0].mxu0
  %v1594 = vadd.f32 %v1465, %v1593
  %v1595 = vpop.f32.mrb[0].mxu0
  %1596 = vmatprep.mubr.f32.mxu0 0.0
  %v1597 = vand.u32 %v935, 4294901760
  %1598 = vmatmul.mubr.f32.gmra.mrb[0].mxu0 %v1597
  %v1599 = vpop.f32.mrb[0].mxu0
  %v1600 = vadd.f32 %v1473, %v1599
  %v1601 = vpop.f32.mrb[0].mxu0
  %1602 = vmatprep.mubr.f32.mxu0 0.0
  %v1603 = vand.u32 %v938, 4294901760
  %1604 = vmatmul.mubr.f32.gmra.mrb[0].mxu0 %v1603
  %v1605 = vpop.f32.mrb[0].mxu0
  %v1606 = vadd.f32 %v1481, %v1605
  %v1607 = vpop.f32.mrb[0].mxu0
  %1608 = vdwg.mxu0
  %1609 = vmatprep.subr.mxu0 0.0
  %v1610 = vand.u32 %v18, 4294901760
  %1611 = vmatpush1.msra.mxu0 %v1610
  %1612 = vmatprep.subr.mxu0 0.0
  %v1613 = vand.u32 %v19, 4294901760
  %1614 = vmatpush1.msra.mxu0 %v1613
  %1615 = vmatprep.subr.mxu0 0.0
  %v1616 = vand.u32 %v20, 4294901760
  %1617 = vmatpush1.msra.mxu0 %v1616
  %1618 = vmatprep.subr.mxu0 0.0
  %v1619 = vand.u32 %v21, 4294901760
  %1620 = vmatpush1.msra.mxu0 %v1619
  %1621 = vmatprep.subr.mxu0 0.0
  %1622 = vmatpush1.msra.mxu0 0.0
  %1623 = vmatprep.subr.mxu0 0.0
  %1624 = vmatpush1.msra.mxu0 0.0
  %1625 = vmatprep.subr.mxu0 0.0
  %1626 = vmatpush1.msra.mxu0 0.0
  %1627 = vmatprep.subr.mxu0 0.0
  %1628 = vmatpush1.msra.mxu0 0.0
  %1629 = vmatprep.subr.mxu0 0.0
  %1630 = vmatpush1.msra.mxu0 0.0
  %1631 = vmatprep.subr.mxu0 0.0
  %1632 = vmatpush1.msra.mxu0 0.0
  %1633 = vmatprep.subr.mxu0 0.0
  %1634 = vmatpush1.msra.mxu0 0.0
  %1635 = vmatprep.subr.mxu0 0.0
  %1636 = vmatpush1.msra.mxu0 0.0
  %1637 = vmatprep.subr.mxu0 0.0
  %1638 = vmatpush1.msra.mxu0 0.0
  %1639 = vmatprep.subr.mxu0 0.0
  %1640 = vmatpush1.msra.mxu0 0.0
  %1641 = vmatprep.subr.mxu0 0.0
  %1642 = vmatpush1.msra.mxu0 0.0
  %1643 = vmatprep.subr.mxu0 0.0
  %1644 = vmatpush1.msra.mxu0 0.0
  %1645 = vmatprep.subr.mxu0 0.0
  %1646 = vmatpush1.msra.mxu0 0.0
  %1647 = vmatprep.subr.mxu0 0.0
  %1648 = vmatpush1.msra.mxu0 0.0
  %1649 = vmatprep.subr.mxu0 0.0
  %1650 = vmatpush1.msra.mxu0 0.0
  %1651 = vmatprep.subr.mxu0 0.0
  %1652 = vmatpush1.msra.mxu0 0.0
  %1653 = vmatprep.subr.mxu0 0.0
  %1654 = vmatpush1.msra.mxu0 0.0
  %1655 = vmatprep.subr.mxu0 0.0
  %1656 = vmatpush1.msra.mxu0 0.0
  %1657 = vmatprep.subr.mxu0 0.0
  %1658 = vmatpush1.msra.mxu0 0.0
  %1659 = vmatprep.subr.mxu0 0.0
  %1660 = vmatpush1.msra.mxu0 0.0
  %1661 = vmatprep.subr.mxu0 0.0
  %1662 = vmatpush1.msra.mxu0 0.0
  %1663 = vmatprep.subr.mxu0 0.0
  %1664 = vmatpush1.msra.mxu0 0.0
  %1665 = vmatprep.subr.mxu0 0.0
  %1666 = vmatpush1.msra.mxu0 0.0
  %1667 = vmatprep.subr.mxu0 0.0
  %1668 = vmatpush1.msra.mxu0 0.0
  %1669 = vmatprep.subr.mxu0 0.0
  %1670 = vmatpush1.msra.mxu0 0.0
  %1671 = vmatprep.subr.mxu0 0.0
  %1672 = vmatpush1.msra.mxu0 0.0
  %1673 = vmatprep.subr.mxu0 0.0
  %1674 = vmatpush1.msra.mxu0 0.0
  %1675 = vmatprep.subr.mxu0 0.0
  %1676 = vmatpush1.msra.mxu0 0.0
  %1677 = vmatprep.mubr.f32.mxu0 0.0
  %v1678 = vand.u32 %v917, 4294901760
  %1679 = vmatmul.mubr.f32.gmra.mrb[0].mxu0 %v1678
  %v1680 = vpop.f32.mrb[0].mxu0
  %v1681 = vadd.f32 %v1564, %v1680
  %v1682 = vpop.f32.mrb[0].mxu0
  %1683 = vmatprep.mubr.f32.mxu0 0.0
  %v1684 = vand.u32 %v920, 4294901760
  %1685 = vmatmul.mubr.f32.gmra.mrb[0].mxu0 %v1684
  %v1686 = vpop.f32.mrb[0].mxu0
  %v1687 = vadd.f32 %v1570, %v1686
  %v1688 = vpop.f32.mrb[0].mxu0
  %1689 = vmatprep.mubr.f32.mxu0 0.0
  %v1690 = vand.u32 %v923, 4294901760
  %1691 = vmatmul.mubr.f32.gmra.mrb[0].mxu0 %v1690
  %v1692 = vpop.f32.mrb[0].mxu0
  %v1693 = vadd.f32 %v1576, %v1692
  %v1694 = vpop.f32.mrb[0].mxu0
  %1695 = vmatprep.mubr.f32.mxu0 0.0
  %v1696 = vand.u32 %v926, 4294901760
  %1697 = vmatmul.mubr.f32.gmra.mrb[0].mxu0 %v1696
  %v1698 = vpop.f32.mrb[0].mxu0
  %v1699 = vadd.f32 %v1582, %v1698
  %v1700 = vpop.f32.mrb[0].mxu0
  %1701 = vmatprep.mubr.f32.mxu0 0.0
  %v1702 = vand.u32 %v929, 4294901760
  %1703 = vmatmul.mubr.f32.gmra.mrb[0].mxu0 %v1702
  %v1704 = vpop.f32.mrb[0].mxu0
  %v1705 = vadd.f32 %v1588, %v1704
  %v1706 = vpop.f32.mrb[0].mxu0
  %1707 = vmatprep.mubr.f32.mxu0 0.0
  %v1708 = vand.u32 %v932, 4294901760
  %1709 = vmatmul.mubr.f32.gmra.mrb[0].mxu0 %v1708
  %v1710 = vpop.f32.mrb[0].mxu0
  %v1711 = vadd.f32 %v1594, %v1710
  %v1712 = vpop.f32.mrb[0].mxu0
  %1713 = vmatprep.mubr.f32.mxu0 0.0
  %v1714 = vand.u32 %v935, 4294901760
  %1715 = vmatmul.mubr.f32.gmra.mrb[0].mxu0 %v1714
  %v1716 = vpop.f32.mrb[0].mxu0
  %v1717 = vadd.f32 %v1600, %v1716
  %v1718 = vpop.f32.mrb[0].mxu0
  %1719 = vmatprep.mubr.f32.mxu0 0.0
  %v1720 = vand.u32 %v938, 4294901760
  %1721 = vmatmul.mubr.f32.gmra.mrb[0].mxu0 %v1720
  %v1722 = vpop.f32.mrb[0].mxu0
  %v1723 = vadd.f32 %v1606, %v1722
  %v1724 = vpop.f32.mrb[0].mxu0
  %1725 = vdwg.mxu0
  %vm1726 = vcmask 523264
  %1727 = vst.msk [vmem:[#allocation3] sm:$0xff] %vm1726, %v1681
  %1728 = vst.msk [vmem:[#allocation3 + $0x8] sm:$0xff] %vm1726, %v1687
  %1729 = vst.msk [vmem:[#allocation3 + $0x10] sm:$0xff] %vm1726, %v1693
  %1730 = vst.msk [vmem:[#allocation3 + $0x18] sm:$0xff] %vm1726, %v1699
  %1731 = vst.msk [vmem:[#allocation3 + $0x20] sm:$0xff] %vm1726, %v1705
  %1732 = vst.msk [vmem:[#allocation3 + $0x28] sm:$0xff] %vm1726, %v1711
  %1733 = vst.msk [vmem:[#allocation3 + $0x30] sm:$0xff] %vm1726, %v1717
  %1734 = vst.msk [vmem:[#allocation3 + $0x38] sm:$0xff] %vm1726, %v1723
  %v1735 = vmul.f32 %v907, %v907
  %v1736 = vmul.f32 %v908, %v908
  %v1737 = vmul.f32 %v909, %v909
  %v1738 = vmul.f32 %v910, %v910
  %v1739 = vmul.f32 %v911, %v911
  %v1740 = vmul.f32 %v912, %v912
  %v1741 = vmul.f32 %v913, %v913
  %v1742 = vmul.f32 %v914, %v914
  %v1743 = vsel %vm915, %v1735, 0.0
  %1744 = vadd.xlane.f32.xlu0 %v1743
  %v1745 = vpop.xlane.xlu0 %1744
  %v1746 = vsel %vm915, %v1736, 0.0
  %1747 = vadd.xlane.f32.xlu0 %v1746
  %v1748 = vpop.xlane.xlu0 %1747
  %v1749 = vsel %vm915, %v1737, 0.0
  %1750 = vadd.xlane.f32.xlu0 %v1749
  %v1751 = vpop.xlane.xlu0 %1750
  %v1752 = vsel %vm915, %v1738, 0.0
  %1753 = vadd.xlane.f32.xlu0 %v1752
  %v1754 = vpop.xlane.xlu0 %1753
  %v1755 = vsel %vm915, %v1739, 0.0
  %1756 = vadd.xlane.f32.xlu0 %v1755
  %v1757 = vpop.xlane.xlu0 %1756
  %v1758 = vsel %vm915, %v1740, 0.0
  %1759 = vadd.xlane.f32.xlu0 %v1758
  %v1760 = vpop.xlane.xlu0 %1759
  %v1761 = vsel %vm915, %v1741, 0.0
  %1762 = vadd.xlane.f32.xlu0 %v1761
  %v1763 = vpop.xlane.xlu0 %1762
  %v1764 = vsel %vm915, %v1742, 0.0
  %1765 = vadd.xlane.f32.xlu0 %v1764
  %v1766 = vpop.xlane.xlu0 %1765
  %v1767 = vmul.f32 %v1745, 0.1
  %v1768 = vmul.f32 %v1748, 0.1
  %v1769 = vmul.f32 %v1751, 0.1
  %v1770 = vmul.f32 %v1754, 0.1
  %v1771 = vmul.f32 %v1757, 0.1
  %v1772 = vmul.f32 %v1760, 0.1
  %v1773 = vmul.f32 %v1763, 0.1
  %v1774 = vmul.f32 %v1766, 0.1
  %v1775 = vlaneseq
  %v1776 = vshrl.u32 %v1775, 7
  %v1777 = vsub.s32 0, %v1776
  %v1778 = vrot.slane %v12, %v1777
  %v1779 = vlaneseq
  %v1780 = vshrl.u32 %v1779, 7
  %v1781 = vsub.s32 0, %v1780
  %v1782 = vrot.slane %v11, %v1781
  %v1783 = vsub.f32 %v1782, %v1778
  %v1784 = vmul.f32 %v1783, %v1783
  %v1785 = vadd.f32 %v1784, 0.0
  %v1786 = vld [vmem:[#allocation3] sm:$0xff]
  %v1787 = vld [vmem:[#allocation3 + $0x8] sm:$0xff]
  %v1788 = vld [vmem:[#allocation3 + $0x10] sm:$0xff]
  %v1789 = vld [vmem:[#allocation3 + $0x18] sm:$0xff]
  %v1790 = vld [vmem:[#allocation3 + $0x20] sm:$0xff]
  %v1791 = vld [vmem:[#allocation3 + $0x28] sm:$0xff]
  %v1792 = vld [vmem:[#allocation3 + $0x30] sm:$0xff]
  %v1793 = vld [vmem:[#allocation3 + $0x38] sm:$0xff]
  %vm1795 = vcmask 64512
  %v1796 = vsel %vm1795, %v1782, 0
  %1798 = vmatprep.subr.mxu0 0.0
  %v1799 = vand.u32 %v17, 4294901760
  %1800 = vmatpush1.msra.mxu0 %v1799
  %1801 = vmatprep.subr.mxu0 0.0
  %1802 = vmatpush1.msra.mxu0 0.0
  %1803 = vmatprep.subr.mxu0 0.0
  %1804 = vmatpush1.msra.mxu0 0.0
  %1805 = vmatprep.subr.mxu0 0.0
  %1806 = vmatpush1.msra.mxu0 0.0
  %1807 = vmatprep.subr.mxu0 0.0
  %1808 = vmatpush1.msra.mxu0 0.0
  %1809 = vmatprep.subr.mxu0 0.0
  %1810 = vmatpush1.msra.mxu0 0.0
  %1811 = vmatprep.subr.mxu0 0.0
  %1812 = vmatpush1.msra.mxu0 0.0
  %1813 = vmatprep.subr.mxu0 0.0
  %1814 = vmatpush1.msra.mxu0 0.0
  %1815 = vmatprep.subr.mxu0 0.0
  %1816 = vmatpush1.msra.mxu0 0.0
  %1817 = vmatprep.subr.mxu0 0.0
  %1818 = vmatpush1.msra.mxu0 0.0
  %1819 = vmatprep.subr.mxu0 0.0
  %1820 = vmatpush1.msra.mxu0 0.0
  %1821 = vmatprep.subr.mxu0 0.0
  %1822 = vmatpush1.msra.mxu0 0.0
  %1823 = vmatprep.subr.mxu0 0.0
  %1824 = vmatpush1.msra.mxu0 0.0
  %1825 = vmatprep.subr.mxu0 0.0
  %1826 = vmatpush1.msra.mxu0 0.0
  %1827 = vmatprep.subr.mxu0 0.0
  %1828 = vmatpush1.msra.mxu0 0.0
  %1829 = vmatprep.subr.mxu0 0.0
  %1830 = vmatpush1.msra.mxu0 0.0
  %1831 = vmatprep.subr.mxu0 0.0
  %1832 = vmatpush1.msra.mxu0 0.0
  %1833 = vmatprep.subr.mxu0 0.0
  %1834 = vmatpush1.msra.mxu0 0.0
  %1835 = vmatprep.subr.mxu0 0.0
  %1836 = vmatpush1.msra.mxu0 0.0
  %1837 = vmatprep.subr.mxu0 0.0
  %1838 = vmatpush1.msra.mxu0 0.0
  %1839 = vmatprep.subr.mxu0 0.0
  %1840 = vmatpush1.msra.mxu0 0.0
  %1841 = vmatprep.subr.mxu0 0.0
  %1842 = vmatpush1.msra.mxu0 0.0
  %1843 = vmatprep.subr.mxu0 0.0
  %1844 = vmatpush1.msra.mxu0 0.0
  %1845 = vmatprep.subr.mxu0 0.0
  %1846 = vmatpush1.msra.mxu0 0.0
  %1847 = vmatprep.subr.mxu0 0.0
  %1848 = vmatpush1.msra.mxu0 0.0
  %1849 = vmatprep.subr.mxu0 0.0
  %1850 = vmatpush1.msra.mxu0 0.0
  %1851 = vmatprep.subr.mxu0 0.0
  %1852 = vmatpush1.msra.mxu0 0.0
  %1853 = vmatprep.subr.mxu0 0.0
  %1854 = vmatpush1.msra.mxu0 0.0
  %1855 = vmatprep.subr.mxu0 0.0
  %1856 = vmatpush1.msra.mxu0 0.0
  %1857 = vmatprep.subr.mxu0 0.0
  %1858 = vmatpush1.msra.mxu0 0.0
  %1859 = vmatprep.subr.mxu0 0.0
  %1860 = vmatpush1.msra.mxu0 0.0
  %1861 = vmatprep.subr.mxu0 0.0
  %1862 = vmatpush1.msra.mxu0 0.0
  %1863 = vmatprep.mubr.f32.mxu0 0.0
  %v1864 = vand.u32 %v1796, 4294901760
  %v1865 = vsub.f32 %v1796, %v1864
  %v1866 = vand.u32 %v1865, 4294901760
  %v1867 = vsub.f32 %v1865, %v1866
  %v1868 = vand.u32 %v1867, 4294901760
  %1869 = vmatmul.mubr.f32.gmra.mrb[0].mxu0 %v1868
  %v1870 = vpop.f32.mrb[0].mxu0
  %v1871 = vadd.f32 %v1786, %v1870
  %v1872 = vpop.f32.mrb[0].mxu0
  %1873 = vmatprep.mubr.f32.mxu0 0.0
  %v1874 = vand.u32 %v1796, 4294901760
  %v1875 = vsub.f32 %v1796, %v1874
  %v1876 = vand.u32 %v1875, 4294901760
  %v1877 = vsub.f32 %v1875, %v1876
  %v1878 = vand.u32 %v1877, 4294901760
  %1879 = vmatmul.mubr.f32.gmra.mrb[0].mxu0 %v1878
  %v1880 = vpop.f32.mrb[0].mxu0
  %v1881 = vadd.f32 %v1787, %v1880
  %v1882 = vpop.f32.mrb[0].mxu0
  %1883 = vmatprep.mubr.f32.mxu0 0.0
  %v1884 = vand.u32 %v1796, 4294901760
  %v1885 = vsub.f32 %v1796, %v1884
  %v1886 = vand.u32 %v1885, 4294901760
  %v1887 = vsub.f32 %v1885, %v1886
  %v1888 = vand.u32 %v1887, 4294901760
  %1889 = vmatmul.mubr.f32.gmra.mrb[0].mxu0 %v1888
  %v1890 = vpop.f32.mrb[0].mxu0
  %v1891 = vadd.f32 %v1788, %v1890
  %v1892 = vpop.f32.mrb[0].mxu0
  %1893 = vmatprep.mubr.f32.mxu0 0.0
  %v1894 = vand.u32 %v1796, 4294901760
  %v1895 = vsub.f32 %v1796, %v1894
  %v1896 = vand.u32 %v1895, 4294901760
  %v1897 = vsub.f32 %v1895, %v1896
  %v1898 = vand.u32 %v1897, 4294901760
  %1899 = vmatmul.mubr.f32.gmra.mrb[0].mxu0 %v1898
  %v1900 = vpop.f32.mrb[0].mxu0
  %v1901 = vadd.f32 %v1789, %v1900
  %v1902 = vpop.f32.mrb[0].mxu0
  %1903 = vmatprep.mubr.f32.mxu0 0.0
  %v1904 = vand.u32 %v1796, 4294901760
  %v1905 = vsub.f32 %v1796, %v1904
  %v1906 = vand.u32 %v1905, 4294901760
  %v1907 = vsub.f32 %v1905, %v1906
  %v1908 = vand.u32 %v1907, 4294901760
  %1909 = vmatmul.mubr.f32.gmra.mrb[0].mxu0 %v1908
  %v1910 = vpop.f32.mrb[0].mxu0
  %v1911 = vadd.f32 %v1790, %v1910
  %v1912 = vpop.f32.mrb[0].mxu0
  %1913 = vmatprep.mubr.f32.mxu0 0.0
  %v1914 = vand.u32 %v1796, 4294901760
  %v1915 = vsub.f32 %v1796, %v1914
  %v1916 = vand.u32 %v1915, 4294901760
  %v1917 = vsub.f32 %v1915, %v1916
  %v1918 = vand.u32 %v1917, 4294901760
  %1919 = vmatmul.mubr.f32.gmra.mrb[0].mxu0 %v1918
  %v1920 = vpop.f32.mrb[0].mxu0
  %v1921 = vadd.f32 %v1791, %v1920
  %v1922 = vpop.f32.mrb[0].mxu0
  %1923 = vmatprep.mubr.f32.mxu0 0.0
  %v1924 = vand.u32 %v1796, 4294901760
  %v1925 = vsub.f32 %v1796, %v1924
  %v1926 = vand.u32 %v1925, 4294901760
  %v1927 = vsub.f32 %v1925, %v1926
  %v1928 = vand.u32 %v1927, 4294901760
  %1929 = vmatmul.mubr.f32.gmra.mrb[0].mxu0 %v1928
  %v1930 = vpop.f32.mrb[0].mxu0
  %v1931 = vadd.f32 %v1792, %v1930
  %v1932 = vpop.f32.mrb[0].mxu0
  %1933 = vmatprep.mubr.f32.mxu0 0.0
  %v1934 = vand.u32 %v1796, 4294901760
  %v1935 = vsub.f32 %v1796, %v1934
  %v1936 = vand.u32 %v1935, 4294901760
  %v1937 = vsub.f32 %v1935, %v1936
  %v1938 = vand.u32 %v1937, 4294901760
  %1939 = vmatmul.mubr.f32.gmra.mrb[0].mxu0 %v1938
  %v1940 = vpop.f32.mrb[0].mxu0
  %v1941 = vadd.f32 %v1793, %v1940
  %v1942 = vpop.f32.mrb[0].mxu0
  %1943 = vdwg.mxu0
  %1944 = vmatprep.subr.mxu0 0.0
  %v1945 = vand.u32 %v17, 4294901760
  %v1946 = vsub.f32 %v17, %v1945
  %v1947 = vand.u32 %v1946, 4294901760
  %v1948 = vsub.f32 %v1946, %v1947
  %v1949 = vand.u32 %v1948, 4294901760
  %1950 = vmatpush1.msra.mxu0 %v1949
  %1951 = vmatprep.subr.mxu0 0.0
  %1952 = vmatpush1.msra.mxu0 0.0
  %1953 = vmatprep.subr.mxu0 0.0
  %1954 = vmatpush1.msra.mxu0 0.0
  %1955 = vmatprep.subr.mxu0 0.0
  %1956 = vmatpush1.msra.mxu0 0.0
  %1957 = vmatprep.subr.mxu0 0.0
  %1958 = vmatpush1.msra.mxu0 0.0
  %1959 = vmatprep.subr.mxu0 0.0
  %1960 = vmatpush1.msra.mxu0 0.0
  %1961 = vmatprep.subr.mxu0 0.0
  %1962 = vmatpush1.msra.mxu0 0.0
  %1963 = vmatprep.subr.mxu0 0.0
  %1964 = vmatpush1.msra.mxu0 0.0
  %1965 = vmatprep.subr.mxu0 0.0
  %1966 = vmatpush1.msra.mxu0 0.0
  %1967 = vmatprep.subr.mxu0 0.0
  %1968 = vmatpush1.msra.mxu0 0.0
  %1969 = vmatprep.subr.mxu0 0.0
  %1970 = vmatpush1.msra.mxu0 0.0
  %1971 = vmatprep.subr.mxu0 0.0
  %1972 = vmatpush1.msra.mxu0 0.0
  %1973 = vmatprep.subr.mxu0 0.0
  %1974 = vmatpush1.msra.mxu0 0.0
  %1975 = vmatprep.subr.mxu0 0.0
  %1976 = vmatpush1.msra.mxu0 0.0
  %1977 = vmatprep.subr.mxu0 0.0
  %1978 = vmatpush1.msra.mxu0 0.0
  %1979 = vmatprep.subr.mxu0 0.0
  %1980 = vmatpush1.msra.mxu0 0.0
  %1981 = vmatprep.subr.mxu0 0.0
  %1982 = vmatpush1.msra.mxu0 0.0
  %1983 = vmatprep.subr.mxu0 0.0
  %1984 = vmatpush1.msra.mxu0 0.0
  %1985 = vmatprep.subr.mxu0 0.0
  %1986 = vmatpush1.msra.mxu0 0.0
  %1987 = vmatprep.subr.mxu0 0.0
  %1988 = vmatpush1.msra.mxu0 0.0
  %1989 = vmatprep.subr.mxu0 0.0
  %1990 = vmatpush1.msra.mxu0 0.0
  %1991 = vmatprep.subr.mxu0 0.0
  %1992 = vmatpush1.msra.mxu0 0.0
  %1993 = vmatprep.subr.mxu0 0.0
  %1994 = vmatpush1.msra.mxu0 0.0
  %1995 = vmatprep.subr.mxu0 0.0
  %1996 = vmatpush1.msra.mxu0 0.0
  %1997 = vmatprep.subr.mxu0 0.0
  %1998 = vmatpush1.msra.mxu0 0.0
  %1999 = vmatprep.subr.mxu0 0.0
  %2000 = vmatpush1.msra.mxu0 0.0
  %2001 = vmatprep.subr.mxu0 0.0
  %2002 = vmatpush1.msra.mxu0 0.0
  %2003 = vmatprep.subr.mxu0 0.0
  %2004 = vmatpush1.msra.mxu0 0.0
  %2005 = vmatprep.subr.mxu0 0.0
  %2006 = vmatpush1.msra.mxu0 0.0
  %2007 = vmatprep.subr.mxu0 0.0
  %2008 = vmatpush1.msra.mxu0 0.0
  %2009 = vmatprep.subr.mxu0 0.0
  %2010 = vmatpush1.msra.mxu0 0.0
  %2011 = vmatprep.subr.mxu0 0.0
  %2012 = vmatpush1.msra.mxu0 0.0
  %2013 = vmatprep.mubr.f32.mxu0 0.0
  %v2014 = vand.u32 %v1796, 4294901760
  %2015 = vmatmul.mubr.f32.gmra.mrb[0].mxu0 %v2014
  %v2016 = vpop.f32.mrb[0].mxu0
  %v2017 = vadd.f32 %v1871, %v2016
  %v2018 = vpop.f32.mrb[0].mxu0
  %2019 = vmatprep.mubr.f32.mxu0 0.0
  %v2020 = vand.u32 %v1796, 4294901760
  %2021 = vmatmul.mubr.f32.gmra.mrb[0].mxu0 %v2020
  %v2022 = vpop.f32.mrb[0].mxu0
  %v2023 = vadd.f32 %v1881, %v2022
  %v2024 = vpop.f32.mrb[0].mxu0
  %2025 = vmatprep.mubr.f32.mxu0 0.0
  %v2026 = vand.u32 %v1796, 4294901760
  %2027 = vmatmul.mubr.f32.gmra.mrb[0].mxu0 %v2026
  %v2028 = vpop.f32.mrb[0].mxu0
  %v2029 = vadd.f32 %v1891, %v2028
  %v2030 = vpop.f32.mrb[0].mxu0
  %2031 = vmatprep.mubr.f32.mxu0 0.0
  %v2032 = vand.u32 %v1796, 4294901760
  %2033 = vmatmul.mubr.f32.gmra.mrb[0].mxu0 %v2032
  %v2034 = vpop.f32.mrb[0].mxu0
  %v2035 = vadd.f32 %v1901, %v2034
  %v2036 = vpop.f32.mrb[0].mxu0
  %2037 = vmatprep.mubr.f32.mxu0 0.0
  %v2038 = vand.u32 %v1796, 4294901760
  %2039 = vmatmul.mubr.f32.gmra.mrb[0].mxu0 %v2038
  %v2040 = vpop.f32.mrb[0].mxu0
  %v2041 = vadd.f32 %v1911, %v2040
  %v2042 = vpop.f32.mrb[0].mxu0
  %2043 = vmatprep.mubr.f32.mxu0 0.0
  %v2044 = vand.u32 %v1796, 4294901760
  %2045 = vmatmul.mubr.f32.gmra.mrb[0].mxu0 %v2044
  %v2046 = vpop.f32.mrb[0].mxu0
  %v2047 = vadd.f32 %v1921, %v2046
  %v2048 = vpop.f32.mrb[0].mxu0
  %2049 = vmatprep.mubr.f32.mxu0 0.0
  %v2050 = vand.u32 %v1796, 4294901760
  %2051 = vmatmul.mubr.f32.gmra.mrb[0].mxu0 %v2050
  %v2052 = vpop.f32.mrb[0].mxu0
  %v2053 = vadd.f32 %v1931, %v2052
  %v2054 = vpop.f32.mrb[0].mxu0
  %2055 = vmatprep.mubr.f32.mxu0 0.0
  %v2056 = vand.u32 %v1796, 4294901760
  %2057 = vmatmul.mubr.f32.gmra.mrb[0].mxu0 %v2056
  %v2058 = vpop.f32.mrb[0].mxu0
  %v2059 = vadd.f32 %v1941, %v2058
  %v2060 = vpop.f32.mrb[0].mxu0
  %2061 = vdwg.mxu0
  %2062 = vmatprep.subr.mxu0 0.0
  %v2063 = vand.u32 %v17, 4294901760
  %v2064 = vsub.f32 %v17, %v2063
  %2065 = vmatpush1.msra.mxu0 %v2064
  %2066 = vmatprep.subr.mxu0 0.0
  %2067 = vmatpush1.msra.mxu0 0.0
  %2068 = vmatprep.subr.mxu0 0.0
  %2069 = vmatpush1.msra.mxu0 0.0
  %2070 = vmatprep.subr.mxu0 0.0
  %2071 = vmatpush1.msra.mxu0 0.0
  %2072 = vmatprep.subr.mxu0 0.0
  %2073 = vmatpush1.msra.mxu0 0.0
  %2074 = vmatprep.subr.mxu0 0.0
  %2075 = vmatpush1.msra.mxu0 0.0
  %2076 = vmatprep.subr.mxu0 0.0
  %2077 = vmatpush1.msra.mxu0 0.0
  %2078 = vmatprep.subr.mxu0 0.0
  %2079 = vmatpush1.msra.mxu0 0.0
  %2080 = vmatprep.subr.mxu0 0.0
  %2081 = vmatpush1.msra.mxu0 0.0
  %2082 = vmatprep.subr.mxu0 0.0
  %2083 = vmatpush1.msra.mxu0 0.0
  %2084 = vmatprep.subr.mxu0 0.0
  %2085 = vmatpush1.msra.mxu0 0.0
  %2086 = vmatprep.subr.mxu0 0.0
  %2087 = vmatpush1.msra.mxu0 0.0
  %2088 = vmatprep.subr.mxu0 0.0
  %2089 = vmatpush1.msra.mxu0 0.0
  %2090 = vmatprep.subr.mxu0 0.0
  %2091 = vmatpush1.msra.mxu0 0.0
  %2092 = vmatprep.subr.mxu0 0.0
  %2093 = vmatpush1.msra.mxu0 0.0
  %2094 = vmatprep.subr.mxu0 0.0
  %2095 = vmatpush1.msra.mxu0 0.0
  %2096 = vmatprep.subr.mxu0 0.0
  %2097 = vmatpush1.msra.mxu0 0.0
  %2098 = vmatprep.subr.mxu0 0.0
  %2099 = vmatpush1.msra.mxu0 0.0
  %2100 = vmatprep.subr.mxu0 0.0
  %2101 = vmatpush1.msra.mxu0 0.0
  %2102 = vmatprep.subr.mxu0 0.0
  %2103 = vmatpush1.msra.mxu0 0.0
  %2104 = vmatprep.subr.mxu0 0.0
  %2105 = vmatpush1.msra.mxu0 0.0
  %2106 = vmatprep.subr.mxu0 0.0
  %2107 = vmatpush1.msra.mxu0 0.0
  %2108 = vmatprep.subr.mxu0 0.0
  %2109 = vmatpush1.msra.mxu0 0.0
  %2110 = vmatprep.subr.mxu0 0.0
  %2111 = vmatpush1.msra.mxu0 0.0
  %2112 = vmatprep.subr.mxu0 0.0
  %2113 = vmatpush1.msra.mxu0 0.0
  %2114 = vmatprep.subr.mxu0 0.0
  %2115 = vmatpush1.msra.mxu0 0.0
  %2116 = vmatprep.subr.mxu0 0.0
  %2117 = vmatpush1.msra.mxu0 0.0
  %2118 = vmatprep.subr.mxu0 0.0
  %2119 = vmatpush1.msra.mxu0 0.0
  %2120 = vmatprep.subr.mxu0 0.0
  %2121 = vmatpush1.msra.mxu0 0.0
  %2122 = vmatprep.subr.mxu0 0.0
  %2123 = vmatpush1.msra.mxu0 0.0
  %2124 = vmatprep.subr.mxu0 0.0
  %2125 = vmatpush1.msra.mxu0 0.0
  %2126 = vmatprep.subr.mxu0 0.0
  %2127 = vmatpush1.msra.mxu0 0.0
  %2128 = vmatprep.mubr.f32.mxu0 0.0
  %v2129 = vand.u32 %v1796, 4294901760
  %v2130 = vsub.f32 %v1796, %v2129
  %2131 = vmatmul.mubr.f32.gmra.mrb[0].mxu0 %v2130
  %v2132 = vpop.f32.mrb[0].mxu0
  %v2133 = vadd.f32 %v2017, %v2132
  %v2134 = vpop.f32.mrb[0].mxu0
  %2135 = vmatprep.mubr.f32.mxu0 0.0
  %v2136 = vand.u32 %v1796, 4294901760
  %v2137 = vsub.f32 %v1796, %v2136
  %2138 = vmatmul.mubr.f32.gmra.mrb[0].mxu0 %v2137
  %v2139 = vpop.f32.mrb[0].mxu0
  %v2140 = vadd.f32 %v2023, %v2139
  %v2141 = vpop.f32.mrb[0].mxu0
  %2142 = vmatprep.mubr.f32.mxu0 0.0
  %v2143 = vand.u32 %v1796, 4294901760
  %v2144 = vsub.f32 %v1796, %v2143
  %2145 = vmatmul.mubr.f32.gmra.mrb[0].mxu0 %v2144
  %v2146 = vpop.f32.mrb[0].mxu0
  %v2147 = vadd.f32 %v2029, %v2146
  %v2148 = vpop.f32.mrb[0].mxu0
  %2149 = vmatprep.mubr.f32.mxu0 0.0
  %v2150 = vand.u32 %v1796, 4294901760
  %v2151 = vsub.f32 %v1796, %v2150
  %2152 = vmatmul.mubr.f32.gmra.mrb[0].mxu0 %v2151
  %v2153 = vpop.f32.mrb[0].mxu0
  %v2154 = vadd.f32 %v2035, %v2153
  %v2155 = vpop.f32.mrb[0].mxu0
  %2156 = vmatprep.mubr.f32.mxu0 0.0
  %v2157 = vand.u32 %v1796, 4294901760
  %v2158 = vsub.f32 %v1796, %v2157
  %2159 = vmatmul.mubr.f32.gmra.mrb[0].mxu0 %v2158
  %v2160 = vpop.f32.mrb[0].mxu0
  %v2161 = vadd.f32 %v2041, %v2160
  %v2162 = vpop.f32.mrb[0].mxu0
  %2163 = vmatprep.mubr.f32.mxu0 0.0
  %v2164 = vand.u32 %v1796, 4294901760
  %v2165 = vsub.f32 %v1796, %v2164
  %2166 = vmatmul.mubr.f32.gmra.mrb[0].mxu0 %v2165
  %v2167 = vpop.f32.mrb[0].mxu0
  %v2168 = vadd.f32 %v2047, %v2167
  %v2169 = vpop.f32.mrb[0].mxu0
  %2170 = vmatprep.mubr.f32.mxu0 0.0
  %v2171 = vand.u32 %v1796, 4294901760
  %v2172 = vsub.f32 %v1796, %v2171
  %2173 = vmatmul.mubr.f32.gmra.mrb[0].mxu0 %v2172
  %v2174 = vpop.f32.mrb[0].mxu0
  %v2175 = vadd.f32 %v2053, %v2174
  %v2176 = vpop.f32.mrb[0].mxu0
  %2177 = vmatprep.mubr.f32.mxu0 0.0
  %v2178 = vand.u32 %v1796, 4294901760
  %v2179 = vsub.f32 %v1796, %v2178
  %2180 = vmatmul.mubr.f32.gmra.mrb[0].mxu0 %v2179
  %v2181 = vpop.f32.mrb[0].mxu0
  %v2182 = vadd.f32 %v2059, %v2181
  %v2183 = vpop.f32.mrb[0].mxu0
  %2184 = vdwg.mxu0
  %2185 = vmatprep.subr.mxu0 0.0
  %v2186 = vand.u32 %v17, 4294901760
  %2187 = vmatpush1.msra.mxu0 %v2186
  %2188 = vmatprep.subr.mxu0 0.0
  %2189 = vmatpush1.msra.mxu0 0.0
  %2190 = vmatprep.subr.mxu0 0.0
  %2191 = vmatpush1.msra.mxu0 0.0
  %2192 = vmatprep.subr.mxu0 0.0
  %2193 = vmatpush1.msra.mxu0 0.0
  %2194 = vmatprep.subr.mxu0 0.0
  %2195 = vmatpush1.msra.mxu0 0.0
  %2196 = vmatprep.subr.mxu0 0.0
  %2197 = vmatpush1.msra.mxu0 0.0
  %2198 = vmatprep.subr.mxu0 0.0
  %2199 = vmatpush1.msra.mxu0 0.0
  %2200 = vmatprep.subr.mxu0 0.0
  %2201 = vmatpush1.msra.mxu0 0.0
  %2202 = vmatprep.subr.mxu0 0.0
  %2203 = vmatpush1.msra.mxu0 0.0
  %2204 = vmatprep.subr.mxu0 0.0
  %2205 = vmatpush1.msra.mxu0 0.0
  %2206 = vmatprep.subr.mxu0 0.0
  %2207 = vmatpush1.msra.mxu0 0.0
  %2208 = vmatprep.subr.mxu0 0.0
  %2209 = vmatpush1.msra.mxu0 0.0
  %2210 = vmatprep.subr.mxu0 0.0
  %2211 = vmatpush1.msra.mxu0 0.0
  %2212 = vmatprep.subr.mxu0 0.0
  %2213 = vmatpush1.msra.mxu0 0.0
  %2214 = vmatprep.subr.mxu0 0.0
  %2215 = vmatpush1.msra.mxu0 0.0
  %2216 = vmatprep.subr.mxu0 0.0
  %2217 = vmatpush1.msra.mxu0 0.0
  %2218 = vmatprep.subr.mxu0 0.0
  %2219 = vmatpush1.msra.mxu0 0.0
  %2220 = vmatprep.subr.mxu0 0.0
  %2221 = vmatpush1.msra.mxu0 0.0
  %2222 = vmatprep.subr.mxu0 0.0
  %2223 = vmatpush1.msra.mxu0 0.0
  %2224 = vmatprep.subr.mxu0 0.0
  %2225 = vmatpush1.msra.mxu0 0.0
  %2226 = vmatprep.subr.mxu0 0.0
  %2227 = vmatpush1.msra.mxu0 0.0
  %2228 = vmatprep.subr.mxu0 0.0
  %2229 = vmatpush1.msra.mxu0 0.0
  %2230 = vmatprep.subr.mxu0 0.0
  %2231 = vmatpush1.msra.mxu0 0.0
  %2232 = vmatprep.subr.mxu0 0.0
  %2233 = vmatpush1.msra.mxu0 0.0
  %2234 = vmatprep.subr.mxu0 0.0
  %2235 = vmatpush1.msra.mxu0 0.0
  %2236 = vmatprep.subr.mxu0 0.0
  %2237 = vmatpush1.msra.mxu0 0.0
  %2238 = vmatprep.subr.mxu0 0.0
  %2239 = vmatpush1.msra.mxu0 0.0
  %2240 = vmatprep.subr.mxu0 0.0
  %2241 = vmatpush1.msra.mxu0 0.0
  %2242 = vmatprep.subr.mxu0 0.0
  %2243 = vmatpush1.msra.mxu0 0.0
  %2244 = vmatprep.subr.mxu0 0.0
  %2245 = vmatpush1.msra.mxu0 0.0
  %2246 = vmatprep.subr.mxu0 0.0
  %2247 = vmatpush1.msra.mxu0 0.0
  %2248 = vmatprep.subr.mxu0 0.0
  %2249 = vmatpush1.msra.mxu0 0.0
  %2250 = vmatprep.mubr.f32.mxu0 0.0
  %v2251 = vand.u32 %v1796, 4294901760
  %v2252 = vsub.f32 %v1796, %v2251
  %v2253 = vand.u32 %v2252, 4294901760
  %2254 = vmatmul.mubr.f32.gmra.mrb[0].mxu0 %v2253
  %v2255 = vpop.f32.mrb[0].mxu0
  %v2256 = vadd.f32 %v2133, %v2255
  %v2257 = vpop.f32.mrb[0].mxu0
  %2258 = vmatprep.mubr.f32.mxu0 0.0
  %v2259 = vand.u32 %v1796, 4294901760
  %v2260 = vsub.f32 %v1796, %v2259
  %v2261 = vand.u32 %v2260, 4294901760
  %2262 = vmatmul.mubr.f32.gmra.mrb[0].mxu0 %v2261
  %v2263 = vpop.f32.mrb[0].mxu0
  %v2264 = vadd.f32 %v2140, %v2263
  %v2265 = vpop.f32.mrb[0].mxu0
  %2266 = vmatprep.mubr.f32.mxu0 0.0
  %v2267 = vand.u32 %v1796, 4294901760
  %v2268 = vsub.f32 %v1796, %v2267
  %v2269 = vand.u32 %v2268, 4294901760
  %2270 = vmatmul.mubr.f32.gmra.mrb[0].mxu0 %v2269
  %v2271 = vpop.f32.mrb[0].mxu0
  %v2272 = vadd.f32 %v2147, %v2271
  %v2273 = vpop.f32.mrb[0].mxu0
  %2274 = vmatprep.mubr.f32.mxu0 0.0
  %v2275 = vand.u32 %v1796, 4294901760
  %v2276 = vsub.f32 %v1796, %v2275
  %v2277 = vand.u32 %v2276, 4294901760
  %2278 = vmatmul.mubr.f32.gmra.mrb[0].mxu0 %v2277
  %v2279 = vpop.f32.mrb[0].mxu0
  %v2280 = vadd.f32 %v2154, %v2279
  %v2281 = vpop.f32.mrb[0].mxu0
  %2282 = vmatprep.mubr.f32.mxu0 0.0
  %v2283 = vand.u32 %v1796, 4294901760
  %v2284 = vsub.f32 %v1796, %v2283
  %v2285 = vand.u32 %v2284, 4294901760
  %2286 = vmatmul.mubr.f32.gmra.mrb[0].mxu0 %v2285
  %v2287 = vpop.f32.mrb[0].mxu0
  %v2288 = vadd.f32 %v2161, %v2287
  %v2289 = vpop.f32.mrb[0].mxu0
  %2290 = vmatprep.mubr.f32.mxu0 0.0
  %v2291 = vand.u32 %v1796, 4294901760
  %v2292 = vsub.f32 %v1796, %v2291
  %v2293 = vand.u32 %v2292, 4294901760
  %2294 = vmatmul.mubr.f32.gmra.mrb[0].mxu0 %v2293
  %v2295 = vpop.f32.mrb[0].mxu0
  %v2296 = vadd.f32 %v2168, %v2295
  %v2297 = vpop.f32.mrb[0].mxu0
  %2298 = vmatprep.mubr.f32.mxu0 0.0
  %v2299 = vand.u32 %v1796, 4294901760
  %v2300 = vsub.f32 %v1796, %v2299
  %v2301 = vand.u32 %v2300, 4294901760
  %2302 = vmatmul.mubr.f32.gmra.mrb[0].mxu0 %v2301
  %v2303 = vpop.f32.mrb[0].mxu0
  %v2304 = vadd.f32 %v2175, %v2303
  %v2305 = vpop.f32.mrb[0].mxu0
  %2306 = vmatprep.mubr.f32.mxu0 0.0
  %v2307 = vand.u32 %v1796, 4294901760
  %v2308 = vsub.f32 %v1796, %v2307
  %v2309 = vand.u32 %v2308, 4294901760
  %2310 = vmatmul.mubr.f32.gmra.mrb[0].mxu0 %v2309
  %v2311 = vpop.f32.mrb[0].mxu0
  %v2312 = vadd.f32 %v2182, %v2311
  %v2313 = vpop.f32.mrb[0].mxu0
  %2314 = vdwg.mxu0
  %2315 = vmatprep.subr.mxu0 0.0
  %v2316 = vand.u32 %v17, 4294901760
  %v2317 = vsub.f32 %v17, %v2316
  %v2318 = vand.u32 %v2317, 4294901760
  %2319 = vmatpush1.msra.mxu0 %v2318
  %2320 = vmatprep.subr.mxu0 0.0
  %2321 = vmatpush1.msra.mxu0 0.0
  %2322 = vmatprep.subr.mxu0 0.0
  %2323 = vmatpush1.msra.mxu0 0.0
  %2324 = vmatprep.subr.mxu0 0.0
  %2325 = vmatpush1.msra.mxu0 0.0
  %2326 = vmatprep.subr.mxu0 0.0
  %2327 = vmatpush1.msra.mxu0 0.0
  %2328 = vmatprep.subr.mxu0 0.0
  %2329 = vmatpush1.msra.mxu0 0.0
  %2330 = vmatprep.subr.mxu0 0.0
  %2331 = vmatpush1.msra.mxu0 0.0
  %2332 = vmatprep.subr.mxu0 0.0
  %2333 = vmatpush1.msra.mxu0 0.0
  %2334 = vmatprep.subr.mxu0 0.0
  %2335 = vmatpush1.msra.mxu0 0.0
  %2336 = vmatprep.subr.mxu0 0.0
  %2337 = vmatpush1.msra.mxu0 0.0
  %2338 = vmatprep.subr.mxu0 0.0
  %2339 = vmatpush1.msra.mxu0 0.0
  %2340 = vmatprep.subr.mxu0 0.0
  %2341 = vmatpush1.msra.mxu0 0.0
  %2342 = vmatprep.subr.mxu0 0.0
  %2343 = vmatpush1.msra.mxu0 0.0
  %2344 = vmatprep.subr.mxu0 0.0
  %2345 = vmatpush1.msra.mxu0 0.0
  %2346 = vmatprep.subr.mxu0 0.0
  %2347 = vmatpush1.msra.mxu0 0.0
  %2348 = vmatprep.subr.mxu0 0.0
  %2349 = vmatpush1.msra.mxu0 0.0
  %2350 = vmatprep.subr.mxu0 0.0
  %2351 = vmatpush1.msra.mxu0 0.0
  %2352 = vmatprep.subr.mxu0 0.0
  %2353 = vmatpush1.msra.mxu0 0.0
  %2354 = vmatprep.subr.mxu0 0.0
  %2355 = vmatpush1.msra.mxu0 0.0
  %2356 = vmatprep.subr.mxu0 0.0
  %2357 = vmatpush1.msra.mxu0 0.0
  %2358 = vmatprep.subr.mxu0 0.0
  %2359 = vmatpush1.msra.mxu0 0.0
  %2360 = vmatprep.subr.mxu0 0.0
  %2361 = vmatpush1.msra.mxu0 0.0
  %2362 = vmatprep.subr.mxu0 0.0
  %2363 = vmatpush1.msra.mxu0 0.0
  %2364 = vmatprep.subr.mxu0 0.0
  %2365 = vmatpush1.msra.mxu0 0.0
  %2366 = vmatprep.subr.mxu0 0.0
  %2367 = vmatpush1.msra.mxu0 0.0
  %2368 = vmatprep.subr.mxu0 0.0
  %2369 = vmatpush1.msra.mxu0 0.0
  %2370 = vmatprep.subr.mxu0 0.0
  %2371 = vmatpush1.msra.mxu0 0.0
  %2372 = vmatprep.subr.mxu0 0.0
  %2373 = vmatpush1.msra.mxu0 0.0
  %2374 = vmatprep.subr.mxu0 0.0
  %2375 = vmatpush1.msra.mxu0 0.0
  %2376 = vmatprep.subr.mxu0 0.0
  %2377 = vmatpush1.msra.mxu0 0.0
  %2378 = vmatprep.subr.mxu0 0.0
  %2379 = vmatpush1.msra.mxu0 0.0
  %2380 = vmatprep.subr.mxu0 0.0
  %2381 = vmatpush1.msra.mxu0 0.0
  %2382 = vmatprep.mubr.f32.mxu0 0.0
  %v2383 = vand.u32 %v1796, 4294901760
  %2384 = vmatmul.mubr.f32.gmra.mrb[0].mxu0 %v2383
  %v2385 = vpop.f32.mrb[0].mxu0
  %v2386 = vadd.f32 %v2256, %v2385
  %v2387 = vpop.f32.mrb[0].mxu0
  %2388 = vmatprep.mubr.f32.mxu0 0.0
  %v2389 = vand.u32 %v1796, 4294901760
  %2390 = vmatmul.mubr.f32.gmra.mrb[0].mxu0 %v2389
  %v2391 = vpop.f32.mrb[0].mxu0
  %v2392 = vadd.f32 %v2264, %v2391
  %v2393 = vpop.f32.mrb[0].mxu0
  %2394 = vmatprep.mubr.f32.mxu0 0.0
  %v2395 = vand.u32 %v1796, 4294901760
  %2396 = vmatmul.mubr.f32.gmra.mrb[0].mxu0 %v2395
  %v2397 = vpop.f32.mrb[0].mxu0
  %v2398 = vadd.f32 %v2272, %v2397
  %v2399 = vpop.f32.mrb[0].mxu0
  %2400 = vmatprep.mubr.f32.mxu0 0.0
  %v2401 = vand.u32 %v1796, 4294901760
  %2402 = vmatmul.mubr.f32.gmra.mrb[0].mxu0 %v2401
  %v2403 = vpop.f32.mrb[0].mxu0
  %v2404 = vadd.f32 %v2280, %v2403
  %v2405 = vpop.f32.mrb[0].mxu0
  %2406 = vmatprep.mubr.f32.mxu0 0.0
  %v2407 = vand.u32 %v1796, 4294901760
  %2408 = vmatmul.mubr.f32.gmra.mrb[0].mxu0 %v2407
  %v2409 = vpop.f32.mrb[0].mxu0
  %v2410 = vadd.f32 %v2288, %v2409
  %v2411 = vpop.f32.mrb[0].mxu0
  %2412 = vmatprep.mubr.f32.mxu0 0.0
  %v2413 = vand.u32 %v1796, 4294901760
  %2414 = vmatmul.mubr.f32.gmra.mrb[0].mxu0 %v2413
  %v2415 = vpop.f32.mrb[0].mxu0
  %v2416 = vadd.f32 %v2296, %v2415
  %v2417 = vpop.f32.mrb[0].mxu0
  %2418 = vmatprep.mubr.f32.mxu0 0.0
  %v2419 = vand.u32 %v1796, 4294901760
  %2420 = vmatmul.mubr.f32.gmra.mrb[0].mxu0 %v2419
  %v2421 = vpop.f32.mrb[0].mxu0
  %v2422 = vadd.f32 %v2304, %v2421
  %v2423 = vpop.f32.mrb[0].mxu0
  %2424 = vmatprep.mubr.f32.mxu0 0.0
  %v2425 = vand.u32 %v1796, 4294901760
  %2426 = vmatmul.mubr.f32.gmra.mrb[0].mxu0 %v2425
  %v2427 = vpop.f32.mrb[0].mxu0
  %v2428 = vadd.f32 %v2312, %v2427
  %v2429 = vpop.f32.mrb[0].mxu0
  %2430 = vdwg.mxu0
  %2431 = vmatprep.subr.mxu0 0.0
  %v2432 = vand.u32 %v17, 4294901760
  %2433 = vmatpush1.msra.mxu0 %v2432
  %2434 = vmatprep.subr.mxu0 0.0
  %2435 = vmatpush1.msra.mxu0 0.0
  %2436 = vmatprep.subr.mxu0 0.0
  %2437 = vmatpush1.msra.mxu0 0.0
  %2438 = vmatprep.subr.mxu0 0.0
  %2439 = vmatpush1.msra.mxu0 0.0
  %2440 = vmatprep.subr.mxu0 0.0
  %2441 = vmatpush1.msra.mxu0 0.0
  %2442 = vmatprep.subr.mxu0 0.0
  %2443 = vmatpush1.msra.mxu0 0.0
  %2444 = vmatprep.subr.mxu0 0.0
  %2445 = vmatpush1.msra.mxu0 0.0
  %2446 = vmatprep.subr.mxu0 0.0
  %2447 = vmatpush1.msra.mxu0 0.0
  %2448 = vmatprep.subr.mxu0 0.0
  %2449 = vmatpush1.msra.mxu0 0.0
  %2450 = vmatprep.subr.mxu0 0.0
  %2451 = vmatpush1.msra.mxu0 0.0
  %2452 = vmatprep.subr.mxu0 0.0
  %2453 = vmatpush1.msra.mxu0 0.0
  %2454 = vmatprep.subr.mxu0 0.0
  %2455 = vmatpush1.msra.mxu0 0.0
  %2456 = vmatprep.subr.mxu0 0.0
  %2457 = vmatpush1.msra.mxu0 0.0
  %2458 = vmatprep.subr.mxu0 0.0
  %2459 = vmatpush1.msra.mxu0 0.0
  %2460 = vmatprep.subr.mxu0 0.0
  %2461 = vmatpush1.msra.mxu0 0.0
  %2462 = vmatprep.subr.mxu0 0.0
  %2463 = vmatpush1.msra.mxu0 0.0
  %2464 = vmatprep.subr.mxu0 0.0
  %2465 = vmatpush1.msra.mxu0 0.0
  %2466 = vmatprep.subr.mxu0 0.0
  %2467 = vmatpush1.msra.mxu0 0.0
  %2468 = vmatprep.subr.mxu0 0.0
  %2469 = vmatpush1.msra.mxu0 0.0
  %2470 = vmatprep.subr.mxu0 0.0
  %2471 = vmatpush1.msra.mxu0 0.0
  %2472 = vmatprep.subr.mxu0 0.0
  %2473 = vmatpush1.msra.mxu0 0.0
  %2474 = vmatprep.subr.mxu0 0.0
  %2475 = vmatpush1.msra.mxu0 0.0
  %2476 = vmatprep.subr.mxu0 0.0
  %2477 = vmatpush1.msra.mxu0 0.0
  %2478 = vmatprep.subr.mxu0 0.0
  %2479 = vmatpush1.msra.mxu0 0.0
  %2480 = vmatprep.subr.mxu0 0.0
  %2481 = vmatpush1.msra.mxu0 0.0
  %2482 = vmatprep.subr.mxu0 0.0
  %2483 = vmatpush1.msra.mxu0 0.0
  %2484 = vmatprep.subr.mxu0 0.0
  %2485 = vmatpush1.msra.mxu0 0.0
  %2486 = vmatprep.subr.mxu0 0.0
  %2487 = vmatpush1.msra.mxu0 0.0
  %2488 = vmatprep.subr.mxu0 0.0
  %2489 = vmatpush1.msra.mxu0 0.0
  %2490 = vmatprep.subr.mxu0 0.0
  %2491 = vmatpush1.msra.mxu0 0.0
  %2492 = vmatprep.subr.mxu0 0.0
  %2493 = vmatpush1.msra.mxu0 0.0
  %2494 = vmatprep.subr.mxu0 0.0
  %2495 = vmatpush1.msra.mxu0 0.0
  %2496 = vmatprep.mubr.f32.mxu0 0.0
  %v2497 = vand.u32 %v1796, 4294901760
  %2498 = vmatmul.mubr.f32.gmra.mrb[0].mxu0 %v2497
  %v2499 = vpop.f32.mrb[0].mxu0
  %v2500 = vadd.f32 %v2386, %v2499
  %v2501 = vpop.f32.mrb[0].mxu0
  %2502 = vmatprep.mubr.f32.mxu0 0.0
  %v2503 = vand.u32 %v1796, 4294901760
  %2504 = vmatmul.mubr.f32.gmra.mrb[0].mxu0 %v2503
  %v2505 = vpop.f32.mrb[0].mxu0
  %v2506 = vadd.f32 %v2392, %v2505
  %v2507 = vpop.f32.mrb[0].mxu0
  %2508 = vmatprep.mubr.f32.mxu0 0.0
  %v2509 = vand.u32 %v1796, 4294901760
  %2510 = vmatmul.mubr.f32.gmra.mrb[0].mxu0 %v2509
  %v2511 = vpop.f32.mrb[0].mxu0
  %v2512 = vadd.f32 %v2398, %v2511
  %v2513 = vpop.f32.mrb[0].mxu0
  %2514 = vmatprep.mubr.f32.mxu0 0.0
  %v2515 = vand.u32 %v1796, 4294901760
  %2516 = vmatmul.mubr.f32.gmra.mrb[0].mxu0 %v2515
  %v2517 = vpop.f32.mrb[0].mxu0
  %v2518 = vadd.f32 %v2404, %v2517
  %v2519 = vpop.f32.mrb[0].mxu0
  %2520 = vmatprep.mubr.f32.mxu0 0.0
  %v2521 = vand.u32 %v1796, 4294901760
  %2522 = vmatmul.mubr.f32.gmra.mrb[0].mxu0 %v2521
  %v2523 = vpop.f32.mrb[0].mxu0
  %v2524 = vadd.f32 %v2410, %v2523
  %v2525 = vpop.f32.mrb[0].mxu0
  %2526 = vmatprep.mubr.f32.mxu0 0.0
  %v2527 = vand.u32 %v1796, 4294901760
  %2528 = vmatmul.mubr.f32.gmra.mrb[0].mxu0 %v2527
  %v2529 = vpop.f32.mrb[0].mxu0
  %v2530 = vadd.f32 %v2416, %v2529
  %v2531 = vpop.f32.mrb[0].mxu0
  %2532 = vmatprep.mubr.f32.mxu0 0.0
  %v2533 = vand.u32 %v1796, 4294901760
  %2534 = vmatmul.mubr.f32.gmra.mrb[0].mxu0 %v2533
  %v2535 = vpop.f32.mrb[0].mxu0
  %v2536 = vadd.f32 %v2422, %v2535
  %v2537 = vpop.f32.mrb[0].mxu0
  %2538 = vmatprep.mubr.f32.mxu0 0.0
  %v2539 = vand.u32 %v1796, 4294901760
  %2540 = vmatmul.mubr.f32.gmra.mrb[0].mxu0 %v2539
  %v2541 = vpop.f32.mrb[0].mxu0
  %v2542 = vadd.f32 %v2428, %v2541
  %v2543 = vpop.f32.mrb[0].mxu0
  %2544 = vdwg.mxu0
  %v2545 = vmul.f32 %v2500, 0.1
  %v2546 = vmul.f32 %v2506, 0.1
  %v2547 = vmul.f32 %v2512, 0.1
  %v2548 = vmul.f32 %v2518, 0.1
  %v2549 = vmul.f32 %v2524, 0.1
  %v2550 = vmul.f32 %v2530, 0.1
  %v2551 = vmul.f32 %v2536, 0.1
  %v2552 = vmul.f32 %v2542, 0.1
  %v2553 = vadd.f32 %v1782, %v2545
  %v2554 = vadd.f32 %v1782, %v2546
  %v2555 = vadd.f32 %v1782, %v2547
  %v2556 = vadd.f32 %v1782, %v2548
  %v2557 = vadd.f32 %v1782, %v2549
  %v2558 = vadd.f32 %v1782, %v2550
  %v2559 = vadd.f32 %v1782, %v2551
  %v2560 = vadd.f32 %v1782, %v2552
  %v2561 = vsub.f32 %v2553, %v1778
  %v2562 = vsub.f32 %v2554, %v1778
  %v2563 = vsub.f32 %v2555, %v1778
  %v2564 = vsub.f32 %v2556, %v1778
  %v2565 = vsub.f32 %v2557, %v1778
  %v2566 = vsub.f32 %v2558, %v1778
  %v2567 = vsub.f32 %v2559, %v1778
  %v2568 = vsub.f32 %v2560, %v1778
  %v2569 = vmul.f32 %v2561, %v2561
  %v2570 = vmul.f32 %v2562, %v2562
  %v2571 = vmul.f32 %v2563, %v2563
  %v2572 = vmul.f32 %v2564, %v2564
  %v2573 = vmul.f32 %v2565, %v2565
  %v2574 = vmul.f32 %v2566, %v2566
  %v2575 = vmul.f32 %v2567, %v2567
  %v2576 = vmul.f32 %v2568, %v2568
  %v2577 = vadd.f32 %v1785, %v2569
  %v2578 = vadd.f32 %v1785, %v2570
  %v2579 = vadd.f32 %v1785, %v2571
  %v2580 = vadd.f32 %v1785, %v2572
  %v2581 = vadd.f32 %v1785, %v2573
  %v2582 = vadd.f32 %v1785, %v2574
  %v2583 = vadd.f32 %v1785, %v2575
  %v2584 = vadd.f32 %v1785, %v2576
  %2593 = vrot.lane.b32.xlu0 %v1786, 120
  %v2594 = vpop.permute.xlu0 %2593
  %2595 = vrot.lane.b32.xlu0 %v1787, 120
  %v2596 = vpop.permute.xlu0 %2595
  %2597 = vrot.lane.b32.xlu0 %v1788, 120
  %v2598 = vpop.permute.xlu0 %2597
  %2599 = vrot.lane.b32.xlu0 %v1789, 120
  %v2600 = vpop.permute.xlu0 %2599
  %2601 = vrot.lane.b32.xlu0 %v1790, 120
  %v2602 = vpop.permute.xlu0 %2601
  %2603 = vrot.lane.b32.xlu0 %v1791, 120
  %v2604 = vpop.permute.xlu0 %2603
  %2605 = vrot.lane.b32.xlu0 %v1792, 120
  %v2606 = vpop.permute.xlu0 %2605
  %2607 = vrot.lane.b32.xlu0 %v1793, 120
  %v2608 = vpop.permute.xlu0 %2607
  %v2618 = vsel %vm1795, %v2553, 0
  %v2621 = vsel %vm1795, %v2554, 0
  %v2624 = vsel %vm1795, %v2555, 0
  %v2627 = vsel %vm1795, %v2556, 0
  %v2630 = vsel %vm1795, %v2557, 0
  %v2633 = vsel %vm1795, %v2558, 0
  %v2636 = vsel %vm1795, %v2559, 0
  %v2639 = vsel %vm1795, %v2560, 0
  %2641 = vmatprep.subr.mxu0 0.0
  %v2642 = vand.u32 %v17, 4294901760
  %2643 = vmatpush1.msra.mxu0 %v2642
  %2644 = vmatprep.subr.mxu0 0.0
  %2645 = vmatpush1.msra.mxu0 0.0
  %2646 = vmatprep.subr.mxu0 0.0
  %2647 = vmatpush1.msra.mxu0 0.0
  %2648 = vmatprep.subr.mxu0 0.0
  %2649 = vmatpush1.msra.mxu0 0.0
  %2650 = vmatprep.subr.mxu0 0.0
  %2651 = vmatpush1.msra.mxu0 0.0
  %2652 = vmatprep.subr.mxu0 0.0
  %2653 = vmatpush1.msra.mxu0 0.0
  %2654 = vmatprep.subr.mxu0 0.0
  %2655 = vmatpush1.msra.mxu0 0.0
  %2656 = vmatprep.subr.mxu0 0.0
  %2657 = vmatpush1.msra.mxu0 0.0
  %2658 = vmatprep.subr.mxu0 0.0
  %2659 = vmatpush1.msra.mxu0 0.0
  %2660 = vmatprep.subr.mxu0 0.0
  %2661 = vmatpush1.msra.mxu0 0.0
  %2662 = vmatprep.subr.mxu0 0.0
  %2663 = vmatpush1.msra.mxu0 0.0
  %2664 = vmatprep.subr.mxu0 0.0
  %2665 = vmatpush1.msra.mxu0 0.0
  %2666 = vmatprep.subr.mxu0 0.0
  %2667 = vmatpush1.msra.mxu0 0.0
  %2668 = vmatprep.subr.mxu0 0.0
  %2669 = vmatpush1.msra.mxu0 0.0
  %2670 = vmatprep.subr.mxu0 0.0
  %2671 = vmatpush1.msra.mxu0 0.0
  %2672 = vmatprep.subr.mxu0 0.0
  %2673 = vmatpush1.msra.mxu0 0.0
  %2674 = vmatprep.subr.mxu0 0.0
  %2675 = vmatpush1.msra.mxu0 0.0
  %2676 = vmatprep.subr.mxu0 0.0
  %2677 = vmatpush1.msra.mxu0 0.0
  %2678 = vmatprep.subr.mxu0 0.0
  %2679 = vmatpush1.msra.mxu0 0.0
  %2680 = vmatprep.subr.mxu0 0.0
  %2681 = vmatpush1.msra.mxu0 0.0
  %2682 = vmatprep.subr.mxu0 0.0
  %2683 = vmatpush1.msra.mxu0 0.0
  %2684 = vmatprep.subr.mxu0 0.0
  %2685 = vmatpush1.msra.mxu0 0.0
  %2686 = vmatprep.subr.mxu0 0.0
  %2687 = vmatpush1.msra.mxu0 0.0
  %2688 = vmatprep.subr.mxu0 0.0
  %2689 = vmatpush1.msra.mxu0 0.0
  %2690 = vmatprep.subr.mxu0 0.0
  %2691 = vmatpush1.msra.mxu0 0.0
  %2692 = vmatprep.subr.mxu0 0.0
  %2693 = vmatpush1.msra.mxu0 0.0
  %2694 = vmatprep.subr.mxu0 0.0
  %2695 = vmatpush1.msra.mxu0 0.0
  %2696 = vmatprep.subr.mxu0 0.0
  %2697 = vmatpush1.msra.mxu0 0.0
  %2698 = vmatprep.subr.mxu0 0.0
  %2699 = vmatpush1.msra.mxu0 0.0
  %2700 = vmatprep.subr.mxu0 0.0
  %2701 = vmatpush1.msra.mxu0 0.0
  %2702 = vmatprep.subr.mxu0 0.0
  %2703 = vmatpush1.msra.mxu0 0.0
  %2704 = vmatprep.subr.mxu0 0.0
  %2705 = vmatpush1.msra.mxu0 0.0
  %2706 = vmatprep.mubr.f32.mxu0 0.0
  %v2707 = vand.u32 %v2618, 4294901760
  %v2708 = vsub.f32 %v2618, %v2707
  %v2709 = vand.u32 %v2708, 4294901760
  %v2710 = vsub.f32 %v2708, %v2709
  %v2711 = vand.u32 %v2710, 4294901760
  %2712 = vmatmul.mubr.f32.gmra.mrb[0].mxu0 %v2711
  %v2713 = vpop.f32.mrb[0].mxu0
  %v2714 = vadd.f32 %v2594, %v2713
  %v2715 = vpop.f32.mrb[0].mxu0
  %2716 = vmatprep.mubr.f32.mxu0 0.0
  %v2717 = vand.u32 %v2621, 4294901760
  %v2718 = vsub.f32 %v2621, %v2717
  %v2719 = vand.u32 %v2718, 4294901760
  %v2720 = vsub.f32 %v2718, %v2719
  %v2721 = vand.u32 %v2720, 4294901760
  %2722 = vmatmul.mubr.f32.gmra.mrb[0].mxu0 %v2721
  %v2723 = vpop.f32.mrb[0].mxu0
  %v2724 = vadd.f32 %v2596, %v2723
  %v2725 = vpop.f32.mrb[0].mxu0
  %2726 = vmatprep.mubr.f32.mxu0 0.0
  %v2727 = vand.u32 %v2624, 4294901760
  %v2728 = vsub.f32 %v2624, %v2727
  %v2729 = vand.u32 %v2728, 4294901760
  %v2730 = vsub.f32 %v2728, %v2729
  %v2731 = vand.u32 %v2730, 4294901760
  %2732 = vmatmul.mubr.f32.gmra.mrb[0].mxu0 %v2731
  %v2733 = vpop.f32.mrb[0].mxu0
  %v2734 = vadd.f32 %v2598, %v2733
  %v2735 = vpop.f32.mrb[0].mxu0
  %2736 = vmatprep.mubr.f32.mxu0 0.0
  %v2737 = vand.u32 %v2627, 4294901760
  %v2738 = vsub.f32 %v2627, %v2737
  %v2739 = vand.u32 %v2738, 4294901760
  %v2740 = vsub.f32 %v2738, %v2739
  %v2741 = vand.u32 %v2740, 4294901760
  %2742 = vmatmul.mubr.f32.gmra.mrb[0].mxu0 %v2741
  %v2743 = vpop.f32.mrb[0].mxu0
  %v2744 = vadd.f32 %v2600, %v2743
  %v2745 = vpop.f32.mrb[0].mxu0
  %2746 = vmatprep.mubr.f32.mxu0 0.0
  %v2747 = vand.u32 %v2630, 4294901760
  %v2748 = vsub.f32 %v2630, %v2747
  %v2749 = vand.u32 %v2748, 4294901760
  %v2750 = vsub.f32 %v2748, %v2749
  %v2751 = vand.u32 %v2750, 4294901760
  %2752 = vmatmul.mubr.f32.gmra.mrb[0].mxu0 %v2751
  %v2753 = vpop.f32.mrb[0].mxu0
  %v2754 = vadd.f32 %v2602, %v2753
  %v2755 = vpop.f32.mrb[0].mxu0
  %2756 = vmatprep.mubr.f32.mxu0 0.0
  %v2757 = vand.u32 %v2633, 4294901760
  %v2758 = vsub.f32 %v2633, %v2757
  %v2759 = vand.u32 %v2758, 4294901760
  %v2760 = vsub.f32 %v2758, %v2759
  %v2761 = vand.u32 %v2760, 4294901760
  %2762 = vmatmul.mubr.f32.gmra.mrb[0].mxu0 %v2761
  %v2763 = vpop.f32.mrb[0].mxu0
  %v2764 = vadd.f32 %v2604, %v2763
  %v2765 = vpop.f32.mrb[0].mxu0
  %2766 = vmatprep.mubr.f32.mxu0 0.0
  %v2767 = vand.u32 %v2636, 4294901760
  %v2768 = vsub.f32 %v2636, %v2767
  %v2769 = vand.u32 %v2768, 4294901760
  %v2770 = vsub.f32 %v2768, %v2769
  %v2771 = vand.u32 %v2770, 4294901760
  %2772 = vmatmul.mubr.f32.gmra.mrb[0].mxu0 %v2771
  %v2773 = vpop.f32.mrb[0].mxu0
  %v2774 = vadd.f32 %v2606, %v2773
  %v2775 = vpop.f32.mrb[0].mxu0
  %2776 = vmatprep.mubr.f32.mxu0 0.0
  %v2777 = vand.u32 %v2639, 4294901760
  %v2778 = vsub.f32 %v2639, %v2777
  %v2779 = vand.u32 %v2778, 4294901760
  %v2780 = vsub.f32 %v2778, %v2779
  %v2781 = vand.u32 %v2780, 4294901760
  %2782 = vmatmul.mubr.f32.gmra.mrb[0].mxu0 %v2781
  %v2783 = vpop.f32.mrb[0].mxu0
  %v2784 = vadd.f32 %v2608, %v2783
  %v2785 = vpop.f32.mrb[0].mxu0
  %2786 = vdwg.mxu0
  %2787 = vmatprep.subr.mxu0 0.0
  %v2788 = vand.u32 %v17, 4294901760
  %v2789 = vsub.f32 %v17, %v2788
  %v2790 = vand.u32 %v2789, 4294901760
  %v2791 = vsub.f32 %v2789, %v2790
  %v2792 = vand.u32 %v2791, 4294901760
  %2793 = vmatpush1.msra.mxu0 %v2792
  %2794 = vmatprep.subr.mxu0 0.0
  %2795 = vmatpush1.msra.mxu0 0.0
  %2796 = vmatprep.subr.mxu0 0.0
  %2797 = vmatpush1.msra.mxu0 0.0
  %2798 = vmatprep.subr.mxu0 0.0
  %2799 = vmatpush1.msra.mxu0 0.0
  %2800 = vmatprep.subr.mxu0 0.0
  %2801 = vmatpush1.msra.mxu0 0.0
  %2802 = vmatprep.subr.mxu0 0.0
  %2803 = vmatpush1.msra.mxu0 0.0
  %2804 = vmatprep.subr.mxu0 0.0
  %2805 = vmatpush1.msra.mxu0 0.0
  %2806 = vmatprep.subr.mxu0 0.0
  %2807 = vmatpush1.msra.mxu0 0.0
  %2808 = vmatprep.subr.mxu0 0.0
  %2809 = vmatpush1.msra.mxu0 0.0
  %2810 = vmatprep.subr.mxu0 0.0
  %2811 = vmatpush1.msra.mxu0 0.0
  %2812 = vmatprep.subr.mxu0 0.0
  %2813 = vmatpush1.msra.mxu0 0.0
  %2814 = vmatprep.subr.mxu0 0.0
  %2815 = vmatpush1.msra.mxu0 0.0
  %2816 = vmatprep.subr.mxu0 0.0
  %2817 = vmatpush1.msra.mxu0 0.0
  %2818 = vmatprep.subr.mxu0 0.0
  %2819 = vmatpush1.msra.mxu0 0.0
  %2820 = vmatprep.subr.mxu0 0.0
  %2821 = vmatpush1.msra.mxu0 0.0
  %2822 = vmatprep.subr.mxu0 0.0
  %2823 = vmatpush1.msra.mxu0 0.0
  %2824 = vmatprep.subr.mxu0 0.0
  %2825 = vmatpush1.msra.mxu0 0.0
  %2826 = vmatprep.subr.mxu0 0.0
  %2827 = vmatpush1.msra.mxu0 0.0
  %2828 = vmatprep.subr.mxu0 0.0
  %2829 = vmatpush1.msra.mxu0 0.0
  %2830 = vmatprep.subr.mxu0 0.0
  %2831 = vmatpush1.msra.mxu0 0.0
  %2832 = vmatprep.subr.mxu0 0.0
  %2833 = vmatpush1.msra.mxu0 0.0
  %2834 = vmatprep.subr.mxu0 0.0
  %2835 = vmatpush1.msra.mxu0 0.0
  %2836 = vmatprep.subr.mxu0 0.0
  %2837 = vmatpush1.msra.mxu0 0.0
  %2838 = vmatprep.subr.mxu0 0.0
  %2839 = vmatpush1.msra.mxu0 0.0
  %2840 = vmatprep.subr.mxu0 0.0
  %2841 = vmatpush1.msra.mxu0 0.0
  %2842 = vmatprep.subr.mxu0 0.0
  %2843 = vmatpush1.msra.mxu0 0.0
  %2844 = vmatprep.subr.mxu0 0.0
  %2845 = vmatpush1.msra.mxu0 0.0
  %2846 = vmatprep.subr.mxu0 0.0
  %2847 = vmatpush1.msra.mxu0 0.0
  %2848 = vmatprep.subr.mxu0 0.0
  %2849 = vmatpush1.msra.mxu0 0.0
  %2850 = vmatprep.subr.mxu0 0.0
  %2851 = vmatpush1.msra.mxu0 0.0
  %2852 = vmatprep.subr.mxu0 0.0
  %2853 = vmatpush1.msra.mxu0 0.0
  %2854 = vmatprep.subr.mxu0 0.0
  %2855 = vmatpush1.msra.mxu0 0.0
  %2856 = vmatprep.mubr.f32.mxu0 0.0
  %v2857 = vand.u32 %v2618, 4294901760
  %2858 = vmatmul.mubr.f32.gmra.mrb[0].mxu0 %v2857
  %v2859 = vpop.f32.mrb[0].mxu0
  %v2860 = vadd.f32 %v2714, %v2859
  %v2861 = vpop.f32.mrb[0].mxu0
  %2862 = vmatprep.mubr.f32.mxu0 0.0
  %v2863 = vand.u32 %v2621, 4294901760
  %2864 = vmatmul.mubr.f32.gmra.mrb[0].mxu0 %v2863
  %v2865 = vpop.f32.mrb[0].mxu0
  %v2866 = vadd.f32 %v2724, %v2865
  %v2867 = vpop.f32.mrb[0].mxu0
  %2868 = vmatprep.mubr.f32.mxu0 0.0
  %v2869 = vand.u32 %v2624, 4294901760
  %2870 = vmatmul.mubr.f32.gmra.mrb[0].mxu0 %v2869
  %v2871 = vpop.f32.mrb[0].mxu0
  %v2872 = vadd.f32 %v2734, %v2871
  %v2873 = vpop.f32.mrb[0].mxu0
  %2874 = vmatprep.mubr.f32.mxu0 0.0
  %v2875 = vand.u32 %v2627, 4294901760
  %2876 = vmatmul.mubr.f32.gmra.mrb[0].mxu0 %v2875
  %v2877 = vpop.f32.mrb[0].mxu0
  %v2878 = vadd.f32 %v2744, %v2877
  %v2879 = vpop.f32.mrb[0].mxu0
  %2880 = vmatprep.mubr.f32.mxu0 0.0
  %v2881 = vand.u32 %v2630, 4294901760
  %2882 = vmatmul.mubr.f32.gmra.mrb[0].mxu0 %v2881
  %v2883 = vpop.f32.mrb[0].mxu0
  %v2884 = vadd.f32 %v2754, %v2883
  %v2885 = vpop.f32.mrb[0].mxu0
  %2886 = vmatprep.mubr.f32.mxu0 0.0
  %v2887 = vand.u32 %v2633, 4294901760
  %2888 = vmatmul.mubr.f32.gmra.mrb[0].mxu0 %v2887
  %v2889 = vpop.f32.mrb[0].mxu0
  %v2890 = vadd.f32 %v2764, %v2889
  %v2891 = vpop.f32.mrb[0].mxu0
  %2892 = vmatprep.mubr.f32.mxu0 0.0
  %v2893 = vand.u32 %v2636, 4294901760
  %2894 = vmatmul.mubr.f32.gmra.mrb[0].mxu0 %v2893
  %v2895 = vpop.f32.mrb[0].mxu0
  %v2896 = vadd.f32 %v2774, %v2895
  %v2897 = vpop.f32.mrb[0].mxu0
  %2898 = vmatprep.mubr.f32.mxu0 0.0
  %v2899 = vand.u32 %v2639, 4294901760
  %2900 = vmatmul.mubr.f32.gmra.mrb[0].mxu0 %v2899
  %v2901 = vpop.f32.mrb[0].mxu0
  %v2902 = vadd.f32 %v2784, %v2901
  %v2903 = vpop.f32.mrb[0].mxu0
  %2904 = vdwg.mxu0
  %2905 = vmatprep.subr.mxu0 0.0
  %v2906 = vand.u32 %v17, 4294901760
  %v2907 = vsub.f32 %v17, %v2906
  %2908 = vmatpush1.msra.mxu0 %v2907
  %2909 = vmatprep.subr.mxu0 0.0
  %2910 = vmatpush1.msra.mxu0 0.0
  %2911 = vmatprep.subr.mxu0 0.0
  %2912 = vmatpush1.msra.mxu0 0.0
  %2913 = vmatprep.subr.mxu0 0.0
  %2914 = vmatpush1.msra.mxu0 0.0
  %2915 = vmatprep.subr.mxu0 0.0
  %2916 = vmatpush1.msra.mxu0 0.0
  %2917 = vmatprep.subr.mxu0 0.0
  %2918 = vmatpush1.msra.mxu0 0.0
  %2919 = vmatprep.subr.mxu0 0.0
  %2920 = vmatpush1.msra.mxu0 0.0
  %2921 = vmatprep.subr.mxu0 0.0
  %2922 = vmatpush1.msra.mxu0 0.0
  %2923 = vmatprep.subr.mxu0 0.0
  %2924 = vmatpush1.msra.mxu0 0.0
  %2925 = vmatprep.subr.mxu0 0.0
  %2926 = vmatpush1.msra.mxu0 0.0
  %2927 = vmatprep.subr.mxu0 0.0
  %2928 = vmatpush1.msra.mxu0 0.0
  %2929 = vmatprep.subr.mxu0 0.0
  %2930 = vmatpush1.msra.mxu0 0.0
  %2931 = vmatprep.subr.mxu0 0.0
  %2932 = vmatpush1.msra.mxu0 0.0
  %2933 = vmatprep.subr.mxu0 0.0
  %2934 = vmatpush1.msra.mxu0 0.0
  %2935 = vmatprep.subr.mxu0 0.0
  %2936 = vmatpush1.msra.mxu0 0.0
  %2937 = vmatprep.subr.mxu0 0.0
  %2938 = vmatpush1.msra.mxu0 0.0
  %2939 = vmatprep.subr.mxu0 0.0
  %2940 = vmatpush1.msra.mxu0 0.0
  %2941 = vmatprep.subr.mxu0 0.0
  %2942 = vmatpush1.msra.mxu0 0.0
  %2943 = vmatprep.subr.mxu0 0.0
  %2944 = vmatpush1.msra.mxu0 0.0
  %2945 = vmatprep.subr.mxu0 0.0
  %2946 = vmatpush1.msra.mxu0 0.0
  %2947 = vmatprep.subr.mxu0 0.0
  %2948 = vmatpush1.msra.mxu0 0.0
  %2949 = vmatprep.subr.mxu0 0.0
  %2950 = vmatpush1.msra.mxu0 0.0
  %2951 = vmatprep.subr.mxu0 0.0
  %2952 = vmatpush1.msra.mxu0 0.0
  %2953 = vmatprep.subr.mxu0 0.0
  %2954 = vmatpush1.msra.mxu0 0.0
  %2955 = vmatprep.subr.mxu0 0.0
  %2956 = vmatpush1.msra.mxu0 0.0
  %2957 = vmatprep.subr.mxu0 0.0
  %2958 = vmatpush1.msra.mxu0 0.0
  %2959 = vmatprep.subr.mxu0 0.0
  %2960 = vmatpush1.msra.mxu0 0.0
  %2961 = vmatprep.subr.mxu0 0.0
  %2962 = vmatpush1.msra.mxu0 0.0
  %2963 = vmatprep.subr.mxu0 0.0
  %2964 = vmatpush1.msra.mxu0 0.0
  %2965 = vmatprep.subr.mxu0 0.0
  %2966 = vmatpush1.msra.mxu0 0.0
  %2967 = vmatprep.subr.mxu0 0.0
  %2968 = vmatpush1.msra.mxu0 0.0
  %2969 = vmatprep.subr.mxu0 0.0
  %2970 = vmatpush1.msra.mxu0 0.0
  %2971 = vmatprep.mubr.f32.mxu0 0.0
  %v2972 = vand.u32 %v2618, 4294901760
  %v2973 = vsub.f32 %v2618, %v2972
  %2974 = vmatmul.mubr.f32.gmra.mrb[0].mxu0 %v2973
  %v2975 = vpop.f32.mrb[0].mxu0
  %v2976 = vadd.f32 %v2860, %v2975
  %v2977 = vpop.f32.mrb[0].mxu0
  %2978 = vmatprep.mubr.f32.mxu0 0.0
  %v2979 = vand.u32 %v2621, 4294901760
  %v2980 = vsub.f32 %v2621, %v2979
  %2981 = vmatmul.mubr.f32.gmra.mrb[0].mxu0 %v2980
  %v2982 = vpop.f32.mrb[0].mxu0
  %v2983 = vadd.f32 %v2866, %v2982
  %v2984 = vpop.f32.mrb[0].mxu0
  %2985 = vmatprep.mubr.f32.mxu0 0.0
  %v2986 = vand.u32 %v2624, 4294901760
  %v2987 = vsub.f32 %v2624, %v2986
  %2988 = vmatmul.mubr.f32.gmra.mrb[0].mxu0 %v2987
  %v2989 = vpop.f32.mrb[0].mxu0
  %v2990 = vadd.f32 %v2872, %v2989
  %v2991 = vpop.f32.mrb[0].mxu0
  %2992 = vmatprep.mubr.f32.mxu0 0.0
  %v2993 = vand.u32 %v2627, 4294901760
  %v2994 = vsub.f32 %v2627, %v2993
  %2995 = vmatmul.mubr.f32.gmra.mrb[0].mxu0 %v2994
  %v2996 = vpop.f32.mrb[0].mxu0
  %v2997 = vadd.f32 %v2878, %v2996
  %v2998 = vpop.f32.mrb[0].mxu0
  %2999 = vmatprep.mubr.f32.mxu0 0.0
  %v3000 = vand.u32 %v2630, 4294901760
  %v3001 = vsub.f32 %v2630, %v3000
  %3002 = vmatmul.mubr.f32.gmra.mrb[0].mxu0 %v3001
  %v3003 = vpop.f32.mrb[0].mxu0
  %v3004 = vadd.f32 %v2884, %v3003
  %v3005 = vpop.f32.mrb[0].mxu0
  %3006 = vmatprep.mubr.f32.mxu0 0.0
  %v3007 = vand.u32 %v2633, 4294901760
  %v3008 = vsub.f32 %v2633, %v3007
  %3009 = vmatmul.mubr.f32.gmra.mrb[0].mxu0 %v3008
  %v3010 = vpop.f32.mrb[0].mxu0
  %v3011 = vadd.f32 %v2890, %v3010
  %v3012 = vpop.f32.mrb[0].mxu0
  %3013 = vmatprep.mubr.f32.mxu0 0.0
  %v3014 = vand.u32 %v2636, 4294901760
  %v3015 = vsub.f32 %v2636, %v3014
  %3016 = vmatmul.mubr.f32.gmra.mrb[0].mxu0 %v3015
  %v3017 = vpop.f32.mrb[0].mxu0
  %v3018 = vadd.f32 %v2896, %v3017
  %v3019 = vpop.f32.mrb[0].mxu0
  %3020 = vmatprep.mubr.f32.mxu0 0.0
  %v3021 = vand.u32 %v2639, 4294901760
  %v3022 = vsub.f32 %v2639, %v3021
  %3023 = vmatmul.mubr.f32.gmra.mrb[0].mxu0 %v3022
  %v3024 = vpop.f32.mrb[0].mxu0
  %v3025 = vadd.f32 %v2902, %v3024
  %v3026 = vpop.f32.mrb[0].mxu0
  %3027 = vdwg.mxu0
  %3028 = vmatprep.subr.mxu0 0.0
  %v3029 = vand.u32 %v17, 4294901760
  %3030 = vmatpush1.msra.mxu0 %v3029
  %3031 = vmatprep.subr.mxu0 0.0
  %3032 = vmatpush1.msra.mxu0 0.0
  %3033 = vmatprep.subr.mxu0 0.0
  %3034 = vmatpush1.msra.mxu0 0.0
  %3035 = vmatprep.subr.mxu0 0.0
  %3036 = vmatpush1.msra.mxu0 0.0
  %3037 = vmatprep.subr.mxu0 0.0
  %3038 = vmatpush1.msra.mxu0 0.0
  %3039 = vmatprep.subr.mxu0 0.0
  %3040 = vmatpush1.msra.mxu0 0.0
  %3041 = vmatprep.subr.mxu0 0.0
  %3042 = vmatpush1.msra.mxu0 0.0
  %3043 = vmatprep.subr.mxu0 0.0
  %3044 = vmatpush1.msra.mxu0 0.0
  %3045 = vmatprep.subr.mxu0 0.0
  %3046 = vmatpush1.msra.mxu0 0.0
  %3047 = vmatprep.subr.mxu0 0.0
  %3048 = vmatpush1.msra.mxu0 0.0
  %3049 = vmatprep.subr.mxu0 0.0
  %3050 = vmatpush1.msra.mxu0 0.0
  %3051 = vmatprep.subr.mxu0 0.0
  %3052 = vmatpush1.msra.mxu0 0.0
  %3053 = vmatprep.subr.mxu0 0.0
  %3054 = vmatpush1.msra.mxu0 0.0
  %3055 = vmatprep.subr.mxu0 0.0
  %3056 = vmatpush1.msra.mxu0 0.0
  %3057 = vmatprep.subr.mxu0 0.0
  %3058 = vmatpush1.msra.mxu0 0.0
  %3059 = vmatprep.subr.mxu0 0.0
  %3060 = vmatpush1.msra.mxu0 0.0
  %3061 = vmatprep.subr.mxu0 0.0
  %3062 = vmatpush1.msra.mxu0 0.0
  %3063 = vmatprep.subr.mxu0 0.0
  %3064 = vmatpush1.msra.mxu0 0.0
  %3065 = vmatprep.subr.mxu0 0.0
  %3066 = vmatpush1.msra.mxu0 0.0
  %3067 = vmatprep.subr.mxu0 0.0
  %3068 = vmatpush1.msra.mxu0 0.0
  %3069 = vmatprep.subr.mxu0 0.0
  %3070 = vmatpush1.msra.mxu0 0.0
  %3071 = vmatprep.subr.mxu0 0.0
  %3072 = vmatpush1.msra.mxu0 0.0
  %3073 = vmatprep.subr.mxu0 0.0
  %3074 = vmatpush1.msra.mxu0 0.0
  %3075 = vmatprep.subr.mxu0 0.0
  %3076 = vmatpush1.msra.mxu0 0.0
  %3077 = vmatprep.subr.mxu0 0.0
  %3078 = vmatpush1.msra.mxu0 0.0
  %3079 = vmatprep.subr.mxu0 0.0
  %3080 = vmatpush1.msra.mxu0 0.0
  %3081 = vmatprep.subr.mxu0 0.0
  %3082 = vmatpush1.msra.mxu0 0.0
  %3083 = vmatprep.subr.mxu0 0.0
  %3084 = vmatpush1.msra.mxu0 0.0
  %3085 = vmatprep.subr.mxu0 0.0
  %3086 = vmatpush1.msra.mxu0 0.0
  %3087 = vmatprep.subr.mxu0 0.0
  %3088 = vmatpush1.msra.mxu0 0.0
  %3089 = vmatprep.subr.mxu0 0.0
  %3090 = vmatpush1.msra.mxu0 0.0
  %3091 = vmatprep.subr.mxu0 0.0
  %3092 = vmatpush1.msra.mxu0 0.0
  %3093 = vmatprep.mubr.f32.mxu0 0.0
  %v3094 = vand.u32 %v2618, 4294901760
  %v3095 = vsub.f32 %v2618, %v3094
  %v3096 = vand.u32 %v3095, 4294901760
  %3097 = vmatmul.mubr.f32.gmra.mrb[0].mxu0 %v3096
  %v3098 = vpop.f32.mrb[0].mxu0
  %v3099 = vadd.f32 %v2976, %v3098
  %v3100 = vpop.f32.mrb[0].mxu0
  %3101 = vmatprep.mubr.f32.mxu0 0.0
  %v3102 = vand.u32 %v2621, 4294901760
  %v3103 = vsub.f32 %v2621, %v3102
  %v3104 = vand.u32 %v3103, 4294901760
  %3105 = vmatmul.mubr.f32.gmra.mrb[0].mxu0 %v3104
  %v3106 = vpop.f32.mrb[0].mxu0
  %v3107 = vadd.f32 %v2983, %v3106
  %v3108 = vpop.f32.mrb[0].mxu0
  %3109 = vmatprep.mubr.f32.mxu0 0.0
  %v3110 = vand.u32 %v2624, 4294901760
  %v3111 = vsub.f32 %v2624, %v3110
  %v3112 = vand.u32 %v3111, 4294901760
  %3113 = vmatmul.mubr.f32.gmra.mrb[0].mxu0 %v3112
  %v3114 = vpop.f32.mrb[0].mxu0
  %v3115 = vadd.f32 %v2990, %v3114
  %v3116 = vpop.f32.mrb[0].mxu0
  %3117 = vmatprep.mubr.f32.mxu0 0.0
  %v3118 = vand.u32 %v2627, 4294901760
  %v3119 = vsub.f32 %v2627, %v3118
  %v3120 = vand.u32 %v3119, 4294901760
  %3121 = vmatmul.mubr.f32.gmra.mrb[0].mxu0 %v3120
  %v3122 = vpop.f32.mrb[0].mxu0
  %v3123 = vadd.f32 %v2997, %v3122
  %v3124 = vpop.f32.mrb[0].mxu0
  %3125 = vmatprep.mubr.f32.mxu0 0.0
  %v3126 = vand.u32 %v2630, 4294901760
  %v3127 = vsub.f32 %v2630, %v3126
  %v3128 = vand.u32 %v3127, 4294901760
  %3129 = vmatmul.mubr.f32.gmra.mrb[0].mxu0 %v3128
  %v3130 = vpop.f32.mrb[0].mxu0
  %v3131 = vadd.f32 %v3004, %v3130
  %v3132 = vpop.f32.mrb[0].mxu0
  %3133 = vmatprep.mubr.f32.mxu0 0.0
  %v3134 = vand.u32 %v2633, 4294901760
  %v3135 = vsub.f32 %v2633, %v3134
  %v3136 = vand.u32 %v3135, 4294901760
  %3137 = vmatmul.mubr.f32.gmra.mrb[0].mxu0 %v3136
  %v3138 = vpop.f32.mrb[0].mxu0
  %v3139 = vadd.f32 %v3011, %v3138
  %v3140 = vpop.f32.mrb[0].mxu0
  %3141 = vmatprep.mubr.f32.mxu0 0.0
  %v3142 = vand.u32 %v2636, 4294901760
  %v3143 = vsub.f32 %v2636, %v3142
  %v3144 = vand.u32 %v3143, 4294901760
  %3145 = vmatmul.mubr.f32.gmra.mrb[0].mxu0 %v3144
  %v3146 = vpop.f32.mrb[0].mxu0
  %v3147 = vadd.f32 %v3018, %v3146
  %v3148 = vpop.f32.mrb[0].mxu0
  %3149 = vmatprep.mubr.f32.mxu0 0.0
  %v3150 = vand.u32 %v2639, 4294901760
  %v3151 = vsub.f32 %v2639, %v3150
  %v3152 = vand.u32 %v3151, 4294901760
  %3153 = vmatmul.mubr.f32.gmra.mrb[0].mxu0 %v3152
  %v3154 = vpop.f32.mrb[0].mxu0
  %v3155 = vadd.f32 %v3025, %v3154
  %v3156 = vpop.f32.mrb[0].mxu0
  %3157 = vdwg.mxu0
  %3158 = vmatprep.subr.mxu0 0.0
  %v3159 = vand.u32 %v17, 4294901760
  %v3160 = vsub.f32 %v17, %v3159
  %v3161 = vand.u32 %v3160, 4294901760
  %3162 = vmatpush1.msra.mxu0 %v3161
  %3163 = vmatprep.subr.mxu0 0.0
  %3164 = vmatpush1.msra.mxu0 0.0
  %3165 = vmatprep.subr.mxu0 0.0
  %3166 = vmatpush1.msra.mxu0 0.0
  %3167 = vmatprep.subr.mxu0 0.0
  %3168 = vmatpush1.msra.mxu0 0.0
  %3169 = vmatprep.subr.mxu0 0.0
  %3170 = vmatpush1.msra.mxu0 0.0
  %3171 = vmatprep.subr.mxu0 0.0
  %3172 = vmatpush1.msra.mxu0 0.0
  %3173 = vmatprep.subr.mxu0 0.0
  %3174 = vmatpush1.msra.mxu0 0.0
  %3175 = vmatprep.subr.mxu0 0.0
  %3176 = vmatpush1.msra.mxu0 0.0
  %3177 = vmatprep.subr.mxu0 0.0
  %3178 = vmatpush1.msra.mxu0 0.0
  %3179 = vmatprep.subr.mxu0 0.0
  %3180 = vmatpush1.msra.mxu0 0.0
  %3181 = vmatprep.subr.mxu0 0.0
  %3182 = vmatpush1.msra.mxu0 0.0
  %3183 = vmatprep.subr.mxu0 0.0
  %3184 = vmatpush1.msra.mxu0 0.0
  %3185 = vmatprep.subr.mxu0 0.0
  %3186 = vmatpush1.msra.mxu0 0.0
  %3187 = vmatprep.subr.mxu0 0.0
  %3188 = vmatpush1.msra.mxu0 0.0
  %3189 = vmatprep.subr.mxu0 0.0
  %3190 = vmatpush1.msra.mxu0 0.0
  %3191 = vmatprep.subr.mxu0 0.0
  %3192 = vmatpush1.msra.mxu0 0.0
  %3193 = vmatprep.subr.mxu0 0.0
  %3194 = vmatpush1.msra.mxu0 0.0
  %3195 = vmatprep.subr.mxu0 0.0
  %3196 = vmatpush1.msra.mxu0 0.0
  %3197 = vmatprep.subr.mxu0 0.0
  %3198 = vmatpush1.msra.mxu0 0.0
  %3199 = vmatprep.subr.mxu0 0.0
  %3200 = vmatpush1.msra.mxu0 0.0
  %3201 = vmatprep.subr.mxu0 0.0
  %3202 = vmatpush1.msra.mxu0 0.0
  %3203 = vmatprep.subr.mxu0 0.0
  %3204 = vmatpush1.msra.mxu0 0.0
  %3205 = vmatprep.subr.mxu0 0.0
  %3206 = vmatpush1.msra.mxu0 0.0
  %3207 = vmatprep.subr.mxu0 0.0
  %3208 = vmatpush1.msra.mxu0 0.0
  %3209 = vmatprep.subr.mxu0 0.0
  %3210 = vmatpush1.msra.mxu0 0.0
  %3211 = vmatprep.subr.mxu0 0.0
  %3212 = vmatpush1.msra.mxu0 0.0
  %3213 = vmatprep.subr.mxu0 0.0
  %3214 = vmatpush1.msra.mxu0 0.0
  %3215 = vmatprep.subr.mxu0 0.0
  %3216 = vmatpush1.msra.mxu0 0.0
  %3217 = vmatprep.subr.mxu0 0.0
  %3218 = vmatpush1.msra.mxu0 0.0
  %3219 = vmatprep.subr.mxu0 0.0
  %3220 = vmatpush1.msra.mxu0 0.0
  %3221 = vmatprep.subr.mxu0 0.0
  %3222 = vmatpush1.msra.mxu0 0.0
  %3223 = vmatprep.subr.mxu0 0.0
  %3224 = vmatpush1.msra.mxu0 0.0
  %3225 = vmatprep.mubr.f32.mxu0 0.0
  %v3226 = vand.u32 %v2618, 4294901760
  %3227 = vmatmul.mubr.f32.gmra.mrb[0].mxu0 %v3226
  %v3228 = vpop.f32.mrb[0].mxu0
  %v3229 = vadd.f32 %v3099, %v3228
  %v3230 = vpop.f32.mrb[0].mxu0
  %3231 = vmatprep.mubr.f32.mxu0 0.0
  %v3232 = vand.u32 %v2621, 4294901760
  %3233 = vmatmul.mubr.f32.gmra.mrb[0].mxu0 %v3232
  %v3234 = vpop.f32.mrb[0].mxu0
  %v3235 = vadd.f32 %v3107, %v3234
  %v3236 = vpop.f32.mrb[0].mxu0
  %3237 = vmatprep.mubr.f32.mxu0 0.0
  %v3238 = vand.u32 %v2624, 4294901760
  %3239 = vmatmul.mubr.f32.gmra.mrb[0].mxu0 %v3238
  %v3240 = vpop.f32.mrb[0].mxu0
  %v3241 = vadd.f32 %v3115, %v3240
  %v3242 = vpop.f32.mrb[0].mxu0
  %3243 = vmatprep.mubr.f32.mxu0 0.0
  %v3244 = vand.u32 %v2627, 4294901760
  %3245 = vmatmul.mubr.f32.gmra.mrb[0].mxu0 %v3244
  %v3246 = vpop.f32.mrb[0].mxu0
  %v3247 = vadd.f32 %v3123, %v3246
  %v3248 = vpop.f32.mrb[0].mxu0
  %3249 = vmatprep.mubr.f32.mxu0 0.0
  %v3250 = vand.u32 %v2630, 4294901760
  %3251 = vmatmul.mubr.f32.gmra.mrb[0].mxu0 %v3250
  %v3252 = vpop.f32.mrb[0].mxu0
  %v3253 = vadd.f32 %v3131, %v3252
  %v3254 = vpop.f32.mrb[0].mxu0
  %3255 = vmatprep.mubr.f32.mxu0 0.0
  %v3256 = vand.u32 %v2633, 4294901760
  %3257 = vmatmul.mubr.f32.gmra.mrb[0].mxu0 %v3256
  %v3258 = vpop.f32.mrb[0].mxu0
  %v3259 = vadd.f32 %v3139, %v3258
  %v3260 = vpop.f32.mrb[0].mxu0
  %3261 = vmatprep.mubr.f32.mxu0 0.0
  %v3262 = vand.u32 %v2636, 4294901760
  %3263 = vmatmul.mubr.f32.gmra.mrb[0].mxu0 %v3262
  %v3264 = vpop.f32.mrb[0].mxu0
  %v3265 = vadd.f32 %v3147, %v3264
  %v3266 = vpop.f32.mrb[0].mxu0
  %3267 = vmatprep.mubr.f32.mxu0 0.0
  %v3268 = vand.u32 %v2639, 4294901760
  %3269 = vmatmul.mubr.f32.gmra.mrb[0].mxu0 %v3268
  %v3270 = vpop.f32.mrb[0].mxu0
  %v3271 = vadd.f32 %v3155, %v3270
  %v3272 = vpop.f32.mrb[0].mxu0
  %3273 = vdwg.mxu0
  %3274 = vmatprep.subr.mxu0 0.0
  %v3275 = vand.u32 %v17, 4294901760
  %3276 = vmatpush1.msra.mxu0 %v3275
  %3277 = vmatprep.subr.mxu0 0.0
  %3278 = vmatpush1.msra.mxu0 0.0
  %3279 = vmatprep.subr.mxu0 0.0
  %3280 = vmatpush1.msra.mxu0 0.0
  %3281 = vmatprep.subr.mxu0 0.0
  %3282 = vmatpush1.msra.mxu0 0.0
  %3283 = vmatprep.subr.mxu0 0.0
  %3284 = vmatpush1.msra.mxu0 0.0
  %3285 = vmatprep.subr.mxu0 0.0
  %3286 = vmatpush1.msra.mxu0 0.0
  %3287 = vmatprep.subr.mxu0 0.0
  %3288 = vmatpush1.msra.mxu0 0.0
  %3289 = vmatprep.subr.mxu0 0.0
  %3290 = vmatpush1.msra.mxu0 0.0
  %3291 = vmatprep.subr.mxu0 0.0
  %3292 = vmatpush1.msra.mxu0 0.0
  %3293 = vmatprep.subr.mxu0 0.0
  %3294 = vmatpush1.msra.mxu0 0.0
  %3295 = vmatprep.subr.mxu0 0.0
  %3296 = vmatpush1.msra.mxu0 0.0
  %3297 = vmatprep.subr.mxu0 0.0
  %3298 = vmatpush1.msra.mxu0 0.0
  %3299 = vmatprep.subr.mxu0 0.0
  %3300 = vmatpush1.msra.mxu0 0.0
  %3301 = vmatprep.subr.mxu0 0.0
  %3302 = vmatpush1.msra.mxu0 0.0
  %3303 = vmatprep.subr.mxu0 0.0
  %3304 = vmatpush1.msra.mxu0 0.0
  %3305 = vmatprep.subr.mxu0 0.0
  %3306 = vmatpush1.msra.mxu0 0.0
  %3307 = vmatprep.subr.mxu0 0.0
  %3308 = vmatpush1.msra.mxu0 0.0
  %3309 = vmatprep.subr.mxu0 0.0
  %3310 = vmatpush1.msra.mxu0 0.0
  %3311 = vmatprep.subr.mxu0 0.0
  %3312 = vmatpush1.msra.mxu0 0.0
  %3313 = vmatprep.subr.mxu0 0.0
  %3314 = vmatpush1.msra.mxu0 0.0
  %3315 = vmatprep.subr.mxu0 0.0
  %3316 = vmatpush1.msra.mxu0 0.0
  %3317 = vmatprep.subr.mxu0 0.0
  %3318 = vmatpush1.msra.mxu0 0.0
  %3319 = vmatprep.subr.mxu0 0.0
  %3320 = vmatpush1.msra.mxu0 0.0
  %3321 = vmatprep.subr.mxu0 0.0
  %3322 = vmatpush1.msra.mxu0 0.0
  %3323 = vmatprep.subr.mxu0 0.0
  %3324 = vmatpush1.msra.mxu0 0.0
  %3325 = vmatprep.subr.mxu0 0.0
  %3326 = vmatpush1.msra.mxu0 0.0
  %3327 = vmatprep.subr.mxu0 0.0
  %3328 = vmatpush1.msra.mxu0 0.0
  %3329 = vmatprep.subr.mxu0 0.0
  %3330 = vmatpush1.msra.mxu0 0.0
  %3331 = vmatprep.subr.mxu0 0.0
  %3332 = vmatpush1.msra.mxu0 0.0
  %3333 = vmatprep.subr.mxu0 0.0
  %3334 = vmatpush1.msra.mxu0 0.0
  %3335 = vmatprep.subr.mxu0 0.0
  %3336 = vmatpush1.msra.mxu0 0.0
  %3337 = vmatprep.subr.mxu0 0.0
  %3338 = vmatpush1.msra.mxu0 0.0
  %3339 = vmatprep.mubr.f32.mxu0 0.0
  %v3340 = vand.u32 %v2618, 4294901760
  %3341 = vmatmul.mubr.f32.gmra.mrb[0].mxu0 %v3340
  %v3342 = vpop.f32.mrb[0].mxu0
  %v3343 = vadd.f32 %v3229, %v3342
  %v3344 = vpop.f32.mrb[0].mxu0
  %3345 = vmatprep.mubr.f32.mxu0 0.0
  %v3346 = vand.u32 %v2621, 4294901760
  %3347 = vmatmul.mubr.f32.gmra.mrb[0].mxu0 %v3346
  %v3348 = vpop.f32.mrb[0].mxu0
  %v3349 = vadd.f32 %v3235, %v3348
  %v3350 = vpop.f32.mrb[0].mxu0
  %3351 = vmatprep.mubr.f32.mxu0 0.0
  %v3352 = vand.u32 %v2624, 4294901760
  %3353 = vmatmul.mubr.f32.gmra.mrb[0].mxu0 %v3352
  %v3354 = vpop.f32.mrb[0].mxu0
  %v3355 = vadd.f32 %v3241, %v3354
  %v3356 = vpop.f32.mrb[0].mxu0
  %3357 = vmatprep.mubr.f32.mxu0 0.0
  %v3358 = vand.u32 %v2627, 4294901760
  %3359 = vmatmul.mubr.f32.gmra.mrb[0].mxu0 %v3358
  %v3360 = vpop.f32.mrb[0].mxu0
  %v3361 = vadd.f32 %v3247, %v3360
  %v3362 = vpop.f32.mrb[0].mxu0
  %3363 = vmatprep.mubr.f32.mxu0 0.0
  %v3364 = vand.u32 %v2630, 4294901760
  %3365 = vmatmul.mubr.f32.gmra.mrb[0].mxu0 %v3364
  %v3366 = vpop.f32.mrb[0].mxu0
  %v3367 = vadd.f32 %v3253, %v3366
  %v3368 = vpop.f32.mrb[0].mxu0
  %3369 = vmatprep.mubr.f32.mxu0 0.0
  %v3370 = vand.u32 %v2633, 4294901760
  %3371 = vmatmul.mubr.f32.gmra.mrb[0].mxu0 %v3370
  %v3372 = vpop.f32.mrb[0].mxu0
  %v3373 = vadd.f32 %v3259, %v3372
  %v3374 = vpop.f32.mrb[0].mxu0
  %3375 = vmatprep.mubr.f32.mxu0 0.0
  %v3376 = vand.u32 %v2636, 4294901760
  %3377 = vmatmul.mubr.f32.gmra.mrb[0].mxu0 %v3376
  %v3378 = vpop.f32.mrb[0].mxu0
  %v3379 = vadd.f32 %v3265, %v3378
  %v3380 = vpop.f32.mrb[0].mxu0
  %3381 = vmatprep.mubr.f32.mxu0 0.0
  %v3382 = vand.u32 %v2639, 4294901760
  %3383 = vmatmul.mubr.f32.gmra.mrb[0].mxu0 %v3382
  %v3384 = vpop.f32.mrb[0].mxu0
  %v3385 = vadd.f32 %v3271, %v3384
  %v3386 = vpop.f32.mrb[0].mxu0
  %3387 = vdwg.mxu0
  %v3388 = vmul.f32 %v3343, 0.1
  %v3389 = vmul.f32 %v3349, 0.1
  %v3390 = vmul.f32 %v3355, 0.1
  %v3391 = vmul.f32 %v3361, 0.1
  %v3392 = vmul.f32 %v3367, 0.1
  %v3393 = vmul.f32 %v3373, 0.1
  %v3394 = vmul.f32 %v3379, 0.1
  %v3395 = vmul.f32 %v3385, 0.1
  %v3396 = vadd.f32 %v2553, %v3388
  %v3397 = vadd.f32 %v2554, %v3389
  %v3398 = vadd.f32 %v2555, %v3390
  %v3399 = vadd.f32 %v2556, %v3391
  %v3400 = vadd.f32 %v2557, %v3392
  %v3401 = vadd.f32 %v2558, %v3393
  %v3402 = vadd.f32 %v2559, %v3394
  %v3403 = vadd.f32 %v2560, %v3395
  %v3404 = vsub.f32 %v3396, %v1778
  %v3405 = vsub.f32 %v3397, %v1778
  %v3406 = vsub.f32 %v3398, %v1778
  %v3407 = vsub.f32 %v3399, %v1778
  %v3408 = vsub.f32 %v3400, %v1778
  %v3409 = vsub.f32 %v3401, %v1778
  %v3410 = vsub.f32 %v3402, %v1778
  %v3411 = vsub.f32 %v3403, %v1778
  %v3412 = vmul.f32 %v3404, %v3404
  %v3413 = vmul.f32 %v3405, %v3405
  %v3414 = vmul.f32 %v3406, %v3406
  %v3415 = vmul.f32 %v3407, %v3407
  %v3416 = vmul.f32 %v3408, %v3408
  %v3417 = vmul.f32 %v3409, %v3409
  %v3418 = vmul.f32 %v3410, %v3410
  %v3419 = vmul.f32 %v3411, %v3411
  %v3420 = vadd.f32 %v2577, %v3412
  %v3421 = vadd.f32 %v2578, %v3413
  %v3422 = vadd.f32 %v2579, %v3414
  %v3423 = vadd.f32 %v2580, %v3415
  %v3424 = vadd.f32 %v2581, %v3416
  %v3425 = vadd.f32 %v2582, %v3417
  %v3426 = vadd.f32 %v2583, %v3418
  %v3427 = vadd.f32 %v2584, %v3419
  %3428 = vrot.lane.b32.xlu0 %v1786, 112
  %v3429 = vpop.permute.xlu0 %3428
  %3430 = vrot.lane.b32.xlu0 %v1787, 112
  %v3431 = vpop.permute.xlu0 %3430
  %3432 = vrot.lane.b32.xlu0 %v1788, 112
  %v3433 = vpop.permute.xlu0 %3432
  %3434 = vrot.lane.b32.xlu0 %v1789, 112
  %v3435 = vpop.permute.xlu0 %3434
  %3436 = vrot.lane.b32.xlu0 %v1790, 112
  %v3437 = vpop.permute.xlu0 %3436
  %3438 = vrot.lane.b32.xlu0 %v1791, 112
  %v3439 = vpop.permute.xlu0 %3438
  %3440 = vrot.lane.b32.xlu0 %v1792, 112
  %v3441 = vpop.permute.xlu0 %3440
  %3442 = vrot.lane.b32.xlu0 %v1793, 112
  %v3443 = vpop.permute.xlu0 %3442
  %v3453 = vsel %vm1795, %v3396, 0
  %v3456 = vsel %vm1795, %v3397, 0
  %v3459 = vsel %vm1795, %v3398, 0
  %v3462 = vsel %vm1795, %v3399, 0
  %v3465 = vsel %vm1795, %v3400, 0
  %v3468 = vsel %vm1795, %v3401, 0
  %v3471 = vsel %vm1795, %v3402, 0
  %v3474 = vsel %vm1795, %v3403, 0
  %3476 = vmatprep.subr.mxu0 0.0
  %v3477 = vand.u32 %v17, 4294901760
  %3478 = vmatpush1.msra.mxu0 %v3477
  %3479 = vmatprep.subr.mxu0 0.0
  %3480 = vmatpush1.msra.mxu0 0.0
  %3481 = vmatprep.subr.mxu0 0.0
  %3482 = vmatpush1.msra.mxu0 0.0
  %3483 = vmatprep.subr.mxu0 0.0
  %3484 = vmatpush1.msra.mxu0 0.0
  %3485 = vmatprep.subr.mxu0 0.0
  %3486 = vmatpush1.msra.mxu0 0.0
  %3487 = vmatprep.subr.mxu0 0.0
  %3488 = vmatpush1.msra.mxu0 0.0
  %3489 = vmatprep.subr.mxu0 0.0
  %3490 = vmatpush1.msra.mxu0 0.0
  %3491 = vmatprep.subr.mxu0 0.0
  %3492 = vmatpush1.msra.mxu0 0.0
  %3493 = vmatprep.subr.mxu0 0.0
  %3494 = vmatpush1.msra.mxu0 0.0
  %3495 = vmatprep.subr.mxu0 0.0
  %3496 = vmatpush1.msra.mxu0 0.0
  %3497 = vmatprep.subr.mxu0 0.0
  %3498 = vmatpush1.msra.mxu0 0.0
  %3499 = vmatprep.subr.mxu0 0.0
  %3500 = vmatpush1.msra.mxu0 0.0
  %3501 = vmatprep.subr.mxu0 0.0
  %3502 = vmatpush1.msra.mxu0 0.0
  %3503 = vmatprep.subr.mxu0 0.0
  %3504 = vmatpush1.msra.mxu0 0.0
  %3505 = vmatprep.subr.mxu0 0.0
  %3506 = vmatpush1.msra.mxu0 0.0
  %3507 = vmatprep.subr.mxu0 0.0
  %3508 = vmatpush1.msra.mxu0 0.0
  %3509 = vmatprep.subr.mxu0 0.0
  %3510 = vmatpush1.msra.mxu0 0.0
  %3511 = vmatprep.subr.mxu0 0.0
  %3512 = vmatpush1.msra.mxu0 0.0
  %3513 = vmatprep.subr.mxu0 0.0
  %3514 = vmatpush1.msra.mxu0 0.0
  %3515 = vmatprep.subr.mxu0 0.0
  %3516 = vmatpush1.msra.mxu0 0.0
  %3517 = vmatprep.subr.mxu0 0.0
  %3518 = vmatpush1.msra.mxu0 0.0
  %3519 = vmatprep.subr.mxu0 0.0
  %3520 = vmatpush1.msra.mxu0 0.0
  %3521 = vmatprep.subr.mxu0 0.0
  %3522 = vmatpush1.msra.mxu0 0.0
  %3523 = vmatprep.subr.mxu0 0.0
  %3524 = vmatpush1.msra.mxu0 0.0
  %3525 = vmatprep.subr.mxu0 0.0
  %3526 = vmatpush1.msra.mxu0 0.0
  %3527 = vmatprep.subr.mxu0 0.0
  %3528 = vmatpush1.msra.mxu0 0.0
  %3529 = vmatprep.subr.mxu0 0.0
  %3530 = vmatpush1.msra.mxu0 0.0
  %3531 = vmatprep.subr.mxu0 0.0
  %3532 = vmatpush1.msra.mxu0 0.0
  %3533 = vmatprep.subr.mxu0 0.0
  %3534 = vmatpush1.msra.mxu0 0.0
  %3535 = vmatprep.subr.mxu0 0.0
  %3536 = vmatpush1.msra.mxu0 0.0
  %3537 = vmatprep.subr.mxu0 0.0
  %3538 = vmatpush1.msra.mxu0 0.0
  %3539 = vmatprep.subr.mxu0 0.0
  %3540 = vmatpush1.msra.mxu0 0.0
  %3541 = vmatprep.mubr.f32.mxu0 0.0
  %v3542 = vand.u32 %v3453, 4294901760
  %v3543 = vsub.f32 %v3453, %v3542
  %v3544 = vand.u32 %v3543, 4294901760
  %v3545 = vsub.f32 %v3543, %v3544
  %v3546 = vand.u32 %v3545, 4294901760
  %3547 = vmatmul.mubr.f32.gmra.mrb[0].mxu0 %v3546
  %v3548 = vpop.f32.mrb[0].mxu0
  %v3549 = vadd.f32 %v3429, %v3548
  %v3550 = vpop.f32.mrb[0].mxu0
  %3551 = vmatprep.mubr.f32.mxu0 0.0
  %v3552 = vand.u32 %v3456, 4294901760
  %v3553 = vsub.f32 %v3456, %v3552
  %v3554 = vand.u32 %v3553, 4294901760
  %v3555 = vsub.f32 %v3553, %v3554
  %v3556 = vand.u32 %v3555, 4294901760
  %3557 = vmatmul.mubr.f32.gmra.mrb[0].mxu0 %v3556
  %v3558 = vpop.f32.mrb[0].mxu0
  %v3559 = vadd.f32 %v3431, %v3558
  %v3560 = vpop.f32.mrb[0].mxu0
  %3561 = vmatprep.mubr.f32.mxu0 0.0
  %v3562 = vand.u32 %v3459, 4294901760
  %v3563 = vsub.f32 %v3459, %v3562
  %v3564 = vand.u32 %v3563, 4294901760
  %v3565 = vsub.f32 %v3563, %v3564
  %v3566 = vand.u32 %v3565, 4294901760
  %3567 = vmatmul.mubr.f32.gmra.mrb[0].mxu0 %v3566
  %v3568 = vpop.f32.mrb[0].mxu0
  %v3569 = vadd.f32 %v3433, %v3568
  %v3570 = vpop.f32.mrb[0].mxu0
  %3571 = vmatprep.mubr.f32.mxu0 0.0
  %v3572 = vand.u32 %v3462, 4294901760
  %v3573 = vsub.f32 %v3462, %v3572
  %v3574 = vand.u32 %v3573, 4294901760
  %v3575 = vsub.f32 %v3573, %v3574
  %v3576 = vand.u32 %v3575, 4294901760
  %3577 = vmatmul.mubr.f32.gmra.mrb[0].mxu0 %v3576
  %v3578 = vpop.f32.mrb[0].mxu0
  %v3579 = vadd.f32 %v3435, %v3578
  %v3580 = vpop.f32.mrb[0].mxu0
  %3581 = vmatprep.mubr.f32.mxu0 0.0
  %v3582 = vand.u32 %v3465, 4294901760
  %v3583 = vsub.f32 %v3465, %v3582
  %v3584 = vand.u32 %v3583, 4294901760
  %v3585 = vsub.f32 %v3583, %v3584
  %v3586 = vand.u32 %v3585, 4294901760
  %3587 = vmatmul.mubr.f32.gmra.mrb[0].mxu0 %v3586
  %v3588 = vpop.f32.mrb[0].mxu0
  %v3589 = vadd.f32 %v3437, %v3588
  %v3590 = vpop.f32.mrb[0].mxu0
  %3591 = vmatprep.mubr.f32.mxu0 0.0
  %v3592 = vand.u32 %v3468, 4294901760
  %v3593 = vsub.f32 %v3468, %v3592
  %v3594 = vand.u32 %v3593, 4294901760
  %v3595 = vsub.f32 %v3593, %v3594
  %v3596 = vand.u32 %v3595, 4294901760
  %3597 = vmatmul.mubr.f32.gmra.mrb[0].mxu0 %v3596
  %v3598 = vpop.f32.mrb[0].mxu0
  %v3599 = vadd.f32 %v3439, %v3598
  %v3600 = vpop.f32.mrb[0].mxu0
  %3601 = vmatprep.mubr.f32.mxu0 0.0
  %v3602 = vand.u32 %v3471, 4294901760
  %v3603 = vsub.f32 %v3471, %v3602
  %v3604 = vand.u32 %v3603, 4294901760
  %v3605 = vsub.f32 %v3603, %v3604
  %v3606 = vand.u32 %v3605, 4294901760
  %3607 = vmatmul.mubr.f32.gmra.mrb[0].mxu0 %v3606
  %v3608 = vpop.f32.mrb[0].mxu0
  %v3609 = vadd.f32 %v3441, %v3608
  %v3610 = vpop.f32.mrb[0].mxu0
  %3611 = vmatprep.mubr.f32.mxu0 0.0
  %v3612 = vand.u32 %v3474, 4294901760
  %v3613 = vsub.f32 %v3474, %v3612
  %v3614 = vand.u32 %v3613, 4294901760
  %v3615 = vsub.f32 %v3613, %v3614
  %v3616 = vand.u32 %v3615, 4294901760
  %3617 = vmatmul.mubr.f32.gmra.mrb[0].mxu0 %v3616
  %v3618 = vpop.f32.mrb[0].mxu0
  %v3619 = vadd.f32 %v3443, %v3618
  %v3620 = vpop.f32.mrb[0].mxu0
  %3621 = vdwg.mxu0
  %3622 = vmatprep.subr.mxu0 0.0
  %v3623 = vand.u32 %v17, 4294901760
  %v3624 = vsub.f32 %v17, %v3623
  %v3625 = vand.u32 %v3624, 4294901760
  %v3626 = vsub.f32 %v3624, %v3625
  %v3627 = vand.u32 %v3626, 4294901760
  %3628 = vmatpush1.msra.mxu0 %v3627
  %3629 = vmatprep.subr.mxu0 0.0
  %3630 = vmatpush1.msra.mxu0 0.0
  %3631 = vmatprep.subr.mxu0 0.0
  %3632 = vmatpush1.msra.mxu0 0.0
  %3633 = vmatprep.subr.mxu0 0.0
  %3634 = vmatpush1.msra.mxu0 0.0
  %3635 = vmatprep.subr.mxu0 0.0
  %3636 = vmatpush1.msra.mxu0 0.0
  %3637 = vmatprep.subr.mxu0 0.0
  %3638 = vmatpush1.msra.mxu0 0.0
  %3639 = vmatprep.subr.mxu0 0.0
  %3640 = vmatpush1.msra.mxu0 0.0
  %3641 = vmatprep.subr.mxu0 0.0
  %3642 = vmatpush1.msra.mxu0 0.0
  %3643 = vmatprep.subr.mxu0 0.0
  %3644 = vmatpush1.msra.mxu0 0.0
  %3645 = vmatprep.subr.mxu0 0.0
  %3646 = vmatpush1.msra.mxu0 0.0
  %3647 = vmatprep.subr.mxu0 0.0
  %3648 = vmatpush1.msra.mxu0 0.0
  %3649 = vmatprep.subr.mxu0 0.0
  %3650 = vmatpush1.msra.mxu0 0.0
  %3651 = vmatprep.subr.mxu0 0.0
  %3652 = vmatpush1.msra.mxu0 0.0
  %3653 = vmatprep.subr.mxu0 0.0
  %3654 = vmatpush1.msra.mxu0 0.0
  %3655 = vmatprep.subr.mxu0 0.0
  %3656 = vmatpush1.msra.mxu0 0.0
  %3657 = vmatprep.subr.mxu0 0.0
  %3658 = vmatpush1.msra.mxu0 0.0
  %3659 = vmatprep.subr.mxu0 0.0
  %3660 = vmatpush1.msra.mxu0 0.0
  %3661 = vmatprep.subr.mxu0 0.0
  %3662 = vmatpush1.msra.mxu0 0.0
  %3663 = vmatprep.subr.mxu0 0.0
  %3664 = vmatpush1.msra.mxu0 0.0
  %3665 = vmatprep.subr.mxu0 0.0
  %3666 = vmatpush1.msra.mxu0 0.0
  %3667 = vmatprep.subr.mxu0 0.0
  %3668 = vmatpush1.msra.mxu0 0.0
  %3669 = vmatprep.subr.mxu0 0.0
  %3670 = vmatpush1.msra.mxu0 0.0
  %3671 = vmatprep.subr.mxu0 0.0
  %3672 = vmatpush1.msra.mxu0 0.0
  %3673 = vmatprep.subr.mxu0 0.0
  %3674 = vmatpush1.msra.mxu0 0.0
  %3675 = vmatprep.subr.mxu0 0.0
  %3676 = vmatpush1.msra.mxu0 0.0
  %3677 = vmatprep.subr.mxu0 0.0
  %3678 = vmatpush1.msra.mxu0 0.0
  %3679 = vmatprep.subr.mxu0 0.0
  %3680 = vmatpush1.msra.mxu0 0.0
  %3681 = vmatprep.subr.mxu0 0.0
  %3682 = vmatpush1.msra.mxu0 0.0
  %3683 = vmatprep.subr.mxu0 0.0
  %3684 = vmatpush1.msra.mxu0 0.0
  %3685 = vmatprep.subr.mxu0 0.0
  %3686 = vmatpush1.msra.mxu0 0.0
  %3687 = vmatprep.subr.mxu0 0.0
  %3688 = vmatpush1.msra.mxu0 0.0
  %3689 = vmatprep.subr.mxu0 0.0
  %3690 = vmatpush1.msra.mxu0 0.0
  %3691 = vmatprep.mubr.f32.mxu0 0.0
  %v3692 = vand.u32 %v3453, 4294901760
  %3693 = vmatmul.mubr.f32.gmra.mrb[0].mxu0 %v3692
  %v3694 = vpop.f32.mrb[0].mxu0
  %v3695 = vadd.f32 %v3549, %v3694
  %v3696 = vpop.f32.mrb[0].mxu0
  %3697 = vmatprep.mubr.f32.mxu0 0.0
  %v3698 = vand.u32 %v3456, 4294901760
  %3699 = vmatmul.mubr.f32.gmra.mrb[0].mxu0 %v3698
  %v3700 = vpop.f32.mrb[0].mxu0
  %v3701 = vadd.f32 %v3559, %v3700
  %v3702 = vpop.f32.mrb[0].mxu0
  %3703 = vmatprep.mubr.f32.mxu0 0.0
  %v3704 = vand.u32 %v3459, 4294901760
  %3705 = vmatmul.mubr.f32.gmra.mrb[0].mxu0 %v3704
  %v3706 = vpop.f32.mrb[0].mxu0
  %v3707 = vadd.f32 %v3569, %v3706
  %v3708 = vpop.f32.mrb[0].mxu0
  %3709 = vmatprep.mubr.f32.mxu0 0.0
  %v3710 = vand.u32 %v3462, 4294901760
  %3711 = vmatmul.mubr.f32.gmra.mrb[0].mxu0 %v3710
  %v3712 = vpop.f32.mrb[0].mxu0
  %v3713 = vadd.f32 %v3579, %v3712
  %v3714 = vpop.f32.mrb[0].mxu0
  %3715 = vmatprep.mubr.f32.mxu0 0.0
  %v3716 = vand.u32 %v3465, 4294901760
  %3717 = vmatmul.mubr.f32.gmra.mrb[0].mxu0 %v3716
  %v3718 = vpop.f32.mrb[0].mxu0
  %v3719 = vadd.f32 %v3589, %v3718
  %v3720 = vpop.f32.mrb[0].mxu0
  %3721 = vmatprep.mubr.f32.mxu0 0.0
  %v3722 = vand.u32 %v3468, 4294901760
  %3723 = vmatmul.mubr.f32.gmra.mrb[0].mxu0 %v3722
  %v3724 = vpop.f32.mrb[0].mxu0
  %v3725 = vadd.f32 %v3599, %v3724
  %v3726 = vpop.f32.mrb[0].mxu0
  %3727 = vmatprep.mubr.f32.mxu0 0.0
  %v3728 = vand.u32 %v3471, 4294901760
  %3729 = vmatmul.mubr.f32.gmra.mrb[0].mxu0 %v3728
  %v3730 = vpop.f32.mrb[0].mxu0
  %v3731 = vadd.f32 %v3609, %v3730
  %v3732 = vpop.f32.mrb[0].mxu0
  %3733 = vmatprep.mubr.f32.mxu0 0.0
  %v3734 = vand.u32 %v3474, 4294901760
  %3735 = vmatmul.mubr.f32.gmra.mrb[0].mxu0 %v3734
  %v3736 = vpop.f32.mrb[0].mxu0
  %v3737 = vadd.f32 %v3619, %v3736
  %v3738 = vpop.f32.mrb[0].mxu0
  %3739 = vdwg.mxu0
  %3740 = vmatprep.subr.mxu0 0.0
  %v3741 = vand.u32 %v17, 4294901760
  %v3742 = vsub.f32 %v17, %v3741
  %3743 = vmatpush1.msra.mxu0 %v3742
  %3744 = vmatprep.subr.mxu0 0.0
  %3745 = vmatpush1.msra.mxu0 0.0
  %3746 = vmatprep.subr.mxu0 0.0
  %3747 = vmatpush1.msra.mxu0 0.0
  %3748 = vmatprep.subr.mxu0 0.0
  %3749 = vmatpush1.msra.mxu0 0.0
  %3750 = vmatprep.subr.mxu0 0.0
  %3751 = vmatpush1.msra.mxu0 0.0
  %3752 = vmatprep.subr.mxu0 0.0
  %3753 = vmatpush1.msra.mxu0 0.0
  %3754 = vmatprep.subr.mxu0 0.0
  %3755 = vmatpush1.msra.mxu0 0.0
  %3756 = vmatprep.subr.mxu0 0.0
  %3757 = vmatpush1.msra.mxu0 0.0
  %3758 = vmatprep.subr.mxu0 0.0
  %3759 = vmatpush1.msra.mxu0 0.0
  %3760 = vmatprep.subr.mxu0 0.0
  %3761 = vmatpush1.msra.mxu0 0.0
  %3762 = vmatprep.subr.mxu0 0.0
  %3763 = vmatpush1.msra.mxu0 0.0
  %3764 = vmatprep.subr.mxu0 0.0
  %3765 = vmatpush1.msra.mxu0 0.0
  %3766 = vmatprep.subr.mxu0 0.0
  %3767 = vmatpush1.msra.mxu0 0.0
  %3768 = vmatprep.subr.mxu0 0.0
  %3769 = vmatpush1.msra.mxu0 0.0
  %3770 = vmatprep.subr.mxu0 0.0
  %3771 = vmatpush1.msra.mxu0 0.0
  %3772 = vmatprep.subr.mxu0 0.0
  %3773 = vmatpush1.msra.mxu0 0.0
  %3774 = vmatprep.subr.mxu0 0.0
  %3775 = vmatpush1.msra.mxu0 0.0
  %3776 = vmatprep.subr.mxu0 0.0
  %3777 = vmatpush1.msra.mxu0 0.0
  %3778 = vmatprep.subr.mxu0 0.0
  %3779 = vmatpush1.msra.mxu0 0.0
  %3780 = vmatprep.subr.mxu0 0.0
  %3781 = vmatpush1.msra.mxu0 0.0
  %3782 = vmatprep.subr.mxu0 0.0
  %3783 = vmatpush1.msra.mxu0 0.0
  %3784 = vmatprep.subr.mxu0 0.0
  %3785 = vmatpush1.msra.mxu0 0.0
  %3786 = vmatprep.subr.mxu0 0.0
  %3787 = vmatpush1.msra.mxu0 0.0
  %3788 = vmatprep.subr.mxu0 0.0
  %3789 = vmatpush1.msra.mxu0 0.0
  %3790 = vmatprep.subr.mxu0 0.0
  %3791 = vmatpush1.msra.mxu0 0.0
  %3792 = vmatprep.subr.mxu0 0.0
  %3793 = vmatpush1.msra.mxu0 0.0
  %3794 = vmatprep.subr.mxu0 0.0
  %3795 = vmatpush1.msra.mxu0 0.0
  %3796 = vmatprep.subr.mxu0 0.0
  %3797 = vmatpush1.msra.mxu0 0.0
  %3798 = vmatprep.subr.mxu0 0.0
  %3799 = vmatpush1.msra.mxu0 0.0
  %3800 = vmatprep.subr.mxu0 0.0
  %3801 = vmatpush1.msra.mxu0 0.0
  %3802 = vmatprep.subr.mxu0 0.0
  %3803 = vmatpush1.msra.mxu0 0.0
  %3804 = vmatprep.subr.mxu0 0.0
  %3805 = vmatpush1.msra.mxu0 0.0
  %3806 = vmatprep.mubr.f32.mxu0 0.0
  %v3807 = vand.u32 %v3453, 4294901760
  %v3808 = vsub.f32 %v3453, %v3807
  %3809 = vmatmul.mubr.f32.gmra.mrb[0].mxu0 %v3808
  %v3810 = vpop.f32.mrb[0].mxu0
  %v3811 = vadd.f32 %v3695, %v3810
  %v3812 = vpop.f32.mrb[0].mxu0
  %3813 = vmatprep.mubr.f32.mxu0 0.0
  %v3814 = vand.u32 %v3456, 4294901760
  %v3815 = vsub.f32 %v3456, %v3814
  %3816 = vmatmul.mubr.f32.gmra.mrb[0].mxu0 %v3815
  %v3817 = vpop.f32.mrb[0].mxu0
  %v3818 = vadd.f32 %v3701, %v3817
  %v3819 = vpop.f32.mrb[0].mxu0
  %3820 = vmatprep.mubr.f32.mxu0 0.0
  %v3821 = vand.u32 %v3459, 4294901760
  %v3822 = vsub.f32 %v3459, %v3821
  %3823 = vmatmul.mubr.f32.gmra.mrb[0].mxu0 %v3822
  %v3824 = vpop.f32.mrb[0].mxu0
  %v3825 = vadd.f32 %v3707, %v3824
  %v3826 = vpop.f32.mrb[0].mxu0
  %3827 = vmatprep.mubr.f32.mxu0 0.0
  %v3828 = vand.u32 %v3462, 4294901760
  %v3829 = vsub.f32 %v3462, %v3828
  %3830 = vmatmul.mubr.f32.gmra.mrb[0].mxu0 %v3829
  %v3831 = vpop.f32.mrb[0].mxu0
  %v3832 = vadd.f32 %v3713, %v3831
  %v3833 = vpop.f32.mrb[0].mxu0
  %3834 = vmatprep.mubr.f32.mxu0 0.0
  %v3835 = vand.u32 %v3465, 4294901760
  %v3836 = vsub.f32 %v3465, %v3835
  %3837 = vmatmul.mubr.f32.gmra.mrb[0].mxu0 %v3836
  %v3838 = vpop.f32.mrb[0].mxu0
  %v3839 = vadd.f32 %v3719, %v3838
  %v3840 = vpop.f32.mrb[0].mxu0
  %3841 = vmatprep.mubr.f32.mxu0 0.0
  %v3842 = vand.u32 %v3468, 4294901760
  %v3843 = vsub.f32 %v3468, %v3842
  %3844 = vmatmul.mubr.f32.gmra.mrb[0].mxu0 %v3843
  %v3845 = vpop.f32.mrb[0].mxu0
  %v3846 = vadd.f32 %v3725, %v3845
  %v3847 = vpop.f32.mrb[0].mxu0
  %3848 = vmatprep.mubr.f32.mxu0 0.0
  %v3849 = vand.u32 %v3471, 4294901760
  %v3850 = vsub.f32 %v3471, %v3849
  %3851 = vmatmul.mubr.f32.gmra.mrb[0].mxu0 %v3850
  %v3852 = vpop.f32.mrb[0].mxu0
  %v3853 = vadd.f32 %v3731, %v3852
  %v3854 = vpop.f32.mrb[0].mxu0
  %3855 = vmatprep.mubr.f32.mxu0 0.0
  %v3856 = vand.u32 %v3474, 4294901760
  %v3857 = vsub.f32 %v3474, %v3856
  %3858 = vmatmul.mubr.f32.gmra.mrb[0].mxu0 %v3857
  %v3859 = vpop.f32.mrb[0].mxu0
  %v3860 = vadd.f32 %v3737, %v3859
  %v3861 = vpop.f32.mrb[0].mxu0
  %3862 = vdwg.mxu0
  %3863 = vmatprep.subr.mxu0 0.0
  %v3864 = vand.u32 %v17, 4294901760
  %3865 = vmatpush1.msra.mxu0 %v3864
  %3866 = vmatprep.subr.mxu0 0.0
  %3867 = vmatpush1.msra.mxu0 0.0
  %3868 = vmatprep.subr.mxu0 0.0
  %3869 = vmatpush1.msra.mxu0 0.0
  %3870 = vmatprep.subr.mxu0 0.0
  %3871 = vmatpush1.msra.mxu0 0.0
  %3872 = vmatprep.subr.mxu0 0.0
  %3873 = vmatpush1.msra.mxu0 0.0
  %3874 = vmatprep.subr.mxu0 0.0
  %3875 = vmatpush1.msra.mxu0 0.0
  %3876 = vmatprep.subr.mxu0 0.0
  %3877 = vmatpush1.msra.mxu0 0.0
  %3878 = vmatprep.subr.mxu0 0.0
  %3879 = vmatpush1.msra.mxu0 0.0
  %3880 = vmatprep.subr.mxu0 0.0
  %3881 = vmatpush1.msra.mxu0 0.0
  %3882 = vmatprep.subr.mxu0 0.0
  %3883 = vmatpush1.msra.mxu0 0.0
  %3884 = vmatprep.subr.mxu0 0.0
  %3885 = vmatpush1.msra.mxu0 0.0
  %3886 = vmatprep.subr.mxu0 0.0
  %3887 = vmatpush1.msra.mxu0 0.0
  %3888 = vmatprep.subr.mxu0 0.0
  %3889 = vmatpush1.msra.mxu0 0.0
  %3890 = vmatprep.subr.mxu0 0.0
  %3891 = vmatpush1.msra.mxu0 0.0
  %3892 = vmatprep.subr.mxu0 0.0
  %3893 = vmatpush1.msra.mxu0 0.0
  %3894 = vmatprep.subr.mxu0 0.0
  %3895 = vmatpush1.msra.mxu0 0.0
  %3896 = vmatprep.subr.mxu0 0.0
  %3897 = vmatpush1.msra.mxu0 0.0
  %3898 = vmatprep.subr.mxu0 0.0
  %3899 = vmatpush1.msra.mxu0 0.0
  %3900 = vmatprep.subr.mxu0 0.0
  %3901 = vmatpush1.msra.mxu0 0.0
  %3902 = vmatprep.subr.mxu0 0.0
  %3903 = vmatpush1.msra.mxu0 0.0
  %3904 = vmatprep.subr.mxu0 0.0
  %3905 = vmatpush1.msra.mxu0 0.0
  %3906 = vmatprep.subr.mxu0 0.0
  %3907 = vmatpush1.msra.mxu0 0.0
  %3908 = vmatprep.subr.mxu0 0.0
  %3909 = vmatpush1.msra.mxu0 0.0
  %3910 = vmatprep.subr.mxu0 0.0
  %3911 = vmatpush1.msra.mxu0 0.0
  %3912 = vmatprep.subr.mxu0 0.0
  %3913 = vmatpush1.msra.mxu0 0.0
  %3914 = vmatprep.subr.mxu0 0.0
  %3915 = vmatpush1.msra.mxu0 0.0
  %3916 = vmatprep.subr.mxu0 0.0
  %3917 = vmatpush1.msra.mxu0 0.0
  %3918 = vmatprep.subr.mxu0 0.0
  %3919 = vmatpush1.msra.mxu0 0.0
  %3920 = vmatprep.subr.mxu0 0.0
  %3921 = vmatpush1.msra.mxu0 0.0
  %3922 = vmatprep.subr.mxu0 0.0
  %3923 = vmatpush1.msra.mxu0 0.0
  %3924 = vmatprep.subr.mxu0 0.0
  %3925 = vmatpush1.msra.mxu0 0.0
  %3926 = vmatprep.subr.mxu0 0.0
  %3927 = vmatpush1.msra.mxu0 0.0
  %3928 = vmatprep.mubr.f32.mxu0 0.0
  %v3929 = vand.u32 %v3453, 4294901760
  %v3930 = vsub.f32 %v3453, %v3929
  %v3931 = vand.u32 %v3930, 4294901760
  %3932 = vmatmul.mubr.f32.gmra.mrb[0].mxu0 %v3931
  %v3933 = vpop.f32.mrb[0].mxu0
  %v3934 = vadd.f32 %v3811, %v3933
  %v3935 = vpop.f32.mrb[0].mxu0
  %3936 = vmatprep.mubr.f32.mxu0 0.0
  %v3937 = vand.u32 %v3456, 4294901760
  %v3938 = vsub.f32 %v3456, %v3937
  %v3939 = vand.u32 %v3938, 4294901760
  %3940 = vmatmul.mubr.f32.gmra.mrb[0].mxu0 %v3939
  %v3941 = vpop.f32.mrb[0].mxu0
  %v3942 = vadd.f32 %v3818, %v3941
  %v3943 = vpop.f32.mrb[0].mxu0
  %3944 = vmatprep.mubr.f32.mxu0 0.0
  %v3945 = vand.u32 %v3459, 4294901760
  %v3946 = vsub.f32 %v3459, %v3945
  %v3947 = vand.u32 %v3946, 4294901760
  %3948 = vmatmul.mubr.f32.gmra.mrb[0].mxu0 %v3947
  %v3949 = vpop.f32.mrb[0].mxu0
  %v3950 = vadd.f32 %v3825, %v3949
  %v3951 = vpop.f32.mrb[0].mxu0
  %3952 = vmatprep.mubr.f32.mxu0 0.0
  %v3953 = vand.u32 %v3462, 4294901760
  %v3954 = vsub.f32 %v3462, %v3953
  %v3955 = vand.u32 %v3954, 4294901760
  %3956 = vmatmul.mubr.f32.gmra.mrb[0].mxu0 %v3955
  %v3957 = vpop.f32.mrb[0].mxu0
  %v3958 = vadd.f32 %v3832, %v3957
  %v3959 = vpop.f32.mrb[0].mxu0
  %3960 = vmatprep.mubr.f32.mxu0 0.0
  %v3961 = vand.u32 %v3465, 4294901760
  %v3962 = vsub.f32 %v3465, %v3961
  %v3963 = vand.u32 %v3962, 4294901760
  %3964 = vmatmul.mubr.f32.gmra.mrb[0].mxu0 %v3963
  %v3965 = vpop.f32.mrb[0].mxu0
  %v3966 = vadd.f32 %v3839, %v3965
  %v3967 = vpop.f32.mrb[0].mxu0
  %3968 = vmatprep.mubr.f32.mxu0 0.0
  %v3969 = vand.u32 %v3468, 4294901760
  %v3970 = vsub.f32 %v3468, %v3969
  %v3971 = vand.u32 %v3970, 4294901760
  %3972 = vmatmul.mubr.f32.gmra.mrb[0].mxu0 %v3971
  %v3973 = vpop.f32.mrb[0].mxu0
  %v3974 = vadd.f32 %v3846, %v3973
  %v3975 = vpop.f32.mrb[0].mxu0
  %3976 = vmatprep.mubr.f32.mxu0 0.0
  %v3977 = vand.u32 %v3471, 4294901760
  %v3978 = vsub.f32 %v3471, %v3977
  %v3979 = vand.u32 %v3978, 4294901760
  %3980 = vmatmul.mubr.f32.gmra.mrb[0].mxu0 %v3979
  %v3981 = vpop.f32.mrb[0].mxu0
  %v3982 = vadd.f32 %v3853, %v3981
  %v3983 = vpop.f32.mrb[0].mxu0
  %3984 = vmatprep.mubr.f32.mxu0 0.0
  %v3985 = vand.u32 %v3474, 4294901760
  %v3986 = vsub.f32 %v3474, %v3985
  %v3987 = vand.u32 %v3986, 4294901760
  %3988 = vmatmul.mubr.f32.gmra.mrb[0].mxu0 %v3987
  %v3989 = vpop.f32.mrb[0].mxu0
  %v3990 = vadd.f32 %v3860, %v3989
  %v3991 = vpop.f32.mrb[0].mxu0
  %3992 = vdwg.mxu0
  %3993 = vmatprep.subr.mxu0 0.0
  %v3994 = vand.u32 %v17, 4294901760
  %v3995 = vsub.f32 %v17, %v3994
  %v3996 = vand.u32 %v3995, 4294901760
  %3997 = vmatpush1.msra.mxu0 %v3996
  %3998 = vmatprep.subr.mxu0 0.0
  %3999 = vmatpush1.msra.mxu0 0.0
  %4000 = vmatprep.subr.mxu0 0.0
  %4001 = vmatpush1.msra.mxu0 0.0
  %4002 = vmatprep.subr.mxu0 0.0
  %4003 = vmatpush1.msra.mxu0 0.0
  %4004 = vmatprep.subr.mxu0 0.0
  %4005 = vmatpush1.msra.mxu0 0.0
  %4006 = vmatprep.subr.mxu0 0.0
  %4007 = vmatpush1.msra.mxu0 0.0
  %4008 = vmatprep.subr.mxu0 0.0
  %4009 = vmatpush1.msra.mxu0 0.0
  %4010 = vmatprep.subr.mxu0 0.0
  %4011 = vmatpush1.msra.mxu0 0.0
  %4012 = vmatprep.subr.mxu0 0.0
  %4013 = vmatpush1.msra.mxu0 0.0
  %4014 = vmatprep.subr.mxu0 0.0
  %4015 = vmatpush1.msra.mxu0 0.0
  %4016 = vmatprep.subr.mxu0 0.0
  %4017 = vmatpush1.msra.mxu0 0.0
  %4018 = vmatprep.subr.mxu0 0.0
  %4019 = vmatpush1.msra.mxu0 0.0
  %4020 = vmatprep.subr.mxu0 0.0
  %4021 = vmatpush1.msra.mxu0 0.0
  %4022 = vmatprep.subr.mxu0 0.0
  %4023 = vmatpush1.msra.mxu0 0.0
  %4024 = vmatprep.subr.mxu0 0.0
  %4025 = vmatpush1.msra.mxu0 0.0
  %4026 = vmatprep.subr.mxu0 0.0
  %4027 = vmatpush1.msra.mxu0 0.0
  %4028 = vmatprep.subr.mxu0 0.0
  %4029 = vmatpush1.msra.mxu0 0.0
  %4030 = vmatprep.subr.mxu0 0.0
  %4031 = vmatpush1.msra.mxu0 0.0
  %4032 = vmatprep.subr.mxu0 0.0
  %4033 = vmatpush1.msra.mxu0 0.0
  %4034 = vmatprep.subr.mxu0 0.0
  %4035 = vmatpush1.msra.mxu0 0.0
  %4036 = vmatprep.subr.mxu0 0.0
  %4037 = vmatpush1.msra.mxu0 0.0
  %4038 = vmatprep.subr.mxu0 0.0
  %4039 = vmatpush1.msra.mxu0 0.0
  %4040 = vmatprep.subr.mxu0 0.0
  %4041 = vmatpush1.msra.mxu0 0.0
  %4042 = vmatprep.subr.mxu0 0.0
  %4043 = vmatpush1.msra.mxu0 0.0
  %4044 = vmatprep.subr.mxu0 0.0
  %4045 = vmatpush1.msra.mxu0 0.0
  %4046 = vmatprep.subr.mxu0 0.0
  %4047 = vmatpush1.msra.mxu0 0.0
  %4048 = vmatprep.subr.mxu0 0.0
  %4049 = vmatpush1.msra.mxu0 0.0
  %4050 = vmatprep.subr.mxu0 0.0
  %4051 = vmatpush1.msra.mxu0 0.0
  %4052 = vmatprep.subr.mxu0 0.0
  %4053 = vmatpush1.msra.mxu0 0.0
  %4054 = vmatprep.subr.mxu0 0.0
  %4055 = vmatpush1.msra.mxu0 0.0
  %4056 = vmatprep.subr.mxu0 0.0
  %4057 = vmatpush1.msra.mxu0 0.0
  %4058 = vmatprep.subr.mxu0 0.0
  %4059 = vmatpush1.msra.mxu0 0.0
  %4060 = vmatprep.mubr.f32.mxu0 0.0
  %v4061 = vand.u32 %v3453, 4294901760
  %4062 = vmatmul.mubr.f32.gmra.mrb[0].mxu0 %v4061
  %v4063 = vpop.f32.mrb[0].mxu0
  %v4064 = vadd.f32 %v3934, %v4063
  %v4065 = vpop.f32.mrb[0].mxu0
  %4066 = vmatprep.mubr.f32.mxu0 0.0
  %v4067 = vand.u32 %v3456, 4294901760
  %4068 = vmatmul.mubr.f32.gmra.mrb[0].mxu0 %v4067
  %v4069 = vpop.f32.mrb[0].mxu0
  %v4070 = vadd.f32 %v3942, %v4069
  %v4071 = vpop.f32.mrb[0].mxu0
  %4072 = vmatprep.mubr.f32.mxu0 0.0
  %v4073 = vand.u32 %v3459, 4294901760
  %4074 = vmatmul.mubr.f32.gmra.mrb[0].mxu0 %v4073
  %v4075 = vpop.f32.mrb[0].mxu0
  %v4076 = vadd.f32 %v3950, %v4075
  %v4077 = vpop.f32.mrb[0].mxu0
  %4078 = vmatprep.mubr.f32.mxu0 0.0
  %v4079 = vand.u32 %v3462, 4294901760
  %4080 = vmatmul.mubr.f32.gmra.mrb[0].mxu0 %v4079
  %v4081 = vpop.f32.mrb[0].mxu0
  %v4082 = vadd.f32 %v3958, %v4081
  %v4083 = vpop.f32.mrb[0].mxu0
  %4084 = vmatprep.mubr.f32.mxu0 0.0
  %v4085 = vand.u32 %v3465, 4294901760
  %4086 = vmatmul.mubr.f32.gmra.mrb[0].mxu0 %v4085
  %v4087 = vpop.f32.mrb[0].mxu0
  %v4088 = vadd.f32 %v3966, %v4087
  %v4089 = vpop.f32.mrb[0].mxu0
  %4090 = vmatprep.mubr.f32.mxu0 0.0
  %v4091 = vand.u32 %v3468, 4294901760
  %4092 = vmatmul.mubr.f32.gmra.mrb[0].mxu0 %v4091
  %v4093 = vpop.f32.mrb[0].mxu0
  %v4094 = vadd.f32 %v3974, %v4093
  %v4095 = vpop.f32.mrb[0].mxu0
  %4096 = vmatprep.mubr.f32.mxu0 0.0
  %v4097 = vand.u32 %v3471, 4294901760
  %4098 = vmatmul.mubr.f32.gmra.mrb[0].mxu0 %v4097
  %v4099 = vpop.f32.mrb[0].mxu0
  %v4100 = vadd.f32 %v3982, %v4099
  %v4101 = vpop.f32.mrb[0].mxu0
  %4102 = vmatprep.mubr.f32.mxu0 0.0
  %v4103 = vand.u32 %v3474, 4294901760
  %4104 = vmatmul.mubr.f32.gmra.mrb[0].mxu0 %v4103
  %v4105 = vpop.f32.mrb[0].mxu0
  %v4106 = vadd.f32 %v3990, %v4105
  %v4107 = vpop.f32.mrb[0].mxu0
  %4108 = vdwg.mxu0
  %4109 = vmatprep.subr.mxu0 0.0
  %v4110 = vand.u32 %v17, 4294901760
  %4111 = vmatpush1.msra.mxu0 %v4110
  %4112 = vmatprep.subr.mxu0 0.0
  %4113 = vmatpush1.msra.mxu0 0.0
  %4114 = vmatprep.subr.mxu0 0.0
  %4115 = vmatpush1.msra.mxu0 0.0
  %4116 = vmatprep.subr.mxu0 0.0
  %4117 = vmatpush1.msra.mxu0 0.0
  %4118 = vmatprep.subr.mxu0 0.0
  %4119 = vmatpush1.msra.mxu0 0.0
  %4120 = vmatprep.subr.mxu0 0.0
  %4121 = vmatpush1.msra.mxu0 0.0
  %4122 = vmatprep.subr.mxu0 0.0
  %4123 = vmatpush1.msra.mxu0 0.0
  %4124 = vmatprep.subr.mxu0 0.0
  %4125 = vmatpush1.msra.mxu0 0.0
  %4126 = vmatprep.subr.mxu0 0.0
  %4127 = vmatpush1.msra.mxu0 0.0
  %4128 = vmatprep.subr.mxu0 0.0
  %4129 = vmatpush1.msra.mxu0 0.0
  %4130 = vmatprep.subr.mxu0 0.0
  %4131 = vmatpush1.msra.mxu0 0.0
  %4132 = vmatprep.subr.mxu0 0.0
  %4133 = vmatpush1.msra.mxu0 0.0
  %4134 = vmatprep.subr.mxu0 0.0
  %4135 = vmatpush1.msra.mxu0 0.0
  %4136 = vmatprep.subr.mxu0 0.0
  %4137 = vmatpush1.msra.mxu0 0.0
  %4138 = vmatprep.subr.mxu0 0.0
  %4139 = vmatpush1.msra.mxu0 0.0
  %4140 = vmatprep.subr.mxu0 0.0
  %4141 = vmatpush1.msra.mxu0 0.0
  %4142 = vmatprep.subr.mxu0 0.0
  %4143 = vmatpush1.msra.mxu0 0.0
  %4144 = vmatprep.subr.mxu0 0.0
  %4145 = vmatpush1.msra.mxu0 0.0
  %4146 = vmatprep.subr.mxu0 0.0
  %4147 = vmatpush1.msra.mxu0 0.0
  %4148 = vmatprep.subr.mxu0 0.0
  %4149 = vmatpush1.msra.mxu0 0.0
  %4150 = vmatprep.subr.mxu0 0.0
  %4151 = vmatpush1.msra.mxu0 0.0
  %4152 = vmatprep.subr.mxu0 0.0
  %4153 = vmatpush1.msra.mxu0 0.0
  %4154 = vmatprep.subr.mxu0 0.0
  %4155 = vmatpush1.msra.mxu0 0.0
  %4156 = vmatprep.subr.mxu0 0.0
  %4157 = vmatpush1.msra.mxu0 0.0
  %4158 = vmatprep.subr.mxu0 0.0
  %4159 = vmatpush1.msra.mxu0 0.0
  %4160 = vmatprep.subr.mxu0 0.0
  %4161 = vmatpush1.msra.mxu0 0.0
  %4162 = vmatprep.subr.mxu0 0.0
  %4163 = vmatpush1.msra.mxu0 0.0
  %4164 = vmatprep.subr.mxu0 0.0
  %4165 = vmatpush1.msra.mxu0 0.0
  %4166 = vmatprep.subr.mxu0 0.0
  %4167 = vmatpush1.msra.mxu0 0.0
  %4168 = vmatprep.subr.mxu0 0.0
  %4169 = vmatpush1.msra.mxu0 0.0
  %4170 = vmatprep.subr.mxu0 0.0
  %4171 = vmatpush1.msra.mxu0 0.0
  %4172 = vmatprep.subr.mxu0 0.0
  %4173 = vmatpush1.msra.mxu0 0.0
  %4174 = vmatprep.mubr.f32.mxu0 0.0
  %v4175 = vand.u32 %v3453, 4294901760
  %4176 = vmatmul.mubr.f32.gmra.mrb[0].mxu0 %v4175
  %v4177 = vpop.f32.mrb[0].mxu0
  %v4178 = vadd.f32 %v4064, %v4177
  %v4179 = vpop.f32.mrb[0].mxu0
  %4180 = vmatprep.mubr.f32.mxu0 0.0
  %v4181 = vand.u32 %v3456, 4294901760
  %4182 = vmatmul.mubr.f32.gmra.mrb[0].mxu0 %v4181
  %v4183 = vpop.f32.mrb[0].mxu0
  %v4184 = vadd.f32 %v4070, %v4183
  %v4185 = vpop.f32.mrb[0].mxu0
  %4186 = vmatprep.mubr.f32.mxu0 0.0
  %v4187 = vand.u32 %v3459, 4294901760
  %4188 = vmatmul.mubr.f32.gmra.mrb[0].mxu0 %v4187
  %v4189 = vpop.f32.mrb[0].mxu0
  %v4190 = vadd.f32 %v4076, %v4189
  %v4191 = vpop.f32.mrb[0].mxu0
  %4192 = vmatprep.mubr.f32.mxu0 0.0
  %v4193 = vand.u32 %v3462, 4294901760
  %4194 = vmatmul.mubr.f32.gmra.mrb[0].mxu0 %v4193
  %v4195 = vpop.f32.mrb[0].mxu0
  %v4196 = vadd.f32 %v4082, %v4195
  %v4197 = vpop.f32.mrb[0].mxu0
  %4198 = vmatprep.mubr.f32.mxu0 0.0
  %v4199 = vand.u32 %v3465, 4294901760
  %4200 = vmatmul.mubr.f32.gmra.mrb[0].mxu0 %v4199
  %v4201 = vpop.f32.mrb[0].mxu0
  %v4202 = vadd.f32 %v4088, %v4201
  %v4203 = vpop.f32.mrb[0].mxu0
  %4204 = vmatprep.mubr.f32.mxu0 0.0
  %v4205 = vand.u32 %v3468, 4294901760
  %4206 = vmatmul.mubr.f32.gmra.mrb[0].mxu0 %v4205
  %v4207 = vpop.f32.mrb[0].mxu0
  %v4208 = vadd.f32 %v4094, %v4207
  %v4209 = vpop.f32.mrb[0].mxu0
  %4210 = vmatprep.mubr.f32.mxu0 0.0
  %v4211 = vand.u32 %v3471, 4294901760
  %4212 = vmatmul.mubr.f32.gmra.mrb[0].mxu0 %v4211
  %v4213 = vpop.f32.mrb[0].mxu0
  %v4214 = vadd.f32 %v4100, %v4213
  %v4215 = vpop.f32.mrb[0].mxu0
  %4216 = vmatprep.mubr.f32.mxu0 0.0
  %v4217 = vand.u32 %v3474, 4294901760
  %4218 = vmatmul.mubr.f32.gmra.mrb[0].mxu0 %v4217
  %v4219 = vpop.f32.mrb[0].mxu0
  %v4220 = vadd.f32 %v4106, %v4219
  %v4221 = vpop.f32.mrb[0].mxu0
  %4222 = vdwg.mxu0
  %v4223 = vmul.f32 %v4178, 0.1
  %v4224 = vmul.f32 %v4184, 0.1
  %v4225 = vmul.f32 %v4190, 0.1
  %v4226 = vmul.f32 %v4196, 0.1
  %v4227 = vmul.f32 %v4202, 0.1
  %v4228 = vmul.f32 %v4208, 0.1
  %v4229 = vmul.f32 %v4214, 0.1
  %v4230 = vmul.f32 %v4220, 0.1
  %v4231 = vadd.f32 %v3396, %v4223
  %v4232 = vadd.f32 %v3397, %v4224
  %v4233 = vadd.f32 %v3398, %v4225
  %v4234 = vadd.f32 %v3399, %v4226
  %v4235 = vadd.f32 %v3400, %v4227
  %v4236 = vadd.f32 %v3401, %v4228
  %v4237 = vadd.f32 %v3402, %v4229
  %v4238 = vadd.f32 %v3403, %v4230
  %v4239 = vsub.f32 %v4231, %v1778
  %v4240 = vsub.f32 %v4232, %v1778
  %v4241 = vsub.f32 %v4233, %v1778
  %v4242 = vsub.f32 %v4234, %v1778
  %v4243 = vsub.f32 %v4235, %v1778
  %v4244 = vsub.f32 %v4236, %v1778
  %v4245 = vsub.f32 %v4237, %v1778
  %v4246 = vsub.f32 %v4238, %v1778
  %v4247 = vmul.f32 %v4239, %v4239
  %v4248 = vmul.f32 %v4240, %v4240
  %v4249 = vmul.f32 %v4241, %v4241
  %v4250 = vmul.f32 %v4242, %v4242
  %v4251 = vmul.f32 %v4243, %v4243
  %v4252 = vmul.f32 %v4244, %v4244
  %v4253 = vmul.f32 %v4245, %v4245
  %v4254 = vmul.f32 %v4246, %v4246
  %v4255 = vadd.f32 %v3420, %v4247
  %v4256 = vadd.f32 %v3421, %v4248
  %v4257 = vadd.f32 %v3422, %v4249
  %v4258 = vadd.f32 %v3423, %v4250
  %v4259 = vadd.f32 %v3424, %v4251
  %v4260 = vadd.f32 %v3425, %v4252
  %v4261 = vadd.f32 %v3426, %v4253
  %v4262 = vadd.f32 %v3427, %v4254
  %4263 = vrot.lane.b32.xlu0 %v1786, 104
  %v4264 = vpop.permute.xlu0 %4263
  %4265 = vrot.lane.b32.xlu0 %v1787, 104
  %v4266 = vpop.permute.xlu0 %4265
  %4267 = vrot.lane.b32.xlu0 %v1788, 104
  %v4268 = vpop.permute.xlu0 %4267
  %4269 = vrot.lane.b32.xlu0 %v1789, 104
  %v4270 = vpop.permute.xlu0 %4269
  %4271 = vrot.lane.b32.xlu0 %v1790, 104
  %v4272 = vpop.permute.xlu0 %4271
  %4273 = vrot.lane.b32.xlu0 %v1791, 104
  %v4274 = vpop.permute.xlu0 %4273
  %4275 = vrot.lane.b32.xlu0 %v1792, 104
  %v4276 = vpop.permute.xlu0 %4275
  %4277 = vrot.lane.b32.xlu0 %v1793, 104
  %v4278 = vpop.permute.xlu0 %4277
  %v4288 = vsel %vm1795, %v4231, 0
  %v4291 = vsel %vm1795, %v4232, 0
  %v4294 = vsel %vm1795, %v4233, 0
  %v4297 = vsel %vm1795, %v4234, 0
  %v4300 = vsel %vm1795, %v4235, 0
  %v4303 = vsel %vm1795, %v4236, 0
  %v4306 = vsel %vm1795, %v4237, 0
  %v4309 = vsel %vm1795, %v4238, 0
  %4311 = vmatprep.subr.mxu0 0.0
  %v4312 = vand.u32 %v17, 4294901760
  %4313 = vmatpush1.msra.mxu0 %v4312
  %4314 = vmatprep.subr.mxu0 0.0
  %4315 = vmatpush1.msra.mxu0 0.0
  %4316 = vmatprep.subr.mxu0 0.0
  %4317 = vmatpush1.msra.mxu0 0.0
  %4318 = vmatprep.subr.mxu0 0.0
  %4319 = vmatpush1.msra.mxu0 0.0
  %4320 = vmatprep.subr.mxu0 0.0
  %4321 = vmatpush1.msra.mxu0 0.0
  %4322 = vmatprep.subr.mxu0 0.0
  %4323 = vmatpush1.msra.mxu0 0.0
  %4324 = vmatprep.subr.mxu0 0.0
  %4325 = vmatpush1.msra.mxu0 0.0
  %4326 = vmatprep.subr.mxu0 0.0
  %4327 = vmatpush1.msra.mxu0 0.0
  %4328 = vmatprep.subr.mxu0 0.0
  %4329 = vmatpush1.msra.mxu0 0.0
  %4330 = vmatprep.subr.mxu0 0.0
  %4331 = vmatpush1.msra.mxu0 0.0
  %4332 = vmatprep.subr.mxu0 0.0
  %4333 = vmatpush1.msra.mxu0 0.0
  %4334 = vmatprep.subr.mxu0 0.0
  %4335 = vmatpush1.msra.mxu0 0.0
  %4336 = vmatprep.subr.mxu0 0.0
  %4337 = vmatpush1.msra.mxu0 0.0
  %4338 = vmatprep.subr.mxu0 0.0
  %4339 = vmatpush1.msra.mxu0 0.0
  %4340 = vmatprep.subr.mxu0 0.0
  %4341 = vmatpush1.msra.mxu0 0.0
  %4342 = vmatprep.subr.mxu0 0.0
  %4343 = vmatpush1.msra.mxu0 0.0
  %4344 = vmatprep.subr.mxu0 0.0
  %4345 = vmatpush1.msra.mxu0 0.0
  %4346 = vmatprep.subr.mxu0 0.0
  %4347 = vmatpush1.msra.mxu0 0.0
  %4348 = vmatprep.subr.mxu0 0.0
  %4349 = vmatpush1.msra.mxu0 0.0
  %4350 = vmatprep.subr.mxu0 0.0
  %4351 = vmatpush1.msra.mxu0 0.0
  %4352 = vmatprep.subr.mxu0 0.0
  %4353 = vmatpush1.msra.mxu0 0.0
  %4354 = vmatprep.subr.mxu0 0.0
  %4355 = vmatpush1.msra.mxu0 0.0
  %4356 = vmatprep.subr.mxu0 0.0
  %4357 = vmatpush1.msra.mxu0 0.0
  %4358 = vmatprep.subr.mxu0 0.0
  %4359 = vmatpush1.msra.mxu0 0.0
  %4360 = vmatprep.subr.mxu0 0.0
  %4361 = vmatpush1.msra.mxu0 0.0
  %4362 = vmatprep.subr.mxu0 0.0
  %4363 = vmatpush1.msra.mxu0 0.0
  %4364 = vmatprep.subr.mxu0 0.0
  %4365 = vmatpush1.msra.mxu0 0.0
  %4366 = vmatprep.subr.mxu0 0.0
  %4367 = vmatpush1.msra.mxu0 0.0
  %4368 = vmatprep.subr.mxu0 0.0
  %4369 = vmatpush1.msra.mxu0 0.0
  %4370 = vmatprep.subr.mxu0 0.0
  %4371 = vmatpush1.msra.mxu0 0.0
  %4372 = vmatprep.subr.mxu0 0.0
  %4373 = vmatpush1.msra.mxu0 0.0
  %4374 = vmatprep.subr.mxu0 0.0
  %4375 = vmatpush1.msra.mxu0 0.0
  %4376 = vmatprep.mubr.f32.mxu0 0.0
  %v4377 = vand.u32 %v4288, 4294901760
  %v4378 = vsub.f32 %v4288, %v4377
  %v4379 = vand.u32 %v4378, 4294901760
  %v4380 = vsub.f32 %v4378, %v4379
  %v4381 = vand.u32 %v4380, 4294901760
  %4382 = vmatmul.mubr.f32.gmra.mrb[0].mxu0 %v4381
  %v4383 = vpop.f32.mrb[0].mxu0
  %v4384 = vadd.f32 %v4264, %v4383
  %v4385 = vpop.f32.mrb[0].mxu0
  %4386 = vmatprep.mubr.f32.mxu0 0.0
  %v4387 = vand.u32 %v4291, 4294901760
  %v4388 = vsub.f32 %v4291, %v4387
  %v4389 = vand.u32 %v4388, 4294901760
  %v4390 = vsub.f32 %v4388, %v4389
  %v4391 = vand.u32 %v4390, 4294901760
  %4392 = vmatmul.mubr.f32.gmra.mrb[0].mxu0 %v4391
  %v4393 = vpop.f32.mrb[0].mxu0
  %v4394 = vadd.f32 %v4266, %v4393
  %v4395 = vpop.f32.mrb[0].mxu0
  %4396 = vmatprep.mubr.f32.mxu0 0.0
  %v4397 = vand.u32 %v4294, 4294901760
  %v4398 = vsub.f32 %v4294, %v4397
  %v4399 = vand.u32 %v4398, 4294901760
  %v4400 = vsub.f32 %v4398, %v4399
  %v4401 = vand.u32 %v4400, 4294901760
  %4402 = vmatmul.mubr.f32.gmra.mrb[0].mxu0 %v4401
  %v4403 = vpop.f32.mrb[0].mxu0
  %v4404 = vadd.f32 %v4268, %v4403
  %v4405 = vpop.f32.mrb[0].mxu0
  %4406 = vmatprep.mubr.f32.mxu0 0.0
  %v4407 = vand.u32 %v4297, 4294901760
  %v4408 = vsub.f32 %v4297, %v4407
  %v4409 = vand.u32 %v4408, 4294901760
  %v4410 = vsub.f32 %v4408, %v4409
  %v4411 = vand.u32 %v4410, 4294901760
  %4412 = vmatmul.mubr.f32.gmra.mrb[0].mxu0 %v4411
  %v4413 = vpop.f32.mrb[0].mxu0
  %v4414 = vadd.f32 %v4270, %v4413
  %v4415 = vpop.f32.mrb[0].mxu0
  %4416 = vmatprep.mubr.f32.mxu0 0.0
  %v4417 = vand.u32 %v4300, 4294901760
  %v4418 = vsub.f32 %v4300, %v4417
  %v4419 = vand.u32 %v4418, 4294901760
  %v4420 = vsub.f32 %v4418, %v4419
  %v4421 = vand.u32 %v4420, 4294901760
  %4422 = vmatmul.mubr.f32.gmra.mrb[0].mxu0 %v4421
  %v4423 = vpop.f32.mrb[0].mxu0
  %v4424 = vadd.f32 %v4272, %v4423
  %v4425 = vpop.f32.mrb[0].mxu0
  %4426 = vmatprep.mubr.f32.mxu0 0.0
  %v4427 = vand.u32 %v4303, 4294901760
  %v4428 = vsub.f32 %v4303, %v4427
  %v4429 = vand.u32 %v4428, 4294901760
  %v4430 = vsub.f32 %v4428, %v4429
  %v4431 = vand.u32 %v4430, 4294901760
  %4432 = vmatmul.mubr.f32.gmra.mrb[0].mxu0 %v4431
  %v4433 = vpop.f32.mrb[0].mxu0
  %v4434 = vadd.f32 %v4274, %v4433
  %v4435 = vpop.f32.mrb[0].mxu0
  %4436 = vmatprep.mubr.f32.mxu0 0.0
  %v4437 = vand.u32 %v4306, 4294901760
  %v4438 = vsub.f32 %v4306, %v4437
  %v4439 = vand.u32 %v4438, 4294901760
  %v4440 = vsub.f32 %v4438, %v4439
  %v4441 = vand.u32 %v4440, 4294901760
  %4442 = vmatmul.mubr.f32.gmra.mrb[0].mxu0 %v4441
  %v4443 = vpop.f32.mrb[0].mxu0
  %v4444 = vadd.f32 %v4276, %v4443
  %v4445 = vpop.f32.mrb[0].mxu0
  %4446 = vmatprep.mubr.f32.mxu0 0.0
  %v4447 = vand.u32 %v4309, 4294901760
  %v4448 = vsub.f32 %v4309, %v4447
  %v4449 = vand.u32 %v4448, 4294901760
  %v4450 = vsub.f32 %v4448, %v4449
  %v4451 = vand.u32 %v4450, 4294901760
  %4452 = vmatmul.mubr.f32.gmra.mrb[0].mxu0 %v4451
  %v4453 = vpop.f32.mrb[0].mxu0
  %v4454 = vadd.f32 %v4278, %v4453
  %v4455 = vpop.f32.mrb[0].mxu0
  %4456 = vdwg.mxu0
  %4457 = vmatprep.subr.mxu0 0.0
  %v4458 = vand.u32 %v17, 4294901760
  %v4459 = vsub.f32 %v17, %v4458
  %v4460 = vand.u32 %v4459, 4294901760
  %v4461 = vsub.f32 %v4459, %v4460
  %v4462 = vand.u32 %v4461, 4294901760
  %4463 = vmatpush1.msra.mxu0 %v4462
  %4464 = vmatprep.subr.mxu0 0.0
  %4465 = vmatpush1.msra.mxu0 0.0
  %4466 = vmatprep.subr.mxu0 0.0
  %4467 = vmatpush1.msra.mxu0 0.0
  %4468 = vmatprep.subr.mxu0 0.0
  %4469 = vmatpush1.msra.mxu0 0.0
  %4470 = vmatprep.subr.mxu0 0.0
  %4471 = vmatpush1.msra.mxu0 0.0
  %4472 = vmatprep.subr.mxu0 0.0
  %4473 = vmatpush1.msra.mxu0 0.0
  %4474 = vmatprep.subr.mxu0 0.0
  %4475 = vmatpush1.msra.mxu0 0.0
  %4476 = vmatprep.subr.mxu0 0.0
  %4477 = vmatpush1.msra.mxu0 0.0
  %4478 = vmatprep.subr.mxu0 0.0
  %4479 = vmatpush1.msra.mxu0 0.0
  %4480 = vmatprep.subr.mxu0 0.0
  %4481 = vmatpush1.msra.mxu0 0.0
  %4482 = vmatprep.subr.mxu0 0.0
  %4483 = vmatpush1.msra.mxu0 0.0
  %4484 = vmatprep.subr.mxu0 0.0
  %4485 = vmatpush1.msra.mxu0 0.0
  %4486 = vmatprep.subr.mxu0 0.0
  %4487 = vmatpush1.msra.mxu0 0.0
  %4488 = vmatprep.subr.mxu0 0.0
  %4489 = vmatpush1.msra.mxu0 0.0
  %4490 = vmatprep.subr.mxu0 0.0
  %4491 = vmatpush1.msra.mxu0 0.0
  %4492 = vmatprep.subr.mxu0 0.0
  %4493 = vmatpush1.msra.mxu0 0.0
  %4494 = vmatprep.subr.mxu0 0.0
  %4495 = vmatpush1.msra.mxu0 0.0
  %4496 = vmatprep.subr.mxu0 0.0
  %4497 = vmatpush1.msra.mxu0 0.0
  %4498 = vmatprep.subr.mxu0 0.0
  %4499 = vmatpush1.msra.mxu0 0.0
  %4500 = vmatprep.subr.mxu0 0.0
  %4501 = vmatpush1.msra.mxu0 0.0
  %4502 = vmatprep.subr.mxu0 0.0
  %4503 = vmatpush1.msra.mxu0 0.0
  %4504 = vmatprep.subr.mxu0 0.0
  %4505 = vmatpush1.msra.mxu0 0.0
  %4506 = vmatprep.subr.mxu0 0.0
  %4507 = vmatpush1.msra.mxu0 0.0
  %4508 = vmatprep.subr.mxu0 0.0
  %4509 = vmatpush1.msra.mxu0 0.0
  %4510 = vmatprep.subr.mxu0 0.0
  %4511 = vmatpush1.msra.mxu0 0.0
  %4512 = vmatprep.subr.mxu0 0.0
  %4513 = vmatpush1.msra.mxu0 0.0
  %4514 = vmatprep.subr.mxu0 0.0
  %4515 = vmatpush1.msra.mxu0 0.0
  %4516 = vmatprep.subr.mxu0 0.0
  %4517 = vmatpush1.msra.mxu0 0.0
  %4518 = vmatprep.subr.mxu0 0.0
  %4519 = vmatpush1.msra.mxu0 0.0
  %4520 = vmatprep.subr.mxu0 0.0
  %4521 = vmatpush1.msra.mxu0 0.0
  %4522 = vmatprep.subr.mxu0 0.0
  %4523 = vmatpush1.msra.mxu0 0.0
  %4524 = vmatprep.subr.mxu0 0.0
  %4525 = vmatpush1.msra.mxu0 0.0
  %4526 = vmatprep.mubr.f32.mxu0 0.0
  %v4527 = vand.u32 %v4288, 4294901760
  %4528 = vmatmul.mubr.f32.gmra.mrb[0].mxu0 %v4527
  %v4529 = vpop.f32.mrb[0].mxu0
  %v4530 = vadd.f32 %v4384, %v4529
  %v4531 = vpop.f32.mrb[0].mxu0
  %4532 = vmatprep.mubr.f32.mxu0 0.0
  %v4533 = vand.u32 %v4291, 4294901760
  %4534 = vmatmul.mubr.f32.gmra.mrb[0].mxu0 %v4533
  %v4535 = vpop.f32.mrb[0].mxu0
  %v4536 = vadd.f32 %v4394, %v4535
  %v4537 = vpop.f32.mrb[0].mxu0
  %4538 = vmatprep.mubr.f32.mxu0 0.0
  %v4539 = vand.u32 %v4294, 4294901760
  %4540 = vmatmul.mubr.f32.gmra.mrb[0].mxu0 %v4539
  %v4541 = vpop.f32.mrb[0].mxu0
  %v4542 = vadd.f32 %v4404, %v4541
  %v4543 = vpop.f32.mrb[0].mxu0
  %4544 = vmatprep.mubr.f32.mxu0 0.0
  %v4545 = vand.u32 %v4297, 4294901760
  %4546 = vmatmul.mubr.f32.gmra.mrb[0].mxu0 %v4545
  %v4547 = vpop.f32.mrb[0].mxu0
  %v4548 = vadd.f32 %v4414, %v4547
  %v4549 = vpop.f32.mrb[0].mxu0
  %4550 = vmatprep.mubr.f32.mxu0 0.0
  %v4551 = vand.u32 %v4300, 4294901760
  %4552 = vmatmul.mubr.f32.gmra.mrb[0].mxu0 %v4551
  %v4553 = vpop.f32.mrb[0].mxu0
  %v4554 = vadd.f32 %v4424, %v4553
  %v4555 = vpop.f32.mrb[0].mxu0
  %4556 = vmatprep.mubr.f32.mxu0 0.0
  %v4557 = vand.u32 %v4303, 4294901760
  %4558 = vmatmul.mubr.f32.gmra.mrb[0].mxu0 %v4557
  %v4559 = vpop.f32.mrb[0].mxu0
  %v4560 = vadd.f32 %v4434, %v4559
  %v4561 = vpop.f32.mrb[0].mxu0
  %4562 = vmatprep.mubr.f32.mxu0 0.0
  %v4563 = vand.u32 %v4306, 4294901760
  %4564 = vmatmul.mubr.f32.gmra.mrb[0].mxu0 %v4563
  %v4565 = vpop.f32.mrb[0].mxu0
  %v4566 = vadd.f32 %v4444, %v4565
  %v4567 = vpop.f32.mrb[0].mxu0
  %4568 = vmatprep.mubr.f32.mxu0 0.0
  %v4569 = vand.u32 %v4309, 4294901760
  %4570 = vmatmul.mubr.f32.gmra.mrb[0].mxu0 %v4569
  %v4571 = vpop.f32.mrb[0].mxu0
  %v4572 = vadd.f32 %v4454, %v4571
  %v4573 = vpop.f32.mrb[0].mxu0
  %4574 = vdwg.mxu0
  %4575 = vmatprep.subr.mxu0 0.0
  %v4576 = vand.u32 %v17, 4294901760
  %v4577 = vsub.f32 %v17, %v4576
  %4578 = vmatpush1.msra.mxu0 %v4577
  %4579 = vmatprep.subr.mxu0 0.0
  %4580 = vmatpush1.msra.mxu0 0.0
  %4581 = vmatprep.subr.mxu0 0.0
  %4582 = vmatpush1.msra.mxu0 0.0
  %4583 = vmatprep.subr.mxu0 0.0
  %4584 = vmatpush1.msra.mxu0 0.0
  %4585 = vmatprep.subr.mxu0 0.0
  %4586 = vmatpush1.msra.mxu0 0.0
  %4587 = vmatprep.subr.mxu0 0.0
  %4588 = vmatpush1.msra.mxu0 0.0
  %4589 = vmatprep.subr.mxu0 0.0
  %4590 = vmatpush1.msra.mxu0 0.0
  %4591 = vmatprep.subr.mxu0 0.0
  %4592 = vmatpush1.msra.mxu0 0.0
  %4593 = vmatprep.subr.mxu0 0.0
  %4594 = vmatpush1.msra.mxu0 0.0
  %4595 = vmatprep.subr.mxu0 0.0
  %4596 = vmatpush1.msra.mxu0 0.0
  %4597 = vmatprep.subr.mxu0 0.0
  %4598 = vmatpush1.msra.mxu0 0.0
  %4599 = vmatprep.subr.mxu0 0.0
  %4600 = vmatpush1.msra.mxu0 0.0
  %4601 = vmatprep.subr.mxu0 0.0
  %4602 = vmatpush1.msra.mxu0 0.0
  %4603 = vmatprep.subr.mxu0 0.0
  %4604 = vmatpush1.msra.mxu0 0.0
  %4605 = vmatprep.subr.mxu0 0.0
  %4606 = vmatpush1.msra.mxu0 0.0
  %4607 = vmatprep.subr.mxu0 0.0
  %4608 = vmatpush1.msra.mxu0 0.0
  %4609 = vmatprep.subr.mxu0 0.0
  %4610 = vmatpush1.msra.mxu0 0.0
  %4611 = vmatprep.subr.mxu0 0.0
  %4612 = vmatpush1.msra.mxu0 0.0
  %4613 = vmatprep.subr.mxu0 0.0
  %4614 = vmatpush1.msra.mxu0 0.0
  %4615 = vmatprep.subr.mxu0 0.0
  %4616 = vmatpush1.msra.mxu0 0.0
  %4617 = vmatprep.subr.mxu0 0.0
  %4618 = vmatpush1.msra.mxu0 0.0
  %4619 = vmatprep.subr.mxu0 0.0
  %4620 = vmatpush1.msra.mxu0 0.0
  %4621 = vmatprep.subr.mxu0 0.0
  %4622 = vmatpush1.msra.mxu0 0.0
  %4623 = vmatprep.subr.mxu0 0.0
  %4624 = vmatpush1.msra.mxu0 0.0
  %4625 = vmatprep.subr.mxu0 0.0
  %4626 = vmatpush1.msra.mxu0 0.0
  %4627 = vmatprep.subr.mxu0 0.0
  %4628 = vmatpush1.msra.mxu0 0.0
  %4629 = vmatprep.subr.mxu0 0.0
  %4630 = vmatpush1.msra.mxu0 0.0
  %4631 = vmatprep.subr.mxu0 0.0
  %4632 = vmatpush1.msra.mxu0 0.0
  %4633 = vmatprep.subr.mxu0 0.0
  %4634 = vmatpush1.msra.mxu0 0.0
  %4635 = vmatprep.subr.mxu0 0.0
  %4636 = vmatpush1.msra.mxu0 0.0
  %4637 = vmatprep.subr.mxu0 0.0
  %4638 = vmatpush1.msra.mxu0 0.0
  %4639 = vmatprep.subr.mxu0 0.0
  %4640 = vmatpush1.msra.mxu0 0.0
  %4641 = vmatprep.mubr.f32.mxu0 0.0
  %v4642 = vand.u32 %v4288, 4294901760
  %v4643 = vsub.f32 %v4288, %v4642
  %4644 = vmatmul.mubr.f32.gmra.mrb[0].mxu0 %v4643
  %v4645 = vpop.f32.mrb[0].mxu0
  %v4646 = vadd.f32 %v4530, %v4645
  %v4647 = vpop.f32.mrb[0].mxu0
  %4648 = vmatprep.mubr.f32.mxu0 0.0
  %v4649 = vand.u32 %v4291, 4294901760
  %v4650 = vsub.f32 %v4291, %v4649
  %4651 = vmatmul.mubr.f32.gmra.mrb[0].mxu0 %v4650
  %v4652 = vpop.f32.mrb[0].mxu0
  %v4653 = vadd.f32 %v4536, %v4652
  %v4654 = vpop.f32.mrb[0].mxu0
  %4655 = vmatprep.mubr.f32.mxu0 0.0
  %v4656 = vand.u32 %v4294, 4294901760
  %v4657 = vsub.f32 %v4294, %v4656
  %4658 = vmatmul.mubr.f32.gmra.mrb[0].mxu0 %v4657
  %v4659 = vpop.f32.mrb[0].mxu0
  %v4660 = vadd.f32 %v4542, %v4659
  %v4661 = vpop.f32.mrb[0].mxu0
  %4662 = vmatprep.mubr.f32.mxu0 0.0
  %v4663 = vand.u32 %v4297, 4294901760
  %v4664 = vsub.f32 %v4297, %v4663
  %4665 = vmatmul.mubr.f32.gmra.mrb[0].mxu0 %v4664
  %v4666 = vpop.f32.mrb[0].mxu0
  %v4667 = vadd.f32 %v4548, %v4666
  %v4668 = vpop.f32.mrb[0].mxu0
  %4669 = vmatprep.mubr.f32.mxu0 0.0
  %v4670 = vand.u32 %v4300, 4294901760
  %v4671 = vsub.f32 %v4300, %v4670
  %4672 = vmatmul.mubr.f32.gmra.mrb[0].mxu0 %v4671
  %v4673 = vpop.f32.mrb[0].mxu0
  %v4674 = vadd.f32 %v4554, %v4673
  %v4675 = vpop.f32.mrb[0].mxu0
  %4676 = vmatprep.mubr.f32.mxu0 0.0
  %v4677 = vand.u32 %v4303, 4294901760
  %v4678 = vsub.f32 %v4303, %v4677
  %4679 = vmatmul.mubr.f32.gmra.mrb[0].mxu0 %v4678
  %v4680 = vpop.f32.mrb[0].mxu0
  %v4681 = vadd.f32 %v4560, %v4680
  %v4682 = vpop.f32.mrb[0].mxu0
  %4683 = vmatprep.mubr.f32.mxu0 0.0
  %v4684 = vand.u32 %v4306, 4294901760
  %v4685 = vsub.f32 %v4306, %v4684
  %4686 = vmatmul.mubr.f32.gmra.mrb[0].mxu0 %v4685
  %v4687 = vpop.f32.mrb[0].mxu0
  %v4688 = vadd.f32 %v4566, %v4687
  %v4689 = vpop.f32.mrb[0].mxu0
  %4690 = vmatprep.mubr.f32.mxu0 0.0
  %v4691 = vand.u32 %v4309, 4294901760
  %v4692 = vsub.f32 %v4309, %v4691
  %4693 = vmatmul.mubr.f32.gmra.mrb[0].mxu0 %v4692
  %v4694 = vpop.f32.mrb[0].mxu0
  %v4695 = vadd.f32 %v4572, %v4694
  %v4696 = vpop.f32.mrb[0].mxu0
  %4697 = vdwg.mxu0
  %4698 = vmatprep.subr.mxu0 0.0
  %v4699 = vand.u32 %v17, 4294901760
  %4700 = vmatpush1.msra.mxu0 %v4699
  %4701 = vmatprep.subr.mxu0 0.0
  %4702 = vmatpush1.msra.mxu0 0.0
  %4703 = vmatprep.subr.mxu0 0.0
  %4704 = vmatpush1.msra.mxu0 0.0
  %4705 = vmatprep.subr.mxu0 0.0
  %4706 = vmatpush1.msra.mxu0 0.0
  %4707 = vmatprep.subr.mxu0 0.0
  %4708 = vmatpush1.msra.mxu0 0.0
  %4709 = vmatprep.subr.mxu0 0.0
  %4710 = vmatpush1.msra.mxu0 0.0
  %4711 = vmatprep.subr.mxu0 0.0
  %4712 = vmatpush1.msra.mxu0 0.0
  %4713 = vmatprep.subr.mxu0 0.0
  %4714 = vmatpush1.msra.mxu0 0.0
  %4715 = vmatprep.subr.mxu0 0.0
  %4716 = vmatpush1.msra.mxu0 0.0
  %4717 = vmatprep.subr.mxu0 0.0
  %4718 = vmatpush1.msra.mxu0 0.0
  %4719 = vmatprep.subr.mxu0 0.0
  %4720 = vmatpush1.msra.mxu0 0.0
  %4721 = vmatprep.subr.mxu0 0.0
  %4722 = vmatpush1.msra.mxu0 0.0
  %4723 = vmatprep.subr.mxu0 0.0
  %4724 = vmatpush1.msra.mxu0 0.0
  %4725 = vmatprep.subr.mxu0 0.0
  %4726 = vmatpush1.msra.mxu0 0.0
  %4727 = vmatprep.subr.mxu0 0.0
  %4728 = vmatpush1.msra.mxu0 0.0
  %4729 = vmatprep.subr.mxu0 0.0
  %4730 = vmatpush1.msra.mxu0 0.0
  %4731 = vmatprep.subr.mxu0 0.0
  %4732 = vmatpush1.msra.mxu0 0.0
  %4733 = vmatprep.subr.mxu0 0.0
  %4734 = vmatpush1.msra.mxu0 0.0
  %4735 = vmatprep.subr.mxu0 0.0
  %4736 = vmatpush1.msra.mxu0 0.0
  %4737 = vmatprep.subr.mxu0 0.0
  %4738 = vmatpush1.msra.mxu0 0.0
  %4739 = vmatprep.subr.mxu0 0.0
  %4740 = vmatpush1.msra.mxu0 0.0
  %4741 = vmatprep.subr.mxu0 0.0
  %4742 = vmatpush1.msra.mxu0 0.0
  %4743 = vmatprep.subr.mxu0 0.0
  %4744 = vmatpush1.msra.mxu0 0.0
  %4745 = vmatprep.subr.mxu0 0.0
  %4746 = vmatpush1.msra.mxu0 0.0
  %4747 = vmatprep.subr.mxu0 0.0
  %4748 = vmatpush1.msra.mxu0 0.0
  %4749 = vmatprep.subr.mxu0 0.0
  %4750 = vmatpush1.msra.mxu0 0.0
  %4751 = vmatprep.subr.mxu0 0.0
  %4752 = vmatpush1.msra.mxu0 0.0
  %4753 = vmatprep.subr.mxu0 0.0
  %4754 = vmatpush1.msra.mxu0 0.0
  %4755 = vmatprep.subr.mxu0 0.0
  %4756 = vmatpush1.msra.mxu0 0.0
  %4757 = vmatprep.subr.mxu0 0.0
  %4758 = vmatpush1.msra.mxu0 0.0
  %4759 = vmatprep.subr.mxu0 0.0
  %4760 = vmatpush1.msra.mxu0 0.0
  %4761 = vmatprep.subr.mxu0 0.0
  %4762 = vmatpush1.msra.mxu0 0.0
  %4763 = vmatprep.mubr.f32.mxu0 0.0
  %v4764 = vand.u32 %v4288, 4294901760
  %v4765 = vsub.f32 %v4288, %v4764
  %v4766 = vand.u32 %v4765, 4294901760
  %4767 = vmatmul.mubr.f32.gmra.mrb[0].mxu0 %v4766
  %v4768 = vpop.f32.mrb[0].mxu0
  %v4769 = vadd.f32 %v4646, %v4768
  %v4770 = vpop.f32.mrb[0].mxu0
  %4771 = vmatprep.mubr.f32.mxu0 0.0
  %v4772 = vand.u32 %v4291, 4294901760
  %v4773 = vsub.f32 %v4291, %v4772
  %v4774 = vand.u32 %v4773, 4294901760
  %4775 = vmatmul.mubr.f32.gmra.mrb[0].mxu0 %v4774
  %v4776 = vpop.f32.mrb[0].mxu0
  %v4777 = vadd.f32 %v4653, %v4776
  %v4778 = vpop.f32.mrb[0].mxu0
  %4779 = vmatprep.mubr.f32.mxu0 0.0
  %v4780 = vand.u32 %v4294, 4294901760
  %v4781 = vsub.f32 %v4294, %v4780
  %v4782 = vand.u32 %v4781, 4294901760
  %4783 = vmatmul.mubr.f32.gmra.mrb[0].mxu0 %v4782
  %v4784 = vpop.f32.mrb[0].mxu0
  %v4785 = vadd.f32 %v4660, %v4784
  %v4786 = vpop.f32.mrb[0].mxu0
  %4787 = vmatprep.mubr.f32.mxu0 0.0
  %v4788 = vand.u32 %v4297, 4294901760
  %v4789 = vsub.f32 %v4297, %v4788
  %v4790 = vand.u32 %v4789, 4294901760
  %4791 = vmatmul.mubr.f32.gmra.mrb[0].mxu0 %v4790
  %v4792 = vpop.f32.mrb[0].mxu0
  %v4793 = vadd.f32 %v4667, %v4792
  %v4794 = vpop.f32.mrb[0].mxu0
  %4795 = vmatprep.mubr.f32.mxu0 0.0
  %v4796 = vand.u32 %v4300, 4294901760
  %v4797 = vsub.f32 %v4300, %v4796
  %v4798 = vand.u32 %v4797, 4294901760
  %4799 = vmatmul.mubr.f32.gmra.mrb[0].mxu0 %v4798
  %v4800 = vpop.f32.mrb[0].mxu0
  %v4801 = vadd.f32 %v4674, %v4800
  %v4802 = vpop.f32.mrb[0].mxu0
  %4803 = vmatprep.mubr.f32.mxu0 0.0
  %v4804 = vand.u32 %v4303, 4294901760
  %v4805 = vsub.f32 %v4303, %v4804
  %v4806 = vand.u32 %v4805, 4294901760
  %4807 = vmatmul.mubr.f32.gmra.mrb[0].mxu0 %v4806
  %v4808 = vpop.f32.mrb[0].mxu0
  %v4809 = vadd.f32 %v4681, %v4808
  %v4810 = vpop.f32.mrb[0].mxu0
  %4811 = vmatprep.mubr.f32.mxu0 0.0
  %v4812 = vand.u32 %v4306, 4294901760
  %v4813 = vsub.f32 %v4306, %v4812
  %v4814 = vand.u32 %v4813, 4294901760
  %4815 = vmatmul.mubr.f32.gmra.mrb[0].mxu0 %v4814
  %v4816 = vpop.f32.mrb[0].mxu0
  %v4817 = vadd.f32 %v4688, %v4816
  %v4818 = vpop.f32.mrb[0].mxu0
  %4819 = vmatprep.mubr.f32.mxu0 0.0
  %v4820 = vand.u32 %v4309, 4294901760
  %v4821 = vsub.f32 %v4309, %v4820
  %v4822 = vand.u32 %v4821, 4294901760
  %4823 = vmatmul.mubr.f32.gmra.mrb[0].mxu0 %v4822
  %v4824 = vpop.f32.mrb[0].mxu0
  %v4825 = vadd.f32 %v4695, %v4824
  %v4826 = vpop.f32.mrb[0].mxu0
  %4827 = vdwg.mxu0
  %4828 = vmatprep.subr.mxu0 0.0
  %v4829 = vand.u32 %v17, 4294901760
  %v4830 = vsub.f32 %v17, %v4829
  %v4831 = vand.u32 %v4830, 4294901760
  %4832 = vmatpush1.msra.mxu0 %v4831
  %4833 = vmatprep.subr.mxu0 0.0
  %4834 = vmatpush1.msra.mxu0 0.0
  %4835 = vmatprep.subr.mxu0 0.0
  %4836 = vmatpush1.msra.mxu0 0.0
  %4837 = vmatprep.subr.mxu0 0.0
  %4838 = vmatpush1.msra.mxu0 0.0
  %4839 = vmatprep.subr.mxu0 0.0
  %4840 = vmatpush1.msra.mxu0 0.0
  %4841 = vmatprep.subr.mxu0 0.0
  %4842 = vmatpush1.msra.mxu0 0.0
  %4843 = vmatprep.subr.mxu0 0.0
  %4844 = vmatpush1.msra.mxu0 0.0
  %4845 = vmatprep.subr.mxu0 0.0
  %4846 = vmatpush1.msra.mxu0 0.0
  %4847 = vmatprep.subr.mxu0 0.0
  %4848 = vmatpush1.msra.mxu0 0.0
  %4849 = vmatprep.subr.mxu0 0.0
  %4850 = vmatpush1.msra.mxu0 0.0
  %4851 = vmatprep.subr.mxu0 0.0
  %4852 = vmatpush1.msra.mxu0 0.0
  %4853 = vmatprep.subr.mxu0 0.0
  %4854 = vmatpush1.msra.mxu0 0.0
  %4855 = vmatprep.subr.mxu0 0.0
  %4856 = vmatpush1.msra.mxu0 0.0
  %4857 = vmatprep.subr.mxu0 0.0
  %4858 = vmatpush1.msra.mxu0 0.0
  %4859 = vmatprep.subr.mxu0 0.0
  %4860 = vmatpush1.msra.mxu0 0.0
  %4861 = vmatprep.subr.mxu0 0.0
  %4862 = vmatpush1.msra.mxu0 0.0
  %4863 = vmatprep.subr.mxu0 0.0
  %4864 = vmatpush1.msra.mxu0 0.0
  %4865 = vmatprep.subr.mxu0 0.0
  %4866 = vmatpush1.msra.mxu0 0.0
  %4867 = vmatprep.subr.mxu0 0.0
  %4868 = vmatpush1.msra.mxu0 0.0
  %4869 = vmatprep.subr.mxu0 0.0
  %4870 = vmatpush1.msra.mxu0 0.0
  %4871 = vmatprep.subr.mxu0 0.0
  %4872 = vmatpush1.msra.mxu0 0.0
  %4873 = vmatprep.subr.mxu0 0.0
  %4874 = vmatpush1.msra.mxu0 0.0
  %4875 = vmatprep.subr.mxu0 0.0
  %4876 = vmatpush1.msra.mxu0 0.0
  %4877 = vmatprep.subr.mxu0 0.0
  %4878 = vmatpush1.msra.mxu0 0.0
  %4879 = vmatprep.subr.mxu0 0.0
  %4880 = vmatpush1.msra.mxu0 0.0
  %4881 = vmatprep.subr.mxu0 0.0
  %4882 = vmatpush1.msra.mxu0 0.0
  %4883 = vmatprep.subr.mxu0 0.0
  %4884 = vmatpush1.msra.mxu0 0.0
  %4885 = vmatprep.subr.mxu0 0.0
  %4886 = vmatpush1.msra.mxu0 0.0
  %4887 = vmatprep.subr.mxu0 0.0
  %4888 = vmatpush1.msra.mxu0 0.0
  %4889 = vmatprep.subr.mxu0 0.0
  %4890 = vmatpush1.msra.mxu0 0.0
  %4891 = vmatprep.subr.mxu0 0.0
  %4892 = vmatpush1.msra.mxu0 0.0
  %4893 = vmatprep.subr.mxu0 0.0
  %4894 = vmatpush1.msra.mxu0 0.0
  %4895 = vmatprep.mubr.f32.mxu0 0.0
  %v4896 = vand.u32 %v4288, 4294901760
  %4897 = vmatmul.mubr.f32.gmra.mrb[0].mxu0 %v4896
  %v4898 = vpop.f32.mrb[0].mxu0
  %v4899 = vadd.f32 %v4769, %v4898
  %v4900 = vpop.f32.mrb[0].mxu0
  %4901 = vmatprep.mubr.f32.mxu0 0.0
  %v4902 = vand.u32 %v4291, 4294901760
  %4903 = vmatmul.mubr.f32.gmra.mrb[0].mxu0 %v4902
  %v4904 = vpop.f32.mrb[0].mxu0
  %v4905 = vadd.f32 %v4777, %v4904
  %v4906 = vpop.f32.mrb[0].mxu0
  %4907 = vmatprep.mubr.f32.mxu0 0.0
  %v4908 = vand.u32 %v4294, 4294901760
  %4909 = vmatmul.mubr.f32.gmra.mrb[0].mxu0 %v4908
  %v4910 = vpop.f32.mrb[0].mxu0
  %v4911 = vadd.f32 %v4785, %v4910
  %v4912 = vpop.f32.mrb[0].mxu0
  %4913 = vmatprep.mubr.f32.mxu0 0.0
  %v4914 = vand.u32 %v4297, 4294901760
  %4915 = vmatmul.mubr.f32.gmra.mrb[0].mxu0 %v4914
  %v4916 = vpop.f32.mrb[0].mxu0
  %v4917 = vadd.f32 %v4793, %v4916
  %v4918 = vpop.f32.mrb[0].mxu0
  %4919 = vmatprep.mubr.f32.mxu0 0.0
  %v4920 = vand.u32 %v4300, 4294901760
  %4921 = vmatmul.mubr.f32.gmra.mrb[0].mxu0 %v4920
  %v4922 = vpop.f32.mrb[0].mxu0
  %v4923 = vadd.f32 %v4801, %v4922
  %v4924 = vpop.f32.mrb[0].mxu0
  %4925 = vmatprep.mubr.f32.mxu0 0.0
  %v4926 = vand.u32 %v4303, 4294901760
  %4927 = vmatmul.mubr.f32.gmra.mrb[0].mxu0 %v4926
  %v4928 = vpop.f32.mrb[0].mxu0
  %v4929 = vadd.f32 %v4809, %v4928
  %v4930 = vpop.f32.mrb[0].mxu0
  %4931 = vmatprep.mubr.f32.mxu0 0.0
  %v4932 = vand.u32 %v4306, 4294901760
  %4933 = vmatmul.mubr.f32.gmra.mrb[0].mxu0 %v4932
  %v4934 = vpop.f32.mrb[0].mxu0
  %v4935 = vadd.f32 %v4817, %v4934
  %v4936 = vpop.f32.mrb[0].mxu0
  %4937 = vmatprep.mubr.f32.mxu0 0.0
  %v4938 = vand.u32 %v4309, 4294901760
  %4939 = vmatmul.mubr.f32.gmra.mrb[0].mxu0 %v4938
  %v4940 = vpop.f32.mrb[0].mxu0
  %v4941 = vadd.f32 %v4825, %v4940
  %v4942 = vpop.f32.mrb[0].mxu0
  %4943 = vdwg.mxu0
  %4944 = vmatprep.subr.mxu0 0.0
  %v4945 = vand.u32 %v17, 4294901760
  %4946 = vmatpush1.msra.mxu0 %v4945
  %4947 = vmatprep.subr.mxu0 0.0
  %4948 = vmatpush1.msra.mxu0 0.0
  %4949 = vmatprep.subr.mxu0 0.0
  %4950 = vmatpush1.msra.mxu0 0.0
  %4951 = vmatprep.subr.mxu0 0.0
  %4952 = vmatpush1.msra.mxu0 0.0
  %4953 = vmatprep.subr.mxu0 0.0
  %4954 = vmatpush1.msra.mxu0 0.0
  %4955 = vmatprep.subr.mxu0 0.0
  %4956 = vmatpush1.msra.mxu0 0.0
  %4957 = vmatprep.subr.mxu0 0.0
  %4958 = vmatpush1.msra.mxu0 0.0
  %4959 = vmatprep.subr.mxu0 0.0
  %4960 = vmatpush1.msra.mxu0 0.0
  %4961 = vmatprep.subr.mxu0 0.0
  %4962 = vmatpush1.msra.mxu0 0.0
  %4963 = vmatprep.subr.mxu0 0.0
  %4964 = vmatpush1.msra.mxu0 0.0
  %4965 = vmatprep.subr.mxu0 0.0
  %4966 = vmatpush1.msra.mxu0 0.0
  %4967 = vmatprep.subr.mxu0 0.0
  %4968 = vmatpush1.msra.mxu0 0.0
  %4969 = vmatprep.subr.mxu0 0.0
  %4970 = vmatpush1.msra.mxu0 0.0
  %4971 = vmatprep.subr.mxu0 0.0
  %4972 = vmatpush1.msra.mxu0 0.0
  %4973 = vmatprep.subr.mxu0 0.0
  %4974 = vmatpush1.msra.mxu0 0.0
  %4975 = vmatprep.subr.mxu0 0.0
  %4976 = vmatpush1.msra.mxu0 0.0
  %4977 = vmatprep.subr.mxu0 0.0
  %4978 = vmatpush1.msra.mxu0 0.0
  %4979 = vmatprep.subr.mxu0 0.0
  %4980 = vmatpush1.msra.mxu0 0.0
  %4981 = vmatprep.subr.mxu0 0.0
  %4982 = vmatpush1.msra.mxu0 0.0
  %4983 = vmatprep.subr.mxu0 0.0
  %4984 = vmatpush1.msra.mxu0 0.0
  %4985 = vmatprep.subr.mxu0 0.0
  %4986 = vmatpush1.msra.mxu0 0.0
  %4987 = vmatprep.subr.mxu0 0.0
  %4988 = vmatpush1.msra.mxu0 0.0
  %4989 = vmatprep.subr.mxu0 0.0
  %4990 = vmatpush1.msra.mxu0 0.0
  %4991 = vmatprep.subr.mxu0 0.0
  %4992 = vmatpush1.msra.mxu0 0.0
  %4993 = vmatprep.subr.mxu0 0.0
  %4994 = vmatpush1.msra.mxu0 0.0
  %4995 = vmatprep.subr.mxu0 0.0
  %4996 = vmatpush1.msra.mxu0 0.0
  %4997 = vmatprep.subr.mxu0 0.0
  %4998 = vmatpush1.msra.mxu0 0.0
  %4999 = vmatprep.subr.mxu0 0.0
  %5000 = vmatpush1.msra.mxu0 0.0
  %5001 = vmatprep.subr.mxu0 0.0
  %5002 = vmatpush1.msra.mxu0 0.0
  %5003 = vmatprep.subr.mxu0 0.0
  %5004 = vmatpush1.msra.mxu0 0.0
  %5005 = vmatprep.subr.mxu0 0.0
  %5006 = vmatpush1.msra.mxu0 0.0
  %5007 = vmatprep.subr.mxu0 0.0
  %5008 = vmatpush1.msra.mxu0 0.0
  %5009 = vmatprep.mubr.f32.mxu0 0.0
  %v5010 = vand.u32 %v4288, 4294901760
  %5011 = vmatmul.mubr.f32.gmra.mrb[0].mxu0 %v5010
  %v5012 = vpop.f32.mrb[0].mxu0
  %v5013 = vadd.f32 %v4899, %v5012
  %v5014 = vpop.f32.mrb[0].mxu0
  %5015 = vmatprep.mubr.f32.mxu0 0.0
  %v5016 = vand.u32 %v4291, 4294901760
  %5017 = vmatmul.mubr.f32.gmra.mrb[0].mxu0 %v5016
  %v5018 = vpop.f32.mrb[0].mxu0
  %v5019 = vadd.f32 %v4905, %v5018
  %v5020 = vpop.f32.mrb[0].mxu0
  %5021 = vmatprep.mubr.f32.mxu0 0.0
  %v5022 = vand.u32 %v4294, 4294901760
  %5023 = vmatmul.mubr.f32.gmra.mrb[0].mxu0 %v5022
  %v5024 = vpop.f32.mrb[0].mxu0
  %v5025 = vadd.f32 %v4911, %v5024
  %v5026 = vpop.f32.mrb[0].mxu0
  %5027 = vmatprep.mubr.f32.mxu0 0.0
  %v5028 = vand.u32 %v4297, 4294901760
  %5029 = vmatmul.mubr.f32.gmra.mrb[0].mxu0 %v5028
  %v5030 = vpop.f32.mrb[0].mxu0
  %v5031 = vadd.f32 %v4917, %v5030
  %v5032 = vpop.f32.mrb[0].mxu0
  %5033 = vmatprep.mubr.f32.mxu0 0.0
  %v5034 = vand.u32 %v4300, 4294901760
  %5035 = vmatmul.mubr.f32.gmra.mrb[0].mxu0 %v5034
  %v5036 = vpop.f32.mrb[0].mxu0
  %v5037 = vadd.f32 %v4923, %v5036
  %v5038 = vpop.f32.mrb[0].mxu0
  %5039 = vmatprep.mubr.f32.mxu0 0.0
  %v5040 = vand.u32 %v4303, 4294901760
  %5041 = vmatmul.mubr.f32.gmra.mrb[0].mxu0 %v5040
  %v5042 = vpop.f32.mrb[0].mxu0
  %v5043 = vadd.f32 %v4929, %v5042
  %v5044 = vpop.f32.mrb[0].mxu0
  %5045 = vmatprep.mubr.f32.mxu0 0.0
  %v5046 = vand.u32 %v4306, 4294901760
  %5047 = vmatmul.mubr.f32.gmra.mrb[0].mxu0 %v5046
  %v5048 = vpop.f32.mrb[0].mxu0
  %v5049 = vadd.f32 %v4935, %v5048
  %v5050 = vpop.f32.mrb[0].mxu0
  %5051 = vmatprep.mubr.f32.mxu0 0.0
  %v5052 = vand.u32 %v4309, 4294901760
  %5053 = vmatmul.mubr.f32.gmra.mrb[0].mxu0 %v5052
  %v5054 = vpop.f32.mrb[0].mxu0
  %v5055 = vadd.f32 %v4941, %v5054
  %v5056 = vpop.f32.mrb[0].mxu0
  %5057 = vdwg.mxu0
  %v5058 = vmul.f32 %v5013, 0.1
  %v5059 = vmul.f32 %v5019, 0.1
  %v5060 = vmul.f32 %v5025, 0.1
  %v5061 = vmul.f32 %v5031, 0.1
  %v5062 = vmul.f32 %v5037, 0.1
  %v5063 = vmul.f32 %v5043, 0.1
  %v5064 = vmul.f32 %v5049, 0.1
  %v5065 = vmul.f32 %v5055, 0.1
  %v5066 = vadd.f32 %v4231, %v5058
  %v5067 = vadd.f32 %v4232, %v5059
  %v5068 = vadd.f32 %v4233, %v5060
  %v5069 = vadd.f32 %v4234, %v5061
  %v5070 = vadd.f32 %v4235, %v5062
  %v5071 = vadd.f32 %v4236, %v5063
  %v5072 = vadd.f32 %v4237, %v5064
  %v5073 = vadd.f32 %v4238, %v5065
  %v5074 = vsub.f32 %v5066, %v1778
  %v5075 = vsub.f32 %v5067, %v1778
  %v5076 = vsub.f32 %v5068, %v1778
  %v5077 = vsub.f32 %v5069, %v1778
  %v5078 = vsub.f32 %v5070, %v1778
  %v5079 = vsub.f32 %v5071, %v1778
  %v5080 = vsub.f32 %v5072, %v1778
  %v5081 = vsub.f32 %v5073, %v1778
  %v5082 = vmul.f32 %v5074, %v5074
  %v5083 = vmul.f32 %v5075, %v5075
  %v5084 = vmul.f32 %v5076, %v5076
  %v5085 = vmul.f32 %v5077, %v5077
  %v5086 = vmul.f32 %v5078, %v5078
  %v5087 = vmul.f32 %v5079, %v5079
  %v5088 = vmul.f32 %v5080, %v5080
  %v5089 = vmul.f32 %v5081, %v5081
  %v5090 = vadd.f32 %v4255, %v5082
  %v5091 = vadd.f32 %v4256, %v5083
  %v5092 = vadd.f32 %v4257, %v5084
  %v5093 = vadd.f32 %v4258, %v5085
  %v5094 = vadd.f32 %v4259, %v5086
  %v5095 = vadd.f32 %v4260, %v5087
  %v5096 = vadd.f32 %v4261, %v5088
  %v5097 = vadd.f32 %v4262, %v5089
  %5098 = vrot.lane.b32.xlu0 %v1786, 96
  %v5099 = vpop.permute.xlu0 %5098
  %5100 = vrot.lane.b32.xlu0 %v1787, 96
  %v5101 = vpop.permute.xlu0 %5100
  %5102 = vrot.lane.b32.xlu0 %v1788, 96
  %v5103 = vpop.permute.xlu0 %5102
  %5104 = vrot.lane.b32.xlu0 %v1789, 96
  %v5105 = vpop.permute.xlu0 %5104
  %5106 = vrot.lane.b32.xlu0 %v1790, 96
  %v5107 = vpop.permute.xlu0 %5106
  %5108 = vrot.lane.b32.xlu0 %v1791, 96
  %v5109 = vpop.permute.xlu0 %5108
  %5110 = vrot.lane.b32.xlu0 %v1792, 96
  %v5111 = vpop.permute.xlu0 %5110
  %5112 = vrot.lane.b32.xlu0 %v1793, 96
  %v5113 = vpop.permute.xlu0 %5112
  %v5123 = vsel %vm1795, %v5066, 0
  %v5126 = vsel %vm1795, %v5067, 0
  %v5129 = vsel %vm1795, %v5068, 0
  %v5132 = vsel %vm1795, %v5069, 0
  %v5135 = vsel %vm1795, %v5070, 0
  %v5138 = vsel %vm1795, %v5071, 0
  %v5141 = vsel %vm1795, %v5072, 0
  %v5144 = vsel %vm1795, %v5073, 0
  %5146 = vmatprep.subr.mxu0 0.0
  %v5147 = vand.u32 %v17, 4294901760
  %5148 = vmatpush1.msra.mxu0 %v5147
  %5149 = vmatprep.subr.mxu0 0.0
  %5150 = vmatpush1.msra.mxu0 0.0
  %5151 = vmatprep.subr.mxu0 0.0
  %5152 = vmatpush1.msra.mxu0 0.0
  %5153 = vmatprep.subr.mxu0 0.0
  %5154 = vmatpush1.msra.mxu0 0.0
  %5155 = vmatprep.subr.mxu0 0.0
  %5156 = vmatpush1.msra.mxu0 0.0
  %5157 = vmatprep.subr.mxu0 0.0
  %5158 = vmatpush1.msra.mxu0 0.0
  %5159 = vmatprep.subr.mxu0 0.0
  %5160 = vmatpush1.msra.mxu0 0.0
  %5161 = vmatprep.subr.mxu0 0.0
  %5162 = vmatpush1.msra.mxu0 0.0
  %5163 = vmatprep.subr.mxu0 0.0
  %5164 = vmatpush1.msra.mxu0 0.0
  %5165 = vmatprep.subr.mxu0 0.0
  %5166 = vmatpush1.msra.mxu0 0.0
  %5167 = vmatprep.subr.mxu0 0.0
  %5168 = vmatpush1.msra.mxu0 0.0
  %5169 = vmatprep.subr.mxu0 0.0
  %5170 = vmatpush1.msra.mxu0 0.0
  %5171 = vmatprep.subr.mxu0 0.0
  %5172 = vmatpush1.msra.mxu0 0.0
  %5173 = vmatprep.subr.mxu0 0.0
  %5174 = vmatpush1.msra.mxu0 0.0
  %5175 = vmatprep.subr.mxu0 0.0
  %5176 = vmatpush1.msra.mxu0 0.0
  %5177 = vmatprep.subr.mxu0 0.0
  %5178 = vmatpush1.msra.mxu0 0.0
  %5179 = vmatprep.subr.mxu0 0.0
  %5180 = vmatpush1.msra.mxu0 0.0
  %5181 = vmatprep.subr.mxu0 0.0
  %5182 = vmatpush1.msra.mxu0 0.0
  %5183 = vmatprep.subr.mxu0 0.0
  %5184 = vmatpush1.msra.mxu0 0.0
  %5185 = vmatprep.subr.mxu0 0.0
  %5186 = vmatpush1.msra.mxu0 0.0
  %5187 = vmatprep.subr.mxu0 0.0
  %5188 = vmatpush1.msra.mxu0 0.0
  %5189 = vmatprep.subr.mxu0 0.0
  %5190 = vmatpush1.msra.mxu0 0.0
  %5191 = vmatprep.subr.mxu0 0.0
  %5192 = vmatpush1.msra.mxu0 0.0
  %5193 = vmatprep.subr.mxu0 0.0
  %5194 = vmatpush1.msra.mxu0 0.0
  %5195 = vmatprep.subr.mxu0 0.0
  %5196 = vmatpush1.msra.mxu0 0.0
  %5197 = vmatprep.subr.mxu0 0.0
  %5198 = vmatpush1.msra.mxu0 0.0
  %5199 = vmatprep.subr.mxu0 0.0
  %5200 = vmatpush1.msra.mxu0 0.0
  %5201 = vmatprep.subr.mxu0 0.0
  %5202 = vmatpush1.msra.mxu0 0.0
  %5203 = vmatprep.subr.mxu0 0.0
  %5204 = vmatpush1.msra.mxu0 0.0
  %5205 = vmatprep.subr.mxu0 0.0
  %5206 = vmatpush1.msra.mxu0 0.0
  %5207 = vmatprep.subr.mxu0 0.0
  %5208 = vmatpush1.msra.mxu0 0.0
  %5209 = vmatprep.subr.mxu0 0.0
  %5210 = vmatpush1.msra.mxu0 0.0
  %5211 = vmatprep.mubr.f32.mxu0 0.0
  %v5212 = vand.u32 %v5123, 4294901760
  %v5213 = vsub.f32 %v5123, %v5212
  %v5214 = vand.u32 %v5213, 4294901760
  %v5215 = vsub.f32 %v5213, %v5214
  %v5216 = vand.u32 %v5215, 4294901760
  %5217 = vmatmul.mubr.f32.gmra.mrb[0].mxu0 %v5216
  %v5218 = vpop.f32.mrb[0].mxu0
  %v5219 = vadd.f32 %v5099, %v5218
  %v5220 = vpop.f32.mrb[0].mxu0
  %5221 = vmatprep.mubr.f32.mxu0 0.0
  %v5222 = vand.u32 %v5126, 4294901760
  %v5223 = vsub.f32 %v5126, %v5222
  %v5224 = vand.u32 %v5223, 4294901760
  %v5225 = vsub.f32 %v5223, %v5224
  %v5226 = vand.u32 %v5225, 4294901760
  %5227 = vmatmul.mubr.f32.gmra.mrb[0].mxu0 %v5226
  %v5228 = vpop.f32.mrb[0].mxu0
  %v5229 = vadd.f32 %v5101, %v5228
  %v5230 = vpop.f32.mrb[0].mxu0
  %5231 = vmatprep.mubr.f32.mxu0 0.0
  %v5232 = vand.u32 %v5129, 4294901760
  %v5233 = vsub.f32 %v5129, %v5232
  %v5234 = vand.u32 %v5233, 4294901760
  %v5235 = vsub.f32 %v5233, %v5234
  %v5236 = vand.u32 %v5235, 4294901760
  %5237 = vmatmul.mubr.f32.gmra.mrb[0].mxu0 %v5236
  %v5238 = vpop.f32.mrb[0].mxu0
  %v5239 = vadd.f32 %v5103, %v5238
  %v5240 = vpop.f32.mrb[0].mxu0
  %5241 = vmatprep.mubr.f32.mxu0 0.0
  %v5242 = vand.u32 %v5132, 4294901760
  %v5243 = vsub.f32 %v5132, %v5242
  %v5244 = vand.u32 %v5243, 4294901760
  %v5245 = vsub.f32 %v5243, %v5244
  %v5246 = vand.u32 %v5245, 4294901760
  %5247 = vmatmul.mubr.f32.gmra.mrb[0].mxu0 %v5246
  %v5248 = vpop.f32.mrb[0].mxu0
  %v5249 = vadd.f32 %v5105, %v5248
  %v5250 = vpop.f32.mrb[0].mxu0
  %5251 = vmatprep.mubr.f32.mxu0 0.0
  %v5252 = vand.u32 %v5135, 4294901760
  %v5253 = vsub.f32 %v5135, %v5252
  %v5254 = vand.u32 %v5253, 4294901760
  %v5255 = vsub.f32 %v5253, %v5254
  %v5256 = vand.u32 %v5255, 4294901760
  %5257 = vmatmul.mubr.f32.gmra.mrb[0].mxu0 %v5256
  %v5258 = vpop.f32.mrb[0].mxu0
  %v5259 = vadd.f32 %v5107, %v5258
  %v5260 = vpop.f32.mrb[0].mxu0
  %5261 = vmatprep.mubr.f32.mxu0 0.0
  %v5262 = vand.u32 %v5138, 4294901760
  %v5263 = vsub.f32 %v5138, %v5262
  %v5264 = vand.u32 %v5263, 4294901760
  %v5265 = vsub.f32 %v5263, %v5264
  %v5266 = vand.u32 %v5265, 4294901760
  %5267 = vmatmul.mubr.f32.gmra.mrb[0].mxu0 %v5266
  %v5268 = vpop.f32.mrb[0].mxu0
  %v5269 = vadd.f32 %v5109, %v5268
  %v5270 = vpop.f32.mrb[0].mxu0
  %5271 = vmatprep.mubr.f32.mxu0 0.0
  %v5272 = vand.u32 %v5141, 4294901760
  %v5273 = vsub.f32 %v5141, %v5272
  %v5274 = vand.u32 %v5273, 4294901760
  %v5275 = vsub.f32 %v5273, %v5274
  %v5276 = vand.u32 %v5275, 4294901760
  %5277 = vmatmul.mubr.f32.gmra.mrb[0].mxu0 %v5276
  %v5278 = vpop.f32.mrb[0].mxu0
  %v5279 = vadd.f32 %v5111, %v5278
  %v5280 = vpop.f32.mrb[0].mxu0
  %5281 = vmatprep.mubr.f32.mxu0 0.0
  %v5282 = vand.u32 %v5144, 4294901760
  %v5283 = vsub.f32 %v5144, %v5282
  %v5284 = vand.u32 %v5283, 4294901760
  %v5285 = vsub.f32 %v5283, %v5284
  %v5286 = vand.u32 %v5285, 4294901760
  %5287 = vmatmul.mubr.f32.gmra.mrb[0].mxu0 %v5286
  %v5288 = vpop.f32.mrb[0].mxu0
  %v5289 = vadd.f32 %v5113, %v5288
  %v5290 = vpop.f32.mrb[0].mxu0
  %5291 = vdwg.mxu0
  %5292 = vmatprep.subr.mxu0 0.0
  %v5293 = vand.u32 %v17, 4294901760
  %v5294 = vsub.f32 %v17, %v5293
  %v5295 = vand.u32 %v5294, 4294901760
  %v5296 = vsub.f32 %v5294, %v5295
  %v5297 = vand.u32 %v5296, 4294901760
  %5298 = vmatpush1.msra.mxu0 %v5297
  %5299 = vmatprep.subr.mxu0 0.0
  %5300 = vmatpush1.msra.mxu0 0.0
  %5301 = vmatprep.subr.mxu0 0.0
  %5302 = vmatpush1.msra.mxu0 0.0
  %5303 = vmatprep.subr.mxu0 0.0
  %5304 = vmatpush1.msra.mxu0 0.0
  %5305 = vmatprep.subr.mxu0 0.0
  %5306 = vmatpush1.msra.mxu0 0.0
  %5307 = vmatprep.subr.mxu0 0.0
  %5308 = vmatpush1.msra.mxu0 0.0
  %5309 = vmatprep.subr.mxu0 0.0
  %5310 = vmatpush1.msra.mxu0 0.0
  %5311 = vmatprep.subr.mxu0 0.0
  %5312 = vmatpush1.msra.mxu0 0.0
  %5313 = vmatprep.subr.mxu0 0.0
  %5314 = vmatpush1.msra.mxu0 0.0
  %5315 = vmatprep.subr.mxu0 0.0
  %5316 = vmatpush1.msra.mxu0 0.0
  %5317 = vmatprep.subr.mxu0 0.0
  %5318 = vmatpush1.msra.mxu0 0.0
  %5319 = vmatprep.subr.mxu0 0.0
  %5320 = vmatpush1.msra.mxu0 0.0
  %5321 = vmatprep.subr.mxu0 0.0
  %5322 = vmatpush1.msra.mxu0 0.0
  %5323 = vmatprep.subr.mxu0 0.0
  %5324 = vmatpush1.msra.mxu0 0.0
  %5325 = vmatprep.subr.mxu0 0.0
  %5326 = vmatpush1.msra.mxu0 0.0
  %5327 = vmatprep.subr.mxu0 0.0
  %5328 = vmatpush1.msra.mxu0 0.0
  %5329 = vmatprep.subr.mxu0 0.0
  %5330 = vmatpush1.msra.mxu0 0.0
  %5331 = vmatprep.subr.mxu0 0.0
  %5332 = vmatpush1.msra.mxu0 0.0
  %5333 = vmatprep.subr.mxu0 0.0
  %5334 = vmatpush1.msra.mxu0 0.0
  %5335 = vmatprep.subr.mxu0 0.0
  %5336 = vmatpush1.msra.mxu0 0.0
  %5337 = vmatprep.subr.mxu0 0.0
  %5338 = vmatpush1.msra.mxu0 0.0
  %5339 = vmatprep.subr.mxu0 0.0
  %5340 = vmatpush1.msra.mxu0 0.0
  %5341 = vmatprep.subr.mxu0 0.0
  %5342 = vmatpush1.msra.mxu0 0.0
  %5343 = vmatprep.subr.mxu0 0.0
  %5344 = vmatpush1.msra.mxu0 0.0
  %5345 = vmatprep.subr.mxu0 0.0
  %5346 = vmatpush1.msra.mxu0 0.0
  %5347 = vmatprep.subr.mxu0 0.0
  %5348 = vmatpush1.msra.mxu0 0.0
  %5349 = vmatprep.subr.mxu0 0.0
  %5350 = vmatpush1.msra.mxu0 0.0
  %5351 = vmatprep.subr.mxu0 0.0
  %5352 = vmatpush1.msra.mxu0 0.0
  %5353 = vmatprep.subr.mxu0 0.0
  %5354 = vmatpush1.msra.mxu0 0.0
  %5355 = vmatprep.subr.mxu0 0.0
  %5356 = vmatpush1.msra.mxu0 0.0
  %5357 = vmatprep.subr.mxu0 0.0
  %5358 = vmatpush1.msra.mxu0 0.0
  %5359 = vmatprep.subr.mxu0 0.0
  %5360 = vmatpush1.msra.mxu0 0.0
  %5361 = vmatprep.mubr.f32.mxu0 0.0
  %v5362 = vand.u32 %v5123, 4294901760
  %5363 = vmatmul.mubr.f32.gmra.mrb[0].mxu0 %v5362
  %v5364 = vpop.f32.mrb[0].mxu0
  %v5365 = vadd.f32 %v5219, %v5364
  %v5366 = vpop.f32.mrb[0].mxu0
  %5367 = vmatprep.mubr.f32.mxu0 0.0
  %v5368 = vand.u32 %v5126, 4294901760
  %5369 = vmatmul.mubr.f32.gmra.mrb[0].mxu0 %v5368
  %v5370 = vpop.f32.mrb[0].mxu0
  %v5371 = vadd.f32 %v5229, %v5370
  %v5372 = vpop.f32.mrb[0].mxu0
  %5373 = vmatprep.mubr.f32.mxu0 0.0
  %v5374 = vand.u32 %v5129, 4294901760
  %5375 = vmatmul.mubr.f32.gmra.mrb[0].mxu0 %v5374
  %v5376 = vpop.f32.mrb[0].mxu0
  %v5377 = vadd.f32 %v5239, %v5376
  %v5378 = vpop.f32.mrb[0].mxu0
  %5379 = vmatprep.mubr.f32.mxu0 0.0
  %v5380 = vand.u32 %v5132, 4294901760
  %5381 = vmatmul.mubr.f32.gmra.mrb[0].mxu0 %v5380
  %v5382 = vpop.f32.mrb[0].mxu0
  %v5383 = vadd.f32 %v5249, %v5382
  %v5384 = vpop.f32.mrb[0].mxu0
  %5385 = vmatprep.mubr.f32.mxu0 0.0
  %v5386 = vand.u32 %v5135, 4294901760
  %5387 = vmatmul.mubr.f32.gmra.mrb[0].mxu0 %v5386
  %v5388 = vpop.f32.mrb[0].mxu0
  %v5389 = vadd.f32 %v5259, %v5388
  %v5390 = vpop.f32.mrb[0].mxu0
  %5391 = vmatprep.mubr.f32.mxu0 0.0
  %v5392 = vand.u32 %v5138, 4294901760
  %5393 = vmatmul.mubr.f32.gmra.mrb[0].mxu0 %v5392
  %v5394 = vpop.f32.mrb[0].mxu0
  %v5395 = vadd.f32 %v5269, %v5394
  %v5396 = vpop.f32.mrb[0].mxu0
  %5397 = vmatprep.mubr.f32.mxu0 0.0
  %v5398 = vand.u32 %v5141, 4294901760
  %5399 = vmatmul.mubr.f32.gmra.mrb[0].mxu0 %v5398
  %v5400 = vpop.f32.mrb[0].mxu0
  %v5401 = vadd.f32 %v5279, %v5400
  %v5402 = vpop.f32.mrb[0].mxu0
  %5403 = vmatprep.mubr.f32.mxu0 0.0
  %v5404 = vand.u32 %v5144, 4294901760
  %5405 = vmatmul.mubr.f32.gmra.mrb[0].mxu0 %v5404
  %v5406 = vpop.f32.mrb[0].mxu0
  %v5407 = vadd.f32 %v5289, %v5406
  %v5408 = vpop.f32.mrb[0].mxu0
  %5409 = vdwg.mxu0
  %5410 = vmatprep.subr.mxu0 0.0
  %v5411 = vand.u32 %v17, 4294901760
  %v5412 = vsub.f32 %v17, %v5411
  %5413 = vmatpush1.msra.mxu0 %v5412
  %5414 = vmatprep.subr.mxu0 0.0
  %5415 = vmatpush1.msra.mxu0 0.0
  %5416 = vmatprep.subr.mxu0 0.0
  %5417 = vmatpush1.msra.mxu0 0.0
  %5418 = vmatprep.subr.mxu0 0.0
  %5419 = vmatpush1.msra.mxu0 0.0
  %5420 = vmatprep.subr.mxu0 0.0
  %5421 = vmatpush1.msra.mxu0 0.0
  %5422 = vmatprep.subr.mxu0 0.0
  %5423 = vmatpush1.msra.mxu0 0.0
  %5424 = vmatprep.subr.mxu0 0.0
  %5425 = vmatpush1.msra.mxu0 0.0
  %5426 = vmatprep.subr.mxu0 0.0
  %5427 = vmatpush1.msra.mxu0 0.0
  %5428 = vmatprep.subr.mxu0 0.0
  %5429 = vmatpush1.msra.mxu0 0.0
  %5430 = vmatprep.subr.mxu0 0.0
  %5431 = vmatpush1.msra.mxu0 0.0
  %5432 = vmatprep.subr.mxu0 0.0
  %5433 = vmatpush1.msra.mxu0 0.0
  %5434 = vmatprep.subr.mxu0 0.0
  %5435 = vmatpush1.msra.mxu0 0.0
  %5436 = vmatprep.subr.mxu0 0.0
  %5437 = vmatpush1.msra.mxu0 0.0
  %5438 = vmatprep.subr.mxu0 0.0
  %5439 = vmatpush1.msra.mxu0 0.0
  %5440 = vmatprep.subr.mxu0 0.0
  %5441 = vmatpush1.msra.mxu0 0.0
  %5442 = vmatprep.subr.mxu0 0.0
  %5443 = vmatpush1.msra.mxu0 0.0
  %5444 = vmatprep.subr.mxu0 0.0
  %5445 = vmatpush1.msra.mxu0 0.0
  %5446 = vmatprep.subr.mxu0 0.0
  %5447 = vmatpush1.msra.mxu0 0.0
  %5448 = vmatprep.subr.mxu0 0.0
  %5449 = vmatpush1.msra.mxu0 0.0
  %5450 = vmatprep.subr.mxu0 0.0
  %5451 = vmatpush1.msra.mxu0 0.0
  %5452 = vmatprep.subr.mxu0 0.0
  %5453 = vmatpush1.msra.mxu0 0.0
  %5454 = vmatprep.subr.mxu0 0.0
  %5455 = vmatpush1.msra.mxu0 0.0
  %5456 = vmatprep.subr.mxu0 0.0
  %5457 = vmatpush1.msra.mxu0 0.0
  %5458 = vmatprep.subr.mxu0 0.0
  %5459 = vmatpush1.msra.mxu0 0.0
  %5460 = vmatprep.subr.mxu0 0.0
  %5461 = vmatpush1.msra.mxu0 0.0
  %5462 = vmatprep.subr.mxu0 0.0
  %5463 = vmatpush1.msra.mxu0 0.0
  %5464 = vmatprep.subr.mxu0 0.0
  %5465 = vmatpush1.msra.mxu0 0.0
  %5466 = vmatprep.subr.mxu0 0.0
  %5467 = vmatpush1.msra.mxu0 0.0
  %5468 = vmatprep.subr.mxu0 0.0
  %5469 = vmatpush1.msra.mxu0 0.0
  %5470 = vmatprep.subr.mxu0 0.0
  %5471 = vmatpush1.msra.mxu0 0.0
  %5472 = vmatprep.subr.mxu0 0.0
  %5473 = vmatpush1.msra.mxu0 0.0
  %5474 = vmatprep.subr.mxu0 0.0
  %5475 = vmatpush1.msra.mxu0 0.0
  %5476 = vmatprep.mubr.f32.mxu0 0.0
  %v5477 = vand.u32 %v5123, 4294901760
  %v5478 = vsub.f32 %v5123, %v5477
  %5479 = vmatmul.mubr.f32.gmra.mrb[0].mxu0 %v5478
  %v5480 = vpop.f32.mrb[0].mxu0
  %v5481 = vadd.f32 %v5365, %v5480
  %v5482 = vpop.f32.mrb[0].mxu0
  %5483 = vmatprep.mubr.f32.mxu0 0.0
  %v5484 = vand.u32 %v5126, 4294901760
  %v5485 = vsub.f32 %v5126, %v5484
  %5486 = vmatmul.mubr.f32.gmra.mrb[0].mxu0 %v5485
  %v5487 = vpop.f32.mrb[0].mxu0
  %v5488 = vadd.f32 %v5371, %v5487
  %v5489 = vpop.f32.mrb[0].mxu0
  %5490 = vmatprep.mubr.f32.mxu0 0.0
  %v5491 = vand.u32 %v5129, 4294901760
  %v5492 = vsub.f32 %v5129, %v5491
  %5493 = vmatmul.mubr.f32.gmra.mrb[0].mxu0 %v5492
  %v5494 = vpop.f32.mrb[0].mxu0
  %v5495 = vadd.f32 %v5377, %v5494
  %v5496 = vpop.f32.mrb[0].mxu0
  %5497 = vmatprep.mubr.f32.mxu0 0.0
  %v5498 = vand.u32 %v5132, 4294901760
  %v5499 = vsub.f32 %v5132, %v5498
  %5500 = vmatmul.mubr.f32.gmra.mrb[0].mxu0 %v5499
  %v5501 = vpop.f32.mrb[0].mxu0
  %v5502 = vadd.f32 %v5383, %v5501
  %v5503 = vpop.f32.mrb[0].mxu0
  %5504 = vmatprep.mubr.f32.mxu0 0.0
  %v5505 = vand.u32 %v5135, 4294901760
  %v5506 = vsub.f32 %v5135, %v5505
  %5507 = vmatmul.mubr.f32.gmra.mrb[0].mxu0 %v5506
  %v5508 = vpop.f32.mrb[0].mxu0
  %v5509 = vadd.f32 %v5389, %v5508
  %v5510 = vpop.f32.mrb[0].mxu0
  %5511 = vmatprep.mubr.f32.mxu0 0.0
  %v5512 = vand.u32 %v5138, 4294901760
  %v5513 = vsub.f32 %v5138, %v5512
  %5514 = vmatmul.mubr.f32.gmra.mrb[0].mxu0 %v5513
  %v5515 = vpop.f32.mrb[0].mxu0
  %v5516 = vadd.f32 %v5395, %v5515
  %v5517 = vpop.f32.mrb[0].mxu0
  %5518 = vmatprep.mubr.f32.mxu0 0.0
  %v5519 = vand.u32 %v5141, 4294901760
  %v5520 = vsub.f32 %v5141, %v5519
  %5521 = vmatmul.mubr.f32.gmra.mrb[0].mxu0 %v5520
  %v5522 = vpop.f32.mrb[0].mxu0
  %v5523 = vadd.f32 %v5401, %v5522
  %v5524 = vpop.f32.mrb[0].mxu0
  %5525 = vmatprep.mubr.f32.mxu0 0.0
  %v5526 = vand.u32 %v5144, 4294901760
  %v5527 = vsub.f32 %v5144, %v5526
  %5528 = vmatmul.mubr.f32.gmra.mrb[0].mxu0 %v5527
  %v5529 = vpop.f32.mrb[0].mxu0
  %v5530 = vadd.f32 %v5407, %v5529
  %v5531 = vpop.f32.mrb[0].mxu0
  %5532 = vdwg.mxu0
  %5533 = vmatprep.subr.mxu0 0.0
  %v5534 = vand.u32 %v17, 4294901760
  %5535 = vmatpush1.msra.mxu0 %v5534
  %5536 = vmatprep.subr.mxu0 0.0
  %5537 = vmatpush1.msra.mxu0 0.0
  %5538 = vmatprep.subr.mxu0 0.0
  %5539 = vmatpush1.msra.mxu0 0.0
  %5540 = vmatprep.subr.mxu0 0.0
  %5541 = vmatpush1.msra.mxu0 0.0
  %5542 = vmatprep.subr.mxu0 0.0
  %5543 = vmatpush1.msra.mxu0 0.0
  %5544 = vmatprep.subr.mxu0 0.0
  %5545 = vmatpush1.msra.mxu0 0.0
  %5546 = vmatprep.subr.mxu0 0.0
  %5547 = vmatpush1.msra.mxu0 0.0
  %5548 = vmatprep.subr.mxu0 0.0
  %5549 = vmatpush1.msra.mxu0 0.0
  %5550 = vmatprep.subr.mxu0 0.0
  %5551 = vmatpush1.msra.mxu0 0.0
  %5552 = vmatprep.subr.mxu0 0.0
  %5553 = vmatpush1.msra.mxu0 0.0
  %5554 = vmatprep.subr.mxu0 0.0
  %5555 = vmatpush1.msra.mxu0 0.0
  %5556 = vmatprep.subr.mxu0 0.0
  %5557 = vmatpush1.msra.mxu0 0.0
  %5558 = vmatprep.subr.mxu0 0.0
  %5559 = vmatpush1.msra.mxu0 0.0
  %5560 = vmatprep.subr.mxu0 0.0
  %5561 = vmatpush1.msra.mxu0 0.0
  %5562 = vmatprep.subr.mxu0 0.0
  %5563 = vmatpush1.msra.mxu0 0.0
  %5564 = vmatprep.subr.mxu0 0.0
  %5565 = vmatpush1.msra.mxu0 0.0
  %5566 = vmatprep.subr.mxu0 0.0
  %5567 = vmatpush1.msra.mxu0 0.0
  %5568 = vmatprep.subr.mxu0 0.0
  %5569 = vmatpush1.msra.mxu0 0.0
  %5570 = vmatprep.subr.mxu0 0.0
  %5571 = vmatpush1.msra.mxu0 0.0
  %5572 = vmatprep.subr.mxu0 0.0
  %5573 = vmatpush1.msra.mxu0 0.0
  %5574 = vmatprep.subr.mxu0 0.0
  %5575 = vmatpush1.msra.mxu0 0.0
  %5576 = vmatprep.subr.mxu0 0.0
  %5577 = vmatpush1.msra.mxu0 0.0
  %5578 = vmatprep.subr.mxu0 0.0
  %5579 = vmatpush1.msra.mxu0 0.0
  %5580 = vmatprep.subr.mxu0 0.0
  %5581 = vmatpush1.msra.mxu0 0.0
  %5582 = vmatprep.subr.mxu0 0.0
  %5583 = vmatpush1.msra.mxu0 0.0
  %5584 = vmatprep.subr.mxu0 0.0
  %5585 = vmatpush1.msra.mxu0 0.0
  %5586 = vmatprep.subr.mxu0 0.0
  %5587 = vmatpush1.msra.mxu0 0.0
  %5588 = vmatprep.subr.mxu0 0.0
  %5589 = vmatpush1.msra.mxu0 0.0
  %5590 = vmatprep.subr.mxu0 0.0
  %5591 = vmatpush1.msra.mxu0 0.0
  %5592 = vmatprep.subr.mxu0 0.0
  %5593 = vmatpush1.msra.mxu0 0.0
  %5594 = vmatprep.subr.mxu0 0.0
  %5595 = vmatpush1.msra.mxu0 0.0
  %5596 = vmatprep.subr.mxu0 0.0
  %5597 = vmatpush1.msra.mxu0 0.0
  %5598 = vmatprep.mubr.f32.mxu0 0.0
  %v5599 = vand.u32 %v5123, 4294901760
  %v5600 = vsub.f32 %v5123, %v5599
  %v5601 = vand.u32 %v5600, 4294901760
  %5602 = vmatmul.mubr.f32.gmra.mrb[0].mxu0 %v5601
  %v5603 = vpop.f32.mrb[0].mxu0
  %v5604 = vadd.f32 %v5481, %v5603
  %v5605 = vpop.f32.mrb[0].mxu0
  %5606 = vmatprep.mubr.f32.mxu0 0.0
  %v5607 = vand.u32 %v5126, 4294901760
  %v5608 = vsub.f32 %v5126, %v5607
  %v5609 = vand.u32 %v5608, 4294901760
  %5610 = vmatmul.mubr.f32.gmra.mrb[0].mxu0 %v5609
  %v5611 = vpop.f32.mrb[0].mxu0
  %v5612 = vadd.f32 %v5488, %v5611
  %v5613 = vpop.f32.mrb[0].mxu0
  %5614 = vmatprep.mubr.f32.mxu0 0.0
  %v5615 = vand.u32 %v5129, 4294901760
  %v5616 = vsub.f32 %v5129, %v5615
  %v5617 = vand.u32 %v5616, 4294901760
  %5618 = vmatmul.mubr.f32.gmra.mrb[0].mxu0 %v5617
  %v5619 = vpop.f32.mrb[0].mxu0
  %v5620 = vadd.f32 %v5495, %v5619
  %v5621 = vpop.f32.mrb[0].mxu0
  %5622 = vmatprep.mubr.f32.mxu0 0.0
  %v5623 = vand.u32 %v5132, 4294901760
  %v5624 = vsub.f32 %v5132, %v5623
  %v5625 = vand.u32 %v5624, 4294901760
  %5626 = vmatmul.mubr.f32.gmra.mrb[0].mxu0 %v5625
  %v5627 = vpop.f32.mrb[0].mxu0
  %v5628 = vadd.f32 %v5502, %v5627
  %v5629 = vpop.f32.mrb[0].mxu0
  %5630 = vmatprep.mubr.f32.mxu0 0.0
  %v5631 = vand.u32 %v5135, 4294901760
  %v5632 = vsub.f32 %v5135, %v5631
  %v5633 = vand.u32 %v5632, 4294901760
  %5634 = vmatmul.mubr.f32.gmra.mrb[0].mxu0 %v5633
  %v5635 = vpop.f32.mrb[0].mxu0
  %v5636 = vadd.f32 %v5509, %v5635
  %v5637 = vpop.f32.mrb[0].mxu0
  %5638 = vmatprep.mubr.f32.mxu0 0.0
  %v5639 = vand.u32 %v5138, 4294901760
  %v5640 = vsub.f32 %v5138, %v5639
  %v5641 = vand.u32 %v5640, 4294901760
  %5642 = vmatmul.mubr.f32.gmra.mrb[0].mxu0 %v5641
  %v5643 = vpop.f32.mrb[0].mxu0
  %v5644 = vadd.f32 %v5516, %v5643
  %v5645 = vpop.f32.mrb[0].mxu0
  %5646 = vmatprep.mubr.f32.mxu0 0.0
  %v5647 = vand.u32 %v5141, 4294901760
  %v5648 = vsub.f32 %v5141, %v5647
  %v5649 = vand.u32 %v5648, 4294901760
  %5650 = vmatmul.mubr.f32.gmra.mrb[0].mxu0 %v5649
  %v5651 = vpop.f32.mrb[0].mxu0
  %v5652 = vadd.f32 %v5523, %v5651
  %v5653 = vpop.f32.mrb[0].mxu0
  %5654 = vmatprep.mubr.f32.mxu0 0.0
  %v5655 = vand.u32 %v5144, 4294901760
  %v5656 = vsub.f32 %v5144, %v5655
  %v5657 = vand.u32 %v5656, 4294901760
  %5658 = vmatmul.mubr.f32.gmra.mrb[0].mxu0 %v5657
  %v5659 = vpop.f32.mrb[0].mxu0
  %v5660 = vadd.f32 %v5530, %v5659
  %v5661 = vpop.f32.mrb[0].mxu0
  %5662 = vdwg.mxu0
  %5663 = vmatprep.subr.mxu0 0.0
  %v5664 = vand.u32 %v17, 4294901760
  %v5665 = vsub.f32 %v17, %v5664
  %v5666 = vand.u32 %v5665, 4294901760
  %5667 = vmatpush1.msra.mxu0 %v5666
  %5668 = vmatprep.subr.mxu0 0.0
  %5669 = vmatpush1.msra.mxu0 0.0
  %5670 = vmatprep.subr.mxu0 0.0
  %5671 = vmatpush1.msra.mxu0 0.0
  %5672 = vmatprep.subr.mxu0 0.0
  %5673 = vmatpush1.msra.mxu0 0.0
  %5674 = vmatprep.subr.mxu0 0.0
  %5675 = vmatpush1.msra.mxu0 0.0
  %5676 = vmatprep.subr.mxu0 0.0
  %5677 = vmatpush1.msra.mxu0 0.0
  %5678 = vmatprep.subr.mxu0 0.0
  %5679 = vmatpush1.msra.mxu0 0.0
  %5680 = vmatprep.subr.mxu0 0.0
  %5681 = vmatpush1.msra.mxu0 0.0
  %5682 = vmatprep.subr.mxu0 0.0
  %5683 = vmatpush1.msra.mxu0 0.0
  %5684 = vmatprep.subr.mxu0 0.0
  %5685 = vmatpush1.msra.mxu0 0.0
  %5686 = vmatprep.subr.mxu0 0.0
  %5687 = vmatpush1.msra.mxu0 0.0
  %5688 = vmatprep.subr.mxu0 0.0
  %5689 = vmatpush1.msra.mxu0 0.0
  %5690 = vmatprep.subr.mxu0 0.0
  %5691 = vmatpush1.msra.mxu0 0.0
  %5692 = vmatprep.subr.mxu0 0.0
  %5693 = vmatpush1.msra.mxu0 0.0
  %5694 = vmatprep.subr.mxu0 0.0
  %5695 = vmatpush1.msra.mxu0 0.0
  %5696 = vmatprep.subr.mxu0 0.0
  %5697 = vmatpush1.msra.mxu0 0.0
  %5698 = vmatprep.subr.mxu0 0.0
  %5699 = vmatpush1.msra.mxu0 0.0
  %5700 = vmatprep.subr.mxu0 0.0
  %5701 = vmatpush1.msra.mxu0 0.0
  %5702 = vmatprep.subr.mxu0 0.0
  %5703 = vmatpush1.msra.mxu0 0.0
  %5704 = vmatprep.subr.mxu0 0.0
  %5705 = vmatpush1.msra.mxu0 0.0
  %5706 = vmatprep.subr.mxu0 0.0
  %5707 = vmatpush1.msra.mxu0 0.0
  %5708 = vmatprep.subr.mxu0 0.0
  %5709 = vmatpush1.msra.mxu0 0.0
  %5710 = vmatprep.subr.mxu0 0.0
  %5711 = vmatpush1.msra.mxu0 0.0
  %5712 = vmatprep.subr.mxu0 0.0
  %5713 = vmatpush1.msra.mxu0 0.0
  %5714 = vmatprep.subr.mxu0 0.0
  %5715 = vmatpush1.msra.mxu0 0.0
  %5716 = vmatprep.subr.mxu0 0.0
  %5717 = vmatpush1.msra.mxu0 0.0
  %5718 = vmatprep.subr.mxu0 0.0
  %5719 = vmatpush1.msra.mxu0 0.0
  %5720 = vmatprep.subr.mxu0 0.0
  %5721 = vmatpush1.msra.mxu0 0.0
  %5722 = vmatprep.subr.mxu0 0.0
  %5723 = vmatpush1.msra.mxu0 0.0
  %5724 = vmatprep.subr.mxu0 0.0
  %5725 = vmatpush1.msra.mxu0 0.0
  %5726 = vmatprep.subr.mxu0 0.0
  %5727 = vmatpush1.msra.mxu0 0.0
  %5728 = vmatprep.subr.mxu0 0.0
  %5729 = vmatpush1.msra.mxu0 0.0
  %5730 = vmatprep.mubr.f32.mxu0 0.0
  %v5731 = vand.u32 %v5123, 4294901760
  %5732 = vmatmul.mubr.f32.gmra.mrb[0].mxu0 %v5731
  %v5733 = vpop.f32.mrb[0].mxu0
  %v5734 = vadd.f32 %v5604, %v5733
  %v5735 = vpop.f32.mrb[0].mxu0
  %5736 = vmatprep.mubr.f32.mxu0 0.0
  %v5737 = vand.u32 %v5126, 4294901760
  %5738 = vmatmul.mubr.f32.gmra.mrb[0].mxu0 %v5737
  %v5739 = vpop.f32.mrb[0].mxu0
  %v5740 = vadd.f32 %v5612, %v5739
  %v5741 = vpop.f32.mrb[0].mxu0
  %5742 = vmatprep.mubr.f32.mxu0 0.0
  %v5743 = vand.u32 %v5129, 4294901760
  %5744 = vmatmul.mubr.f32.gmra.mrb[0].mxu0 %v5743
  %v5745 = vpop.f32.mrb[0].mxu0
  %v5746 = vadd.f32 %v5620, %v5745
  %v5747 = vpop.f32.mrb[0].mxu0
  %5748 = vmatprep.mubr.f32.mxu0 0.0
  %v5749 = vand.u32 %v5132, 4294901760
  %5750 = vmatmul.mubr.f32.gmra.mrb[0].mxu0 %v5749
  %v5751 = vpop.f32.mrb[0].mxu0
  %v5752 = vadd.f32 %v5628, %v5751
  %v5753 = vpop.f32.mrb[0].mxu0
  %5754 = vmatprep.mubr.f32.mxu0 0.0
  %v5755 = vand.u32 %v5135, 4294901760
  %5756 = vmatmul.mubr.f32.gmra.mrb[0].mxu0 %v5755
  %v5757 = vpop.f32.mrb[0].mxu0
  %v5758 = vadd.f32 %v5636, %v5757
  %v5759 = vpop.f32.mrb[0].mxu0
  %5760 = vmatprep.mubr.f32.mxu0 0.0
  %v5761 = vand.u32 %v5138, 4294901760
  %5762 = vmatmul.mubr.f32.gmra.mrb[0].mxu0 %v5761
  %v5763 = vpop.f32.mrb[0].mxu0
  %v5764 = vadd.f32 %v5644, %v5763
  %v5765 = vpop.f32.mrb[0].mxu0
  %5766 = vmatprep.mubr.f32.mxu0 0.0
  %v5767 = vand.u32 %v5141, 4294901760
  %5768 = vmatmul.mubr.f32.gmra.mrb[0].mxu0 %v5767
  %v5769 = vpop.f32.mrb[0].mxu0
  %v5770 = vadd.f32 %v5652, %v5769
  %v5771 = vpop.f32.mrb[0].mxu0
  %5772 = vmatprep.mubr.f32.mxu0 0.0
  %v5773 = vand.u32 %v5144, 4294901760
  %5774 = vmatmul.mubr.f32.gmra.mrb[0].mxu0 %v5773
  %v5775 = vpop.f32.mrb[0].mxu0
  %v5776 = vadd.f32 %v5660, %v5775
  %v5777 = vpop.f32.mrb[0].mxu0
  %5778 = vdwg.mxu0
  %5779 = vmatprep.subr.mxu0 0.0
  %v5780 = vand.u32 %v17, 4294901760
  %5781 = vmatpush1.msra.mxu0 %v5780
  %5782 = vmatprep.subr.mxu0 0.0
  %5783 = vmatpush1.msra.mxu0 0.0
  %5784 = vmatprep.subr.mxu0 0.0
  %5785 = vmatpush1.msra.mxu0 0.0
  %5786 = vmatprep.subr.mxu0 0.0
  %5787 = vmatpush1.msra.mxu0 0.0
  %5788 = vmatprep.subr.mxu0 0.0
  %5789 = vmatpush1.msra.mxu0 0.0
  %5790 = vmatprep.subr.mxu0 0.0
  %5791 = vmatpush1.msra.mxu0 0.0
  %5792 = vmatprep.subr.mxu0 0.0
  %5793 = vmatpush1.msra.mxu0 0.0
  %5794 = vmatprep.subr.mxu0 0.0
  %5795 = vmatpush1.msra.mxu0 0.0
  %5796 = vmatprep.subr.mxu0 0.0
  %5797 = vmatpush1.msra.mxu0 0.0
  %5798 = vmatprep.subr.mxu0 0.0
  %5799 = vmatpush1.msra.mxu0 0.0
  %5800 = vmatprep.subr.mxu0 0.0
  %5801 = vmatpush1.msra.mxu0 0.0
  %5802 = vmatprep.subr.mxu0 0.0
  %5803 = vmatpush1.msra.mxu0 0.0
  %5804 = vmatprep.subr.mxu0 0.0
  %5805 = vmatpush1.msra.mxu0 0.0
  %5806 = vmatprep.subr.mxu0 0.0
  %5807 = vmatpush1.msra.mxu0 0.0
  %5808 = vmatprep.subr.mxu0 0.0
  %5809 = vmatpush1.msra.mxu0 0.0
  %5810 = vmatprep.subr.mxu0 0.0
  %5811 = vmatpush1.msra.mxu0 0.0
  %5812 = vmatprep.subr.mxu0 0.0
  %5813 = vmatpush1.msra.mxu0 0.0
  %5814 = vmatprep.subr.mxu0 0.0
  %5815 = vmatpush1.msra.mxu0 0.0
  %5816 = vmatprep.subr.mxu0 0.0
  %5817 = vmatpush1.msra.mxu0 0.0
  %5818 = vmatprep.subr.mxu0 0.0
  %5819 = vmatpush1.msra.mxu0 0.0
  %5820 = vmatprep.subr.mxu0 0.0
  %5821 = vmatpush1.msra.mxu0 0.0
  %5822 = vmatprep.subr.mxu0 0.0
  %5823 = vmatpush1.msra.mxu0 0.0
  %5824 = vmatprep.subr.mxu0 0.0
  %5825 = vmatpush1.msra.mxu0 0.0
  %5826 = vmatprep.subr.mxu0 0.0
  %5827 = vmatpush1.msra.mxu0 0.0
  %5828 = vmatprep.subr.mxu0 0.0
  %5829 = vmatpush1.msra.mxu0 0.0
  %5830 = vmatprep.subr.mxu0 0.0
  %5831 = vmatpush1.msra.mxu0 0.0
  %5832 = vmatprep.subr.mxu0 0.0
  %5833 = vmatpush1.msra.mxu0 0.0
  %5834 = vmatprep.subr.mxu0 0.0
  %5835 = vmatpush1.msra.mxu0 0.0
  %5836 = vmatprep.subr.mxu0 0.0
  %5837 = vmatpush1.msra.mxu0 0.0
  %5838 = vmatprep.subr.mxu0 0.0
  %5839 = vmatpush1.msra.mxu0 0.0
  %5840 = vmatprep.subr.mxu0 0.0
  %5841 = vmatpush1.msra.mxu0 0.0
  %5842 = vmatprep.subr.mxu0 0.0
  %5843 = vmatpush1.msra.mxu0 0.0
  %5844 = vmatprep.mubr.f32.mxu0 0.0
  %v5845 = vand.u32 %v5123, 4294901760
  %5846 = vmatmul.mubr.f32.gmra.mrb[0].mxu0 %v5845
  %v5847 = vpop.f32.mrb[0].mxu0
  %v5848 = vadd.f32 %v5734, %v5847
  %v5849 = vpop.f32.mrb[0].mxu0
  %5850 = vmatprep.mubr.f32.mxu0 0.0
  %v5851 = vand.u32 %v5126, 4294901760
  %5852 = vmatmul.mubr.f32.gmra.mrb[0].mxu0 %v5851
  %v5853 = vpop.f32.mrb[0].mxu0
  %v5854 = vadd.f32 %v5740, %v5853
  %v5855 = vpop.f32.mrb[0].mxu0
  %5856 = vmatprep.mubr.f32.mxu0 0.0
  %v5857 = vand.u32 %v5129, 4294901760
  %5858 = vmatmul.mubr.f32.gmra.mrb[0].mxu0 %v5857
  %v5859 = vpop.f32.mrb[0].mxu0
  %v5860 = vadd.f32 %v5746, %v5859
  %v5861 = vpop.f32.mrb[0].mxu0
  %5862 = vmatprep.mubr.f32.mxu0 0.0
  %v5863 = vand.u32 %v5132, 4294901760
  %5864 = vmatmul.mubr.f32.gmra.mrb[0].mxu0 %v5863
  %v5865 = vpop.f32.mrb[0].mxu0
  %v5866 = vadd.f32 %v5752, %v5865
  %v5867 = vpop.f32.mrb[0].mxu0
  %5868 = vmatprep.mubr.f32.mxu0 0.0
  %v5869 = vand.u32 %v5135, 4294901760
  %5870 = vmatmul.mubr.f32.gmra.mrb[0].mxu0 %v5869
  %v5871 = vpop.f32.mrb[0].mxu0
  %v5872 = vadd.f32 %v5758, %v5871
  %v5873 = vpop.f32.mrb[0].mxu0
  %5874 = vmatprep.mubr.f32.mxu0 0.0
  %v5875 = vand.u32 %v5138, 4294901760
  %5876 = vmatmul.mubr.f32.gmra.mrb[0].mxu0 %v5875
  %v5877 = vpop.f32.mrb[0].mxu0
  %v5878 = vadd.f32 %v5764, %v5877
  %v5879 = vpop.f32.mrb[0].mxu0
  %5880 = vmatprep.mubr.f32.mxu0 0.0
  %v5881 = vand.u32 %v5141, 4294901760
  %5882 = vmatmul.mubr.f32.gmra.mrb[0].mxu0 %v5881
  %v5883 = vpop.f32.mrb[0].mxu0
  %v5884 = vadd.f32 %v5770, %v5883
  %v5885 = vpop.f32.mrb[0].mxu0
  %5886 = vmatprep.mubr.f32.mxu0 0.0
  %v5887 = vand.u32 %v5144, 4294901760
  %5888 = vmatmul.mubr.f32.gmra.mrb[0].mxu0 %v5887
  %v5889 = vpop.f32.mrb[0].mxu0
  %v5890 = vadd.f32 %v5776, %v5889
  %v5891 = vpop.f32.mrb[0].mxu0
  %5892 = vdwg.mxu0
  %v5893 = vmul.f32 %v5848, 0.1
  %v5894 = vmul.f32 %v5854, 0.1
  %v5895 = vmul.f32 %v5860, 0.1
  %v5896 = vmul.f32 %v5866, 0.1
  %v5897 = vmul.f32 %v5872, 0.1
  %v5898 = vmul.f32 %v5878, 0.1
  %v5899 = vmul.f32 %v5884, 0.1
  %v5900 = vmul.f32 %v5890, 0.1
  %v5901 = vadd.f32 %v5066, %v5893
  %v5902 = vadd.f32 %v5067, %v5894
  %v5903 = vadd.f32 %v5068, %v5895
  %v5904 = vadd.f32 %v5069, %v5896
  %v5905 = vadd.f32 %v5070, %v5897
  %v5906 = vadd.f32 %v5071, %v5898
  %v5907 = vadd.f32 %v5072, %v5899
  %v5908 = vadd.f32 %v5073, %v5900
  %v5909 = vsub.f32 %v5901, %v1778
  %v5910 = vsub.f32 %v5902, %v1778
  %v5911 = vsub.f32 %v5903, %v1778
  %v5912 = vsub.f32 %v5904, %v1778
  %v5913 = vsub.f32 %v5905, %v1778
  %v5914 = vsub.f32 %v5906, %v1778
  %v5915 = vsub.f32 %v5907, %v1778
  %v5916 = vsub.f32 %v5908, %v1778
  %v5917 = vmul.f32 %v5909, %v5909
  %v5918 = vmul.f32 %v5910, %v5910
  %v5919 = vmul.f32 %v5911, %v5911
  %v5920 = vmul.f32 %v5912, %v5912
  %v5921 = vmul.f32 %v5913, %v5913
  %v5922 = vmul.f32 %v5914, %v5914
  %v5923 = vmul.f32 %v5915, %v5915
  %v5924 = vmul.f32 %v5916, %v5916
  %v5925 = vadd.f32 %v5090, %v5917
  %v5926 = vadd.f32 %v5091, %v5918
  %v5927 = vadd.f32 %v5092, %v5919
  %v5928 = vadd.f32 %v5093, %v5920
  %v5929 = vadd.f32 %v5094, %v5921
  %v5930 = vadd.f32 %v5095, %v5922
  %v5931 = vadd.f32 %v5096, %v5923
  %v5932 = vadd.f32 %v5097, %v5924
  %5933 = vrot.lane.b32.xlu0 %v1786, 88
  %v5934 = vpop.permute.xlu0 %5933
  %5935 = vrot.lane.b32.xlu0 %v1787, 88
  %v5936 = vpop.permute.xlu0 %5935
  %5937 = vrot.lane.b32.xlu0 %v1788, 88
  %v5938 = vpop.permute.xlu0 %5937
  %5939 = vrot.lane.b32.xlu0 %v1789, 88
  %v5940 = vpop.permute.xlu0 %5939
  %5941 = vrot.lane.b32.xlu0 %v1790, 88
  %v5942 = vpop.permute.xlu0 %5941
  %5943 = vrot.lane.b32.xlu0 %v1791, 88
  %v5944 = vpop.permute.xlu0 %5943
  %5945 = vrot.lane.b32.xlu0 %v1792, 88
  %v5946 = vpop.permute.xlu0 %5945
  %5947 = vrot.lane.b32.xlu0 %v1793, 88
  %v5948 = vpop.permute.xlu0 %5947
  %v5958 = vsel %vm1795, %v5901, 0
  %v5961 = vsel %vm1795, %v5902, 0
  %v5964 = vsel %vm1795, %v5903, 0
  %v5967 = vsel %vm1795, %v5904, 0
  %v5970 = vsel %vm1795, %v5905, 0
  %v5973 = vsel %vm1795, %v5906, 0
  %v5976 = vsel %vm1795, %v5907, 0
  %v5979 = vsel %vm1795, %v5908, 0
  %5981 = vmatprep.subr.mxu0 0.0
  %v5982 = vand.u32 %v17, 4294901760
  %5983 = vmatpush1.msra.mxu0 %v5982
  %5984 = vmatprep.subr.mxu0 0.0
  %5985 = vmatpush1.msra.mxu0 0.0
  %5986 = vmatprep.subr.mxu0 0.0
  %5987 = vmatpush1.msra.mxu0 0.0
  %5988 = vmatprep.subr.mxu0 0.0
  %5989 = vmatpush1.msra.mxu0 0.0
  %5990 = vmatprep.subr.mxu0 0.0
  %5991 = vmatpush1.msra.mxu0 0.0
  %5992 = vmatprep.subr.mxu0 0.0
  %5993 = vmatpush1.msra.mxu0 0.0
  %5994 = vmatprep.subr.mxu0 0.0
  %5995 = vmatpush1.msra.mxu0 0.0
  %5996 = vmatprep.subr.mxu0 0.0
  %5997 = vmatpush1.msra.mxu0 0.0
  %5998 = vmatprep.subr.mxu0 0.0
  %5999 = vmatpush1.msra.mxu0 0.0
  %6000 = vmatprep.subr.mxu0 0.0
  %6001 = vmatpush1.msra.mxu0 0.0
  %6002 = vmatprep.subr.mxu0 0.0
  %6003 = vmatpush1.msra.mxu0 0.0
  %6004 = vmatprep.subr.mxu0 0.0
  %6005 = vmatpush1.msra.mxu0 0.0
  %6006 = vmatprep.subr.mxu0 0.0
  %6007 = vmatpush1.msra.mxu0 0.0
  %6008 = vmatprep.subr.mxu0 0.0
  %6009 = vmatpush1.msra.mxu0 0.0
  %6010 = vmatprep.subr.mxu0 0.0
  %6011 = vmatpush1.msra.mxu0 0.0
  %6012 = vmatprep.subr.mxu0 0.0
  %6013 = vmatpush1.msra.mxu0 0.0
  %6014 = vmatprep.subr.mxu0 0.0
  %6015 = vmatpush1.msra.mxu0 0.0
  %6016 = vmatprep.subr.mxu0 0.0
  %6017 = vmatpush1.msra.mxu0 0.0
  %6018 = vmatprep.subr.mxu0 0.0
  %6019 = vmatpush1.msra.mxu0 0.0
  %6020 = vmatprep.subr.mxu0 0.0
  %6021 = vmatpush1.msra.mxu0 0.0
  %6022 = vmatprep.subr.mxu0 0.0
  %6023 = vmatpush1.msra.mxu0 0.0
  %6024 = vmatprep.subr.mxu0 0.0
  %6025 = vmatpush1.msra.mxu0 0.0
  %6026 = vmatprep.subr.mxu0 0.0
  %6027 = vmatpush1.msra.mxu0 0.0
  %6028 = vmatprep.subr.mxu0 0.0
  %6029 = vmatpush1.msra.mxu0 0.0
  %6030 = vmatprep.subr.mxu0 0.0
  %6031 = vmatpush1.msra.mxu0 0.0
  %6032 = vmatprep.subr.mxu0 0.0
  %6033 = vmatpush1.msra.mxu0 0.0
  %6034 = vmatprep.subr.mxu0 0.0
  %6035 = vmatpush1.msra.mxu0 0.0
  %6036 = vmatprep.subr.mxu0 0.0
  %6037 = vmatpush1.msra.mxu0 0.0
  %6038 = vmatprep.subr.mxu0 0.0
  %6039 = vmatpush1.msra.mxu0 0.0
  %6040 = vmatprep.subr.mxu0 0.0
  %6041 = vmatpush1.msra.mxu0 0.0
  %6042 = vmatprep.subr.mxu0 0.0
  %6043 = vmatpush1.msra.mxu0 0.0
  %6044 = vmatprep.subr.mxu0 0.0
  %6045 = vmatpush1.msra.mxu0 0.0
  %6046 = vmatprep.mubr.f32.mxu0 0.0
  %v6047 = vand.u32 %v5958, 4294901760
  %v6048 = vsub.f32 %v5958, %v6047
  %v6049 = vand.u32 %v6048, 4294901760
  %v6050 = vsub.f32 %v6048, %v6049
  %v6051 = vand.u32 %v6050, 4294901760
  %6052 = vmatmul.mubr.f32.gmra.mrb[0].mxu0 %v6051
  %v6053 = vpop.f32.mrb[0].mxu0
  %v6054 = vadd.f32 %v5934, %v6053
  %v6055 = vpop.f32.mrb[0].mxu0
  %6056 = vmatprep.mubr.f32.mxu0 0.0
  %v6057 = vand.u32 %v5961, 4294901760
  %v6058 = vsub.f32 %v5961, %v6057
  %v6059 = vand.u32 %v6058, 4294901760
  %v6060 = vsub.f32 %v6058, %v6059
  %v6061 = vand.u32 %v6060, 4294901760
  %6062 = vmatmul.mubr.f32.gmra.mrb[0].mxu0 %v6061
  %v6063 = vpop.f32.mrb[0].mxu0
  %v6064 = vadd.f32 %v5936, %v6063
  %v6065 = vpop.f32.mrb[0].mxu0
  %6066 = vmatprep.mubr.f32.mxu0 0.0
  %v6067 = vand.u32 %v5964, 4294901760
  %v6068 = vsub.f32 %v5964, %v6067
  %v6069 = vand.u32 %v6068, 4294901760
  %v6070 = vsub.f32 %v6068, %v6069
  %v6071 = vand.u32 %v6070, 4294901760
  %6072 = vmatmul.mubr.f32.gmra.mrb[0].mxu0 %v6071
  %v6073 = vpop.f32.mrb[0].mxu0
  %v6074 = vadd.f32 %v5938, %v6073
  %v6075 = vpop.f32.mrb[0].mxu0
  %6076 = vmatprep.mubr.f32.mxu0 0.0
  %v6077 = vand.u32 %v5967, 4294901760
  %v6078 = vsub.f32 %v5967, %v6077
  %v6079 = vand.u32 %v6078, 4294901760
  %v6080 = vsub.f32 %v6078, %v6079
  %v6081 = vand.u32 %v6080, 4294901760
  %6082 = vmatmul.mubr.f32.gmra.mrb[0].mxu0 %v6081
  %v6083 = vpop.f32.mrb[0].mxu0
  %v6084 = vadd.f32 %v5940, %v6083
  %v6085 = vpop.f32.mrb[0].mxu0
  %6086 = vmatprep.mubr.f32.mxu0 0.0
  %v6087 = vand.u32 %v5970, 4294901760
  %v6088 = vsub.f32 %v5970, %v6087
  %v6089 = vand.u32 %v6088, 4294901760
  %v6090 = vsub.f32 %v6088, %v6089
  %v6091 = vand.u32 %v6090, 4294901760
  %6092 = vmatmul.mubr.f32.gmra.mrb[0].mxu0 %v6091
  %v6093 = vpop.f32.mrb[0].mxu0
  %v6094 = vadd.f32 %v5942, %v6093
  %v6095 = vpop.f32.mrb[0].mxu0
  %6096 = vmatprep.mubr.f32.mxu0 0.0
  %v6097 = vand.u32 %v5973, 4294901760
  %v6098 = vsub.f32 %v5973, %v6097
  %v6099 = vand.u32 %v6098, 4294901760
  %v6100 = vsub.f32 %v6098, %v6099
  %v6101 = vand.u32 %v6100, 4294901760
  %6102 = vmatmul.mubr.f32.gmra.mrb[0].mxu0 %v6101
  %v6103 = vpop.f32.mrb[0].mxu0
  %v6104 = vadd.f32 %v5944, %v6103
  %v6105 = vpop.f32.mrb[0].mxu0
  %6106 = vmatprep.mubr.f32.mxu0 0.0
  %v6107 = vand.u32 %v5976, 4294901760
  %v6108 = vsub.f32 %v5976, %v6107
  %v6109 = vand.u32 %v6108, 4294901760
  %v6110 = vsub.f32 %v6108, %v6109
  %v6111 = vand.u32 %v6110, 4294901760
  %6112 = vmatmul.mubr.f32.gmra.mrb[0].mxu0 %v6111
  %v6113 = vpop.f32.mrb[0].mxu0
  %v6114 = vadd.f32 %v5946, %v6113
  %v6115 = vpop.f32.mrb[0].mxu0
  %6116 = vmatprep.mubr.f32.mxu0 0.0
  %v6117 = vand.u32 %v5979, 4294901760
  %v6118 = vsub.f32 %v5979, %v6117
  %v6119 = vand.u32 %v6118, 4294901760
  %v6120 = vsub.f32 %v6118, %v6119
  %v6121 = vand.u32 %v6120, 4294901760
  %6122 = vmatmul.mubr.f32.gmra.mrb[0].mxu0 %v6121
  %v6123 = vpop.f32.mrb[0].mxu0
  %v6124 = vadd.f32 %v5948, %v6123
  %v6125 = vpop.f32.mrb[0].mxu0
  %6126 = vdwg.mxu0
  %6127 = vmatprep.subr.mxu0 0.0
  %v6128 = vand.u32 %v17, 4294901760
  %v6129 = vsub.f32 %v17, %v6128
  %v6130 = vand.u32 %v6129, 4294901760
  %v6131 = vsub.f32 %v6129, %v6130
  %v6132 = vand.u32 %v6131, 4294901760
  %6133 = vmatpush1.msra.mxu0 %v6132
  %6134 = vmatprep.subr.mxu0 0.0
  %6135 = vmatpush1.msra.mxu0 0.0
  %6136 = vmatprep.subr.mxu0 0.0
  %6137 = vmatpush1.msra.mxu0 0.0
  %6138 = vmatprep.subr.mxu0 0.0
  %6139 = vmatpush1.msra.mxu0 0.0
  %6140 = vmatprep.subr.mxu0 0.0
  %6141 = vmatpush1.msra.mxu0 0.0
  %6142 = vmatprep.subr.mxu0 0.0
  %6143 = vmatpush1.msra.mxu0 0.0
  %6144 = vmatprep.subr.mxu0 0.0
  %6145 = vmatpush1.msra.mxu0 0.0
  %6146 = vmatprep.subr.mxu0 0.0
  %6147 = vmatpush1.msra.mxu0 0.0
  %6148 = vmatprep.subr.mxu0 0.0
  %6149 = vmatpush1.msra.mxu0 0.0
  %6150 = vmatprep.subr.mxu0 0.0
  %6151 = vmatpush1.msra.mxu0 0.0
  %6152 = vmatprep.subr.mxu0 0.0
  %6153 = vmatpush1.msra.mxu0 0.0
  %6154 = vmatprep.subr.mxu0 0.0
  %6155 = vmatpush1.msra.mxu0 0.0
  %6156 = vmatprep.subr.mxu0 0.0
  %6157 = vmatpush1.msra.mxu0 0.0
  %6158 = vmatprep.subr.mxu0 0.0
  %6159 = vmatpush1.msra.mxu0 0.0
  %6160 = vmatprep.subr.mxu0 0.0
  %6161 = vmatpush1.msra.mxu0 0.0
  %6162 = vmatprep.subr.mxu0 0.0
  %6163 = vmatpush1.msra.mxu0 0.0
  %6164 = vmatprep.subr.mxu0 0.0
  %6165 = vmatpush1.msra.mxu0 0.0
  %6166 = vmatprep.subr.mxu0 0.0
  %6167 = vmatpush1.msra.mxu0 0.0
  %6168 = vmatprep.subr.mxu0 0.0
  %6169 = vmatpush1.msra.mxu0 0.0
  %6170 = vmatprep.subr.mxu0 0.0
  %6171 = vmatpush1.msra.mxu0 0.0
  %6172 = vmatprep.subr.mxu0 0.0
  %6173 = vmatpush1.msra.mxu0 0.0
  %6174 = vmatprep.subr.mxu0 0.0
  %6175 = vmatpush1.msra.mxu0 0.0
  %6176 = vmatprep.subr.mxu0 0.0
  %6177 = vmatpush1.msra.mxu0 0.0
  %6178 = vmatprep.subr.mxu0 0.0
  %6179 = vmatpush1.msra.mxu0 0.0
  %6180 = vmatprep.subr.mxu0 0.0
  %6181 = vmatpush1.msra.mxu0 0.0
  %6182 = vmatprep.subr.mxu0 0.0
  %6183 = vmatpush1.msra.mxu0 0.0
  %6184 = vmatprep.subr.mxu0 0.0
  %6185 = vmatpush1.msra.mxu0 0.0
  %6186 = vmatprep.subr.mxu0 0.0
  %6187 = vmatpush1.msra.mxu0 0.0
  %6188 = vmatprep.subr.mxu0 0.0
  %6189 = vmatpush1.msra.mxu0 0.0
  %6190 = vmatprep.subr.mxu0 0.0
  %6191 = vmatpush1.msra.mxu0 0.0
  %6192 = vmatprep.subr.mxu0 0.0
  %6193 = vmatpush1.msra.mxu0 0.0
  %6194 = vmatprep.subr.mxu0 0.0
  %6195 = vmatpush1.msra.mxu0 0.0
  %6196 = vmatprep.mubr.f32.mxu0 0.0
  %v6197 = vand.u32 %v5958, 4294901760
  %6198 = vmatmul.mubr.f32.gmra.mrb[0].mxu0 %v6197
  %v6199 = vpop.f32.mrb[0].mxu0
  %v6200 = vadd.f32 %v6054, %v6199
  %v6201 = vpop.f32.mrb[0].mxu0
  %6202 = vmatprep.mubr.f32.mxu0 0.0
  %v6203 = vand.u32 %v5961, 4294901760
  %6204 = vmatmul.mubr.f32.gmra.mrb[0].mxu0 %v6203
  %v6205 = vpop.f32.mrb[0].mxu0
  %v6206 = vadd.f32 %v6064, %v6205
  %v6207 = vpop.f32.mrb[0].mxu0
  %6208 = vmatprep.mubr.f32.mxu0 0.0
  %v6209 = vand.u32 %v5964, 4294901760
  %6210 = vmatmul.mubr.f32.gmra.mrb[0].mxu0 %v6209
  %v6211 = vpop.f32.mrb[0].mxu0
  %v6212 = vadd.f32 %v6074, %v6211
  %v6213 = vpop.f32.mrb[0].mxu0
  %6214 = vmatprep.mubr.f32.mxu0 0.0
  %v6215 = vand.u32 %v5967, 4294901760
  %6216 = vmatmul.mubr.f32.gmra.mrb[0].mxu0 %v6215
  %v6217 = vpop.f32.mrb[0].mxu0
  %v6218 = vadd.f32 %v6084, %v6217
  %v6219 = vpop.f32.mrb[0].mxu0
  %6220 = vmatprep.mubr.f32.mxu0 0.0
  %v6221 = vand.u32 %v5970, 4294901760
  %6222 = vmatmul.mubr.f32.gmra.mrb[0].mxu0 %v6221
  %v6223 = vpop.f32.mrb[0].mxu0
  %v6224 = vadd.f32 %v6094, %v6223
  %v6225 = vpop.f32.mrb[0].mxu0
  %6226 = vmatprep.mubr.f32.mxu0 0.0
  %v6227 = vand.u32 %v5973, 4294901760
  %6228 = vmatmul.mubr.f32.gmra.mrb[0].mxu0 %v6227
  %v6229 = vpop.f32.mrb[0].mxu0
  %v6230 = vadd.f32 %v6104, %v6229
  %v6231 = vpop.f32.mrb[0].mxu0
  %6232 = vmatprep.mubr.f32.mxu0 0.0
  %v6233 = vand.u32 %v5976, 4294901760
  %6234 = vmatmul.mubr.f32.gmra.mrb[0].mxu0 %v6233
  %v6235 = vpop.f32.mrb[0].mxu0
  %v6236 = vadd.f32 %v6114, %v6235
  %v6237 = vpop.f32.mrb[0].mxu0
  %6238 = vmatprep.mubr.f32.mxu0 0.0
  %v6239 = vand.u32 %v5979, 4294901760
  %6240 = vmatmul.mubr.f32.gmra.mrb[0].mxu0 %v6239
  %v6241 = vpop.f32.mrb[0].mxu0
  %v6242 = vadd.f32 %v6124, %v6241
  %v6243 = vpop.f32.mrb[0].mxu0
  %6244 = vdwg.mxu0
  %6245 = vmatprep.subr.mxu0 0.0
  %v6246 = vand.u32 %v17, 4294901760
  %v6247 = vsub.f32 %v17, %v6246
  %6248 = vmatpush1.msra.mxu0 %v6247
  %6249 = vmatprep.subr.mxu0 0.0
  %6250 = vmatpush1.msra.mxu0 0.0
  %6251 = vmatprep.subr.mxu0 0.0
  %6252 = vmatpush1.msra.mxu0 0.0
  %6253 = vmatprep.subr.mxu0 0.0
  %6254 = vmatpush1.msra.mxu0 0.0
  %6255 = vmatprep.subr.mxu0 0.0
  %6256 = vmatpush1.msra.mxu0 0.0
  %6257 = vmatprep.subr.mxu0 0.0
  %6258 = vmatpush1.msra.mxu0 0.0
  %6259 = vmatprep.subr.mxu0 0.0
  %6260 = vmatpush1.msra.mxu0 0.0
  %6261 = vmatprep.subr.mxu0 0.0
  %6262 = vmatpush1.msra.mxu0 0.0
  %6263 = vmatprep.subr.mxu0 0.0
  %6264 = vmatpush1.msra.mxu0 0.0
  %6265 = vmatprep.subr.mxu0 0.0
  %6266 = vmatpush1.msra.mxu0 0.0
  %6267 = vmatprep.subr.mxu0 0.0
  %6268 = vmatpush1.msra.mxu0 0.0
  %6269 = vmatprep.subr.mxu0 0.0
  %6270 = vmatpush1.msra.mxu0 0.0
  %6271 = vmatprep.subr.mxu0 0.0
  %6272 = vmatpush1.msra.mxu0 0.0
  %6273 = vmatprep.subr.mxu0 0.0
  %6274 = vmatpush1.msra.mxu0 0.0
  %6275 = vmatprep.subr.mxu0 0.0
  %6276 = vmatpush1.msra.mxu0 0.0
  %6277 = vmatprep.subr.mxu0 0.0
  %6278 = vmatpush1.msra.mxu0 0.0
  %6279 = vmatprep.subr.mxu0 0.0
  %6280 = vmatpush1.msra.mxu0 0.0
  %6281 = vmatprep.subr.mxu0 0.0
  %6282 = vmatpush1.msra.mxu0 0.0
  %6283 = vmatprep.subr.mxu0 0.0
  %6284 = vmatpush1.msra.mxu0 0.0
  %6285 = vmatprep.subr.mxu0 0.0
  %6286 = vmatpush1.msra.mxu0 0.0
  %6287 = vmatprep.subr.mxu0 0.0
  %6288 = vmatpush1.msra.mxu0 0.0
  %6289 = vmatprep.subr.mxu0 0.0
  %6290 = vmatpush1.msra.mxu0 0.0
  %6291 = vmatprep.subr.mxu0 0.0
  %6292 = vmatpush1.msra.mxu0 0.0
  %6293 = vmatprep.subr.mxu0 0.0
  %6294 = vmatpush1.msra.mxu0 0.0
  %6295 = vmatprep.subr.mxu0 0.0
  %6296 = vmatpush1.msra.mxu0 0.0
  %6297 = vmatprep.subr.mxu0 0.0
  %6298 = vmatpush1.msra.mxu0 0.0
  %6299 = vmatprep.subr.mxu0 0.0
  %6300 = vmatpush1.msra.mxu0 0.0
  %6301 = vmatprep.subr.mxu0 0.0
  %6302 = vmatpush1.msra.mxu0 0.0
  %6303 = vmatprep.subr.mxu0 0.0
  %6304 = vmatpush1.msra.mxu0 0.0
  %6305 = vmatprep.subr.mxu0 0.0
  %6306 = vmatpush1.msra.mxu0 0.0
  %6307 = vmatprep.subr.mxu0 0.0
  %6308 = vmatpush1.msra.mxu0 0.0
  %6309 = vmatprep.subr.mxu0 0.0
  %6310 = vmatpush1.msra.mxu0 0.0
  %6311 = vmatprep.mubr.f32.mxu0 0.0
  %v6312 = vand.u32 %v5958, 4294901760
  %v6313 = vsub.f32 %v5958, %v6312
  %6314 = vmatmul.mubr.f32.gmra.mrb[0].mxu0 %v6313
  %v6315 = vpop.f32.mrb[0].mxu0
  %v6316 = vadd.f32 %v6200, %v6315
  %v6317 = vpop.f32.mrb[0].mxu0
  %6318 = vmatprep.mubr.f32.mxu0 0.0
  %v6319 = vand.u32 %v5961, 4294901760
  %v6320 = vsub.f32 %v5961, %v6319
  %6321 = vmatmul.mubr.f32.gmra.mrb[0].mxu0 %v6320
  %v6322 = vpop.f32.mrb[0].mxu0
  %v6323 = vadd.f32 %v6206, %v6322
  %v6324 = vpop.f32.mrb[0].mxu0
  %6325 = vmatprep.mubr.f32.mxu0 0.0
  %v6326 = vand.u32 %v5964, 4294901760
  %v6327 = vsub.f32 %v5964, %v6326
  %6328 = vmatmul.mubr.f32.gmra.mrb[0].mxu0 %v6327
  %v6329 = vpop.f32.mrb[0].mxu0
  %v6330 = vadd.f32 %v6212, %v6329
  %v6331 = vpop.f32.mrb[0].mxu0
  %6332 = vmatprep.mubr.f32.mxu0 0.0
  %v6333 = vand.u32 %v5967, 4294901760
  %v6334 = vsub.f32 %v5967, %v6333
  %6335 = vmatmul.mubr.f32.gmra.mrb[0].mxu0 %v6334
  %v6336 = vpop.f32.mrb[0].mxu0
  %v6337 = vadd.f32 %v6218, %v6336
  %v6338 = vpop.f32.mrb[0].mxu0
  %6339 = vmatprep.mubr.f32.mxu0 0.0
  %v6340 = vand.u32 %v5970, 4294901760
  %v6341 = vsub.f32 %v5970, %v6340
  %6342 = vmatmul.mubr.f32.gmra.mrb[0].mxu0 %v6341
  %v6343 = vpop.f32.mrb[0].mxu0
  %v6344 = vadd.f32 %v6224, %v6343
  %v6345 = vpop.f32.mrb[0].mxu0
  %6346 = vmatprep.mubr.f32.mxu0 0.0
  %v6347 = vand.u32 %v5973, 4294901760
  %v6348 = vsub.f32 %v5973, %v6347
  %6349 = vmatmul.mubr.f32.gmra.mrb[0].mxu0 %v6348
  %v6350 = vpop.f32.mrb[0].mxu0
  %v6351 = vadd.f32 %v6230, %v6350
  %v6352 = vpop.f32.mrb[0].mxu0
  %6353 = vmatprep.mubr.f32.mxu0 0.0
  %v6354 = vand.u32 %v5976, 4294901760
  %v6355 = vsub.f32 %v5976, %v6354
  %6356 = vmatmul.mubr.f32.gmra.mrb[0].mxu0 %v6355
  %v6357 = vpop.f32.mrb[0].mxu0
  %v6358 = vadd.f32 %v6236, %v6357
  %v6359 = vpop.f32.mrb[0].mxu0
  %6360 = vmatprep.mubr.f32.mxu0 0.0
  %v6361 = vand.u32 %v5979, 4294901760
  %v6362 = vsub.f32 %v5979, %v6361
  %6363 = vmatmul.mubr.f32.gmra.mrb[0].mxu0 %v6362
  %v6364 = vpop.f32.mrb[0].mxu0
  %v6365 = vadd.f32 %v6242, %v6364
  %v6366 = vpop.f32.mrb[0].mxu0
  %6367 = vdwg.mxu0
  %6368 = vmatprep.subr.mxu0 0.0
  %v6369 = vand.u32 %v17, 4294901760
  %6370 = vmatpush1.msra.mxu0 %v6369
  %6371 = vmatprep.subr.mxu0 0.0
  %6372 = vmatpush1.msra.mxu0 0.0
  %6373 = vmatprep.subr.mxu0 0.0
  %6374 = vmatpush1.msra.mxu0 0.0
  %6375 = vmatprep.subr.mxu0 0.0
  %6376 = vmatpush1.msra.mxu0 0.0
  %6377 = vmatprep.subr.mxu0 0.0
  %6378 = vmatpush1.msra.mxu0 0.0
  %6379 = vmatprep.subr.mxu0 0.0
  %6380 = vmatpush1.msra.mxu0 0.0
  %6381 = vmatprep.subr.mxu0 0.0
  %6382 = vmatpush1.msra.mxu0 0.0
  %6383 = vmatprep.subr.mxu0 0.0
  %6384 = vmatpush1.msra.mxu0 0.0
  %6385 = vmatprep.subr.mxu0 0.0
  %6386 = vmatpush1.msra.mxu0 0.0
  %6387 = vmatprep.subr.mxu0 0.0
  %6388 = vmatpush1.msra.mxu0 0.0
  %6389 = vmatprep.subr.mxu0 0.0
  %6390 = vmatpush1.msra.mxu0 0.0
  %6391 = vmatprep.subr.mxu0 0.0
  %6392 = vmatpush1.msra.mxu0 0.0
  %6393 = vmatprep.subr.mxu0 0.0
  %6394 = vmatpush1.msra.mxu0 0.0
  %6395 = vmatprep.subr.mxu0 0.0
  %6396 = vmatpush1.msra.mxu0 0.0
  %6397 = vmatprep.subr.mxu0 0.0
  %6398 = vmatpush1.msra.mxu0 0.0
  %6399 = vmatprep.subr.mxu0 0.0
  %6400 = vmatpush1.msra.mxu0 0.0
  %6401 = vmatprep.subr.mxu0 0.0
  %6402 = vmatpush1.msra.mxu0 0.0
  %6403 = vmatprep.subr.mxu0 0.0
  %6404 = vmatpush1.msra.mxu0 0.0
  %6405 = vmatprep.subr.mxu0 0.0
  %6406 = vmatpush1.msra.mxu0 0.0
  %6407 = vmatprep.subr.mxu0 0.0
  %6408 = vmatpush1.msra.mxu0 0.0
  %6409 = vmatprep.subr.mxu0 0.0
  %6410 = vmatpush1.msra.mxu0 0.0
  %6411 = vmatprep.subr.mxu0 0.0
  %6412 = vmatpush1.msra.mxu0 0.0
  %6413 = vmatprep.subr.mxu0 0.0
  %6414 = vmatpush1.msra.mxu0 0.0
  %6415 = vmatprep.subr.mxu0 0.0
  %6416 = vmatpush1.msra.mxu0 0.0
  %6417 = vmatprep.subr.mxu0 0.0
  %6418 = vmatpush1.msra.mxu0 0.0
  %6419 = vmatprep.subr.mxu0 0.0
  %6420 = vmatpush1.msra.mxu0 0.0
  %6421 = vmatprep.subr.mxu0 0.0
  %6422 = vmatpush1.msra.mxu0 0.0
  %6423 = vmatprep.subr.mxu0 0.0
  %6424 = vmatpush1.msra.mxu0 0.0
  %6425 = vmatprep.subr.mxu0 0.0
  %6426 = vmatpush1.msra.mxu0 0.0
  %6427 = vmatprep.subr.mxu0 0.0
  %6428 = vmatpush1.msra.mxu0 0.0
  %6429 = vmatprep.subr.mxu0 0.0
  %6430 = vmatpush1.msra.mxu0 0.0
  %6431 = vmatprep.subr.mxu0 0.0
  %6432 = vmatpush1.msra.mxu0 0.0
  %6433 = vmatprep.mubr.f32.mxu0 0.0
  %v6434 = vand.u32 %v5958, 4294901760
  %v6435 = vsub.f32 %v5958, %v6434
  %v6436 = vand.u32 %v6435, 4294901760
  %6437 = vmatmul.mubr.f32.gmra.mrb[0].mxu0 %v6436
  %v6438 = vpop.f32.mrb[0].mxu0
  %v6439 = vadd.f32 %v6316, %v6438
  %v6440 = vpop.f32.mrb[0].mxu0
  %6441 = vmatprep.mubr.f32.mxu0 0.0
  %v6442 = vand.u32 %v5961, 4294901760
  %v6443 = vsub.f32 %v5961, %v6442
  %v6444 = vand.u32 %v6443, 4294901760
  %6445 = vmatmul.mubr.f32.gmra.mrb[0].mxu0 %v6444
  %v6446 = vpop.f32.mrb[0].mxu0
  %v6447 = vadd.f32 %v6323, %v6446
  %v6448 = vpop.f32.mrb[0].mxu0
  %6449 = vmatprep.mubr.f32.mxu0 0.0
  %v6450 = vand.u32 %v5964, 4294901760
  %v6451 = vsub.f32 %v5964, %v6450
  %v6452 = vand.u32 %v6451, 4294901760
  %6453 = vmatmul.mubr.f32.gmra.mrb[0].mxu0 %v6452
  %v6454 = vpop.f32.mrb[0].mxu0
  %v6455 = vadd.f32 %v6330, %v6454
  %v6456 = vpop.f32.mrb[0].mxu0
  %6457 = vmatprep.mubr.f32.mxu0 0.0
  %v6458 = vand.u32 %v5967, 4294901760
  %v6459 = vsub.f32 %v5967, %v6458
  %v6460 = vand.u32 %v6459, 4294901760
  %6461 = vmatmul.mubr.f32.gmra.mrb[0].mxu0 %v6460
  %v6462 = vpop.f32.mrb[0].mxu0
  %v6463 = vadd.f32 %v6337, %v6462
  %v6464 = vpop.f32.mrb[0].mxu0
  %6465 = vmatprep.mubr.f32.mxu0 0.0
  %v6466 = vand.u32 %v5970, 4294901760
  %v6467 = vsub.f32 %v5970, %v6466
  %v6468 = vand.u32 %v6467, 4294901760
  %6469 = vmatmul.mubr.f32.gmra.mrb[0].mxu0 %v6468
  %v6470 = vpop.f32.mrb[0].mxu0
  %v6471 = vadd.f32 %v6344, %v6470
  %v6472 = vpop.f32.mrb[0].mxu0
  %6473 = vmatprep.mubr.f32.mxu0 0.0
  %v6474 = vand.u32 %v5973, 4294901760
  %v6475 = vsub.f32 %v5973, %v6474
  %v6476 = vand.u32 %v6475, 4294901760
  %6477 = vmatmul.mubr.f32.gmra.mrb[0].mxu0 %v6476
  %v6478 = vpop.f32.mrb[0].mxu0
  %v6479 = vadd.f32 %v6351, %v6478
  %v6480 = vpop.f32.mrb[0].mxu0
  %6481 = vmatprep.mubr.f32.mxu0 0.0
  %v6482 = vand.u32 %v5976, 4294901760
  %v6483 = vsub.f32 %v5976, %v6482
  %v6484 = vand.u32 %v6483, 4294901760
  %6485 = vmatmul.mubr.f32.gmra.mrb[0].mxu0 %v6484
  %v6486 = vpop.f32.mrb[0].mxu0
  %v6487 = vadd.f32 %v6358, %v6486
  %v6488 = vpop.f32.mrb[0].mxu0
  %6489 = vmatprep.mubr.f32.mxu0 0.0
  %v6490 = vand.u32 %v5979, 4294901760
  %v6491 = vsub.f32 %v5979, %v6490
  %v6492 = vand.u32 %v6491, 4294901760
  %6493 = vmatmul.mubr.f32.gmra.mrb[0].mxu0 %v6492
  %v6494 = vpop.f32.mrb[0].mxu0
  %v6495 = vadd.f32 %v6365, %v6494
  %v6496 = vpop.f32.mrb[0].mxu0
  %6497 = vdwg.mxu0
  %6498 = vmatprep.subr.mxu0 0.0
  %v6499 = vand.u32 %v17, 4294901760
  %v6500 = vsub.f32 %v17, %v6499
  %v6501 = vand.u32 %v6500, 4294901760
  %6502 = vmatpush1.msra.mxu0 %v6501
  %6503 = vmatprep.subr.mxu0 0.0
  %6504 = vmatpush1.msra.mxu0 0.0
  %6505 = vmatprep.subr.mxu0 0.0
  %6506 = vmatpush1.msra.mxu0 0.0
  %6507 = vmatprep.subr.mxu0 0.0
  %6508 = vmatpush1.msra.mxu0 0.0
  %6509 = vmatprep.subr.mxu0 0.0
  %6510 = vmatpush1.msra.mxu0 0.0
  %6511 = vmatprep.subr.mxu0 0.0
  %6512 = vmatpush1.msra.mxu0 0.0
  %6513 = vmatprep.subr.mxu0 0.0
  %6514 = vmatpush1.msra.mxu0 0.0
  %6515 = vmatprep.subr.mxu0 0.0
  %6516 = vmatpush1.msra.mxu0 0.0
  %6517 = vmatprep.subr.mxu0 0.0
  %6518 = vmatpush1.msra.mxu0 0.0
  %6519 = vmatprep.subr.mxu0 0.0
  %6520 = vmatpush1.msra.mxu0 0.0
  %6521 = vmatprep.subr.mxu0 0.0
  %6522 = vmatpush1.msra.mxu0 0.0
  %6523 = vmatprep.subr.mxu0 0.0
  %6524 = vmatpush1.msra.mxu0 0.0
  %6525 = vmatprep.subr.mxu0 0.0
  %6526 = vmatpush1.msra.mxu0 0.0
  %6527 = vmatprep.subr.mxu0 0.0
  %6528 = vmatpush1.msra.mxu0 0.0
  %6529 = vmatprep.subr.mxu0 0.0
  %6530 = vmatpush1.msra.mxu0 0.0
  %6531 = vmatprep.subr.mxu0 0.0
  %6532 = vmatpush1.msra.mxu0 0.0
  %6533 = vmatprep.subr.mxu0 0.0
  %6534 = vmatpush1.msra.mxu0 0.0
  %6535 = vmatprep.subr.mxu0 0.0
  %6536 = vmatpush1.msra.mxu0 0.0
  %6537 = vmatprep.subr.mxu0 0.0
  %6538 = vmatpush1.msra.mxu0 0.0
  %6539 = vmatprep.subr.mxu0 0.0
  %6540 = vmatpush1.msra.mxu0 0.0
  %6541 = vmatprep.subr.mxu0 0.0
  %6542 = vmatpush1.msra.mxu0 0.0
  %6543 = vmatprep.subr.mxu0 0.0
  %6544 = vmatpush1.msra.mxu0 0.0
  %6545 = vmatprep.subr.mxu0 0.0
  %6546 = vmatpush1.msra.mxu0 0.0
  %6547 = vmatprep.subr.mxu0 0.0
  %6548 = vmatpush1.msra.mxu0 0.0
  %6549 = vmatprep.subr.mxu0 0.0
  %6550 = vmatpush1.msra.mxu0 0.0
  %6551 = vmatprep.subr.mxu0 0.0
  %6552 = vmatpush1.msra.mxu0 0.0
  %6553 = vmatprep.subr.mxu0 0.0
  %6554 = vmatpush1.msra.mxu0 0.0
  %6555 = vmatprep.subr.mxu0 0.0
  %6556 = vmatpush1.msra.mxu0 0.0
  %6557 = vmatprep.subr.mxu0 0.0
  %6558 = vmatpush1.msra.mxu0 0.0
  %6559 = vmatprep.subr.mxu0 0.0
  %6560 = vmatpush1.msra.mxu0 0.0
  %6561 = vmatprep.subr.mxu0 0.0
  %6562 = vmatpush1.msra.mxu0 0.0
  %6563 = vmatprep.subr.mxu0 0.0
  %6564 = vmatpush1.msra.mxu0 0.0
  %6565 = vmatprep.mubr.f32.mxu0 0.0
  %v6566 = vand.u32 %v5958, 4294901760
  %6567 = vmatmul.mubr.f32.gmra.mrb[0].mxu0 %v6566
  %v6568 = vpop.f32.mrb[0].mxu0
  %v6569 = vadd.f32 %v6439, %v6568
  %v6570 = vpop.f32.mrb[0].mxu0
  %6571 = vmatprep.mubr.f32.mxu0 0.0
  %v6572 = vand.u32 %v5961, 4294901760
  %6573 = vmatmul.mubr.f32.gmra.mrb[0].mxu0 %v6572
  %v6574 = vpop.f32.mrb[0].mxu0
  %v6575 = vadd.f32 %v6447, %v6574
  %v6576 = vpop.f32.mrb[0].mxu0
  %6577 = vmatprep.mubr.f32.mxu0 0.0
  %v6578 = vand.u32 %v5964, 4294901760
  %6579 = vmatmul.mubr.f32.gmra.mrb[0].mxu0 %v6578
  %v6580 = vpop.f32.mrb[0].mxu0
  %v6581 = vadd.f32 %v6455, %v6580
  %v6582 = vpop.f32.mrb[0].mxu0
  %6583 = vmatprep.mubr.f32.mxu0 0.0
  %v6584 = vand.u32 %v5967, 4294901760
  %6585 = vmatmul.mubr.f32.gmra.mrb[0].mxu0 %v6584
  %v6586 = vpop.f32.mrb[0].mxu0
  %v6587 = vadd.f32 %v6463, %v6586
  %v6588 = vpop.f32.mrb[0].mxu0
  %6589 = vmatprep.mubr.f32.mxu0 0.0
  %v6590 = vand.u32 %v5970, 4294901760
  %6591 = vmatmul.mubr.f32.gmra.mrb[0].mxu0 %v6590
  %v6592 = vpop.f32.mrb[0].mxu0
  %v6593 = vadd.f32 %v6471, %v6592
  %v6594 = vpop.f32.mrb[0].mxu0
  %6595 = vmatprep.mubr.f32.mxu0 0.0
  %v6596 = vand.u32 %v5973, 4294901760
  %6597 = vmatmul.mubr.f32.gmra.mrb[0].mxu0 %v6596
  %v6598 = vpop.f32.mrb[0].mxu0
  %v6599 = vadd.f32 %v6479, %v6598
  %v6600 = vpop.f32.mrb[0].mxu0
  %6601 = vmatprep.mubr.f32.mxu0 0.0
  %v6602 = vand.u32 %v5976, 4294901760
  %6603 = vmatmul.mubr.f32.gmra.mrb[0].mxu0 %v6602
  %v6604 = vpop.f32.mrb[0].mxu0
  %v6605 = vadd.f32 %v6487, %v6604
  %v6606 = vpop.f32.mrb[0].mxu0
  %6607 = vmatprep.mubr.f32.mxu0 0.0
  %v6608 = vand.u32 %v5979, 4294901760
  %6609 = vmatmul.mubr.f32.gmra.mrb[0].mxu0 %v6608
  %v6610 = vpop.f32.mrb[0].mxu0
  %v6611 = vadd.f32 %v6495, %v6610
  %v6612 = vpop.f32.mrb[0].mxu0
  %6613 = vdwg.mxu0
  %6614 = vmatprep.subr.mxu0 0.0
  %v6615 = vand.u32 %v17, 4294901760
  %6616 = vmatpush1.msra.mxu0 %v6615
  %6617 = vmatprep.subr.mxu0 0.0
  %6618 = vmatpush1.msra.mxu0 0.0
  %6619 = vmatprep.subr.mxu0 0.0
  %6620 = vmatpush1.msra.mxu0 0.0
  %6621 = vmatprep.subr.mxu0 0.0
  %6622 = vmatpush1.msra.mxu0 0.0
  %6623 = vmatprep.subr.mxu0 0.0
  %6624 = vmatpush1.msra.mxu0 0.0
  %6625 = vmatprep.subr.mxu0 0.0
  %6626 = vmatpush1.msra.mxu0 0.0
  %6627 = vmatprep.subr.mxu0 0.0
  %6628 = vmatpush1.msra.mxu0 0.0
  %6629 = vmatprep.subr.mxu0 0.0
  %6630 = vmatpush1.msra.mxu0 0.0
  %6631 = vmatprep.subr.mxu0 0.0
  %6632 = vmatpush1.msra.mxu0 0.0
  %6633 = vmatprep.subr.mxu0 0.0
  %6634 = vmatpush1.msra.mxu0 0.0
  %6635 = vmatprep.subr.mxu0 0.0
  %6636 = vmatpush1.msra.mxu0 0.0
  %6637 = vmatprep.subr.mxu0 0.0
  %6638 = vmatpush1.msra.mxu0 0.0
  %6639 = vmatprep.subr.mxu0 0.0
  %6640 = vmatpush1.msra.mxu0 0.0
  %6641 = vmatprep.subr.mxu0 0.0
  %6642 = vmatpush1.msra.mxu0 0.0
  %6643 = vmatprep.subr.mxu0 0.0
  %6644 = vmatpush1.msra.mxu0 0.0
  %6645 = vmatprep.subr.mxu0 0.0
  %6646 = vmatpush1.msra.mxu0 0.0
  %6647 = vmatprep.subr.mxu0 0.0
  %6648 = vmatpush1.msra.mxu0 0.0
  %6649 = vmatprep.subr.mxu0 0.0
  %6650 = vmatpush1.msra.mxu0 0.0
  %6651 = vmatprep.subr.mxu0 0.0
  %6652 = vmatpush1.msra.mxu0 0.0
  %6653 = vmatprep.subr.mxu0 0.0
  %6654 = vmatpush1.msra.mxu0 0.0
  %6655 = vmatprep.subr.mxu0 0.0
  %6656 = vmatpush1.msra.mxu0 0.0
  %6657 = vmatprep.subr.mxu0 0.0
  %6658 = vmatpush1.msra.mxu0 0.0
  %6659 = vmatprep.subr.mxu0 0.0
  %6660 = vmatpush1.msra.mxu0 0.0
  %6661 = vmatprep.subr.mxu0 0.0
  %6662 = vmatpush1.msra.mxu0 0.0
  %6663 = vmatprep.subr.mxu0 0.0
  %6664 = vmatpush1.msra.mxu0 0.0
  %6665 = vmatprep.subr.mxu0 0.0
  %6666 = vmatpush1.msra.mxu0 0.0
  %6667 = vmatprep.subr.mxu0 0.0
  %6668 = vmatpush1.msra.mxu0 0.0
  %6669 = vmatprep.subr.mxu0 0.0
  %6670 = vmatpush1.msra.mxu0 0.0
  %6671 = vmatprep.subr.mxu0 0.0
  %6672 = vmatpush1.msra.mxu0 0.0
  %6673 = vmatprep.subr.mxu0 0.0
  %6674 = vmatpush1.msra.mxu0 0.0
  %6675 = vmatprep.subr.mxu0 0.0
  %6676 = vmatpush1.msra.mxu0 0.0
  %6677 = vmatprep.subr.mxu0 0.0
  %6678 = vmatpush1.msra.mxu0 0.0
  %6679 = vmatprep.mubr.f32.mxu0 0.0
  %v6680 = vand.u32 %v5958, 4294901760
  %6681 = vmatmul.mubr.f32.gmra.mrb[0].mxu0 %v6680
  %v6682 = vpop.f32.mrb[0].mxu0
  %v6683 = vadd.f32 %v6569, %v6682
  %v6684 = vpop.f32.mrb[0].mxu0
  %6685 = vmatprep.mubr.f32.mxu0 0.0
  %v6686 = vand.u32 %v5961, 4294901760
  %6687 = vmatmul.mubr.f32.gmra.mrb[0].mxu0 %v6686
  %v6688 = vpop.f32.mrb[0].mxu0
  %v6689 = vadd.f32 %v6575, %v6688
  %v6690 = vpop.f32.mrb[0].mxu0
  %6691 = vmatprep.mubr.f32.mxu0 0.0
  %v6692 = vand.u32 %v5964, 4294901760
  %6693 = vmatmul.mubr.f32.gmra.mrb[0].mxu0 %v6692
  %v6694 = vpop.f32.mrb[0].mxu0
  %v6695 = vadd.f32 %v6581, %v6694
  %v6696 = vpop.f32.mrb[0].mxu0
  %6697 = vmatprep.mubr.f32.mxu0 0.0
  %v6698 = vand.u32 %v5967, 4294901760
  %6699 = vmatmul.mubr.f32.gmra.mrb[0].mxu0 %v6698
  %v6700 = vpop.f32.mrb[0].mxu0
  %v6701 = vadd.f32 %v6587, %v6700
  %v6702 = vpop.f32.mrb[0].mxu0
  %6703 = vmatprep.mubr.f32.mxu0 0.0
  %v6704 = vand.u32 %v5970, 4294901760
  %6705 = vmatmul.mubr.f32.gmra.mrb[0].mxu0 %v6704
  %v6706 = vpop.f32.mrb[0].mxu0
  %v6707 = vadd.f32 %v6593, %v6706
  %v6708 = vpop.f32.mrb[0].mxu0
  %6709 = vmatprep.mubr.f32.mxu0 0.0
  %v6710 = vand.u32 %v5973, 4294901760
  %6711 = vmatmul.mubr.f32.gmra.mrb[0].mxu0 %v6710
  %v6712 = vpop.f32.mrb[0].mxu0
  %v6713 = vadd.f32 %v6599, %v6712
  %v6714 = vpop.f32.mrb[0].mxu0
  %6715 = vmatprep.mubr.f32.mxu0 0.0
  %v6716 = vand.u32 %v5976, 4294901760
  %6717 = vmatmul.mubr.f32.gmra.mrb[0].mxu0 %v6716
  %v6718 = vpop.f32.mrb[0].mxu0
  %v6719 = vadd.f32 %v6605, %v6718
  %v6720 = vpop.f32.mrb[0].mxu0
  %6721 = vmatprep.mubr.f32.mxu0 0.0
  %v6722 = vand.u32 %v5979, 4294901760
  %6723 = vmatmul.mubr.f32.gmra.mrb[0].mxu0 %v6722
  %v6724 = vpop.f32.mrb[0].mxu0
  %v6725 = vadd.f32 %v6611, %v6724
  %v6726 = vpop.f32.mrb[0].mxu0
  %6727 = vdwg.mxu0
  %v6728 = vmul.f32 %v6683, 0.1
  %v6729 = vmul.f32 %v6689, 0.1
  %v6730 = vmul.f32 %v6695, 0.1
  %v6731 = vmul.f32 %v6701, 0.1
  %v6732 = vmul.f32 %v6707, 0.1
  %v6733 = vmul.f32 %v6713, 0.1
  %v6734 = vmul.f32 %v6719, 0.1
  %v6735 = vmul.f32 %v6725, 0.1
  %v6736 = vadd.f32 %v5901, %v6728
  %v6737 = vadd.f32 %v5902, %v6729
  %v6738 = vadd.f32 %v5903, %v6730
  %v6739 = vadd.f32 %v5904, %v6731
  %v6740 = vadd.f32 %v5905, %v6732
  %v6741 = vadd.f32 %v5906, %v6733
  %v6742 = vadd.f32 %v5907, %v6734
  %v6743 = vadd.f32 %v5908, %v6735
  %v6744 = vsub.f32 %v6736, %v1778
  %v6745 = vsub.f32 %v6737, %v1778
  %v6746 = vsub.f32 %v6738, %v1778
  %v6747 = vsub.f32 %v6739, %v1778
  %v6748 = vsub.f32 %v6740, %v1778
  %v6749 = vsub.f32 %v6741, %v1778
  %v6750 = vsub.f32 %v6742, %v1778
  %v6751 = vsub.f32 %v6743, %v1778
  %v6752 = vmul.f32 %v6744, %v6744
  %v6753 = vmul.f32 %v6745, %v6745
  %v6754 = vmul.f32 %v6746, %v6746
  %v6755 = vmul.f32 %v6747, %v6747
  %v6756 = vmul.f32 %v6748, %v6748
  %v6757 = vmul.f32 %v6749, %v6749
  %v6758 = vmul.f32 %v6750, %v6750
  %v6759 = vmul.f32 %v6751, %v6751
  %v6760 = vadd.f32 %v5925, %v6752
  %v6761 = vadd.f32 %v5926, %v6753
  %v6762 = vadd.f32 %v5927, %v6754
  %v6763 = vadd.f32 %v5928, %v6755
  %v6764 = vadd.f32 %v5929, %v6756
  %v6765 = vadd.f32 %v5930, %v6757
  %v6766 = vadd.f32 %v5931, %v6758
  %v6767 = vadd.f32 %v5932, %v6759
  %6768 = vrot.lane.b32.xlu0 %v1786, 80
  %v6769 = vpop.permute.xlu0 %6768
  %6770 = vrot.lane.b32.xlu0 %v1787, 80
  %v6771 = vpop.permute.xlu0 %6770
  %6772 = vrot.lane.b32.xlu0 %v1788, 80
  %v6773 = vpop.permute.xlu0 %6772
  %6774 = vrot.lane.b32.xlu0 %v1789, 80
  %v6775 = vpop.permute.xlu0 %6774
  %6776 = vrot.lane.b32.xlu0 %v1790, 80
  %v6777 = vpop.permute.xlu0 %6776
  %6778 = vrot.lane.b32.xlu0 %v1791, 80
  %v6779 = vpop.permute.xlu0 %6778
  %6780 = vrot.lane.b32.xlu0 %v1792, 80
  %v6781 = vpop.permute.xlu0 %6780
  %6782 = vrot.lane.b32.xlu0 %v1793, 80
  %v6783 = vpop.permute.xlu0 %6782
  %v6793 = vsel %vm1795, %v6736, 0
  %v6796 = vsel %vm1795, %v6737, 0
  %v6799 = vsel %vm1795, %v6738, 0
  %v6802 = vsel %vm1795, %v6739, 0
  %v6805 = vsel %vm1795, %v6740, 0
  %v6808 = vsel %vm1795, %v6741, 0
  %v6811 = vsel %vm1795, %v6742, 0
  %v6814 = vsel %vm1795, %v6743, 0
  %6816 = vmatprep.subr.mxu0 0.0
  %v6817 = vand.u32 %v17, 4294901760
  %6818 = vmatpush1.msra.mxu0 %v6817
  %6819 = vmatprep.subr.mxu0 0.0
  %6820 = vmatpush1.msra.mxu0 0.0
  %6821 = vmatprep.subr.mxu0 0.0
  %6822 = vmatpush1.msra.mxu0 0.0
  %6823 = vmatprep.subr.mxu0 0.0
  %6824 = vmatpush1.msra.mxu0 0.0
  %6825 = vmatprep.subr.mxu0 0.0
  %6826 = vmatpush1.msra.mxu0 0.0
  %6827 = vmatprep.subr.mxu0 0.0
  %6828 = vmatpush1.msra.mxu0 0.0
  %6829 = vmatprep.subr.mxu0 0.0
  %6830 = vmatpush1.msra.mxu0 0.0
  %6831 = vmatprep.subr.mxu0 0.0
  %6832 = vmatpush1.msra.mxu0 0.0
  %6833 = vmatprep.subr.mxu0 0.0
  %6834 = vmatpush1.msra.mxu0 0.0
  %6835 = vmatprep.subr.mxu0 0.0
  %6836 = vmatpush1.msra.mxu0 0.0
  %6837 = vmatprep.subr.mxu0 0.0
  %6838 = vmatpush1.msra.mxu0 0.0
  %6839 = vmatprep.subr.mxu0 0.0
  %6840 = vmatpush1.msra.mxu0 0.0
  %6841 = vmatprep.subr.mxu0 0.0
  %6842 = vmatpush1.msra.mxu0 0.0
  %6843 = vmatprep.subr.mxu0 0.0
  %6844 = vmatpush1.msra.mxu0 0.0
  %6845 = vmatprep.subr.mxu0 0.0
  %6846 = vmatpush1.msra.mxu0 0.0
  %6847 = vmatprep.subr.mxu0 0.0
  %6848 = vmatpush1.msra.mxu0 0.0
  %6849 = vmatprep.subr.mxu0 0.0
  %6850 = vmatpush1.msra.mxu0 0.0
  %6851 = vmatprep.subr.mxu0 0.0
  %6852 = vmatpush1.msra.mxu0 0.0
  %6853 = vmatprep.subr.mxu0 0.0
  %6854 = vmatpush1.msra.mxu0 0.0
  %6855 = vmatprep.subr.mxu0 0.0
  %6856 = vmatpush1.msra.mxu0 0.0
  %6857 = vmatprep.subr.mxu0 0.0
  %6858 = vmatpush1.msra.mxu0 0.0
  %6859 = vmatprep.subr.mxu0 0.0
  %6860 = vmatpush1.msra.mxu0 0.0
  %6861 = vmatprep.subr.mxu0 0.0
  %6862 = vmatpush1.msra.mxu0 0.0
  %6863 = vmatprep.subr.mxu0 0.0
  %6864 = vmatpush1.msra.mxu0 0.0
  %6865 = vmatprep.subr.mxu0 0.0
  %6866 = vmatpush1.msra.mxu0 0.0
  %6867 = vmatprep.subr.mxu0 0.0
  %6868 = vmatpush1.msra.mxu0 0.0
  %6869 = vmatprep.subr.mxu0 0.0
  %6870 = vmatpush1.msra.mxu0 0.0
  %6871 = vmatprep.subr.mxu0 0.0
  %6872 = vmatpush1.msra.mxu0 0.0
  %6873 = vmatprep.subr.mxu0 0.0
  %6874 = vmatpush1.msra.mxu0 0.0
  %6875 = vmatprep.subr.mxu0 0.0
  %6876 = vmatpush1.msra.mxu0 0.0
  %6877 = vmatprep.subr.mxu0 0.0
  %6878 = vmatpush1.msra.mxu0 0.0
  %6879 = vmatprep.subr.mxu0 0.0
  %6880 = vmatpush1.msra.mxu0 0.0
  %6881 = vmatprep.mubr.f32.mxu0 0.0
  %v6882 = vand.u32 %v6793, 4294901760
  %v6883 = vsub.f32 %v6793, %v6882
  %v6884 = vand.u32 %v6883, 4294901760
  %v6885 = vsub.f32 %v6883, %v6884
  %v6886 = vand.u32 %v6885, 4294901760
  %6887 = vmatmul.mubr.f32.gmra.mrb[0].mxu0 %v6886
  %v6888 = vpop.f32.mrb[0].mxu0
  %v6889 = vadd.f32 %v6769, %v6888
  %v6890 = vpop.f32.mrb[0].mxu0
  %6891 = vmatprep.mubr.f32.mxu0 0.0
  %v6892 = vand.u32 %v6796, 4294901760
  %v6893 = vsub.f32 %v6796, %v6892
  %v6894 = vand.u32 %v6893, 4294901760
  %v6895 = vsub.f32 %v6893, %v6894
  %v6896 = vand.u32 %v6895, 4294901760
  %6897 = vmatmul.mubr.f32.gmra.mrb[0].mxu0 %v6896
  %v6898 = vpop.f32.mrb[0].mxu0
  %v6899 = vadd.f32 %v6771, %v6898
  %v6900 = vpop.f32.mrb[0].mxu0
  %6901 = vmatprep.mubr.f32.mxu0 0.0
  %v6902 = vand.u32 %v6799, 4294901760
  %v6903 = vsub.f32 %v6799, %v6902
  %v6904 = vand.u32 %v6903, 4294901760
  %v6905 = vsub.f32 %v6903, %v6904
  %v6906 = vand.u32 %v6905, 4294901760
  %6907 = vmatmul.mubr.f32.gmra.mrb[0].mxu0 %v6906
  %v6908 = vpop.f32.mrb[0].mxu0
  %v6909 = vadd.f32 %v6773, %v6908
  %v6910 = vpop.f32.mrb[0].mxu0
  %6911 = vmatprep.mubr.f32.mxu0 0.0
  %v6912 = vand.u32 %v6802, 4294901760
  %v6913 = vsub.f32 %v6802, %v6912
  %v6914 = vand.u32 %v6913, 4294901760
  %v6915 = vsub.f32 %v6913, %v6914
  %v6916 = vand.u32 %v6915, 4294901760
  %6917 = vmatmul.mubr.f32.gmra.mrb[0].mxu0 %v6916
  %v6918 = vpop.f32.mrb[0].mxu0
  %v6919 = vadd.f32 %v6775, %v6918
  %v6920 = vpop.f32.mrb[0].mxu0
  %6921 = vmatprep.mubr.f32.mxu0 0.0
  %v6922 = vand.u32 %v6805, 4294901760
  %v6923 = vsub.f32 %v6805, %v6922
  %v6924 = vand.u32 %v6923, 4294901760
  %v6925 = vsub.f32 %v6923, %v6924
  %v6926 = vand.u32 %v6925, 4294901760
  %6927 = vmatmul.mubr.f32.gmra.mrb[0].mxu0 %v6926
  %v6928 = vpop.f32.mrb[0].mxu0
  %v6929 = vadd.f32 %v6777, %v6928
  %v6930 = vpop.f32.mrb[0].mxu0
  %6931 = vmatprep.mubr.f32.mxu0 0.0
  %v6932 = vand.u32 %v6808, 4294901760
  %v6933 = vsub.f32 %v6808, %v6932
  %v6934 = vand.u32 %v6933, 4294901760
  %v6935 = vsub.f32 %v6933, %v6934
  %v6936 = vand.u32 %v6935, 4294901760
  %6937 = vmatmul.mubr.f32.gmra.mrb[0].mxu0 %v6936
  %v6938 = vpop.f32.mrb[0].mxu0
  %v6939 = vadd.f32 %v6779, %v6938
  %v6940 = vpop.f32.mrb[0].mxu0
  %6941 = vmatprep.mubr.f32.mxu0 0.0
  %v6942 = vand.u32 %v6811, 4294901760
  %v6943 = vsub.f32 %v6811, %v6942
  %v6944 = vand.u32 %v6943, 4294901760
  %v6945 = vsub.f32 %v6943, %v6944
  %v6946 = vand.u32 %v6945, 4294901760
  %6947 = vmatmul.mubr.f32.gmra.mrb[0].mxu0 %v6946
  %v6948 = vpop.f32.mrb[0].mxu0
  %v6949 = vadd.f32 %v6781, %v6948
  %v6950 = vpop.f32.mrb[0].mxu0
  %6951 = vmatprep.mubr.f32.mxu0 0.0
  %v6952 = vand.u32 %v6814, 4294901760
  %v6953 = vsub.f32 %v6814, %v6952
  %v6954 = vand.u32 %v6953, 4294901760
  %v6955 = vsub.f32 %v6953, %v6954
  %v6956 = vand.u32 %v6955, 4294901760
  %6957 = vmatmul.mubr.f32.gmra.mrb[0].mxu0 %v6956
  %v6958 = vpop.f32.mrb[0].mxu0
  %v6959 = vadd.f32 %v6783, %v6958
  %v6960 = vpop.f32.mrb[0].mxu0
  %6961 = vdwg.mxu0
  %6962 = vmatprep.subr.mxu0 0.0
  %v6963 = vand.u32 %v17, 4294901760
  %v6964 = vsub.f32 %v17, %v6963
  %v6965 = vand.u32 %v6964, 4294901760
  %v6966 = vsub.f32 %v6964, %v6965
  %v6967 = vand.u32 %v6966, 4294901760
  %6968 = vmatpush1.msra.mxu0 %v6967
  %6969 = vmatprep.subr.mxu0 0.0
  %6970 = vmatpush1.msra.mxu0 0.0
  %6971 = vmatprep.subr.mxu0 0.0
  %6972 = vmatpush1.msra.mxu0 0.0
  %6973 = vmatprep.subr.mxu0 0.0
  %6974 = vmatpush1.msra.mxu0 0.0
  %6975 = vmatprep.subr.mxu0 0.0
  %6976 = vmatpush1.msra.mxu0 0.0
  %6977 = vmatprep.subr.mxu0 0.0
  %6978 = vmatpush1.msra.mxu0 0.0
  %6979 = vmatprep.subr.mxu0 0.0
  %6980 = vmatpush1.msra.mxu0 0.0
  %6981 = vmatprep.subr.mxu0 0.0
  %6982 = vmatpush1.msra.mxu0 0.0
  %6983 = vmatprep.subr.mxu0 0.0
  %6984 = vmatpush1.msra.mxu0 0.0
  %6985 = vmatprep.subr.mxu0 0.0
  %6986 = vmatpush1.msra.mxu0 0.0
  %6987 = vmatprep.subr.mxu0 0.0
  %6988 = vmatpush1.msra.mxu0 0.0
  %6989 = vmatprep.subr.mxu0 0.0
  %6990 = vmatpush1.msra.mxu0 0.0
  %6991 = vmatprep.subr.mxu0 0.0
  %6992 = vmatpush1.msra.mxu0 0.0
  %6993 = vmatprep.subr.mxu0 0.0
  %6994 = vmatpush1.msra.mxu0 0.0
  %6995 = vmatprep.subr.mxu0 0.0
  %6996 = vmatpush1.msra.mxu0 0.0
  %6997 = vmatprep.subr.mxu0 0.0
  %6998 = vmatpush1.msra.mxu0 0.0
  %6999 = vmatprep.subr.mxu0 0.0
  %7000 = vmatpush1.msra.mxu0 0.0
  %7001 = vmatprep.subr.mxu0 0.0
  %7002 = vmatpush1.msra.mxu0 0.0
  %7003 = vmatprep.subr.mxu0 0.0
  %7004 = vmatpush1.msra.mxu0 0.0
  %7005 = vmatprep.subr.mxu0 0.0
  %7006 = vmatpush1.msra.mxu0 0.0
  %7007 = vmatprep.subr.mxu0 0.0
  %7008 = vmatpush1.msra.mxu0 0.0
  %7009 = vmatprep.subr.mxu0 0.0
  %7010 = vmatpush1.msra.mxu0 0.0
  %7011 = vmatprep.subr.mxu0 0.0
  %7012 = vmatpush1.msra.mxu0 0.0
  %7013 = vmatprep.subr.mxu0 0.0
  %7014 = vmatpush1.msra.mxu0 0.0
  %7015 = vmatprep.subr.mxu0 0.0
  %7016 = vmatpush1.msra.mxu0 0.0
  %7017 = vmatprep.subr.mxu0 0.0
  %7018 = vmatpush1.msra.mxu0 0.0
  %7019 = vmatprep.subr.mxu0 0.0
  %7020 = vmatpush1.msra.mxu0 0.0
  %7021 = vmatprep.subr.mxu0 0.0
  %7022 = vmatpush1.msra.mxu0 0.0
  %7023 = vmatprep.subr.mxu0 0.0
  %7024 = vmatpush1.msra.mxu0 0.0
  %7025 = vmatprep.subr.mxu0 0.0
  %7026 = vmatpush1.msra.mxu0 0.0
  %7027 = vmatprep.subr.mxu0 0.0
  %7028 = vmatpush1.msra.mxu0 0.0
  %7029 = vmatprep.subr.mxu0 0.0
  %7030 = vmatpush1.msra.mxu0 0.0
  %7031 = vmatprep.mubr.f32.mxu0 0.0
  %v7032 = vand.u32 %v6793, 4294901760
  %7033 = vmatmul.mubr.f32.gmra.mrb[0].mxu0 %v7032
  %v7034 = vpop.f32.mrb[0].mxu0
  %v7035 = vadd.f32 %v6889, %v7034
  %v7036 = vpop.f32.mrb[0].mxu0
  %7037 = vmatprep.mubr.f32.mxu0 0.0
  %v7038 = vand.u32 %v6796, 4294901760
  %7039 = vmatmul.mubr.f32.gmra.mrb[0].mxu0 %v7038
  %v7040 = vpop.f32.mrb[0].mxu0
  %v7041 = vadd.f32 %v6899, %v7040
  %v7042 = vpop.f32.mrb[0].mxu0
  %7043 = vmatprep.mubr.f32.mxu0 0.0
  %v7044 = vand.u32 %v6799, 4294901760
  %7045 = vmatmul.mubr.f32.gmra.mrb[0].mxu0 %v7044
  %v7046 = vpop.f32.mrb[0].mxu0
  %v7047 = vadd.f32 %v6909, %v7046
  %v7048 = vpop.f32.mrb[0].mxu0
  %7049 = vmatprep.mubr.f32.mxu0 0.0
  %v7050 = vand.u32 %v6802, 4294901760
  %7051 = vmatmul.mubr.f32.gmra.mrb[0].mxu0 %v7050
  %v7052 = vpop.f32.mrb[0].mxu0
  %v7053 = vadd.f32 %v6919, %v7052
  %v7054 = vpop.f32.mrb[0].mxu0
  %7055 = vmatprep.mubr.f32.mxu0 0.0
  %v7056 = vand.u32 %v6805, 4294901760
  %7057 = vmatmul.mubr.f32.gmra.mrb[0].mxu0 %v7056
  %v7058 = vpop.f32.mrb[0].mxu0
  %v7059 = vadd.f32 %v6929, %v7058
  %v7060 = vpop.f32.mrb[0].mxu0
  %7061 = vmatprep.mubr.f32.mxu0 0.0
  %v7062 = vand.u32 %v6808, 4294901760
  %7063 = vmatmul.mubr.f32.gmra.mrb[0].mxu0 %v7062
  %v7064 = vpop.f32.mrb[0].mxu0
  %v7065 = vadd.f32 %v6939, %v7064
  %v7066 = vpop.f32.mrb[0].mxu0
  %7067 = vmatprep.mubr.f32.mxu0 0.0
  %v7068 = vand.u32 %v6811, 4294901760
  %7069 = vmatmul.mubr.f32.gmra.mrb[0].mxu0 %v7068
  %v7070 = vpop.f32.mrb[0].mxu0
  %v7071 = vadd.f32 %v6949, %v7070
  %v7072 = vpop.f32.mrb[0].mxu0
  %7073 = vmatprep.mubr.f32.mxu0 0.0
  %v7074 = vand.u32 %v6814, 4294901760
  %7075 = vmatmul.mubr.f32.gmra.mrb[0].mxu0 %v7074
  %v7076 = vpop.f32.mrb[0].mxu0
  %v7077 = vadd.f32 %v6959, %v7076
  %v7078 = vpop.f32.mrb[0].mxu0
  %7079 = vdwg.mxu0
  %7080 = vmatprep.subr.mxu0 0.0
  %v7081 = vand.u32 %v17, 4294901760
  %v7082 = vsub.f32 %v17, %v7081
  %7083 = vmatpush1.msra.mxu0 %v7082
  %7084 = vmatprep.subr.mxu0 0.0
  %7085 = vmatpush1.msra.mxu0 0.0
  %7086 = vmatprep.subr.mxu0 0.0
  %7087 = vmatpush1.msra.mxu0 0.0
  %7088 = vmatprep.subr.mxu0 0.0
  %7089 = vmatpush1.msra.mxu0 0.0
  %7090 = vmatprep.subr.mxu0 0.0
  %7091 = vmatpush1.msra.mxu0 0.0
  %7092 = vmatprep.subr.mxu0 0.0
  %7093 = vmatpush1.msra.mxu0 0.0
  %7094 = vmatprep.subr.mxu0 0.0
  %7095 = vmatpush1.msra.mxu0 0.0
  %7096 = vmatprep.subr.mxu0 0.0
  %7097 = vmatpush1.msra.mxu0 0.0
  %7098 = vmatprep.subr.mxu0 0.0
  %7099 = vmatpush1.msra.mxu0 0.0
  %7100 = vmatprep.subr.mxu0 0.0
  %7101 = vmatpush1.msra.mxu0 0.0
  %7102 = vmatprep.subr.mxu0 0.0
  %7103 = vmatpush1.msra.mxu0 0.0
  %7104 = vmatprep.subr.mxu0 0.0
  %7105 = vmatpush1.msra.mxu0 0.0
  %7106 = vmatprep.subr.mxu0 0.0
  %7107 = vmatpush1.msra.mxu0 0.0
  %7108 = vmatprep.subr.mxu0 0.0
  %7109 = vmatpush1.msra.mxu0 0.0
  %7110 = vmatprep.subr.mxu0 0.0
  %7111 = vmatpush1.msra.mxu0 0.0
  %7112 = vmatprep.subr.mxu0 0.0
  %7113 = vmatpush1.msra.mxu0 0.0
  %7114 = vmatprep.subr.mxu0 0.0
  %7115 = vmatpush1.msra.mxu0 0.0
  %7116 = vmatprep.subr.mxu0 0.0
  %7117 = vmatpush1.msra.mxu0 0.0
  %7118 = vmatprep.subr.mxu0 0.0
  %7119 = vmatpush1.msra.mxu0 0.0
  %7120 = vmatprep.subr.mxu0 0.0
  %7121 = vmatpush1.msra.mxu0 0.0
  %7122 = vmatprep.subr.mxu0 0.0
  %7123 = vmatpush1.msra.mxu0 0.0
  %7124 = vmatprep.subr.mxu0 0.0
  %7125 = vmatpush1.msra.mxu0 0.0
  %7126 = vmatprep.subr.mxu0 0.0
  %7127 = vmatpush1.msra.mxu0 0.0
  %7128 = vmatprep.subr.mxu0 0.0
  %7129 = vmatpush1.msra.mxu0 0.0
  %7130 = vmatprep.subr.mxu0 0.0
  %7131 = vmatpush1.msra.mxu0 0.0
  %7132 = vmatprep.subr.mxu0 0.0
  %7133 = vmatpush1.msra.mxu0 0.0
  %7134 = vmatprep.subr.mxu0 0.0
  %7135 = vmatpush1.msra.mxu0 0.0
  %7136 = vmatprep.subr.mxu0 0.0
  %7137 = vmatpush1.msra.mxu0 0.0
  %7138 = vmatprep.subr.mxu0 0.0
  %7139 = vmatpush1.msra.mxu0 0.0
  %7140 = vmatprep.subr.mxu0 0.0
  %7141 = vmatpush1.msra.mxu0 0.0
  %7142 = vmatprep.subr.mxu0 0.0
  %7143 = vmatpush1.msra.mxu0 0.0
  %7144 = vmatprep.subr.mxu0 0.0
  %7145 = vmatpush1.msra.mxu0 0.0
  %7146 = vmatprep.mubr.f32.mxu0 0.0
  %v7147 = vand.u32 %v6793, 4294901760
  %v7148 = vsub.f32 %v6793, %v7147
  %7149 = vmatmul.mubr.f32.gmra.mrb[0].mxu0 %v7148
  %v7150 = vpop.f32.mrb[0].mxu0
  %v7151 = vadd.f32 %v7035, %v7150
  %v7152 = vpop.f32.mrb[0].mxu0
  %7153 = vmatprep.mubr.f32.mxu0 0.0
  %v7154 = vand.u32 %v6796, 4294901760
  %v7155 = vsub.f32 %v6796, %v7154
  %7156 = vmatmul.mubr.f32.gmra.mrb[0].mxu0 %v7155
  %v7157 = vpop.f32.mrb[0].mxu0
  %v7158 = vadd.f32 %v7041, %v7157
  %v7159 = vpop.f32.mrb[0].mxu0
  %7160 = vmatprep.mubr.f32.mxu0 0.0
  %v7161 = vand.u32 %v6799, 4294901760
  %v7162 = vsub.f32 %v6799, %v7161
  %7163 = vmatmul.mubr.f32.gmra.mrb[0].mxu0 %v7162
  %v7164 = vpop.f32.mrb[0].mxu0
  %v7165 = vadd.f32 %v7047, %v7164
  %v7166 = vpop.f32.mrb[0].mxu0
  %7167 = vmatprep.mubr.f32.mxu0 0.0
  %v7168 = vand.u32 %v6802, 4294901760
  %v7169 = vsub.f32 %v6802, %v7168
  %7170 = vmatmul.mubr.f32.gmra.mrb[0].mxu0 %v7169
  %v7171 = vpop.f32.mrb[0].mxu0
  %v7172 = vadd.f32 %v7053, %v7171
  %v7173 = vpop.f32.mrb[0].mxu0
  %7174 = vmatprep.mubr.f32.mxu0 0.0
  %v7175 = vand.u32 %v6805, 4294901760
  %v7176 = vsub.f32 %v6805, %v7175
  %7177 = vmatmul.mubr.f32.gmra.mrb[0].mxu0 %v7176
  %v7178 = vpop.f32.mrb[0].mxu0
  %v7179 = vadd.f32 %v7059, %v7178
  %v7180 = vpop.f32.mrb[0].mxu0
  %7181 = vmatprep.mubr.f32.mxu0 0.0
  %v7182 = vand.u32 %v6808, 4294901760
  %v7183 = vsub.f32 %v6808, %v7182
  %7184 = vmatmul.mubr.f32.gmra.mrb[0].mxu0 %v7183
  %v7185 = vpop.f32.mrb[0].mxu0
  %v7186 = vadd.f32 %v7065, %v7185
  %v7187 = vpop.f32.mrb[0].mxu0
  %7188 = vmatprep.mubr.f32.mxu0 0.0
  %v7189 = vand.u32 %v6811, 4294901760
  %v7190 = vsub.f32 %v6811, %v7189
  %7191 = vmatmul.mubr.f32.gmra.mrb[0].mxu0 %v7190
  %v7192 = vpop.f32.mrb[0].mxu0
  %v7193 = vadd.f32 %v7071, %v7192
  %v7194 = vpop.f32.mrb[0].mxu0
  %7195 = vmatprep.mubr.f32.mxu0 0.0
  %v7196 = vand.u32 %v6814, 4294901760
  %v7197 = vsub.f32 %v6814, %v7196
  %7198 = vmatmul.mubr.f32.gmra.mrb[0].mxu0 %v7197
  %v7199 = vpop.f32.mrb[0].mxu0
  %v7200 = vadd.f32 %v7077, %v7199
  %v7201 = vpop.f32.mrb[0].mxu0
  %7202 = vdwg.mxu0
  %7203 = vmatprep.subr.mxu0 0.0
  %v7204 = vand.u32 %v17, 4294901760
  %7205 = vmatpush1.msra.mxu0 %v7204
  %7206 = vmatprep.subr.mxu0 0.0
  %7207 = vmatpush1.msra.mxu0 0.0
  %7208 = vmatprep.subr.mxu0 0.0
  %7209 = vmatpush1.msra.mxu0 0.0
  %7210 = vmatprep.subr.mxu0 0.0
  %7211 = vmatpush1.msra.mxu0 0.0
  %7212 = vmatprep.subr.mxu0 0.0
  %7213 = vmatpush1.msra.mxu0 0.0
  %7214 = vmatprep.subr.mxu0 0.0
  %7215 = vmatpush1.msra.mxu0 0.0
  %7216 = vmatprep.subr.mxu0 0.0
  %7217 = vmatpush1.msra.mxu0 0.0
  %7218 = vmatprep.subr.mxu0 0.0
  %7219 = vmatpush1.msra.mxu0 0.0
  %7220 = vmatprep.subr.mxu0 0.0
  %7221 = vmatpush1.msra.mxu0 0.0
  %7222 = vmatprep.subr.mxu0 0.0
  %7223 = vmatpush1.msra.mxu0 0.0
  %7224 = vmatprep.subr.mxu0 0.0
  %7225 = vmatpush1.msra.mxu0 0.0
  %7226 = vmatprep.subr.mxu0 0.0
  %7227 = vmatpush1.msra.mxu0 0.0
  %7228 = vmatprep.subr.mxu0 0.0
  %7229 = vmatpush1.msra.mxu0 0.0
  %7230 = vmatprep.subr.mxu0 0.0
  %7231 = vmatpush1.msra.mxu0 0.0
  %7232 = vmatprep.subr.mxu0 0.0
  %7233 = vmatpush1.msra.mxu0 0.0
  %7234 = vmatprep.subr.mxu0 0.0
  %7235 = vmatpush1.msra.mxu0 0.0
  %7236 = vmatprep.subr.mxu0 0.0
  %7237 = vmatpush1.msra.mxu0 0.0
  %7238 = vmatprep.subr.mxu0 0.0
  %7239 = vmatpush1.msra.mxu0 0.0
  %7240 = vmatprep.subr.mxu0 0.0
  %7241 = vmatpush1.msra.mxu0 0.0
  %7242 = vmatprep.subr.mxu0 0.0
  %7243 = vmatpush1.msra.mxu0 0.0
  %7244 = vmatprep.subr.mxu0 0.0
  %7245 = vmatpush1.msra.mxu0 0.0
  %7246 = vmatprep.subr.mxu0 0.0
  %7247 = vmatpush1.msra.mxu0 0.0
  %7248 = vmatprep.subr.mxu0 0.0
  %7249 = vmatpush1.msra.mxu0 0.0
  %7250 = vmatprep.subr.mxu0 0.0
  %7251 = vmatpush1.msra.mxu0 0.0
  %7252 = vmatprep.subr.mxu0 0.0
  %7253 = vmatpush1.msra.mxu0 0.0
  %7254 = vmatprep.subr.mxu0 0.0
  %7255 = vmatpush1.msra.mxu0 0.0
  %7256 = vmatprep.subr.mxu0 0.0
  %7257 = vmatpush1.msra.mxu0 0.0
  %7258 = vmatprep.subr.mxu0 0.0
  %7259 = vmatpush1.msra.mxu0 0.0
  %7260 = vmatprep.subr.mxu0 0.0
  %7261 = vmatpush1.msra.mxu0 0.0
  %7262 = vmatprep.subr.mxu0 0.0
  %7263 = vmatpush1.msra.mxu0 0.0
  %7264 = vmatprep.subr.mxu0 0.0
  %7265 = vmatpush1.msra.mxu0 0.0
  %7266 = vmatprep.subr.mxu0 0.0
  %7267 = vmatpush1.msra.mxu0 0.0
  %7268 = vmatprep.mubr.f32.mxu0 0.0
  %v7269 = vand.u32 %v6793, 4294901760
  %v7270 = vsub.f32 %v6793, %v7269
  %v7271 = vand.u32 %v7270, 4294901760
  %7272 = vmatmul.mubr.f32.gmra.mrb[0].mxu0 %v7271
  %v7273 = vpop.f32.mrb[0].mxu0
  %v7274 = vadd.f32 %v7151, %v7273
  %v7275 = vpop.f32.mrb[0].mxu0
  %7276 = vmatprep.mubr.f32.mxu0 0.0
  %v7277 = vand.u32 %v6796, 4294901760
  %v7278 = vsub.f32 %v6796, %v7277
  %v7279 = vand.u32 %v7278, 4294901760
  %7280 = vmatmul.mubr.f32.gmra.mrb[0].mxu0 %v7279
  %v7281 = vpop.f32.mrb[0].mxu0
  %v7282 = vadd.f32 %v7158, %v7281
  %v7283 = vpop.f32.mrb[0].mxu0
  %7284 = vmatprep.mubr.f32.mxu0 0.0
  %v7285 = vand.u32 %v6799, 4294901760
  %v7286 = vsub.f32 %v6799, %v7285
  %v7287 = vand.u32 %v7286, 4294901760
  %7288 = vmatmul.mubr.f32.gmra.mrb[0].mxu0 %v7287
  %v7289 = vpop.f32.mrb[0].mxu0
  %v7290 = vadd.f32 %v7165, %v7289
  %v7291 = vpop.f32.mrb[0].mxu0
  %7292 = vmatprep.mubr.f32.mxu0 0.0
  %v7293 = vand.u32 %v6802, 4294901760
  %v7294 = vsub.f32 %v6802, %v7293
  %v7295 = vand.u32 %v7294, 4294901760
  %7296 = vmatmul.mubr.f32.gmra.mrb[0].mxu0 %v7295
  %v7297 = vpop.f32.mrb[0].mxu0
  %v7298 = vadd.f32 %v7172, %v7297
  %v7299 = vpop.f32.mrb[0].mxu0
  %7300 = vmatprep.mubr.f32.mxu0 0.0
  %v7301 = vand.u32 %v6805, 4294901760
  %v7302 = vsub.f32 %v6805, %v7301
  %v7303 = vand.u32 %v7302, 4294901760
  %7304 = vmatmul.mubr.f32.gmra.mrb[0].mxu0 %v7303
  %v7305 = vpop.f32.mrb[0].mxu0
  %v7306 = vadd.f32 %v7179, %v7305
  %v7307 = vpop.f32.mrb[0].mxu0
  %7308 = vmatprep.mubr.f32.mxu0 0.0
  %v7309 = vand.u32 %v6808, 4294901760
  %v7310 = vsub.f32 %v6808, %v7309
  %v7311 = vand.u32 %v7310, 4294901760
  %7312 = vmatmul.mubr.f32.gmra.mrb[0].mxu0 %v7311
  %v7313 = vpop.f32.mrb[0].mxu0
  %v7314 = vadd.f32 %v7186, %v7313
  %v7315 = vpop.f32.mrb[0].mxu0
  %7316 = vmatprep.mubr.f32.mxu0 0.0
  %v7317 = vand.u32 %v6811, 4294901760
  %v7318 = vsub.f32 %v6811, %v7317
  %v7319 = vand.u32 %v7318, 4294901760
  %7320 = vmatmul.mubr.f32.gmra.mrb[0].mxu0 %v7319
  %v7321 = vpop.f32.mrb[0].mxu0
  %v7322 = vadd.f32 %v7193, %v7321
  %v7323 = vpop.f32.mrb[0].mxu0
  %7324 = vmatprep.mubr.f32.mxu0 0.0
  %v7325 = vand.u32 %v6814, 4294901760
  %v7326 = vsub.f32 %v6814, %v7325
  %v7327 = vand.u32 %v7326, 4294901760
  %7328 = vmatmul.mubr.f32.gmra.mrb[0].mxu0 %v7327
  %v7329 = vpop.f32.mrb[0].mxu0
  %v7330 = vadd.f32 %v7200, %v7329
  %v7331 = vpop.f32.mrb[0].mxu0
  %7332 = vdwg.mxu0
  %7333 = vmatprep.subr.mxu0 0.0
  %v7334 = vand.u32 %v17, 4294901760
  %v7335 = vsub.f32 %v17, %v7334
  %v7336 = vand.u32 %v7335, 4294901760
  %7337 = vmatpush1.msra.mxu0 %v7336
  %7338 = vmatprep.subr.mxu0 0.0
  %7339 = vmatpush1.msra.mxu0 0.0
  %7340 = vmatprep.subr.mxu0 0.0
  %7341 = vmatpush1.msra.mxu0 0.0
  %7342 = vmatprep.subr.mxu0 0.0
  %7343 = vmatpush1.msra.mxu0 0.0
  %7344 = vmatprep.subr.mxu0 0.0
  %7345 = vmatpush1.msra.mxu0 0.0
  %7346 = vmatprep.subr.mxu0 0.0
  %7347 = vmatpush1.msra.mxu0 0.0
  %7348 = vmatprep.subr.mxu0 0.0
  %7349 = vmatpush1.msra.mxu0 0.0
  %7350 = vmatprep.subr.mxu0 0.0
  %7351 = vmatpush1.msra.mxu0 0.0
  %7352 = vmatprep.subr.mxu0 0.0
  %7353 = vmatpush1.msra.mxu0 0.0
  %7354 = vmatprep.subr.mxu0 0.0
  %7355 = vmatpush1.msra.mxu0 0.0
  %7356 = vmatprep.subr.mxu0 0.0
  %7357 = vmatpush1.msra.mxu0 0.0
  %7358 = vmatprep.subr.mxu0 0.0
  %7359 = vmatpush1.msra.mxu0 0.0
  %7360 = vmatprep.subr.mxu0 0.0
  %7361 = vmatpush1.msra.mxu0 0.0
  %7362 = vmatprep.subr.mxu0 0.0
  %7363 = vmatpush1.msra.mxu0 0.0
  %7364 = vmatprep.subr.mxu0 0.0
  %7365 = vmatpush1.msra.mxu0 0.0
  %7366 = vmatprep.subr.mxu0 0.0
  %7367 = vmatpush1.msra.mxu0 0.0
  %7368 = vmatprep.subr.mxu0 0.0
  %7369 = vmatpush1.msra.mxu0 0.0
  %7370 = vmatprep.subr.mxu0 0.0
  %7371 = vmatpush1.msra.mxu0 0.0
  %7372 = vmatprep.subr.mxu0 0.0
  %7373 = vmatpush1.msra.mxu0 0.0
  %7374 = vmatprep.subr.mxu0 0.0
  %7375 = vmatpush1.msra.mxu0 0.0
  %7376 = vmatprep.subr.mxu0 0.0
  %7377 = vmatpush1.msra.mxu0 0.0
  %7378 = vmatprep.subr.mxu0 0.0
  %7379 = vmatpush1.msra.mxu0 0.0
  %7380 = vmatprep.subr.mxu0 0.0
  %7381 = vmatpush1.msra.mxu0 0.0
  %7382 = vmatprep.subr.mxu0 0.0
  %7383 = vmatpush1.msra.mxu0 0.0
  %7384 = vmatprep.subr.mxu0 0.0
  %7385 = vmatpush1.msra.mxu0 0.0
  %7386 = vmatprep.subr.mxu0 0.0
  %7387 = vmatpush1.msra.mxu0 0.0
  %7388 = vmatprep.subr.mxu0 0.0
  %7389 = vmatpush1.msra.mxu0 0.0
  %7390 = vmatprep.subr.mxu0 0.0
  %7391 = vmatpush1.msra.mxu0 0.0
  %7392 = vmatprep.subr.mxu0 0.0
  %7393 = vmatpush1.msra.mxu0 0.0
  %7394 = vmatprep.subr.mxu0 0.0
  %7395 = vmatpush1.msra.mxu0 0.0
  %7396 = vmatprep.subr.mxu0 0.0
  %7397 = vmatpush1.msra.mxu0 0.0
  %7398 = vmatprep.subr.mxu0 0.0
  %7399 = vmatpush1.msra.mxu0 0.0
  %7400 = vmatprep.mubr.f32.mxu0 0.0
  %v7401 = vand.u32 %v6793, 4294901760
  %7402 = vmatmul.mubr.f32.gmra.mrb[0].mxu0 %v7401
  %v7403 = vpop.f32.mrb[0].mxu0
  %v7404 = vadd.f32 %v7274, %v7403
  %v7405 = vpop.f32.mrb[0].mxu0
  %7406 = vmatprep.mubr.f32.mxu0 0.0
  %v7407 = vand.u32 %v6796, 4294901760
  %7408 = vmatmul.mubr.f32.gmra.mrb[0].mxu0 %v7407
  %v7409 = vpop.f32.mrb[0].mxu0
  %v7410 = vadd.f32 %v7282, %v7409
  %v7411 = vpop.f32.mrb[0].mxu0
  %7412 = vmatprep.mubr.f32.mxu0 0.0
  %v7413 = vand.u32 %v6799, 4294901760
  %7414 = vmatmul.mubr.f32.gmra.mrb[0].mxu0 %v7413
  %v7415 = vpop.f32.mrb[0].mxu0
  %v7416 = vadd.f32 %v7290, %v7415
  %v7417 = vpop.f32.mrb[0].mxu0
  %7418 = vmatprep.mubr.f32.mxu0 0.0
  %v7419 = vand.u32 %v6802, 4294901760
  %7420 = vmatmul.mubr.f32.gmra.mrb[0].mxu0 %v7419
  %v7421 = vpop.f32.mrb[0].mxu0
  %v7422 = vadd.f32 %v7298, %v7421
  %v7423 = vpop.f32.mrb[0].mxu0
  %7424 = vmatprep.mubr.f32.mxu0 0.0
  %v7425 = vand.u32 %v6805, 4294901760
  %7426 = vmatmul.mubr.f32.gmra.mrb[0].mxu0 %v7425
  %v7427 = vpop.f32.mrb[0].mxu0
  %v7428 = vadd.f32 %v7306, %v7427
  %v7429 = vpop.f32.mrb[0].mxu0
  %7430 = vmatprep.mubr.f32.mxu0 0.0
  %v7431 = vand.u32 %v6808, 4294901760
  %7432 = vmatmul.mubr.f32.gmra.mrb[0].mxu0 %v7431
  %v7433 = vpop.f32.mrb[0].mxu0
  %v7434 = vadd.f32 %v7314, %v7433
  %v7435 = vpop.f32.mrb[0].mxu0
  %7436 = vmatprep.mubr.f32.mxu0 0.0
  %v7437 = vand.u32 %v6811, 4294901760
  %7438 = vmatmul.mubr.f32.gmra.mrb[0].mxu0 %v7437
  %v7439 = vpop.f32.mrb[0].mxu0
  %v7440 = vadd.f32 %v7322, %v7439
  %v7441 = vpop.f32.mrb[0].mxu0
  %7442 = vmatprep.mubr.f32.mxu0 0.0
  %v7443 = vand.u32 %v6814, 4294901760
  %7444 = vmatmul.mubr.f32.gmra.mrb[0].mxu0 %v7443
  %v7445 = vpop.f32.mrb[0].mxu0
  %v7446 = vadd.f32 %v7330, %v7445
  %v7447 = vpop.f32.mrb[0].mxu0
  %7448 = vdwg.mxu0
  %7449 = vmatprep.subr.mxu0 0.0
  %v7450 = vand.u32 %v17, 4294901760
  %7451 = vmatpush1.msra.mxu0 %v7450
  %7452 = vmatprep.subr.mxu0 0.0
  %7453 = vmatpush1.msra.mxu0 0.0
  %7454 = vmatprep.subr.mxu0 0.0
  %7455 = vmatpush1.msra.mxu0 0.0
  %7456 = vmatprep.subr.mxu0 0.0
  %7457 = vmatpush1.msra.mxu0 0.0
  %7458 = vmatprep.subr.mxu0 0.0
  %7459 = vmatpush1.msra.mxu0 0.0
  %7460 = vmatprep.subr.mxu0 0.0
  %7461 = vmatpush1.msra.mxu0 0.0
  %7462 = vmatprep.subr.mxu0 0.0
  %7463 = vmatpush1.msra.mxu0 0.0
  %7464 = vmatprep.subr.mxu0 0.0
  %7465 = vmatpush1.msra.mxu0 0.0
  %7466 = vmatprep.subr.mxu0 0.0
  %7467 = vmatpush1.msra.mxu0 0.0
  %7468 = vmatprep.subr.mxu0 0.0
  %7469 = vmatpush1.msra.mxu0 0.0
  %7470 = vmatprep.subr.mxu0 0.0
  %7471 = vmatpush1.msra.mxu0 0.0
  %7472 = vmatprep.subr.mxu0 0.0
  %7473 = vmatpush1.msra.mxu0 0.0
  %7474 = vmatprep.subr.mxu0 0.0
  %7475 = vmatpush1.msra.mxu0 0.0
  %7476 = vmatprep.subr.mxu0 0.0
  %7477 = vmatpush1.msra.mxu0 0.0
  %7478 = vmatprep.subr.mxu0 0.0
  %7479 = vmatpush1.msra.mxu0 0.0
  %7480 = vmatprep.subr.mxu0 0.0
  %7481 = vmatpush1.msra.mxu0 0.0
  %7482 = vmatprep.subr.mxu0 0.0
  %7483 = vmatpush1.msra.mxu0 0.0
  %7484 = vmatprep.subr.mxu0 0.0
  %7485 = vmatpush1.msra.mxu0 0.0
  %7486 = vmatprep.subr.mxu0 0.0
  %7487 = vmatpush1.msra.mxu0 0.0
  %7488 = vmatprep.subr.mxu0 0.0
  %7489 = vmatpush1.msra.mxu0 0.0
  %7490 = vmatprep.subr.mxu0 0.0
  %7491 = vmatpush1.msra.mxu0 0.0
  %7492 = vmatprep.subr.mxu0 0.0
  %7493 = vmatpush1.msra.mxu0 0.0
  %7494 = vmatprep.subr.mxu0 0.0
  %7495 = vmatpush1.msra.mxu0 0.0
  %7496 = vmatprep.subr.mxu0 0.0
  %7497 = vmatpush1.msra.mxu0 0.0
  %7498 = vmatprep.subr.mxu0 0.0
  %7499 = vmatpush1.msra.mxu0 0.0
  %7500 = vmatprep.subr.mxu0 0.0
  %7501 = vmatpush1.msra.mxu0 0.0
  %7502 = vmatprep.subr.mxu0 0.0
  %7503 = vmatpush1.msra.mxu0 0.0
  %7504 = vmatprep.subr.mxu0 0.0
  %7505 = vmatpush1.msra.mxu0 0.0
  %7506 = vmatprep.subr.mxu0 0.0
  %7507 = vmatpush1.msra.mxu0 0.0
  %7508 = vmatprep.subr.mxu0 0.0
  %7509 = vmatpush1.msra.mxu0 0.0
  %7510 = vmatprep.subr.mxu0 0.0
  %7511 = vmatpush1.msra.mxu0 0.0
  %7512 = vmatprep.subr.mxu0 0.0
  %7513 = vmatpush1.msra.mxu0 0.0
  %7514 = vmatprep.mubr.f32.mxu0 0.0
  %v7515 = vand.u32 %v6793, 4294901760
  %7516 = vmatmul.mubr.f32.gmra.mrb[0].mxu0 %v7515
  %v7517 = vpop.f32.mrb[0].mxu0
  %v7518 = vadd.f32 %v7404, %v7517
  %v7519 = vpop.f32.mrb[0].mxu0
  %7520 = vmatprep.mubr.f32.mxu0 0.0
  %v7521 = vand.u32 %v6796, 4294901760
  %7522 = vmatmul.mubr.f32.gmra.mrb[0].mxu0 %v7521
  %v7523 = vpop.f32.mrb[0].mxu0
  %v7524 = vadd.f32 %v7410, %v7523
  %v7525 = vpop.f32.mrb[0].mxu0
  %7526 = vmatprep.mubr.f32.mxu0 0.0
  %v7527 = vand.u32 %v6799, 4294901760
  %7528 = vmatmul.mubr.f32.gmra.mrb[0].mxu0 %v7527
  %v7529 = vpop.f32.mrb[0].mxu0
  %v7530 = vadd.f32 %v7416, %v7529
  %v7531 = vpop.f32.mrb[0].mxu0
  %7532 = vmatprep.mubr.f32.mxu0 0.0
  %v7533 = vand.u32 %v6802, 4294901760
  %7534 = vmatmul.mubr.f32.gmra.mrb[0].mxu0 %v7533
  %v7535 = vpop.f32.mrb[0].mxu0
  %v7536 = vadd.f32 %v7422, %v7535
  %v7537 = vpop.f32.mrb[0].mxu0
  %7538 = vmatprep.mubr.f32.mxu0 0.0
  %v7539 = vand.u32 %v6805, 4294901760
  %7540 = vmatmul.mubr.f32.gmra.mrb[0].mxu0 %v7539
  %v7541 = vpop.f32.mrb[0].mxu0
  %v7542 = vadd.f32 %v7428, %v7541
  %v7543 = vpop.f32.mrb[0].mxu0
  %7544 = vmatprep.mubr.f32.mxu0 0.0
  %v7545 = vand.u32 %v6808, 4294901760
  %7546 = vmatmul.mubr.f32.gmra.mrb[0].mxu0 %v7545
  %v7547 = vpop.f32.mrb[0].mxu0
  %v7548 = vadd.f32 %v7434, %v7547
  %v7549 = vpop.f32.mrb[0].mxu0
  %7550 = vmatprep.mubr.f32.mxu0 0.0
  %v7551 = vand.u32 %v6811, 4294901760
  %7552 = vmatmul.mubr.f32.gmra.mrb[0].mxu0 %v7551
  %v7553 = vpop.f32.mrb[0].mxu0
  %v7554 = vadd.f32 %v7440, %v7553
  %v7555 = vpop.f32.mrb[0].mxu0
  %7556 = vmatprep.mubr.f32.mxu0 0.0
  %v7557 = vand.u32 %v6814, 4294901760
  %7558 = vmatmul.mubr.f32.gmra.mrb[0].mxu0 %v7557
  %v7559 = vpop.f32.mrb[0].mxu0
  %v7560 = vadd.f32 %v7446, %v7559
  %v7561 = vpop.f32.mrb[0].mxu0
  %7562 = vdwg.mxu0
  %v7563 = vmul.f32 %v7518, 0.1
  %v7564 = vmul.f32 %v7524, 0.1
  %v7565 = vmul.f32 %v7530, 0.1
  %v7566 = vmul.f32 %v7536, 0.1
  %v7567 = vmul.f32 %v7542, 0.1
  %v7568 = vmul.f32 %v7548, 0.1
  %v7569 = vmul.f32 %v7554, 0.1
  %v7570 = vmul.f32 %v7560, 0.1
  %v7571 = vadd.f32 %v6736, %v7563
  %v7572 = vadd.f32 %v6737, %v7564
  %v7573 = vadd.f32 %v6738, %v7565
  %v7574 = vadd.f32 %v6739, %v7566
  %v7575 = vadd.f32 %v6740, %v7567
  %v7576 = vadd.f32 %v6741, %v7568
  %v7577 = vadd.f32 %v6742, %v7569
  %v7578 = vadd.f32 %v6743, %v7570
  %v7579 = vsub.f32 %v7571, %v1778
  %v7580 = vsub.f32 %v7572, %v1778
  %v7581 = vsub.f32 %v7573, %v1778
  %v7582 = vsub.f32 %v7574, %v1778
  %v7583 = vsub.f32 %v7575, %v1778
  %v7584 = vsub.f32 %v7576, %v1778
  %v7585 = vsub.f32 %v7577, %v1778
  %v7586 = vsub.f32 %v7578, %v1778
  %v7587 = vmul.f32 %v7579, %v7579
  %v7588 = vmul.f32 %v7580, %v7580
  %v7589 = vmul.f32 %v7581, %v7581
  %v7590 = vmul.f32 %v7582, %v7582
  %v7591 = vmul.f32 %v7583, %v7583
  %v7592 = vmul.f32 %v7584, %v7584
  %v7593 = vmul.f32 %v7585, %v7585
  %v7594 = vmul.f32 %v7586, %v7586
  %v7595 = vadd.f32 %v6760, %v7587
  %v7596 = vadd.f32 %v6761, %v7588
  %v7597 = vadd.f32 %v6762, %v7589
  %v7598 = vadd.f32 %v6763, %v7590
  %v7599 = vadd.f32 %v6764, %v7591
  %v7600 = vadd.f32 %v6765, %v7592
  %v7601 = vadd.f32 %v6766, %v7593
  %v7602 = vadd.f32 %v6767, %v7594
  %7603 = vrot.lane.b32.xlu0 %v1786, 72
  %v7604 = vpop.permute.xlu0 %7603
  %7605 = vrot.lane.b32.xlu0 %v1787, 72
  %v7606 = vpop.permute.xlu0 %7605
  %7607 = vrot.lane.b32.xlu0 %v1788, 72
  %v7608 = vpop.permute.xlu0 %7607
  %7609 = vrot.lane.b32.xlu0 %v1789, 72
  %v7610 = vpop.permute.xlu0 %7609
  %7611 = vrot.lane.b32.xlu0 %v1790, 72
  %v7612 = vpop.permute.xlu0 %7611
  %7613 = vrot.lane.b32.xlu0 %v1791, 72
  %v7614 = vpop.permute.xlu0 %7613
  %7615 = vrot.lane.b32.xlu0 %v1792, 72
  %v7616 = vpop.permute.xlu0 %7615
  %7617 = vrot.lane.b32.xlu0 %v1793, 72
  %v7618 = vpop.permute.xlu0 %7617
  %v7628 = vsel %vm1795, %v7571, 0
  %v7631 = vsel %vm1795, %v7572, 0
  %v7634 = vsel %vm1795, %v7573, 0
  %v7637 = vsel %vm1795, %v7574, 0
  %v7640 = vsel %vm1795, %v7575, 0
  %v7643 = vsel %vm1795, %v7576, 0
  %v7646 = vsel %vm1795, %v7577, 0
  %v7649 = vsel %vm1795, %v7578, 0
  %7651 = vmatprep.subr.mxu0 0.0
  %v7652 = vand.u32 %v17, 4294901760
  %7653 = vmatpush1.msra.mxu0 %v7652
  %7654 = vmatprep.subr.mxu0 0.0
  %7655 = vmatpush1.msra.mxu0 0.0
  %7656 = vmatprep.subr.mxu0 0.0
  %7657 = vmatpush1.msra.mxu0 0.0
  %7658 = vmatprep.subr.mxu0 0.0
  %7659 = vmatpush1.msra.mxu0 0.0
  %7660 = vmatprep.subr.mxu0 0.0
  %7661 = vmatpush1.msra.mxu0 0.0
  %7662 = vmatprep.subr.mxu0 0.0
  %7663 = vmatpush1.msra.mxu0 0.0
  %7664 = vmatprep.subr.mxu0 0.0
  %7665 = vmatpush1.msra.mxu0 0.0
  %7666 = vmatprep.subr.mxu0 0.0
  %7667 = vmatpush1.msra.mxu0 0.0
  %7668 = vmatprep.subr.mxu0 0.0
  %7669 = vmatpush1.msra.mxu0 0.0
  %7670 = vmatprep.subr.mxu0 0.0
  %7671 = vmatpush1.msra.mxu0 0.0
  %7672 = vmatprep.subr.mxu0 0.0
  %7673 = vmatpush1.msra.mxu0 0.0
  %7674 = vmatprep.subr.mxu0 0.0
  %7675 = vmatpush1.msra.mxu0 0.0
  %7676 = vmatprep.subr.mxu0 0.0
  %7677 = vmatpush1.msra.mxu0 0.0
  %7678 = vmatprep.subr.mxu0 0.0
  %7679 = vmatpush1.msra.mxu0 0.0
  %7680 = vmatprep.subr.mxu0 0.0
  %7681 = vmatpush1.msra.mxu0 0.0
  %7682 = vmatprep.subr.mxu0 0.0
  %7683 = vmatpush1.msra.mxu0 0.0
  %7684 = vmatprep.subr.mxu0 0.0
  %7685 = vmatpush1.msra.mxu0 0.0
  %7686 = vmatprep.subr.mxu0 0.0
  %7687 = vmatpush1.msra.mxu0 0.0
  %7688 = vmatprep.subr.mxu0 0.0
  %7689 = vmatpush1.msra.mxu0 0.0
  %7690 = vmatprep.subr.mxu0 0.0
  %7691 = vmatpush1.msra.mxu0 0.0
  %7692 = vmatprep.subr.mxu0 0.0
  %7693 = vmatpush1.msra.mxu0 0.0
  %7694 = vmatprep.subr.mxu0 0.0
  %7695 = vmatpush1.msra.mxu0 0.0
  %7696 = vmatprep.subr.mxu0 0.0
  %7697 = vmatpush1.msra.mxu0 0.0
  %7698 = vmatprep.subr.mxu0 0.0
  %7699 = vmatpush1.msra.mxu0 0.0
  %7700 = vmatprep.subr.mxu0 0.0
  %7701 = vmatpush1.msra.mxu0 0.0
  %7702 = vmatprep.subr.mxu0 0.0
  %7703 = vmatpush1.msra.mxu0 0.0
  %7704 = vmatprep.subr.mxu0 0.0
  %7705 = vmatpush1.msra.mxu0 0.0
  %7706 = vmatprep.subr.mxu0 0.0
  %7707 = vmatpush1.msra.mxu0 0.0
  %7708 = vmatprep.subr.mxu0 0.0
  %7709 = vmatpush1.msra.mxu0 0.0
  %7710 = vmatprep.subr.mxu0 0.0
  %7711 = vmatpush1.msra.mxu0 0.0
  %7712 = vmatprep.subr.mxu0 0.0
  %7713 = vmatpush1.msra.mxu0 0.0
  %7714 = vmatprep.subr.mxu0 0.0
  %7715 = vmatpush1.msra.mxu0 0.0
  %7716 = vmatprep.mubr.f32.mxu0 0.0
  %v7717 = vand.u32 %v7628, 4294901760
  %v7718 = vsub.f32 %v7628, %v7717
  %v7719 = vand.u32 %v7718, 4294901760
  %v7720 = vsub.f32 %v7718, %v7719
  %v7721 = vand.u32 %v7720, 4294901760
  %7722 = vmatmul.mubr.f32.gmra.mrb[0].mxu0 %v7721
  %v7723 = vpop.f32.mrb[0].mxu0
  %v7724 = vadd.f32 %v7604, %v7723
  %v7725 = vpop.f32.mrb[0].mxu0
  %7726 = vmatprep.mubr.f32.mxu0 0.0
  %v7727 = vand.u32 %v7631, 4294901760
  %v7728 = vsub.f32 %v7631, %v7727
  %v7729 = vand.u32 %v7728, 4294901760
  %v7730 = vsub.f32 %v7728, %v7729
  %v7731 = vand.u32 %v7730, 4294901760
  %7732 = vmatmul.mubr.f32.gmra.mrb[0].mxu0 %v7731
  %v7733 = vpop.f32.mrb[0].mxu0
  %v7734 = vadd.f32 %v7606, %v7733
  %v7735 = vpop.f32.mrb[0].mxu0
  %7736 = vmatprep.mubr.f32.mxu0 0.0
  %v7737 = vand.u32 %v7634, 4294901760
  %v7738 = vsub.f32 %v7634, %v7737
  %v7739 = vand.u32 %v7738, 4294901760
  %v7740 = vsub.f32 %v7738, %v7739
  %v7741 = vand.u32 %v7740, 4294901760
  %7742 = vmatmul.mubr.f32.gmra.mrb[0].mxu0 %v7741
  %v7743 = vpop.f32.mrb[0].mxu0
  %v7744 = vadd.f32 %v7608, %v7743
  %v7745 = vpop.f32.mrb[0].mxu0
  %7746 = vmatprep.mubr.f32.mxu0 0.0
  %v7747 = vand.u32 %v7637, 4294901760
  %v7748 = vsub.f32 %v7637, %v7747
  %v7749 = vand.u32 %v7748, 4294901760
  %v7750 = vsub.f32 %v7748, %v7749
  %v7751 = vand.u32 %v7750, 4294901760
  %7752 = vmatmul.mubr.f32.gmra.mrb[0].mxu0 %v7751
  %v7753 = vpop.f32.mrb[0].mxu0
  %v7754 = vadd.f32 %v7610, %v7753
  %v7755 = vpop.f32.mrb[0].mxu0
  %7756 = vmatprep.mubr.f32.mxu0 0.0
  %v7757 = vand.u32 %v7640, 4294901760
  %v7758 = vsub.f32 %v7640, %v7757
  %v7759 = vand.u32 %v7758, 4294901760
  %v7760 = vsub.f32 %v7758, %v7759
  %v7761 = vand.u32 %v7760, 4294901760
  %7762 = vmatmul.mubr.f32.gmra.mrb[0].mxu0 %v7761
  %v7763 = vpop.f32.mrb[0].mxu0
  %v7764 = vadd.f32 %v7612, %v7763
  %v7765 = vpop.f32.mrb[0].mxu0
  %7766 = vmatprep.mubr.f32.mxu0 0.0
  %v7767 = vand.u32 %v7643, 4294901760
  %v7768 = vsub.f32 %v7643, %v7767
  %v7769 = vand.u32 %v7768, 4294901760
  %v7770 = vsub.f32 %v7768, %v7769
  %v7771 = vand.u32 %v7770, 4294901760
  %7772 = vmatmul.mubr.f32.gmra.mrb[0].mxu0 %v7771
  %v7773 = vpop.f32.mrb[0].mxu0
  %v7774 = vadd.f32 %v7614, %v7773
  %v7775 = vpop.f32.mrb[0].mxu0
  %7776 = vmatprep.mubr.f32.mxu0 0.0
  %v7777 = vand.u32 %v7646, 4294901760
  %v7778 = vsub.f32 %v7646, %v7777
  %v7779 = vand.u32 %v7778, 4294901760
  %v7780 = vsub.f32 %v7778, %v7779
  %v7781 = vand.u32 %v7780, 4294901760
  %7782 = vmatmul.mubr.f32.gmra.mrb[0].mxu0 %v7781
  %v7783 = vpop.f32.mrb[0].mxu0
  %v7784 = vadd.f32 %v7616, %v7783
  %v7785 = vpop.f32.mrb[0].mxu0
  %7786 = vmatprep.mubr.f32.mxu0 0.0
  %v7787 = vand.u32 %v7649, 4294901760
  %v7788 = vsub.f32 %v7649, %v7787
  %v7789 = vand.u32 %v7788, 4294901760
  %v7790 = vsub.f32 %v7788, %v7789
  %v7791 = vand.u32 %v7790, 4294901760
  %7792 = vmatmul.mubr.f32.gmra.mrb[0].mxu0 %v7791
  %v7793 = vpop.f32.mrb[0].mxu0
  %v7794 = vadd.f32 %v7618, %v7793
  %v7795 = vpop.f32.mrb[0].mxu0
  %7796 = vdwg.mxu0
  %7797 = vmatprep.subr.mxu0 0.0
  %v7798 = vand.u32 %v17, 4294901760
  %v7799 = vsub.f32 %v17, %v7798
  %v7800 = vand.u32 %v7799, 4294901760
  %v7801 = vsub.f32 %v7799, %v7800
  %v7802 = vand.u32 %v7801, 4294901760
  %7803 = vmatpush1.msra.mxu0 %v7802
  %7804 = vmatprep.subr.mxu0 0.0
  %7805 = vmatpush1.msra.mxu0 0.0
  %7806 = vmatprep.subr.mxu0 0.0
  %7807 = vmatpush1.msra.mxu0 0.0
  %7808 = vmatprep.subr.mxu0 0.0
  %7809 = vmatpush1.msra.mxu0 0.0
  %7810 = vmatprep.subr.mxu0 0.0
  %7811 = vmatpush1.msra.mxu0 0.0
  %7812 = vmatprep.subr.mxu0 0.0
  %7813 = vmatpush1.msra.mxu0 0.0
  %7814 = vmatprep.subr.mxu0 0.0
  %7815 = vmatpush1.msra.mxu0 0.0
  %7816 = vmatprep.subr.mxu0 0.0
  %7817 = vmatpush1.msra.mxu0 0.0
  %7818 = vmatprep.subr.mxu0 0.0
  %7819 = vmatpush1.msra.mxu0 0.0
  %7820 = vmatprep.subr.mxu0 0.0
  %7821 = vmatpush1.msra.mxu0 0.0
  %7822 = vmatprep.subr.mxu0 0.0
  %7823 = vmatpush1.msra.mxu0 0.0
  %7824 = vmatprep.subr.mxu0 0.0
  %7825 = vmatpush1.msra.mxu0 0.0
  %7826 = vmatprep.subr.mxu0 0.0
  %7827 = vmatpush1.msra.mxu0 0.0
  %7828 = vmatprep.subr.mxu0 0.0
  %7829 = vmatpush1.msra.mxu0 0.0
  %7830 = vmatprep.subr.mxu0 0.0
  %7831 = vmatpush1.msra.mxu0 0.0
  %7832 = vmatprep.subr.mxu0 0.0
  %7833 = vmatpush1.msra.mxu0 0.0
  %7834 = vmatprep.subr.mxu0 0.0
  %7835 = vmatpush1.msra.mxu0 0.0
  %7836 = vmatprep.subr.mxu0 0.0
  %7837 = vmatpush1.msra.mxu0 0.0
  %7838 = vmatprep.subr.mxu0 0.0
  %7839 = vmatpush1.msra.mxu0 0.0
  %7840 = vmatprep.subr.mxu0 0.0
  %7841 = vmatpush1.msra.mxu0 0.0
  %7842 = vmatprep.subr.mxu0 0.0
  %7843 = vmatpush1.msra.mxu0 0.0
  %7844 = vmatprep.subr.mxu0 0.0
  %7845 = vmatpush1.msra.mxu0 0.0
  %7846 = vmatprep.subr.mxu0 0.0
  %7847 = vmatpush1.msra.mxu0 0.0
  %7848 = vmatprep.subr.mxu0 0.0
  %7849 = vmatpush1.msra.mxu0 0.0
  %7850 = vmatprep.subr.mxu0 0.0
  %7851 = vmatpush1.msra.mxu0 0.0
  %7852 = vmatprep.subr.mxu0 0.0
  %7853 = vmatpush1.msra.mxu0 0.0
  %7854 = vmatprep.subr.mxu0 0.0
  %7855 = vmatpush1.msra.mxu0 0.0
  %7856 = vmatprep.subr.mxu0 0.0
  %7857 = vmatpush1.msra.mxu0 0.0
  %7858 = vmatprep.subr.mxu0 0.0
  %7859 = vmatpush1.msra.mxu0 0.0
  %7860 = vmatprep.subr.mxu0 0.0
  %7861 = vmatpush1.msra.mxu0 0.0
  %7862 = vmatprep.subr.mxu0 0.0
  %7863 = vmatpush1.msra.mxu0 0.0
  %7864 = vmatprep.subr.mxu0 0.0
  %7865 = vmatpush1.msra.mxu0 0.0
  %7866 = vmatprep.mubr.f32.mxu0 0.0
  %v7867 = vand.u32 %v7628, 4294901760
  %7868 = vmatmul.mubr.f32.gmra.mrb[0].mxu0 %v7867
  %v7869 = vpop.f32.mrb[0].mxu0
  %v7870 = vadd.f32 %v7724, %v7869
  %v7871 = vpop.f32.mrb[0].mxu0
  %7872 = vmatprep.mubr.f32.mxu0 0.0
  %v7873 = vand.u32 %v7631, 4294901760
  %7874 = vmatmul.mubr.f32.gmra.mrb[0].mxu0 %v7873
  %v7875 = vpop.f32.mrb[0].mxu0
  %v7876 = vadd.f32 %v7734, %v7875
  %v7877 = vpop.f32.mrb[0].mxu0
  %7878 = vmatprep.mubr.f32.mxu0 0.0
  %v7879 = vand.u32 %v7634, 4294901760
  %7880 = vmatmul.mubr.f32.gmra.mrb[0].mxu0 %v7879
  %v7881 = vpop.f32.mrb[0].mxu0
  %v7882 = vadd.f32 %v7744, %v7881
  %v7883 = vpop.f32.mrb[0].mxu0
  %7884 = vmatprep.mubr.f32.mxu0 0.0
  %v7885 = vand.u32 %v7637, 4294901760
  %7886 = vmatmul.mubr.f32.gmra.mrb[0].mxu0 %v7885
  %v7887 = vpop.f32.mrb[0].mxu0
  %v7888 = vadd.f32 %v7754, %v7887
  %v7889 = vpop.f32.mrb[0].mxu0
  %7890 = vmatprep.mubr.f32.mxu0 0.0
  %v7891 = vand.u32 %v7640, 4294901760
  %7892 = vmatmul.mubr.f32.gmra.mrb[0].mxu0 %v7891
  %v7893 = vpop.f32.mrb[0].mxu0
  %v7894 = vadd.f32 %v7764, %v7893
  %v7895 = vpop.f32.mrb[0].mxu0
  %7896 = vmatprep.mubr.f32.mxu0 0.0
  %v7897 = vand.u32 %v7643, 4294901760
  %7898 = vmatmul.mubr.f32.gmra.mrb[0].mxu0 %v7897
  %v7899 = vpop.f32.mrb[0].mxu0
  %v7900 = vadd.f32 %v7774, %v7899
  %v7901 = vpop.f32.mrb[0].mxu0
  %7902 = vmatprep.mubr.f32.mxu0 0.0
  %v7903 = vand.u32 %v7646, 4294901760
  %7904 = vmatmul.mubr.f32.gmra.mrb[0].mxu0 %v7903
  %v7905 = vpop.f32.mrb[0].mxu0
  %v7906 = vadd.f32 %v7784, %v7905
  %v7907 = vpop.f32.mrb[0].mxu0
  %7908 = vmatprep.mubr.f32.mxu0 0.0
  %v7909 = vand.u32 %v7649, 4294901760
  %7910 = vmatmul.mubr.f32.gmra.mrb[0].mxu0 %v7909
  %v7911 = vpop.f32.mrb[0].mxu0
  %v7912 = vadd.f32 %v7794, %v7911
  %v7913 = vpop.f32.mrb[0].mxu0
  %7914 = vdwg.mxu0
  %7915 = vmatprep.subr.mxu0 0.0
  %v7916 = vand.u32 %v17, 4294901760
  %v7917 = vsub.f32 %v17, %v7916
  %7918 = vmatpush1.msra.mxu0 %v7917
  %7919 = vmatprep.subr.mxu0 0.0
  %7920 = vmatpush1.msra.mxu0 0.0
  %7921 = vmatprep.subr.mxu0 0.0
  %7922 = vmatpush1.msra.mxu0 0.0
  %7923 = vmatprep.subr.mxu0 0.0
  %7924 = vmatpush1.msra.mxu0 0.0
  %7925 = vmatprep.subr.mxu0 0.0
  %7926 = vmatpush1.msra.mxu0 0.0
  %7927 = vmatprep.subr.mxu0 0.0
  %7928 = vmatpush1.msra.mxu0 0.0
  %7929 = vmatprep.subr.mxu0 0.0
  %7930 = vmatpush1.msra.mxu0 0.0
  %7931 = vmatprep.subr.mxu0 0.0
  %7932 = vmatpush1.msra.mxu0 0.0
  %7933 = vmatprep.subr.mxu0 0.0
  %7934 = vmatpush1.msra.mxu0 0.0
  %7935 = vmatprep.subr.mxu0 0.0
  %7936 = vmatpush1.msra.mxu0 0.0
  %7937 = vmatprep.subr.mxu0 0.0
  %7938 = vmatpush1.msra.mxu0 0.0
  %7939 = vmatprep.subr.mxu0 0.0
  %7940 = vmatpush1.msra.mxu0 0.0
  %7941 = vmatprep.subr.mxu0 0.0
  %7942 = vmatpush1.msra.mxu0 0.0
  %7943 = vmatprep.subr.mxu0 0.0
  %7944 = vmatpush1.msra.mxu0 0.0
  %7945 = vmatprep.subr.mxu0 0.0
  %7946 = vmatpush1.msra.mxu0 0.0
  %7947 = vmatprep.subr.mxu0 0.0
  %7948 = vmatpush1.msra.mxu0 0.0
  %7949 = vmatprep.subr.mxu0 0.0
  %7950 = vmatpush1.msra.mxu0 0.0
  %7951 = vmatprep.subr.mxu0 0.0
  %7952 = vmatpush1.msra.mxu0 0.0
  %7953 = vmatprep.subr.mxu0 0.0
  %7954 = vmatpush1.msra.mxu0 0.0
  %7955 = vmatprep.subr.mxu0 0.0
  %7956 = vmatpush1.msra.mxu0 0.0
  %7957 = vmatprep.subr.mxu0 0.0
  %7958 = vmatpush1.msra.mxu0 0.0
  %7959 = vmatprep.subr.mxu0 0.0
  %7960 = vmatpush1.msra.mxu0 0.0
  %7961 = vmatprep.subr.mxu0 0.0
  %7962 = vmatpush1.msra.mxu0 0.0
  %7963 = vmatprep.subr.mxu0 0.0
  %7964 = vmatpush1.msra.mxu0 0.0
  %7965 = vmatprep.subr.mxu0 0.0
  %7966 = vmatpush1.msra.mxu0 0.0
  %7967 = vmatprep.subr.mxu0 0.0
  %7968 = vmatpush1.msra.mxu0 0.0
  %7969 = vmatprep.subr.mxu0 0.0
  %7970 = vmatpush1.msra.mxu0 0.0
  %7971 = vmatprep.subr.mxu0 0.0
  %7972 = vmatpush1.msra.mxu0 0.0
  %7973 = vmatprep.subr.mxu0 0.0
  %7974 = vmatpush1.msra.mxu0 0.0
  %7975 = vmatprep.subr.mxu0 0.0
  %7976 = vmatpush1.msra.mxu0 0.0
  %7977 = vmatprep.subr.mxu0 0.0
  %7978 = vmatpush1.msra.mxu0 0.0
  %7979 = vmatprep.subr.mxu0 0.0
  %7980 = vmatpush1.msra.mxu0 0.0
  %7981 = vmatprep.mubr.f32.mxu0 0.0
  %v7982 = vand.u32 %v7628, 4294901760
  %v7983 = vsub.f32 %v7628, %v7982
  %7984 = vmatmul.mubr.f32.gmra.mrb[0].mxu0 %v7983
  %v7985 = vpop.f32.mrb[0].mxu0
  %v7986 = vadd.f32 %v7870, %v7985
  %v7987 = vpop.f32.mrb[0].mxu0
  %7988 = vmatprep.mubr.f32.mxu0 0.0
  %v7989 = vand.u32 %v7631, 4294901760
  %v7990 = vsub.f32 %v7631, %v7989
  %7991 = vmatmul.mubr.f32.gmra.mrb[0].mxu0 %v7990
  %v7992 = vpop.f32.mrb[0].mxu0
  %v7993 = vadd.f32 %v7876, %v7992
  %v7994 = vpop.f32.mrb[0].mxu0
  %7995 = vmatprep.mubr.f32.mxu0 0.0
  %v7996 = vand.u32 %v7634, 4294901760
  %v7997 = vsub.f32 %v7634, %v7996
  %7998 = vmatmul.mubr.f32.gmra.mrb[0].mxu0 %v7997
  %v7999 = vpop.f32.mrb[0].mxu0
  %v8000 = vadd.f32 %v7882, %v7999
  %v8001 = vpop.f32.mrb[0].mxu0
  %8002 = vmatprep.mubr.f32.mxu0 0.0
  %v8003 = vand.u32 %v7637, 4294901760
  %v8004 = vsub.f32 %v7637, %v8003
  %8005 = vmatmul.mubr.f32.gmra.mrb[0].mxu0 %v8004
  %v8006 = vpop.f32.mrb[0].mxu0
  %v8007 = vadd.f32 %v7888, %v8006
  %v8008 = vpop.f32.mrb[0].mxu0
  %8009 = vmatprep.mubr.f32.mxu0 0.0
  %v8010 = vand.u32 %v7640, 4294901760
  %v8011 = vsub.f32 %v7640, %v8010
  %8012 = vmatmul.mubr.f32.gmra.mrb[0].mxu0 %v8011
  %v8013 = vpop.f32.mrb[0].mxu0
  %v8014 = vadd.f32 %v7894, %v8013
  %v8015 = vpop.f32.mrb[0].mxu0
  %8016 = vmatprep.mubr.f32.mxu0 0.0
  %v8017 = vand.u32 %v7643, 4294901760
  %v8018 = vsub.f32 %v7643, %v8017
  %8019 = vmatmul.mubr.f32.gmra.mrb[0].mxu0 %v8018
  %v8020 = vpop.f32.mrb[0].mxu0
  %v8021 = vadd.f32 %v7900, %v8020
  %v8022 = vpop.f32.mrb[0].mxu0
  %8023 = vmatprep.mubr.f32.mxu0 0.0
  %v8024 = vand.u32 %v7646, 4294901760
  %v8025 = vsub.f32 %v7646, %v8024
  %8026 = vmatmul.mubr.f32.gmra.mrb[0].mxu0 %v8025
  %v8027 = vpop.f32.mrb[0].mxu0
  %v8028 = vadd.f32 %v7906, %v8027
  %v8029 = vpop.f32.mrb[0].mxu0
  %8030 = vmatprep.mubr.f32.mxu0 0.0
  %v8031 = vand.u32 %v7649, 4294901760
  %v8032 = vsub.f32 %v7649, %v8031
  %8033 = vmatmul.mubr.f32.gmra.mrb[0].mxu0 %v8032
  %v8034 = vpop.f32.mrb[0].mxu0
  %v8035 = vadd.f32 %v7912, %v8034
  %v8036 = vpop.f32.mrb[0].mxu0
  %8037 = vdwg.mxu0
  %8038 = vmatprep.subr.mxu0 0.0
  %v8039 = vand.u32 %v17, 4294901760
  %8040 = vmatpush1.msra.mxu0 %v8039
  %8041 = vmatprep.subr.mxu0 0.0
  %8042 = vmatpush1.msra.mxu0 0.0
  %8043 = vmatprep.subr.mxu0 0.0
  %8044 = vmatpush1.msra.mxu0 0.0
  %8045 = vmatprep.subr.mxu0 0.0
  %8046 = vmatpush1.msra.mxu0 0.0
  %8047 = vmatprep.subr.mxu0 0.0
  %8048 = vmatpush1.msra.mxu0 0.0
  %8049 = vmatprep.subr.mxu0 0.0
  %8050 = vmatpush1.msra.mxu0 0.0
  %8051 = vmatprep.subr.mxu0 0.0
  %8052 = vmatpush1.msra.mxu0 0.0
  %8053 = vmatprep.subr.mxu0 0.0
  %8054 = vmatpush1.msra.mxu0 0.0
  %8055 = vmatprep.subr.mxu0 0.0
  %8056 = vmatpush1.msra.mxu0 0.0
  %8057 = vmatprep.subr.mxu0 0.0
  %8058 = vmatpush1.msra.mxu0 0.0
  %8059 = vmatprep.subr.mxu0 0.0
  %8060 = vmatpush1.msra.mxu0 0.0
  %8061 = vmatprep.subr.mxu0 0.0
  %8062 = vmatpush1.msra.mxu0 0.0
  %8063 = vmatprep.subr.mxu0 0.0
  %8064 = vmatpush1.msra.mxu0 0.0
  %8065 = vmatprep.subr.mxu0 0.0
  %8066 = vmatpush1.msra.mxu0 0.0
  %8067 = vmatprep.subr.mxu0 0.0
  %8068 = vmatpush1.msra.mxu0 0.0
  %8069 = vmatprep.subr.mxu0 0.0
  %8070 = vmatpush1.msra.mxu0 0.0
  %8071 = vmatprep.subr.mxu0 0.0
  %8072 = vmatpush1.msra.mxu0 0.0
  %8073 = vmatprep.subr.mxu0 0.0
  %8074 = vmatpush1.msra.mxu0 0.0
  %8075 = vmatprep.subr.mxu0 0.0
  %8076 = vmatpush1.msra.mxu0 0.0
  %8077 = vmatprep.subr.mxu0 0.0
  %8078 = vmatpush1.msra.mxu0 0.0
  %8079 = vmatprep.subr.mxu0 0.0
  %8080 = vmatpush1.msra.mxu0 0.0
  %8081 = vmatprep.subr.mxu0 0.0
  %8082 = vmatpush1.msra.mxu0 0.0
  %8083 = vmatprep.subr.mxu0 0.0
  %8084 = vmatpush1.msra.mxu0 0.0
  %8085 = vmatprep.subr.mxu0 0.0
  %8086 = vmatpush1.msra.mxu0 0.0
  %8087 = vmatprep.subr.mxu0 0.0
  %8088 = vmatpush1.msra.mxu0 0.0
  %8089 = vmatprep.subr.mxu0 0.0
  %8090 = vmatpush1.msra.mxu0 0.0
  %8091 = vmatprep.subr.mxu0 0.0
  %8092 = vmatpush1.msra.mxu0 0.0
  %8093 = vmatprep.subr.mxu0 0.0
  %8094 = vmatpush1.msra.mxu0 0.0
  %8095 = vmatprep.subr.mxu0 0.0
  %8096 = vmatpush1.msra.mxu0 0.0
  %8097 = vmatprep.subr.mxu0 0.0
  %8098 = vmatpush1.msra.mxu0 0.0
  %8099 = vmatprep.subr.mxu0 0.0
  %8100 = vmatpush1.msra.mxu0 0.0
  %8101 = vmatprep.subr.mxu0 0.0
  %8102 = vmatpush1.msra.mxu0 0.0
  %8103 = vmatprep.mubr.f32.mxu0 0.0
  %v8104 = vand.u32 %v7628, 4294901760
  %v8105 = vsub.f32 %v7628, %v8104
  %v8106 = vand.u32 %v8105, 4294901760
  %8107 = vmatmul.mubr.f32.gmra.mrb[0].mxu0 %v8106
  %v8108 = vpop.f32.mrb[0].mxu0
  %v8109 = vadd.f32 %v7986, %v8108
  %v8110 = vpop.f32.mrb[0].mxu0
  %8111 = vmatprep.mubr.f32.mxu0 0.0
  %v8112 = vand.u32 %v7631, 4294901760
  %v8113 = vsub.f32 %v7631, %v8112
  %v8114 = vand.u32 %v8113, 4294901760
  %8115 = vmatmul.mubr.f32.gmra.mrb[0].mxu0 %v8114
  %v8116 = vpop.f32.mrb[0].mxu0
  %v8117 = vadd.f32 %v7993, %v8116
  %v8118 = vpop.f32.mrb[0].mxu0
  %8119 = vmatprep.mubr.f32.mxu0 0.0
  %v8120 = vand.u32 %v7634, 4294901760
  %v8121 = vsub.f32 %v7634, %v8120
  %v8122 = vand.u32 %v8121, 4294901760
  %8123 = vmatmul.mubr.f32.gmra.mrb[0].mxu0 %v8122
  %v8124 = vpop.f32.mrb[0].mxu0
  %v8125 = vadd.f32 %v8000, %v8124
  %v8126 = vpop.f32.mrb[0].mxu0
  %8127 = vmatprep.mubr.f32.mxu0 0.0
  %v8128 = vand.u32 %v7637, 4294901760
  %v8129 = vsub.f32 %v7637, %v8128
  %v8130 = vand.u32 %v8129, 4294901760
  %8131 = vmatmul.mubr.f32.gmra.mrb[0].mxu0 %v8130
  %v8132 = vpop.f32.mrb[0].mxu0
  %v8133 = vadd.f32 %v8007, %v8132
  %v8134 = vpop.f32.mrb[0].mxu0
  %8135 = vmatprep.mubr.f32.mxu0 0.0
  %v8136 = vand.u32 %v7640, 4294901760
  %v8137 = vsub.f32 %v7640, %v8136
  %v8138 = vand.u32 %v8137, 4294901760
  %8139 = vmatmul.mubr.f32.gmra.mrb[0].mxu0 %v8138
  %v8140 = vpop.f32.mrb[0].mxu0
  %v8141 = vadd.f32 %v8014, %v8140
  %v8142 = vpop.f32.mrb[0].mxu0
  %8143 = vmatprep.mubr.f32.mxu0 0.0
  %v8144 = vand.u32 %v7643, 4294901760
  %v8145 = vsub.f32 %v7643, %v8144
  %v8146 = vand.u32 %v8145, 4294901760
  %8147 = vmatmul.mubr.f32.gmra.mrb[0].mxu0 %v8146
  %v8148 = vpop.f32.mrb[0].mxu0
  %v8149 = vadd.f32 %v8021, %v8148
  %v8150 = vpop.f32.mrb[0].mxu0
  %8151 = vmatprep.mubr.f32.mxu0 0.0
  %v8152 = vand.u32 %v7646, 4294901760
  %v8153 = vsub.f32 %v7646, %v8152
  %v8154 = vand.u32 %v8153, 4294901760
  %8155 = vmatmul.mubr.f32.gmra.mrb[0].mxu0 %v8154
  %v8156 = vpop.f32.mrb[0].mxu0
  %v8157 = vadd.f32 %v8028, %v8156
  %v8158 = vpop.f32.mrb[0].mxu0
  %8159 = vmatprep.mubr.f32.mxu0 0.0
  %v8160 = vand.u32 %v7649, 4294901760
  %v8161 = vsub.f32 %v7649, %v8160
  %v8162 = vand.u32 %v8161, 4294901760
  %8163 = vmatmul.mubr.f32.gmra.mrb[0].mxu0 %v8162
  %v8164 = vpop.f32.mrb[0].mxu0
  %v8165 = vadd.f32 %v8035, %v8164
  %v8166 = vpop.f32.mrb[0].mxu0
  %8167 = vdwg.mxu0
  %8168 = vmatprep.subr.mxu0 0.0
  %v8169 = vand.u32 %v17, 4294901760
  %v8170 = vsub.f32 %v17, %v8169
  %v8171 = vand.u32 %v8170, 4294901760
  %8172 = vmatpush1.msra.mxu0 %v8171
  %8173 = vmatprep.subr.mxu0 0.0
  %8174 = vmatpush1.msra.mxu0 0.0
  %8175 = vmatprep.subr.mxu0 0.0
  %8176 = vmatpush1.msra.mxu0 0.0
  %8177 = vmatprep.subr.mxu0 0.0
  %8178 = vmatpush1.msra.mxu0 0.0
  %8179 = vmatprep.subr.mxu0 0.0
  %8180 = vmatpush1.msra.mxu0 0.0
  %8181 = vmatprep.subr.mxu0 0.0
  %8182 = vmatpush1.msra.mxu0 0.0
  %8183 = vmatprep.subr.mxu0 0.0
  %8184 = vmatpush1.msra.mxu0 0.0
  %8185 = vmatprep.subr.mxu0 0.0
  %8186 = vmatpush1.msra.mxu0 0.0
  %8187 = vmatprep.subr.mxu0 0.0
  %8188 = vmatpush1.msra.mxu0 0.0
  %8189 = vmatprep.subr.mxu0 0.0
  %8190 = vmatpush1.msra.mxu0 0.0
  %8191 = vmatprep.subr.mxu0 0.0
  %8192 = vmatpush1.msra.mxu0 0.0
  %8193 = vmatprep.subr.mxu0 0.0
  %8194 = vmatpush1.msra.mxu0 0.0
  %8195 = vmatprep.subr.mxu0 0.0
  %8196 = vmatpush1.msra.mxu0 0.0
  %8197 = vmatprep.subr.mxu0 0.0
  %8198 = vmatpush1.msra.mxu0 0.0
  %8199 = vmatprep.subr.mxu0 0.0
  %8200 = vmatpush1.msra.mxu0 0.0
  %8201 = vmatprep.subr.mxu0 0.0
  %8202 = vmatpush1.msra.mxu0 0.0
  %8203 = vmatprep.subr.mxu0 0.0
  %8204 = vmatpush1.msra.mxu0 0.0
  %8205 = vmatprep.subr.mxu0 0.0
  %8206 = vmatpush1.msra.mxu0 0.0
  %8207 = vmatprep.subr.mxu0 0.0
  %8208 = vmatpush1.msra.mxu0 0.0
  %8209 = vmatprep.subr.mxu0 0.0
  %8210 = vmatpush1.msra.mxu0 0.0
  %8211 = vmatprep.subr.mxu0 0.0
  %8212 = vmatpush1.msra.mxu0 0.0
  %8213 = vmatprep.subr.mxu0 0.0
  %8214 = vmatpush1.msra.mxu0 0.0
  %8215 = vmatprep.subr.mxu0 0.0
  %8216 = vmatpush1.msra.mxu0 0.0
  %8217 = vmatprep.subr.mxu0 0.0
  %8218 = vmatpush1.msra.mxu0 0.0
  %8219 = vmatprep.subr.mxu0 0.0
  %8220 = vmatpush1.msra.mxu0 0.0
  %8221 = vmatprep.subr.mxu0 0.0
  %8222 = vmatpush1.msra.mxu0 0.0
  %8223 = vmatprep.subr.mxu0 0.0
  %8224 = vmatpush1.msra.mxu0 0.0
  %8225 = vmatprep.subr.mxu0 0.0
  %8226 = vmatpush1.msra.mxu0 0.0
  %8227 = vmatprep.subr.mxu0 0.0
  %8228 = vmatpush1.msra.mxu0 0.0
  %8229 = vmatprep.subr.mxu0 0.0
  %8230 = vmatpush1.msra.mxu0 0.0
  %8231 = vmatprep.subr.mxu0 0.0
  %8232 = vmatpush1.msra.mxu0 0.0
  %8233 = vmatprep.subr.mxu0 0.0
  %8234 = vmatpush1.msra.mxu0 0.0
  %8235 = vmatprep.mubr.f32.mxu0 0.0
  %v8236 = vand.u32 %v7628, 4294901760
  %8237 = vmatmul.mubr.f32.gmra.mrb[0].mxu0 %v8236
  %v8238 = vpop.f32.mrb[0].mxu0
  %v8239 = vadd.f32 %v8109, %v8238
  %v8240 = vpop.f32.mrb[0].mxu0
  %8241 = vmatprep.mubr.f32.mxu0 0.0
  %v8242 = vand.u32 %v7631, 4294901760
  %8243 = vmatmul.mubr.f32.gmra.mrb[0].mxu0 %v8242
  %v8244 = vpop.f32.mrb[0].mxu0
  %v8245 = vadd.f32 %v8117, %v8244
  %v8246 = vpop.f32.mrb[0].mxu0
  %8247 = vmatprep.mubr.f32.mxu0 0.0
  %v8248 = vand.u32 %v7634, 4294901760
  %8249 = vmatmul.mubr.f32.gmra.mrb[0].mxu0 %v8248
  %v8250 = vpop.f32.mrb[0].mxu0
  %v8251 = vadd.f32 %v8125, %v8250
  %v8252 = vpop.f32.mrb[0].mxu0
  %8253 = vmatprep.mubr.f32.mxu0 0.0
  %v8254 = vand.u32 %v7637, 4294901760
  %8255 = vmatmul.mubr.f32.gmra.mrb[0].mxu0 %v8254
  %v8256 = vpop.f32.mrb[0].mxu0
  %v8257 = vadd.f32 %v8133, %v8256
  %v8258 = vpop.f32.mrb[0].mxu0
  %8259 = vmatprep.mubr.f32.mxu0 0.0
  %v8260 = vand.u32 %v7640, 4294901760
  %8261 = vmatmul.mubr.f32.gmra.mrb[0].mxu0 %v8260
  %v8262 = vpop.f32.mrb[0].mxu0
  %v8263 = vadd.f32 %v8141, %v8262
  %v8264 = vpop.f32.mrb[0].mxu0
  %8265 = vmatprep.mubr.f32.mxu0 0.0
  %v8266 = vand.u32 %v7643, 4294901760
  %8267 = vmatmul.mubr.f32.gmra.mrb[0].mxu0 %v8266
  %v8268 = vpop.f32.mrb[0].mxu0
  %v8269 = vadd.f32 %v8149, %v8268
  %v8270 = vpop.f32.mrb[0].mxu0
  %8271 = vmatprep.mubr.f32.mxu0 0.0
  %v8272 = vand.u32 %v7646, 4294901760
  %8273 = vmatmul.mubr.f32.gmra.mrb[0].mxu0 %v8272
  %v8274 = vpop.f32.mrb[0].mxu0
  %v8275 = vadd.f32 %v8157, %v8274
  %v8276 = vpop.f32.mrb[0].mxu0
  %8277 = vmatprep.mubr.f32.mxu0 0.0
  %v8278 = vand.u32 %v7649, 4294901760
  %8279 = vmatmul.mubr.f32.gmra.mrb[0].mxu0 %v8278
  %v8280 = vpop.f32.mrb[0].mxu0
  %v8281 = vadd.f32 %v8165, %v8280
  %v8282 = vpop.f32.mrb[0].mxu0
  %8283 = vdwg.mxu0
  %8284 = vmatprep.subr.mxu0 0.0
  %v8285 = vand.u32 %v17, 4294901760
  %8286 = vmatpush1.msra.mxu0 %v8285
  %8287 = vmatprep.subr.mxu0 0.0
  %8288 = vmatpush1.msra.mxu0 0.0
  %8289 = vmatprep.subr.mxu0 0.0
  %8290 = vmatpush1.msra.mxu0 0.0
  %8291 = vmatprep.subr.mxu0 0.0
  %8292 = vmatpush1.msra.mxu0 0.0
  %8293 = vmatprep.subr.mxu0 0.0
  %8294 = vmatpush1.msra.mxu0 0.0
  %8295 = vmatprep.subr.mxu0 0.0
  %8296 = vmatpush1.msra.mxu0 0.0
  %8297 = vmatprep.subr.mxu0 0.0
  %8298 = vmatpush1.msra.mxu0 0.0
  %8299 = vmatprep.subr.mxu0 0.0
  %8300 = vmatpush1.msra.mxu0 0.0
  %8301 = vmatprep.subr.mxu0 0.0
  %8302 = vmatpush1.msra.mxu0 0.0
  %8303 = vmatprep.subr.mxu0 0.0
  %8304 = vmatpush1.msra.mxu0 0.0
  %8305 = vmatprep.subr.mxu0 0.0
  %8306 = vmatpush1.msra.mxu0 0.0
  %8307 = vmatprep.subr.mxu0 0.0
  %8308 = vmatpush1.msra.mxu0 0.0
  %8309 = vmatprep.subr.mxu0 0.0
  %8310 = vmatpush1.msra.mxu0 0.0
  %8311 = vmatprep.subr.mxu0 0.0
  %8312 = vmatpush1.msra.mxu0 0.0
  %8313 = vmatprep.subr.mxu0 0.0
  %8314 = vmatpush1.msra.mxu0 0.0
  %8315 = vmatprep.subr.mxu0 0.0
  %8316 = vmatpush1.msra.mxu0 0.0
  %8317 = vmatprep.subr.mxu0 0.0
  %8318 = vmatpush1.msra.mxu0 0.0
  %8319 = vmatprep.subr.mxu0 0.0
  %8320 = vmatpush1.msra.mxu0 0.0
  %8321 = vmatprep.subr.mxu0 0.0
  %8322 = vmatpush1.msra.mxu0 0.0
  %8323 = vmatprep.subr.mxu0 0.0
  %8324 = vmatpush1.msra.mxu0 0.0
  %8325 = vmatprep.subr.mxu0 0.0
  %8326 = vmatpush1.msra.mxu0 0.0
  %8327 = vmatprep.subr.mxu0 0.0
  %8328 = vmatpush1.msra.mxu0 0.0
  %8329 = vmatprep.subr.mxu0 0.0
  %8330 = vmatpush1.msra.mxu0 0.0
  %8331 = vmatprep.subr.mxu0 0.0
  %8332 = vmatpush1.msra.mxu0 0.0
  %8333 = vmatprep.subr.mxu0 0.0
  %8334 = vmatpush1.msra.mxu0 0.0
  %8335 = vmatprep.subr.mxu0 0.0
  %8336 = vmatpush1.msra.mxu0 0.0
  %8337 = vmatprep.subr.mxu0 0.0
  %8338 = vmatpush1.msra.mxu0 0.0
  %8339 = vmatprep.subr.mxu0 0.0
  %8340 = vmatpush1.msra.mxu0 0.0
  %8341 = vmatprep.subr.mxu0 0.0
  %8342 = vmatpush1.msra.mxu0 0.0
  %8343 = vmatprep.subr.mxu0 0.0
  %8344 = vmatpush1.msra.mxu0 0.0
  %8345 = vmatprep.subr.mxu0 0.0
  %8346 = vmatpush1.msra.mxu0 0.0
  %8347 = vmatprep.subr.mxu0 0.0
  %8348 = vmatpush1.msra.mxu0 0.0
  %8349 = vmatprep.mubr.f32.mxu0 0.0
  %v8350 = vand.u32 %v7628, 4294901760
  %8351 = vmatmul.mubr.f32.gmra.mrb[0].mxu0 %v8350
  %v8352 = vpop.f32.mrb[0].mxu0
  %v8353 = vadd.f32 %v8239, %v8352
  %v8354 = vpop.f32.mrb[0].mxu0
  %8355 = vmatprep.mubr.f32.mxu0 0.0
  %v8356 = vand.u32 %v7631, 4294901760
  %8357 = vmatmul.mubr.f32.gmra.mrb[0].mxu0 %v8356
  %v8358 = vpop.f32.mrb[0].mxu0
  %v8359 = vadd.f32 %v8245, %v8358
  %v8360 = vpop.f32.mrb[0].mxu0
  %8361 = vmatprep.mubr.f32.mxu0 0.0
  %v8362 = vand.u32 %v7634, 4294901760
  %8363 = vmatmul.mubr.f32.gmra.mrb[0].mxu0 %v8362
  %v8364 = vpop.f32.mrb[0].mxu0
  %v8365 = vadd.f32 %v8251, %v8364
  %v8366 = vpop.f32.mrb[0].mxu0
  %8367 = vmatprep.mubr.f32.mxu0 0.0
  %v8368 = vand.u32 %v7637, 4294901760
  %8369 = vmatmul.mubr.f32.gmra.mrb[0].mxu0 %v8368
  %v8370 = vpop.f32.mrb[0].mxu0
  %v8371 = vadd.f32 %v8257, %v8370
  %v8372 = vpop.f32.mrb[0].mxu0
  %8373 = vmatprep.mubr.f32.mxu0 0.0
  %v8374 = vand.u32 %v7640, 4294901760
  %8375 = vmatmul.mubr.f32.gmra.mrb[0].mxu0 %v8374
  %v8376 = vpop.f32.mrb[0].mxu0
  %v8377 = vadd.f32 %v8263, %v8376
  %v8378 = vpop.f32.mrb[0].mxu0
  %8379 = vmatprep.mubr.f32.mxu0 0.0
  %v8380 = vand.u32 %v7643, 4294901760
  %8381 = vmatmul.mubr.f32.gmra.mrb[0].mxu0 %v8380
  %v8382 = vpop.f32.mrb[0].mxu0
  %v8383 = vadd.f32 %v8269, %v8382
  %v8384 = vpop.f32.mrb[0].mxu0
  %8385 = vmatprep.mubr.f32.mxu0 0.0
  %v8386 = vand.u32 %v7646, 4294901760
  %8387 = vmatmul.mubr.f32.gmra.mrb[0].mxu0 %v8386
  %v8388 = vpop.f32.mrb[0].mxu0
  %v8389 = vadd.f32 %v8275, %v8388
  %v8390 = vpop.f32.mrb[0].mxu0
  %8391 = vmatprep.mubr.f32.mxu0 0.0
  %v8392 = vand.u32 %v7649, 4294901760
  %8393 = vmatmul.mubr.f32.gmra.mrb[0].mxu0 %v8392
  %v8394 = vpop.f32.mrb[0].mxu0
  %v8395 = vadd.f32 %v8281, %v8394
  %v8396 = vpop.f32.mrb[0].mxu0
  %8397 = vdwg.mxu0
  %v8398 = vmul.f32 %v8353, 0.1
  %v8399 = vmul.f32 %v8359, 0.1
  %v8400 = vmul.f32 %v8365, 0.1
  %v8401 = vmul.f32 %v8371, 0.1
  %v8402 = vmul.f32 %v8377, 0.1
  %v8403 = vmul.f32 %v8383, 0.1
  %v8404 = vmul.f32 %v8389, 0.1
  %v8405 = vmul.f32 %v8395, 0.1
  %v8406 = vadd.f32 %v7571, %v8398
  %v8407 = vadd.f32 %v7572, %v8399
  %v8408 = vadd.f32 %v7573, %v8400
  %v8409 = vadd.f32 %v7574, %v8401
  %v8410 = vadd.f32 %v7575, %v8402
  %v8411 = vadd.f32 %v7576, %v8403
  %v8412 = vadd.f32 %v7577, %v8404
  %v8413 = vadd.f32 %v7578, %v8405
  %v8414 = vsub.f32 %v8406, %v1778
  %v8415 = vsub.f32 %v8407, %v1778
  %v8416 = vsub.f32 %v8408, %v1778
  %v8417 = vsub.f32 %v8409, %v1778
  %v8418 = vsub.f32 %v8410, %v1778
  %v8419 = vsub.f32 %v8411, %v1778
  %v8420 = vsub.f32 %v8412, %v1778
  %v8421 = vsub.f32 %v8413, %v1778
  %v8422 = vmul.f32 %v8414, %v8414
  %v8423 = vmul.f32 %v8415, %v8415
  %v8424 = vmul.f32 %v8416, %v8416
  %v8425 = vmul.f32 %v8417, %v8417
  %v8426 = vmul.f32 %v8418, %v8418
  %v8427 = vmul.f32 %v8419, %v8419
  %v8428 = vmul.f32 %v8420, %v8420
  %v8429 = vmul.f32 %v8421, %v8421
  %v8430 = vadd.f32 %v7595, %v8422
  %v8431 = vadd.f32 %v7596, %v8423
  %v8432 = vadd.f32 %v7597, %v8424
  %v8433 = vadd.f32 %v7598, %v8425
  %v8434 = vadd.f32 %v7599, %v8426
  %v8435 = vadd.f32 %v7600, %v8427
  %v8436 = vadd.f32 %v7601, %v8428
  %v8437 = vadd.f32 %v7602, %v8429
  %v8438 = vsel %vm1795, %v8430, 0.0
  %8439 = vadd.xlane.f32.xlu0 %v8438
  %v8440 = vpop.xlane.xlu0 %8439
  %v8441 = vsel %vm1795, %v8431, 0.0
  %8442 = vadd.xlane.f32.xlu0 %v8441
  %v8443 = vpop.xlane.xlu0 %8442
  %v8444 = vsel %vm1795, %v8432, 0.0
  %8445 = vadd.xlane.f32.xlu0 %v8444
  %v8446 = vpop.xlane.xlu0 %8445
  %v8447 = vsel %vm1795, %v8433, 0.0
  %8448 = vadd.xlane.f32.xlu0 %v8447
  %v8449 = vpop.xlane.xlu0 %8448
  %v8450 = vsel %vm1795, %v8434, 0.0
  %8451 = vadd.xlane.f32.xlu0 %v8450
  %v8452 = vpop.xlane.xlu0 %8451
  %v8453 = vsel %vm1795, %v8435, 0.0
  %8454 = vadd.xlane.f32.xlu0 %v8453
  %v8455 = vpop.xlane.xlu0 %8454
  %v8456 = vsel %vm1795, %v8436, 0.0
  %8457 = vadd.xlane.f32.xlu0 %v8456
  %v8458 = vpop.xlane.xlu0 %8457
  %v8459 = vsel %vm1795, %v8437, 0.0
  %8460 = vadd.xlane.f32.xlu0 %v8459
  %v8461 = vpop.xlane.xlu0 %8460
  %v8462 = vadd.f32 %v8440, %v1767
  %v8463 = vadd.f32 %v8443, %v1768
  %v8464 = vadd.f32 %v8446, %v1769
  %v8465 = vadd.f32 %v8449, %v1770
  %v8466 = vadd.f32 %v8452, %v1771
  %v8467 = vadd.f32 %v8455, %v1772
  %v8468 = vadd.f32 %v8458, %v1773
  %v8469 = vadd.f32 %v8461, %v1774
  %v8470 = vmul.f32 %v8462, -1.0
  %v8471 = vmul.f32 %v8463, -1.0
  %v8472 = vmul.f32 %v8464, -1.0
  %v8473 = vmul.f32 %v8465, -1.0
  %v8474 = vmul.f32 %v8466, -1.0
  %v8475 = vmul.f32 %v8467, -1.0
  %v8476 = vmul.f32 %v8468, -1.0
  %v8477 = vmul.f32 %v8469, -1.0
  %v8478 = vmax.f32 %v8470, %v8474
  %v8479 = vmax.f32 %v8471, %v8475
  %v8480 = vmax.f32 %v8472, %v8476
  %v8481 = vmax.f32 %v8473, %v8477
  %v8482 = vmax.f32 %v8478, %v8479
  %v8483 = vmax.f32 %v8480, %v8481
  %v8484 = vmax.f32 %v8482, %v8483
  %v8485 = vrot.slane %v8484, 4
  %v8486 = vmax.f32 %v8484, %v8485
  %v8487 = vrot.slane %v8486, 2
  %v8488 = vmax.f32 %v8486, %v8487
  %v8489 = vrot.slane %v8488, 1
  %v8490 = vmax.f32 %v8488, %v8489
  %v8491 = vsub.f32 %v8470, %v8490
  %v8492 = vsub.f32 %v8471, %v8490
  %v8493 = vsub.f32 %v8472, %v8490
  %v8494 = vsub.f32 %v8473, %v8490
  %v8495 = vsub.f32 %v8474, %v8490
  %v8496 = vsub.f32 %v8475, %v8490
  %v8497 = vsub.f32 %v8476, %v8490
  %v8498 = vsub.f32 %v8477, %v8490
  %v8499 = vmul.f32 %v8491, 1.442695
  %v8500 = vpow.pop %v8499
  %v8501 = vmul.f32 %v8492, 1.442695
  %v8502 = vpow.pop %v8501
  %v8503 = vmul.f32 %v8493, 1.442695
  %v8504 = vpow.pop %v8503
  %v8505 = vmul.f32 %v8494, 1.442695
  %v8506 = vpow.pop %v8505
  %v8507 = vmul.f32 %v8495, 1.442695
  %v8508 = vpow.pop %v8507
  %v8509 = vmul.f32 %v8496, 1.442695
  %v8510 = vpow.pop %v8509
  %v8511 = vmul.f32 %v8497, 1.442695
  %v8512 = vpow.pop %v8511
  %v8513 = vmul.f32 %v8498, 1.442695
  %v8514 = vpow.pop %v8513
  %v8515 = vadd.f32 %v8500, %v8502
  %v8516 = vadd.f32 %v8515, %v8504
  %v8517 = vadd.f32 %v8516, %v8506
  %v8518 = vadd.f32 %v8517, %v8508
  %v8519 = vadd.f32 %v8518, %v8510
  %v8520 = vadd.f32 %v8519, %v8512
  %v8521 = vadd.f32 %v8520, %v8514
  %v8522 = vrot.slane %v8521, 4
  %v8523 = vadd.f32 %v8521, %v8522
  %v8524 = vrot.slane %v8523, 2
  %v8525 = vadd.f32 %v8523, %v8524
  %v8526 = vrot.slane %v8525, 1
  %v8527 = vadd.f32 %v8525, %v8526
  %v8528 = vrcp.pop %v8527
  %v8529 = vmul.f32 %v8500, %v8528
  %v8530 = vmul.f32 %v8502, %v8528
  %v8531 = vmul.f32 %v8504, %v8528
  %v8532 = vmul.f32 %v8506, %v8528
  %v8533 = vmul.f32 %v8508, %v8528
  %v8534 = vmul.f32 %v8510, %v8528
  %v8535 = vmul.f32 %v8512, %v8528
  %v8536 = vmul.f32 %v8514, %v8528
  %v8537 = vld [vmem:[#allocation2] sm:$0xff]
  %v8538 = vld [vmem:[#allocation2 + $0x8] sm:$0xff]
  %v8539 = vld [vmem:[#allocation2 + $0x10] sm:$0xff]
  %v8540 = vld [vmem:[#allocation2 + $0x18] sm:$0xff]
  %v8541 = vld [vmem:[#allocation2 + $0x20] sm:$0xff]
  %v8542 = vld [vmem:[#allocation2 + $0x28] sm:$0xff]
  %v8543 = vld [vmem:[#allocation2 + $0x30] sm:$0xff]
  %v8544 = vld [vmem:[#allocation2 + $0x38] sm:$0xff]
  %v8545 = vmul.f32 %v8529, %v8537
  %v8546 = vmul.f32 %v8530, %v8538
  %v8547 = vmul.f32 %v8531, %v8539
  %v8548 = vmul.f32 %v8532, %v8540
  %v8549 = vmul.f32 %v8533, %v8541
  %v8550 = vmul.f32 %v8534, %v8542
  %v8551 = vmul.f32 %v8535, %v8543
  %v8552 = vmul.f32 %v8536, %v8544
  %v8553 = vsel %vm915, %v8545, 0.0
  %v8554 = vsel %vm915, %v8546, 0.0
  %v8555 = vadd.f32 %v8553, %v8554
  %v8556 = vsel %vm915, %v8547, 0.0
  %v8557 = vadd.f32 %v8555, %v8556
  %v8558 = vsel %vm915, %v8548, 0.0
  %v8559 = vadd.f32 %v8557, %v8558
  %v8560 = vsel %vm915, %v8549, 0.0
  %v8561 = vadd.f32 %v8559, %v8560
  %v8562 = vsel %vm915, %v8550, 0.0
  %v8563 = vadd.f32 %v8561, %v8562
  %v8564 = vsel %vm915, %v8551, 0.0
  %v8565 = vadd.f32 %v8563, %v8564
  %v8566 = vsel %vm915, %v8552, 0.0
  %v8567 = vadd.f32 %v8565, %v8566
  %v8568 = vrot.slane %v8567, 4
  %v8569 = vadd.f32 %v8567, %v8568
  %v8570 = vrot.slane %v8569, 2
  %v8571 = vadd.f32 %v8569, %v8570
  %v8572 = vrot.slane %v8571, 1
  %v8573 = vadd.f32 %v8571, %v8572
  %vm8574 = vcmask 253952
  %8575 = vst.msk [vmem:[%s2] sm:$0x1] %vm8574, %v8573
  %v8577 = vsel %vm915, %v8573, 0
  %8579 = vmatprep.subr.mxu0 0.0
  %v8580 = vand.u32 %v18, 4294901760
  %8581 = vmatpush1.msra.mxu0 %v8580
  %8582 = vmatprep.subr.mxu0 0.0
  %v8583 = vand.u32 %v19, 4294901760
  %8584 = vmatpush1.msra.mxu0 %v8583
  %8585 = vmatprep.subr.mxu0 0.0
  %v8586 = vand.u32 %v20, 4294901760
  %8587 = vmatpush1.msra.mxu0 %v8586
  %8588 = vmatprep.subr.mxu0 0.0
  %v8589 = vand.u32 %v21, 4294901760
  %8590 = vmatpush1.msra.mxu0 %v8589
  %8591 = vmatprep.subr.mxu0 0.0
  %8592 = vmatpush1.msra.mxu0 0.0
  %8593 = vmatprep.subr.mxu0 0.0
  %8594 = vmatpush1.msra.mxu0 0.0
  %8595 = vmatprep.subr.mxu0 0.0
  %8596 = vmatpush1.msra.mxu0 0.0
  %8597 = vmatprep.subr.mxu0 0.0
  %8598 = vmatpush1.msra.mxu0 0.0
  %8599 = vmatprep.subr.mxu0 0.0
  %8600 = vmatpush1.msra.mxu0 0.0
  %8601 = vmatprep.subr.mxu0 0.0
  %8602 = vmatpush1.msra.mxu0 0.0
  %8603 = vmatprep.subr.mxu0 0.0
  %8604 = vmatpush1.msra.mxu0 0.0
  %8605 = vmatprep.subr.mxu0 0.0
  %8606 = vmatpush1.msra.mxu0 0.0
  %8607 = vmatprep.subr.mxu0 0.0
  %8608 = vmatpush1.msra.mxu0 0.0
  %8609 = vmatprep.subr.mxu0 0.0
  %8610 = vmatpush1.msra.mxu0 0.0
  %8611 = vmatprep.subr.mxu0 0.0
  %8612 = vmatpush1.msra.mxu0 0.0
  %8613 = vmatprep.subr.mxu0 0.0
  %8614 = vmatpush1.msra.mxu0 0.0
  %8615 = vmatprep.subr.mxu0 0.0
  %8616 = vmatpush1.msra.mxu0 0.0
  %8617 = vmatprep.subr.mxu0 0.0
  %8618 = vmatpush1.msra.mxu0 0.0
  %8619 = vmatprep.subr.mxu0 0.0
  %8620 = vmatpush1.msra.mxu0 0.0
  %8621 = vmatprep.subr.mxu0 0.0
  %8622 = vmatpush1.msra.mxu0 0.0
  %8623 = vmatprep.subr.mxu0 0.0
  %8624 = vmatpush1.msra.mxu0 0.0
  %8625 = vmatprep.subr.mxu0 0.0
  %8626 = vmatpush1.msra.mxu0 0.0
  %8627 = vmatprep.subr.mxu0 0.0
  %8628 = vmatpush1.msra.mxu0 0.0
  %8629 = vmatprep.subr.mxu0 0.0
  %8630 = vmatpush1.msra.mxu0 0.0
  %8631 = vmatprep.subr.mxu0 0.0
  %8632 = vmatpush1.msra.mxu0 0.0
  %8633 = vmatprep.subr.mxu0 0.0
  %8634 = vmatpush1.msra.mxu0 0.0
  %8635 = vmatprep.subr.mxu0 0.0
  %8636 = vmatpush1.msra.mxu0 0.0
  %8637 = vmatprep.subr.mxu0 0.0
  %8638 = vmatpush1.msra.mxu0 0.0
  %8639 = vmatprep.subr.mxu0 0.0
  %8640 = vmatpush1.msra.mxu0 0.0
  %8641 = vmatprep.subr.mxu0 0.0
  %8642 = vmatpush1.msra.mxu0 0.0
  %8643 = vmatprep.subr.mxu0 0.0
  %8644 = vmatpush1.msra.mxu0 0.0
  %8645 = vmatprep.subr.mxu0 0.0
  %8646 = vmatpush1.msra.mxu0 0.0
  %8647 = vmatprep.mubr.f32.mxu0 0.0
  %v8648 = vand.u32 %v8577, 4294901760
  %v8649 = vsub.f32 %v8577, %v8648
  %v8650 = vand.u32 %v8649, 4294901760
  %v8651 = vsub.f32 %v8649, %v8650
  %v8652 = vand.u32 %v8651, 4294901760
  %8653 = vmatmul.mubr.f32.gmra.mrb[0].mxu0 %v8652
  %v8654 = vpop.f32.mrb[0].mxu0
  %v8655 = vadd.f32 0.0, %v8654
  %v8656 = vpop.f32.mrb[0].mxu0
  %8657 = vdwg.mxu0
  %8658 = vmatprep.subr.mxu0 0.0
  %v8659 = vand.u32 %v18, 4294901760
  %v8660 = vsub.f32 %v18, %v8659
  %v8661 = vand.u32 %v8660, 4294901760
  %v8662 = vsub.f32 %v8660, %v8661
  %v8663 = vand.u32 %v8662, 4294901760
  %8664 = vmatpush1.msra.mxu0 %v8663
  %8665 = vmatprep.subr.mxu0 0.0
  %v8666 = vand.u32 %v19, 4294901760
  %v8667 = vsub.f32 %v19, %v8666
  %v8668 = vand.u32 %v8667, 4294901760
  %v8669 = vsub.f32 %v8667, %v8668
  %v8670 = vand.u32 %v8669, 4294901760
  %8671 = vmatpush1.msra.mxu0 %v8670
  %8672 = vmatprep.subr.mxu0 0.0
  %v8673 = vand.u32 %v20, 4294901760
  %v8674 = vsub.f32 %v20, %v8673
  %v8675 = vand.u32 %v8674, 4294901760
  %v8676 = vsub.f32 %v8674, %v8675
  %v8677 = vand.u32 %v8676, 4294901760
  %8678 = vmatpush1.msra.mxu0 %v8677
  %8679 = vmatprep.subr.mxu0 0.0
  %v8680 = vand.u32 %v21, 4294901760
  %v8681 = vsub.f32 %v21, %v8680
  %v8682 = vand.u32 %v8681, 4294901760
  %v8683 = vsub.f32 %v8681, %v8682
  %v8684 = vand.u32 %v8683, 4294901760
  %8685 = vmatpush1.msra.mxu0 %v8684
  %8686 = vmatprep.subr.mxu0 0.0
  %8687 = vmatpush1.msra.mxu0 0.0
  %8688 = vmatprep.subr.mxu0 0.0
  %8689 = vmatpush1.msra.mxu0 0.0
  %8690 = vmatprep.subr.mxu0 0.0
  %8691 = vmatpush1.msra.mxu0 0.0
  %8692 = vmatprep.subr.mxu0 0.0
  %8693 = vmatpush1.msra.mxu0 0.0
  %8694 = vmatprep.subr.mxu0 0.0
  %8695 = vmatpush1.msra.mxu0 0.0
  %8696 = vmatprep.subr.mxu0 0.0
  %8697 = vmatpush1.msra.mxu0 0.0
  %8698 = vmatprep.subr.mxu0 0.0
  %8699 = vmatpush1.msra.mxu0 0.0
  %8700 = vmatprep.subr.mxu0 0.0
  %8701 = vmatpush1.msra.mxu0 0.0
  %8702 = vmatprep.subr.mxu0 0.0
  %8703 = vmatpush1.msra.mxu0 0.0
  %8704 = vmatprep.subr.mxu0 0.0
  %8705 = vmatpush1.msra.mxu0 0.0
  %8706 = vmatprep.subr.mxu0 0.0
  %8707 = vmatpush1.msra.mxu0 0.0
  %8708 = vmatprep.subr.mxu0 0.0
  %8709 = vmatpush1.msra.mxu0 0.0
  %8710 = vmatprep.subr.mxu0 0.0
  %8711 = vmatpush1.msra.mxu0 0.0
  %8712 = vmatprep.subr.mxu0 0.0
  %8713 = vmatpush1.msra.mxu0 0.0
  %8714 = vmatprep.subr.mxu0 0.0
  %8715 = vmatpush1.msra.mxu0 0.0
  %8716 = vmatprep.subr.mxu0 0.0
  %8717 = vmatpush1.msra.mxu0 0.0
  %8718 = vmatprep.subr.mxu0 0.0
  %8719 = vmatpush1.msra.mxu0 0.0
  %8720 = vmatprep.subr.mxu0 0.0
  %8721 = vmatpush1.msra.mxu0 0.0
  %8722 = vmatprep.subr.mxu0 0.0
  %8723 = vmatpush1.msra.mxu0 0.0
  %8724 = vmatprep.subr.mxu0 0.0
  %8725 = vmatpush1.msra.mxu0 0.0
  %8726 = vmatprep.subr.mxu0 0.0
  %8727 = vmatpush1.msra.mxu0 0.0
  %8728 = vmatprep.subr.mxu0 0.0
  %8729 = vmatpush1.msra.mxu0 0.0
  %8730 = vmatprep.subr.mxu0 0.0
  %8731 = vmatpush1.msra.mxu0 0.0
  %8732 = vmatprep.subr.mxu0 0.0
  %8733 = vmatpush1.msra.mxu0 0.0
  %8734 = vmatprep.subr.mxu0 0.0
  %8735 = vmatpush1.msra.mxu0 0.0
  %8736 = vmatprep.subr.mxu0 0.0
  %8737 = vmatpush1.msra.mxu0 0.0
  %8738 = vmatprep.subr.mxu0 0.0
  %8739 = vmatpush1.msra.mxu0 0.0
  %8740 = vmatprep.subr.mxu0 0.0
  %8741 = vmatpush1.msra.mxu0 0.0
  %8742 = vmatprep.mubr.f32.mxu0 0.0
  %v8743 = vand.u32 %v8577, 4294901760
  %8744 = vmatmul.mubr.f32.gmra.mrb[0].mxu0 %v8743
  %v8745 = vpop.f32.mrb[0].mxu0
  %v8746 = vadd.f32 %v8655, %v8745
  %v8747 = vpop.f32.mrb[0].mxu0
  %8748 = vdwg.mxu0
  %8749 = vmatprep.subr.mxu0 0.0
  %v8750 = vand.u32 %v18, 4294901760
  %v8751 = vsub.f32 %v18, %v8750
  %8752 = vmatpush1.msra.mxu0 %v8751
  %8753 = vmatprep.subr.mxu0 0.0
  %v8754 = vand.u32 %v19, 4294901760
  %v8755 = vsub.f32 %v19, %v8754
  %8756 = vmatpush1.msra.mxu0 %v8755
  %8757 = vmatprep.subr.mxu0 0.0
  %v8758 = vand.u32 %v20, 4294901760
  %v8759 = vsub.f32 %v20, %v8758
  %8760 = vmatpush1.msra.mxu0 %v8759
  %8761 = vmatprep.subr.mxu0 0.0
  %v8762 = vand.u32 %v21, 4294901760
  %v8763 = vsub.f32 %v21, %v8762
  %8764 = vmatpush1.msra.mxu0 %v8763
  %8765 = vmatprep.subr.mxu0 0.0
  %8766 = vmatpush1.msra.mxu0 0.0
  %8767 = vmatprep.subr.mxu0 0.0
  %8768 = vmatpush1.msra.mxu0 0.0
  %8769 = vmatprep.subr.mxu0 0.0
  %8770 = vmatpush1.msra.mxu0 0.0
  %8771 = vmatprep.subr.mxu0 0.0
  %8772 = vmatpush1.msra.mxu0 0.0
  %8773 = vmatprep.subr.mxu0 0.0
  %8774 = vmatpush1.msra.mxu0 0.0
  %8775 = vmatprep.subr.mxu0 0.0
  %8776 = vmatpush1.msra.mxu0 0.0
  %8777 = vmatprep.subr.mxu0 0.0
  %8778 = vmatpush1.msra.mxu0 0.0
  %8779 = vmatprep.subr.mxu0 0.0
  %8780 = vmatpush1.msra.mxu0 0.0
  %8781 = vmatprep.subr.mxu0 0.0
  %8782 = vmatpush1.msra.mxu0 0.0
  %8783 = vmatprep.subr.mxu0 0.0
  %8784 = vmatpush1.msra.mxu0 0.0
  %8785 = vmatprep.subr.mxu0 0.0
  %8786 = vmatpush1.msra.mxu0 0.0
  %8787 = vmatprep.subr.mxu0 0.0
  %8788 = vmatpush1.msra.mxu0 0.0
  %8789 = vmatprep.subr.mxu0 0.0
  %8790 = vmatpush1.msra.mxu0 0.0
  %8791 = vmatprep.subr.mxu0 0.0
  %8792 = vmatpush1.msra.mxu0 0.0
  %8793 = vmatprep.subr.mxu0 0.0
  %8794 = vmatpush1.msra.mxu0 0.0
  %8795 = vmatprep.subr.mxu0 0.0
  %8796 = vmatpush1.msra.mxu0 0.0
  %8797 = vmatprep.subr.mxu0 0.0
  %8798 = vmatpush1.msra.mxu0 0.0
  %8799 = vmatprep.subr.mxu0 0.0
  %8800 = vmatpush1.msra.mxu0 0.0
  %8801 = vmatprep.subr.mxu0 0.0
  %8802 = vmatpush1.msra.mxu0 0.0
  %8803 = vmatprep.subr.mxu0 0.0
  %8804 = vmatpush1.msra.mxu0 0.0
  %8805 = vmatprep.subr.mxu0 0.0
  %8806 = vmatpush1.msra.mxu0 0.0
  %8807 = vmatprep.subr.mxu0 0.0
  %8808 = vmatpush1.msra.mxu0 0.0
  %8809 = vmatprep.subr.mxu0 0.0
  %8810 = vmatpush1.msra.mxu0 0.0
  %8811 = vmatprep.subr.mxu0 0.0
  %8812 = vmatpush1.msra.mxu0 0.0
  %8813 = vmatprep.subr.mxu0 0.0
  %8814 = vmatpush1.msra.mxu0 0.0
  %8815 = vmatprep.subr.mxu0 0.0
  %8816 = vmatpush1.msra.mxu0 0.0
  %8817 = vmatprep.subr.mxu0 0.0
  %8818 = vmatpush1.msra.mxu0 0.0
  %8819 = vmatprep.subr.mxu0 0.0
  %8820 = vmatpush1.msra.mxu0 0.0
  %8821 = vmatprep.mubr.f32.mxu0 0.0
  %v8822 = vand.u32 %v8577, 4294901760
  %v8823 = vsub.f32 %v8577, %v8822
  %8824 = vmatmul.mubr.f32.gmra.mrb[0].mxu0 %v8823
  %v8825 = vpop.f32.mrb[0].mxu0
  %v8826 = vadd.f32 %v8746, %v8825
  %v8827 = vpop.f32.mrb[0].mxu0
  %8828 = vdwg.mxu0
  %8829 = vmatprep.subr.mxu0 0.0
  %v8830 = vand.u32 %v18, 4294901760
  %8831 = vmatpush1.msra.mxu0 %v8830
  %8832 = vmatprep.subr.mxu0 0.0
  %v8833 = vand.u32 %v19, 4294901760
  %8834 = vmatpush1.msra.mxu0 %v8833
  %8835 = vmatprep.subr.mxu0 0.0
  %v8836 = vand.u32 %v20, 4294901760
  %8837 = vmatpush1.msra.mxu0 %v8836
  %8838 = vmatprep.subr.mxu0 0.0
  %v8839 = vand.u32 %v21, 4294901760
  %8840 = vmatpush1.msra.mxu0 %v8839
  %8841 = vmatprep.subr.mxu0 0.0
  %8842 = vmatpush1.msra.mxu0 0.0
  %8843 = vmatprep.subr.mxu0 0.0
  %8844 = vmatpush1.msra.mxu0 0.0
  %8845 = vmatprep.subr.mxu0 0.0
  %8846 = vmatpush1.msra.mxu0 0.0
  %8847 = vmatprep.subr.mxu0 0.0
  %8848 = vmatpush1.msra.mxu0 0.0
  %8849 = vmatprep.subr.mxu0 0.0
  %8850 = vmatpush1.msra.mxu0 0.0
  %8851 = vmatprep.subr.mxu0 0.0
  %8852 = vmatpush1.msra.mxu0 0.0
  %8853 = vmatprep.subr.mxu0 0.0
  %8854 = vmatpush1.msra.mxu0 0.0
  %8855 = vmatprep.subr.mxu0 0.0
  %8856 = vmatpush1.msra.mxu0 0.0
  %8857 = vmatprep.subr.mxu0 0.0
  %8858 = vmatpush1.msra.mxu0 0.0
  %8859 = vmatprep.subr.mxu0 0.0
  %8860 = vmatpush1.msra.mxu0 0.0
  %8861 = vmatprep.subr.mxu0 0.0
  %8862 = vmatpush1.msra.mxu0 0.0
  %8863 = vmatprep.subr.mxu0 0.0
  %8864 = vmatpush1.msra.mxu0 0.0
  %8865 = vmatprep.subr.mxu0 0.0
  %8866 = vmatpush1.msra.mxu0 0.0
  %8867 = vmatprep.subr.mxu0 0.0
  %8868 = vmatpush1.msra.mxu0 0.0
  %8869 = vmatprep.subr.mxu0 0.0
  %8870 = vmatpush1.msra.mxu0 0.0
  %8871 = vmatprep.subr.mxu0 0.0
  %8872 = vmatpush1.msra.mxu0 0.0
  %8873 = vmatprep.subr.mxu0 0.0
  %8874 = vmatpush1.msra.mxu0 0.0
  %8875 = vmatprep.subr.mxu0 0.0
  %8876 = vmatpush1.msra.mxu0 0.0
  %8877 = vmatprep.subr.mxu0 0.0
  %8878 = vmatpush1.msra.mxu0 0.0
  %8879 = vmatprep.subr.mxu0 0.0
  %8880 = vmatpush1.msra.mxu0 0.0
  %8881 = vmatprep.subr.mxu0 0.0
  %8882 = vmatpush1.msra.mxu0 0.0
  %8883 = vmatprep.subr.mxu0 0.0
  %8884 = vmatpush1.msra.mxu0 0.0
  %8885 = vmatprep.subr.mxu0 0.0
  %8886 = vmatpush1.msra.mxu0 0.0
  %8887 = vmatprep.subr.mxu0 0.0
  %8888 = vmatpush1.msra.mxu0 0.0
  %8889 = vmatprep.subr.mxu0 0.0
  %8890 = vmatpush1.msra.mxu0 0.0
  %8891 = vmatprep.subr.mxu0 0.0
  %8892 = vmatpush1.msra.mxu0 0.0
  %8893 = vmatprep.subr.mxu0 0.0
  %8894 = vmatpush1.msra.mxu0 0.0
  %8895 = vmatprep.subr.mxu0 0.0
  %8896 = vmatpush1.msra.mxu0 0.0
  %8897 = vmatprep.mubr.f32.mxu0 0.0
  %v8898 = vand.u32 %v8577, 4294901760
  %v8899 = vsub.f32 %v8577, %v8898
  %v8900 = vand.u32 %v8899, 4294901760
  %8901 = vmatmul.mubr.f32.gmra.mrb[0].mxu0 %v8900
  %v8902 = vpop.f32.mrb[0].mxu0
  %v8903 = vadd.f32 %v8826, %v8902
  %v8904 = vpop.f32.mrb[0].mxu0
  %8905 = vdwg.mxu0
  %8906 = vmatprep.subr.mxu0 0.0
  %v8907 = vand.u32 %v18, 4294901760
  %v8908 = vsub.f32 %v18, %v8907
  %v8909 = vand.u32 %v8908, 4294901760
  %8910 = vmatpush1.msra.mxu0 %v8909
  %8911 = vmatprep.subr.mxu0 0.0
  %v8912 = vand.u32 %v19, 4294901760
  %v8913 = vsub.f32 %v19, %v8912
  %v8914 = vand.u32 %v8913, 4294901760
  %8915 = vmatpush1.msra.mxu0 %v8914
  %8916 = vmatprep.subr.mxu0 0.0
  %v8917 = vand.u32 %v20, 4294901760
  %v8918 = vsub.f32 %v20, %v8917
  %v8919 = vand.u32 %v8918, 4294901760
  %8920 = vmatpush1.msra.mxu0 %v8919
  %8921 = vmatprep.subr.mxu0 0.0
  %v8922 = vand.u32 %v21, 4294901760
  %v8923 = vsub.f32 %v21, %v8922
  %v8924 = vand.u32 %v8923, 4294901760
  %8925 = vmatpush1.msra.mxu0 %v8924
  %8926 = vmatprep.subr.mxu0 0.0
  %8927 = vmatpush1.msra.mxu0 0.0
  %8928 = vmatprep.subr.mxu0 0.0
  %8929 = vmatpush1.msra.mxu0 0.0
  %8930 = vmatprep.subr.mxu0 0.0
  %8931 = vmatpush1.msra.mxu0 0.0
  %8932 = vmatprep.subr.mxu0 0.0
  %8933 = vmatpush1.msra.mxu0 0.0
  %8934 = vmatprep.subr.mxu0 0.0
  %8935 = vmatpush1.msra.mxu0 0.0
  %8936 = vmatprep.subr.mxu0 0.0
  %8937 = vmatpush1.msra.mxu0 0.0
  %8938 = vmatprep.subr.mxu0 0.0
  %8939 = vmatpush1.msra.mxu0 0.0
  %8940 = vmatprep.subr.mxu0 0.0
  %8941 = vmatpush1.msra.mxu0 0.0
  %8942 = vmatprep.subr.mxu0 0.0
  %8943 = vmatpush1.msra.mxu0 0.0
  %8944 = vmatprep.subr.mxu0 0.0
  %8945 = vmatpush1.msra.mxu0 0.0
  %8946 = vmatprep.subr.mxu0 0.0
  %8947 = vmatpush1.msra.mxu0 0.0
  %8948 = vmatprep.subr.mxu0 0.0
  %8949 = vmatpush1.msra.mxu0 0.0
  %8950 = vmatprep.subr.mxu0 0.0
  %8951 = vmatpush1.msra.mxu0 0.0
  %8952 = vmatprep.subr.mxu0 0.0
  %8953 = vmatpush1.msra.mxu0 0.0
  %8954 = vmatprep.subr.mxu0 0.0
  %8955 = vmatpush1.msra.mxu0 0.0
  %8956 = vmatprep.subr.mxu0 0.0
  %8957 = vmatpush1.msra.mxu0 0.0
  %8958 = vmatprep.subr.mxu0 0.0
  %8959 = vmatpush1.msra.mxu0 0.0
  %8960 = vmatprep.subr.mxu0 0.0
  %8961 = vmatpush1.msra.mxu0 0.0
  %8962 = vmatprep.subr.mxu0 0.0
  %8963 = vmatpush1.msra.mxu0 0.0
  %8964 = vmatprep.subr.mxu0 0.0
  %8965 = vmatpush1.msra.mxu0 0.0
  %8966 = vmatprep.subr.mxu0 0.0
  %8967 = vmatpush1.msra.mxu0 0.0
  %8968 = vmatprep.subr.mxu0 0.0
  %8969 = vmatpush1.msra.mxu0 0.0
  %8970 = vmatprep.subr.mxu0 0.0
  %8971 = vmatpush1.msra.mxu0 0.0
  %8972 = vmatprep.subr.mxu0 0.0
  %8973 = vmatpush1.msra.mxu0 0.0
  %8974 = vmatprep.subr.mxu0 0.0
  %8975 = vmatpush1.msra.mxu0 0.0
  %8976 = vmatprep.subr.mxu0 0.0
  %8977 = vmatpush1.msra.mxu0 0.0
  %8978 = vmatprep.subr.mxu0 0.0
  %8979 = vmatpush1.msra.mxu0 0.0
  %8980 = vmatprep.subr.mxu0 0.0
  %8981 = vmatpush1.msra.mxu0 0.0
  %8982 = vmatprep.mubr.f32.mxu0 0.0
  %v8983 = vand.u32 %v8577, 4294901760
  %8984 = vmatmul.mubr.f32.gmra.mrb[0].mxu0 %v8983
  %v8985 = vpop.f32.mrb[0].mxu0
  %v8986 = vadd.f32 %v8903, %v8985
  %v8987 = vpop.f32.mrb[0].mxu0
  %8988 = vdwg.mxu0
  %8989 = vmatprep.subr.mxu0 0.0
  %v8990 = vand.u32 %v18, 4294901760
  %8991 = vmatpush1.msra.mxu0 %v8990
  %8992 = vmatprep.subr.mxu0 0.0
  %v8993 = vand.u32 %v19, 4294901760
  %8994 = vmatpush1.msra.mxu0 %v8993
  %8995 = vmatprep.subr.mxu0 0.0
  %v8996 = vand.u32 %v20, 4294901760
  %8997 = vmatpush1.msra.mxu0 %v8996
  %8998 = vmatprep.subr.mxu0 0.0
  %v8999 = vand.u32 %v21, 4294901760
  %9000 = vmatpush1.msra.mxu0 %v8999
  %9001 = vmatprep.subr.mxu0 0.0
  %9002 = vmatpush1.msra.mxu0 0.0
  %9003 = vmatprep.subr.mxu0 0.0
  %9004 = vmatpush1.msra.mxu0 0.0
  %9005 = vmatprep.subr.mxu0 0.0
  %9006 = vmatpush1.msra.mxu0 0.0
  %9007 = vmatprep.subr.mxu0 0.0
  %9008 = vmatpush1.msra.mxu0 0.0
  %9009 = vmatprep.subr.mxu0 0.0
  %9010 = vmatpush1.msra.mxu0 0.0
  %9011 = vmatprep.subr.mxu0 0.0
  %9012 = vmatpush1.msra.mxu0 0.0
  %9013 = vmatprep.subr.mxu0 0.0
  %9014 = vmatpush1.msra.mxu0 0.0
  %9015 = vmatprep.subr.mxu0 0.0
  %9016 = vmatpush1.msra.mxu0 0.0
  %9017 = vmatprep.subr.mxu0 0.0
  %9018 = vmatpush1.msra.mxu0 0.0
  %9019 = vmatprep.subr.mxu0 0.0
  %9020 = vmatpush1.msra.mxu0 0.0
  %9021 = vmatprep.subr.mxu0 0.0
  %9022 = vmatpush1.msra.mxu0 0.0
  %9023 = vmatprep.subr.mxu0 0.0
  %9024 = vmatpush1.msra.mxu0 0.0
  %9025 = vmatprep.subr.mxu0 0.0
  %9026 = vmatpush1.msra.mxu0 0.0
  %9027 = vmatprep.subr.mxu0 0.0
  %9028 = vmatpush1.msra.mxu0 0.0
  %9029 = vmatprep.subr.mxu0 0.0
  %9030 = vmatpush1.msra.mxu0 0.0
  %9031 = vmatprep.subr.mxu0 0.0
  %9032 = vmatpush1.msra.mxu0 0.0
  %9033 = vmatprep.subr.mxu0 0.0
  %9034 = vmatpush1.msra.mxu0 0.0
  %9035 = vmatprep.subr.mxu0 0.0
  %9036 = vmatpush1.msra.mxu0 0.0
  %9037 = vmatprep.subr.mxu0 0.0
  %9038 = vmatpush1.msra.mxu0 0.0
  %9039 = vmatprep.subr.mxu0 0.0
  %9040 = vmatpush1.msra.mxu0 0.0
  %9041 = vmatprep.subr.mxu0 0.0
  %9042 = vmatpush1.msra.mxu0 0.0
  %9043 = vmatprep.subr.mxu0 0.0
  %9044 = vmatpush1.msra.mxu0 0.0
  %9045 = vmatprep.subr.mxu0 0.0
  %9046 = vmatpush1.msra.mxu0 0.0
  %9047 = vmatprep.subr.mxu0 0.0
  %9048 = vmatpush1.msra.mxu0 0.0
  %9049 = vmatprep.subr.mxu0 0.0
  %9050 = vmatpush1.msra.mxu0 0.0
  %9051 = vmatprep.subr.mxu0 0.0
  %9052 = vmatpush1.msra.mxu0 0.0
  %9053 = vmatprep.subr.mxu0 0.0
  %9054 = vmatpush1.msra.mxu0 0.0
  %9055 = vmatprep.subr.mxu0 0.0
  %9056 = vmatpush1.msra.mxu0 0.0
  %9057 = vmatprep.mubr.f32.mxu0 0.0
  %v9058 = vand.u32 %v8577, 4294901760
  %9059 = vmatmul.mubr.f32.gmra.mrb[0].mxu0 %v9058
  %v9060 = vpop.f32.mrb[0].mxu0
  %v9061 = vadd.f32 %v8986, %v9060
  %v9062 = vpop.f32.mrb[0].mxu0
  %9063 = vdwg.mxu0
  %9065 = vrot.lane.b32.xlu0 %v11, 32
  %v9066 = vpop.permute.xlu0 %9065
  %vm9068 = vcmask 319744
  %9069 = vst.msk [vmem:[%s2] sm:$0x1] %vm9068, %v9066
  %v9070 = vsel %vm1795, %v11, 0
  %9072 = vmatprep.subr.mxu0 0.0
  %v9073 = vand.u32 %v17, 4294901760
  %9074 = vmatpush1.msra.mxu0 %v9073
  %9075 = vmatprep.subr.mxu0 0.0
  %9076 = vmatpush1.msra.mxu0 0.0
  %9077 = vmatprep.subr.mxu0 0.0
  %9078 = vmatpush1.msra.mxu0 0.0
  %9079 = vmatprep.subr.mxu0 0.0
  %9080 = vmatpush1.msra.mxu0 0.0
  %9081 = vmatprep.subr.mxu0 0.0
  %9082 = vmatpush1.msra.mxu0 0.0
  %9083 = vmatprep.subr.mxu0 0.0
  %9084 = vmatpush1.msra.mxu0 0.0
  %9085 = vmatprep.subr.mxu0 0.0
  %9086 = vmatpush1.msra.mxu0 0.0
  %9087 = vmatprep.subr.mxu0 0.0
  %9088 = vmatpush1.msra.mxu0 0.0
  %9089 = vmatprep.subr.mxu0 0.0
  %9090 = vmatpush1.msra.mxu0 0.0
  %9091 = vmatprep.subr.mxu0 0.0
  %9092 = vmatpush1.msra.mxu0 0.0
  %9093 = vmatprep.subr.mxu0 0.0
  %9094 = vmatpush1.msra.mxu0 0.0
  %9095 = vmatprep.subr.mxu0 0.0
  %9096 = vmatpush1.msra.mxu0 0.0
  %9097 = vmatprep.subr.mxu0 0.0
  %9098 = vmatpush1.msra.mxu0 0.0
  %9099 = vmatprep.subr.mxu0 0.0
  %9100 = vmatpush1.msra.mxu0 0.0
  %9101 = vmatprep.subr.mxu0 0.0
  %9102 = vmatpush1.msra.mxu0 0.0
  %9103 = vmatprep.subr.mxu0 0.0
  %9104 = vmatpush1.msra.mxu0 0.0
  %9105 = vmatprep.subr.mxu0 0.0
  %9106 = vmatpush1.msra.mxu0 0.0
  %9107 = vmatprep.subr.mxu0 0.0
  %9108 = vmatpush1.msra.mxu0 0.0
  %9109 = vmatprep.subr.mxu0 0.0
  %9110 = vmatpush1.msra.mxu0 0.0
  %9111 = vmatprep.subr.mxu0 0.0
  %9112 = vmatpush1.msra.mxu0 0.0
  %9113 = vmatprep.subr.mxu0 0.0
  %9114 = vmatpush1.msra.mxu0 0.0
  %9115 = vmatprep.subr.mxu0 0.0
  %9116 = vmatpush1.msra.mxu0 0.0
  %9117 = vmatprep.subr.mxu0 0.0
  %9118 = vmatpush1.msra.mxu0 0.0
  %9119 = vmatprep.subr.mxu0 0.0
  %9120 = vmatpush1.msra.mxu0 0.0
  %9121 = vmatprep.subr.mxu0 0.0
  %9122 = vmatpush1.msra.mxu0 0.0
  %9123 = vmatprep.subr.mxu0 0.0
  %9124 = vmatpush1.msra.mxu0 0.0
  %9125 = vmatprep.subr.mxu0 0.0
  %9126 = vmatpush1.msra.mxu0 0.0
  %9127 = vmatprep.subr.mxu0 0.0
  %9128 = vmatpush1.msra.mxu0 0.0
  %9129 = vmatprep.subr.mxu0 0.0
  %9130 = vmatpush1.msra.mxu0 0.0
  %9131 = vmatprep.subr.mxu0 0.0
  %9132 = vmatpush1.msra.mxu0 0.0
  %9133 = vmatprep.subr.mxu0 0.0
  %9134 = vmatpush1.msra.mxu0 0.0
  %9135 = vmatprep.subr.mxu0 0.0
  %9136 = vmatpush1.msra.mxu0 0.0
  %9137 = vmatprep.mubr.f32.mxu0 0.0
  %v9138 = vand.u32 %v9070, 4294901760
  %v9139 = vsub.f32 %v9070, %v9138
  %v9140 = vand.u32 %v9139, 4294901760
  %v9141 = vsub.f32 %v9139, %v9140
  %v9142 = vand.u32 %v9141, 4294901760
  %9143 = vmatmul.mubr.f32.gmra.mrb[0].mxu0 %v9142
  %v9144 = vpop.f32.mrb[0].mxu0
  %v9145 = vadd.f32 %v9061, %v9144
  %v9146 = vpop.f32.mrb[0].mxu0
  %9147 = vdwg.mxu0
  %9148 = vmatprep.subr.mxu0 0.0
  %v9149 = vand.u32 %v17, 4294901760
  %v9150 = vsub.f32 %v17, %v9149
  %v9151 = vand.u32 %v9150, 4294901760
  %v9152 = vsub.f32 %v9150, %v9151
  %v9153 = vand.u32 %v9152, 4294901760
  %9154 = vmatpush1.msra.mxu0 %v9153
  %9155 = vmatprep.subr.mxu0 0.0
  %9156 = vmatpush1.msra.mxu0 0.0
  %9157 = vmatprep.subr.mxu0 0.0
  %9158 = vmatpush1.msra.mxu0 0.0
  %9159 = vmatprep.subr.mxu0 0.0
  %9160 = vmatpush1.msra.mxu0 0.0
  %9161 = vmatprep.subr.mxu0 0.0
  %9162 = vmatpush1.msra.mxu0 0.0
  %9163 = vmatprep.subr.mxu0 0.0
  %9164 = vmatpush1.msra.mxu0 0.0
  %9165 = vmatprep.subr.mxu0 0.0
  %9166 = vmatpush1.msra.mxu0 0.0
  %9167 = vmatprep.subr.mxu0 0.0
  %9168 = vmatpush1.msra.mxu0 0.0
  %9169 = vmatprep.subr.mxu0 0.0
  %9170 = vmatpush1.msra.mxu0 0.0
  %9171 = vmatprep.subr.mxu0 0.0
  %9172 = vmatpush1.msra.mxu0 0.0
  %9173 = vmatprep.subr.mxu0 0.0
  %9174 = vmatpush1.msra.mxu0 0.0
  %9175 = vmatprep.subr.mxu0 0.0
  %9176 = vmatpush1.msra.mxu0 0.0
  %9177 = vmatprep.subr.mxu0 0.0
  %9178 = vmatpush1.msra.mxu0 0.0
  %9179 = vmatprep.subr.mxu0 0.0
  %9180 = vmatpush1.msra.mxu0 0.0
  %9181 = vmatprep.subr.mxu0 0.0
  %9182 = vmatpush1.msra.mxu0 0.0
  %9183 = vmatprep.subr.mxu0 0.0
  %9184 = vmatpush1.msra.mxu0 0.0
  %9185 = vmatprep.subr.mxu0 0.0
  %9186 = vmatpush1.msra.mxu0 0.0
  %9187 = vmatprep.subr.mxu0 0.0
  %9188 = vmatpush1.msra.mxu0 0.0
  %9189 = vmatprep.subr.mxu0 0.0
  %9190 = vmatpush1.msra.mxu0 0.0
  %9191 = vmatprep.subr.mxu0 0.0
  %9192 = vmatpush1.msra.mxu0 0.0
  %9193 = vmatprep.subr.mxu0 0.0
  %9194 = vmatpush1.msra.mxu0 0.0
  %9195 = vmatprep.subr.mxu0 0.0
  %9196 = vmatpush1.msra.mxu0 0.0
  %9197 = vmatprep.subr.mxu0 0.0
  %9198 = vmatpush1.msra.mxu0 0.0
  %9199 = vmatprep.subr.mxu0 0.0
  %9200 = vmatpush1.msra.mxu0 0.0
  %9201 = vmatprep.subr.mxu0 0.0
  %9202 = vmatpush1.msra.mxu0 0.0
  %9203 = vmatprep.subr.mxu0 0.0
  %9204 = vmatpush1.msra.mxu0 0.0
  %9205 = vmatprep.subr.mxu0 0.0
  %9206 = vmatpush1.msra.mxu0 0.0
  %9207 = vmatprep.subr.mxu0 0.0
  %9208 = vmatpush1.msra.mxu0 0.0
  %9209 = vmatprep.subr.mxu0 0.0
  %9210 = vmatpush1.msra.mxu0 0.0
  %9211 = vmatprep.subr.mxu0 0.0
  %9212 = vmatpush1.msra.mxu0 0.0
  %9213 = vmatprep.subr.mxu0 0.0
  %9214 = vmatpush1.msra.mxu0 0.0
  %9215 = vmatprep.subr.mxu0 0.0
  %9216 = vmatpush1.msra.mxu0 0.0
  %9217 = vmatprep.mubr.f32.mxu0 0.0
  %v9218 = vand.u32 %v9070, 4294901760
  %9219 = vmatmul.mubr.f32.gmra.mrb[0].mxu0 %v9218
  %v9220 = vpop.f32.mrb[0].mxu0
  %v9221 = vadd.f32 %v9145, %v9220
  %v9222 = vpop.f32.mrb[0].mxu0
  %9223 = vdwg.mxu0
  %9224 = vmatprep.subr.mxu0 0.0
  %v9225 = vand.u32 %v17, 4294901760
  %v9226 = vsub.f32 %v17, %v9225
  %9227 = vmatpush1.msra.mxu0 %v9226
  %9228 = vmatprep.subr.mxu0 0.0
  %9229 = vmatpush1.msra.mxu0 0.0
  %9230 = vmatprep.subr.mxu0 0.0
  %9231 = vmatpush1.msra.mxu0 0.0
  %9232 = vmatprep.subr.mxu0 0.0
  %9233 = vmatpush1.msra.mxu0 0.0
  %9234 = vmatprep.subr.mxu0 0.0
  %9235 = vmatpush1.msra.mxu0 0.0
  %9236 = vmatprep.subr.mxu0 0.0
  %9237 = vmatpush1.msra.mxu0 0.0
  %9238 = vmatprep.subr.mxu0 0.0
  %9239 = vmatpush1.msra.mxu0 0.0
  %9240 = vmatprep.subr.mxu0 0.0
  %9241 = vmatpush1.msra.mxu0 0.0
  %9242 = vmatprep.subr.mxu0 0.0
  %9243 = vmatpush1.msra.mxu0 0.0
  %9244 = vmatprep.subr.mxu0 0.0
  %9245 = vmatpush1.msra.mxu0 0.0
  %9246 = vmatprep.subr.mxu0 0.0
  %9247 = vmatpush1.msra.mxu0 0.0
  %9248 = vmatprep.subr.mxu0 0.0
  %9249 = vmatpush1.msra.mxu0 0.0
  %9250 = vmatprep.subr.mxu0 0.0
  %9251 = vmatpush1.msra.mxu0 0.0
  %9252 = vmatprep.subr.mxu0 0.0
  %9253 = vmatpush1.msra.mxu0 0.0
  %9254 = vmatprep.subr.mxu0 0.0
  %9255 = vmatpush1.msra.mxu0 0.0
  %9256 = vmatprep.subr.mxu0 0.0
  %9257 = vmatpush1.msra.mxu0 0.0
  %9258 = vmatprep.subr.mxu0 0.0
  %9259 = vmatpush1.msra.mxu0 0.0
  %9260 = vmatprep.subr.mxu0 0.0
  %9261 = vmatpush1.msra.mxu0 0.0
  %9262 = vmatprep.subr.mxu0 0.0
  %9263 = vmatpush1.msra.mxu0 0.0
  %9264 = vmatprep.subr.mxu0 0.0
  %9265 = vmatpush1.msra.mxu0 0.0
  %9266 = vmatprep.subr.mxu0 0.0
  %9267 = vmatpush1.msra.mxu0 0.0
  %9268 = vmatprep.subr.mxu0 0.0
  %9269 = vmatpush1.msra.mxu0 0.0
  %9270 = vmatprep.subr.mxu0 0.0
  %9271 = vmatpush1.msra.mxu0 0.0
  %9272 = vmatprep.subr.mxu0 0.0
  %9273 = vmatpush1.msra.mxu0 0.0
  %9274 = vmatprep.subr.mxu0 0.0
  %9275 = vmatpush1.msra.mxu0 0.0
  %9276 = vmatprep.subr.mxu0 0.0
  %9277 = vmatpush1.msra.mxu0 0.0
  %9278 = vmatprep.subr.mxu0 0.0
  %9279 = vmatpush1.msra.mxu0 0.0
  %9280 = vmatprep.subr.mxu0 0.0
  %9281 = vmatpush1.msra.mxu0 0.0
  %9282 = vmatprep.subr.mxu0 0.0
  %9283 = vmatpush1.msra.mxu0 0.0
  %9284 = vmatprep.subr.mxu0 0.0
  %9285 = vmatpush1.msra.mxu0 0.0
  %9286 = vmatprep.subr.mxu0 0.0
  %9287 = vmatpush1.msra.mxu0 0.0
  %9288 = vmatprep.subr.mxu0 0.0
  %9289 = vmatpush1.msra.mxu0 0.0
  %9290 = vmatprep.mubr.f32.mxu0 0.0
  %v9291 = vand.u32 %v9070, 4294901760
  %v9292 = vsub.f32 %v9070, %v9291
  %9293 = vmatmul.mubr.f32.gmra.mrb[0].mxu0 %v9292
  %v9294 = vpop.f32.mrb[0].mxu0
  %v9295 = vadd.f32 %v9221, %v9294
  %v9296 = vpop.f32.mrb[0].mxu0
  %9297 = vdwg.mxu0
  %9298 = vmatprep.subr.mxu0 0.0
  %v9299 = vand.u32 %v17, 4294901760
  %9300 = vmatpush1.msra.mxu0 %v9299
  %9301 = vmatprep.subr.mxu0 0.0
  %9302 = vmatpush1.msra.mxu0 0.0
  %9303 = vmatprep.subr.mxu0 0.0
  %9304 = vmatpush1.msra.mxu0 0.0
  %9305 = vmatprep.subr.mxu0 0.0
  %9306 = vmatpush1.msra.mxu0 0.0
  %9307 = vmatprep.subr.mxu0 0.0
  %9308 = vmatpush1.msra.mxu0 0.0
  %9309 = vmatprep.subr.mxu0 0.0
  %9310 = vmatpush1.msra.mxu0 0.0
  %9311 = vmatprep.subr.mxu0 0.0
  %9312 = vmatpush1.msra.mxu0 0.0
  %9313 = vmatprep.subr.mxu0 0.0
  %9314 = vmatpush1.msra.mxu0 0.0
  %9315 = vmatprep.subr.mxu0 0.0
  %9316 = vmatpush1.msra.mxu0 0.0
  %9317 = vmatprep.subr.mxu0 0.0
  %9318 = vmatpush1.msra.mxu0 0.0
  %9319 = vmatprep.subr.mxu0 0.0
  %9320 = vmatpush1.msra.mxu0 0.0
  %9321 = vmatprep.subr.mxu0 0.0
  %9322 = vmatpush1.msra.mxu0 0.0
  %9323 = vmatprep.subr.mxu0 0.0
  %9324 = vmatpush1.msra.mxu0 0.0
  %9325 = vmatprep.subr.mxu0 0.0
  %9326 = vmatpush1.msra.mxu0 0.0
  %9327 = vmatprep.subr.mxu0 0.0
  %9328 = vmatpush1.msra.mxu0 0.0
  %9329 = vmatprep.subr.mxu0 0.0
  %9330 = vmatpush1.msra.mxu0 0.0
  %9331 = vmatprep.subr.mxu0 0.0
  %9332 = vmatpush1.msra.mxu0 0.0
  %9333 = vmatprep.subr.mxu0 0.0
  %9334 = vmatpush1.msra.mxu0 0.0
  %9335 = vmatprep.subr.mxu0 0.0
  %9336 = vmatpush1.msra.mxu0 0.0
  %9337 = vmatprep.subr.mxu0 0.0
  %9338 = vmatpush1.msra.mxu0 0.0
  %9339 = vmatprep.subr.mxu0 0.0
  %9340 = vmatpush1.msra.mxu0 0.0
  %9341 = vmatprep.subr.mxu0 0.0
  %9342 = vmatpush1.msra.mxu0 0.0
  %9343 = vmatprep.subr.mxu0 0.0
  %9344 = vmatpush1.msra.mxu0 0.0
  %9345 = vmatprep.subr.mxu0 0.0
  %9346 = vmatpush1.msra.mxu0 0.0
  %9347 = vmatprep.subr.mxu0 0.0
  %9348 = vmatpush1.msra.mxu0 0.0
  %9349 = vmatprep.subr.mxu0 0.0
  %9350 = vmatpush1.msra.mxu0 0.0
  %9351 = vmatprep.subr.mxu0 0.0
  %9352 = vmatpush1.msra.mxu0 0.0
  %9353 = vmatprep.subr.mxu0 0.0
  %9354 = vmatpush1.msra.mxu0 0.0
  %9355 = vmatprep.subr.mxu0 0.0
  %9356 = vmatpush1.msra.mxu0 0.0
  %9357 = vmatprep.subr.mxu0 0.0
  %9358 = vmatpush1.msra.mxu0 0.0
  %9359 = vmatprep.subr.mxu0 0.0
  %9360 = vmatpush1.msra.mxu0 0.0
  %9361 = vmatprep.subr.mxu0 0.0
  %9362 = vmatpush1.msra.mxu0 0.0
  %9363 = vmatprep.mubr.f32.mxu0 0.0
  %v9364 = vand.u32 %v9070, 4294901760
  %v9365 = vsub.f32 %v9070, %v9364
  %v9366 = vand.u32 %v9365, 4294901760
  %9367 = vmatmul.mubr.f32.gmra.mrb[0].mxu0 %v9366
  %v9368 = vpop.f32.mrb[0].mxu0
  %v9369 = vadd.f32 %v9295, %v9368
  %v9370 = vpop.f32.mrb[0].mxu0
  %9371 = vdwg.mxu0
  %9372 = vmatprep.subr.mxu0 0.0
  %v9373 = vand.u32 %v17, 4294901760
  %v9374 = vsub.f32 %v17, %v9373
  %v9375 = vand.u32 %v9374, 4294901760
  %9376 = vmatpush1.msra.mxu0 %v9375
  %9377 = vmatprep.subr.mxu0 0.0
  %9378 = vmatpush1.msra.mxu0 0.0
  %9379 = vmatprep.subr.mxu0 0.0
  %9380 = vmatpush1.msra.mxu0 0.0
  %9381 = vmatprep.subr.mxu0 0.0
  %9382 = vmatpush1.msra.mxu0 0.0
  %9383 = vmatprep.subr.mxu0 0.0
  %9384 = vmatpush1.msra.mxu0 0.0
  %9385 = vmatprep.subr.mxu0 0.0
  %9386 = vmatpush1.msra.mxu0 0.0
  %9387 = vmatprep.subr.mxu0 0.0
  %9388 = vmatpush1.msra.mxu0 0.0
  %9389 = vmatprep.subr.mxu0 0.0
  %9390 = vmatpush1.msra.mxu0 0.0
  %9391 = vmatprep.subr.mxu0 0.0
  %9392 = vmatpush1.msra.mxu0 0.0
  %9393 = vmatprep.subr.mxu0 0.0
  %9394 = vmatpush1.msra.mxu0 0.0
  %9395 = vmatprep.subr.mxu0 0.0
  %9396 = vmatpush1.msra.mxu0 0.0
  %9397 = vmatprep.subr.mxu0 0.0
  %9398 = vmatpush1.msra.mxu0 0.0
  %9399 = vmatprep.subr.mxu0 0.0
  %9400 = vmatpush1.msra.mxu0 0.0
  %9401 = vmatprep.subr.mxu0 0.0
  %9402 = vmatpush1.msra.mxu0 0.0
  %9403 = vmatprep.subr.mxu0 0.0
  %9404 = vmatpush1.msra.mxu0 0.0
  %9405 = vmatprep.subr.mxu0 0.0
  %9406 = vmatpush1.msra.mxu0 0.0
  %9407 = vmatprep.subr.mxu0 0.0
  %9408 = vmatpush1.msra.mxu0 0.0
  %9409 = vmatprep.subr.mxu0 0.0
  %9410 = vmatpush1.msra.mxu0 0.0
  %9411 = vmatprep.subr.mxu0 0.0
  %9412 = vmatpush1.msra.mxu0 0.0
  %9413 = vmatprep.subr.mxu0 0.0
  %9414 = vmatpush1.msra.mxu0 0.0
  %9415 = vmatprep.subr.mxu0 0.0
  %9416 = vmatpush1.msra.mxu0 0.0
  %9417 = vmatprep.subr.mxu0 0.0
  %9418 = vmatpush1.msra.mxu0 0.0
  %9419 = vmatprep.subr.mxu0 0.0
  %9420 = vmatpush1.msra.mxu0 0.0
  %9421 = vmatprep.subr.mxu0 0.0
  %9422 = vmatpush1.msra.mxu0 0.0
  %9423 = vmatprep.subr.mxu0 0.0
  %9424 = vmatpush1.msra.mxu0 0.0
  %9425 = vmatprep.subr.mxu0 0.0
  %9426 = vmatpush1.msra.mxu0 0.0
  %9427 = vmatprep.subr.mxu0 0.0
  %9428 = vmatpush1.msra.mxu0 0.0
  %9429 = vmatprep.subr.mxu0 0.0
  %9430 = vmatpush1.msra.mxu0 0.0
  %9431 = vmatprep.subr.mxu0 0.0
  %9432 = vmatpush1.msra.mxu0 0.0
  %9433 = vmatprep.subr.mxu0 0.0
  %9434 = vmatpush1.msra.mxu0 0.0
  %9435 = vmatprep.subr.mxu0 0.0
  %9436 = vmatpush1.msra.mxu0 0.0
  %9437 = vmatprep.subr.mxu0 0.0
  %9438 = vmatpush1.msra.mxu0 0.0
  %9439 = vmatprep.mubr.f32.mxu0 0.0
  %v9440 = vand.u32 %v9070, 4294901760
  %9441 = vmatmul.mubr.f32.gmra.mrb[0].mxu0 %v9440
  %v9442 = vpop.f32.mrb[0].mxu0
  %v9443 = vadd.f32 %v9369, %v9442
  %v9444 = vpop.f32.mrb[0].mxu0
  %9445 = vdwg.mxu0
  %9446 = vmatprep.subr.mxu0 0.0
  %v9447 = vand.u32 %v17, 4294901760
  %9448 = vmatpush1.msra.mxu0 %v9447
  %9449 = vmatprep.subr.mxu0 0.0
  %9450 = vmatpush1.msra.mxu0 0.0
  %9451 = vmatprep.subr.mxu0 0.0
  %9452 = vmatpush1.msra.mxu0 0.0
  %9453 = vmatprep.subr.mxu0 0.0
  %9454 = vmatpush1.msra.mxu0 0.0
  %9455 = vmatprep.subr.mxu0 0.0
  %9456 = vmatpush1.msra.mxu0 0.0
  %9457 = vmatprep.subr.mxu0 0.0
  %9458 = vmatpush1.msra.mxu0 0.0
  %9459 = vmatprep.subr.mxu0 0.0
  %9460 = vmatpush1.msra.mxu0 0.0
  %9461 = vmatprep.subr.mxu0 0.0
  %9462 = vmatpush1.msra.mxu0 0.0
  %9463 = vmatprep.subr.mxu0 0.0
  %9464 = vmatpush1.msra.mxu0 0.0
  %9465 = vmatprep.subr.mxu0 0.0
  %9466 = vmatpush1.msra.mxu0 0.0
  %9467 = vmatprep.subr.mxu0 0.0
  %9468 = vmatpush1.msra.mxu0 0.0
  %9469 = vmatprep.subr.mxu0 0.0
  %9470 = vmatpush1.msra.mxu0 0.0
  %9471 = vmatprep.subr.mxu0 0.0
  %9472 = vmatpush1.msra.mxu0 0.0
  %9473 = vmatprep.subr.mxu0 0.0
  %9474 = vmatpush1.msra.mxu0 0.0
  %9475 = vmatprep.subr.mxu0 0.0
  %9476 = vmatpush1.msra.mxu0 0.0
  %9477 = vmatprep.subr.mxu0 0.0
  %9478 = vmatpush1.msra.mxu0 0.0
  %9479 = vmatprep.subr.mxu0 0.0
  %9480 = vmatpush1.msra.mxu0 0.0
  %9481 = vmatprep.subr.mxu0 0.0
  %9482 = vmatpush1.msra.mxu0 0.0
  %9483 = vmatprep.subr.mxu0 0.0
  %9484 = vmatpush1.msra.mxu0 0.0
  %9485 = vmatprep.subr.mxu0 0.0
  %9486 = vmatpush1.msra.mxu0 0.0
  %9487 = vmatprep.subr.mxu0 0.0
  %9488 = vmatpush1.msra.mxu0 0.0
  %9489 = vmatprep.subr.mxu0 0.0
  %9490 = vmatpush1.msra.mxu0 0.0
  %9491 = vmatprep.subr.mxu0 0.0
  %9492 = vmatpush1.msra.mxu0 0.0
  %9493 = vmatprep.subr.mxu0 0.0
  %9494 = vmatpush1.msra.mxu0 0.0
  %9495 = vmatprep.subr.mxu0 0.0
  %9496 = vmatpush1.msra.mxu0 0.0
  %9497 = vmatprep.subr.mxu0 0.0
  %9498 = vmatpush1.msra.mxu0 0.0
  %9499 = vmatprep.subr.mxu0 0.0
  %9500 = vmatpush1.msra.mxu0 0.0
  %9501 = vmatprep.subr.mxu0 0.0
  %9502 = vmatpush1.msra.mxu0 0.0
  %9503 = vmatprep.subr.mxu0 0.0
  %9504 = vmatpush1.msra.mxu0 0.0
  %9505 = vmatprep.subr.mxu0 0.0
  %9506 = vmatpush1.msra.mxu0 0.0
  %9507 = vmatprep.subr.mxu0 0.0
  %9508 = vmatpush1.msra.mxu0 0.0
  %9509 = vmatprep.subr.mxu0 0.0
  %9510 = vmatpush1.msra.mxu0 0.0
  %9511 = vmatprep.mubr.f32.mxu0 0.0
  %v9512 = vand.u32 %v9070, 4294901760
  %9513 = vmatmul.mubr.f32.gmra.mrb[0].mxu0 %v9512
  %v9514 = vpop.f32.mrb[0].mxu0
  %v9515 = vadd.f32 %v9443, %v9514
  %v9516 = vpop.f32.mrb[0].mxu0
  %9517 = vdwg.mxu0
  %v9518 = vmul.f32 %v9515, 0.1
  %v9519 = vadd.f32 %v11, %v9518
  %9521 = vrot.lane.b32.xlu0 %v9519, 40
  %v9522 = vpop.permute.xlu0 %9521
  %vm9524 = vcmask 385344
  %9525 = vst.msk [vmem:[%s2] sm:$0x1] %vm9524, %v9522
  %9527 = vrot.lane.b32.xlu0 %v9061, 120
  %v9528 = vpop.permute.xlu0 %9527
  %v9530 = vsel %vm1795, %v9519, 0
  %9532 = vmatprep.subr.mxu0 0.0
  %v9533 = vand.u32 %v17, 4294901760
  %9534 = vmatpush1.msra.mxu0 %v9533
  %9535 = vmatprep.subr.mxu0 0.0
  %9536 = vmatpush1.msra.mxu0 0.0
  %9537 = vmatprep.subr.mxu0 0.0
  %9538 = vmatpush1.msra.mxu0 0.0
  %9539 = vmatprep.subr.mxu0 0.0
  %9540 = vmatpush1.msra.mxu0 0.0
  %9541 = vmatprep.subr.mxu0 0.0
  %9542 = vmatpush1.msra.mxu0 0.0
  %9543 = vmatprep.subr.mxu0 0.0
  %9544 = vmatpush1.msra.mxu0 0.0
  %9545 = vmatprep.subr.mxu0 0.0
  %9546 = vmatpush1.msra.mxu0 0.0
  %9547 = vmatprep.subr.mxu0 0.0
  %9548 = vmatpush1.msra.mxu0 0.0
  %9549 = vmatprep.subr.mxu0 0.0
  %9550 = vmatpush1.msra.mxu0 0.0
  %9551 = vmatprep.subr.mxu0 0.0
  %9552 = vmatpush1.msra.mxu0 0.0
  %9553 = vmatprep.subr.mxu0 0.0
  %9554 = vmatpush1.msra.mxu0 0.0
  %9555 = vmatprep.subr.mxu0 0.0
  %9556 = vmatpush1.msra.mxu0 0.0
  %9557 = vmatprep.subr.mxu0 0.0
  %9558 = vmatpush1.msra.mxu0 0.0
  %9559 = vmatprep.subr.mxu0 0.0
  %9560 = vmatpush1.msra.mxu0 0.0
  %9561 = vmatprep.subr.mxu0 0.0
  %9562 = vmatpush1.msra.mxu0 0.0
  %9563 = vmatprep.subr.mxu0 0.0
  %9564 = vmatpush1.msra.mxu0 0.0
  %9565 = vmatprep.subr.mxu0 0.0
  %9566 = vmatpush1.msra.mxu0 0.0
  %9567 = vmatprep.subr.mxu0 0.0
  %9568 = vmatpush1.msra.mxu0 0.0
  %9569 = vmatprep.subr.mxu0 0.0
  %9570 = vmatpush1.msra.mxu0 0.0
  %9571 = vmatprep.subr.mxu0 0.0
  %9572 = vmatpush1.msra.mxu0 0.0
  %9573 = vmatprep.subr.mxu0 0.0
  %9574 = vmatpush1.msra.mxu0 0.0
  %9575 = vmatprep.subr.mxu0 0.0
  %9576 = vmatpush1.msra.mxu0 0.0
  %9577 = vmatprep.subr.mxu0 0.0
  %9578 = vmatpush1.msra.mxu0 0.0
  %9579 = vmatprep.subr.mxu0 0.0
  %9580 = vmatpush1.msra.mxu0 0.0
  %9581 = vmatprep.subr.mxu0 0.0
  %9582 = vmatpush1.msra.mxu0 0.0
  %9583 = vmatprep.subr.mxu0 0.0
  %9584 = vmatpush1.msra.mxu0 0.0
  %9585 = vmatprep.subr.mxu0 0.0
  %9586 = vmatpush1.msra.mxu0 0.0
  %9587 = vmatprep.subr.mxu0 0.0
  %9588 = vmatpush1.msra.mxu0 0.0
  %9589 = vmatprep.subr.mxu0 0.0
  %9590 = vmatpush1.msra.mxu0 0.0
  %9591 = vmatprep.subr.mxu0 0.0
  %9592 = vmatpush1.msra.mxu0 0.0
  %9593 = vmatprep.subr.mxu0 0.0
  %9594 = vmatpush1.msra.mxu0 0.0
  %9595 = vmatprep.subr.mxu0 0.0
  %9596 = vmatpush1.msra.mxu0 0.0
  %9597 = vmatprep.mubr.f32.mxu0 0.0
  %v9598 = vand.u32 %v9530, 4294901760
  %v9599 = vsub.f32 %v9530, %v9598
  %v9600 = vand.u32 %v9599, 4294901760
  %v9601 = vsub.f32 %v9599, %v9600
  %v9602 = vand.u32 %v9601, 4294901760
  %9603 = vmatmul.mubr.f32.gmra.mrb[0].mxu0 %v9602
  %v9604 = vpop.f32.mrb[0].mxu0
  %v9605 = vadd.f32 %v9528, %v9604
  %v9606 = vpop.f32.mrb[0].mxu0
  %9607 = vdwg.mxu0
  %9608 = vmatprep.subr.mxu0 0.0
  %v9609 = vand.u32 %v17, 4294901760
  %v9610 = vsub.f32 %v17, %v9609
  %v9611 = vand.u32 %v9610, 4294901760
  %v9612 = vsub.f32 %v9610, %v9611
  %v9613 = vand.u32 %v9612, 4294901760
  %9614 = vmatpush1.msra.mxu0 %v9613
  %9615 = vmatprep.subr.mxu0 0.0
  %9616 = vmatpush1.msra.mxu0 0.0
  %9617 = vmatprep.subr.mxu0 0.0
  %9618 = vmatpush1.msra.mxu0 0.0
  %9619 = vmatprep.subr.mxu0 0.0
  %9620 = vmatpush1.msra.mxu0 0.0
  %9621 = vmatprep.subr.mxu0 0.0
  %9622 = vmatpush1.msra.mxu0 0.0
  %9623 = vmatprep.subr.mxu0 0.0
  %9624 = vmatpush1.msra.mxu0 0.0
  %9625 = vmatprep.subr.mxu0 0.0
  %9626 = vmatpush1.msra.mxu0 0.0
  %9627 = vmatprep.subr.mxu0 0.0
  %9628 = vmatpush1.msra.mxu0 0.0
  %9629 = vmatprep.subr.mxu0 0.0
  %9630 = vmatpush1.msra.mxu0 0.0
  %9631 = vmatprep.subr.mxu0 0.0
  %9632 = vmatpush1.msra.mxu0 0.0
  %9633 = vmatprep.subr.mxu0 0.0
  %9634 = vmatpush1.msra.mxu0 0.0
  %9635 = vmatprep.subr.mxu0 0.0
  %9636 = vmatpush1.msra.mxu0 0.0
  %9637 = vmatprep.subr.mxu0 0.0
  %9638 = vmatpush1.msra.mxu0 0.0
  %9639 = vmatprep.subr.mxu0 0.0
  %9640 = vmatpush1.msra.mxu0 0.0
  %9641 = vmatprep.subr.mxu0 0.0
  %9642 = vmatpush1.msra.mxu0 0.0
  %9643 = vmatprep.subr.mxu0 0.0
  %9644 = vmatpush1.msra.mxu0 0.0
  %9645 = vmatprep.subr.mxu0 0.0
  %9646 = vmatpush1.msra.mxu0 0.0
  %9647 = vmatprep.subr.mxu0 0.0
  %9648 = vmatpush1.msra.mxu0 0.0
  %9649 = vmatprep.subr.mxu0 0.0
  %9650 = vmatpush1.msra.mxu0 0.0
  %9651 = vmatprep.subr.mxu0 0.0
  %9652 = vmatpush1.msra.mxu0 0.0
  %9653 = vmatprep.subr.mxu0 0.0
  %9654 = vmatpush1.msra.mxu0 0.0
  %9655 = vmatprep.subr.mxu0 0.0
  %9656 = vmatpush1.msra.mxu0 0.0
  %9657 = vmatprep.subr.mxu0 0.0
  %9658 = vmatpush1.msra.mxu0 0.0
  %9659 = vmatprep.subr.mxu0 0.0
  %9660 = vmatpush1.msra.mxu0 0.0
  %9661 = vmatprep.subr.mxu0 0.0
  %9662 = vmatpush1.msra.mxu0 0.0
  %9663 = vmatprep.subr.mxu0 0.0
  %9664 = vmatpush1.msra.mxu0 0.0
  %9665 = vmatprep.subr.mxu0 0.0
  %9666 = vmatpush1.msra.mxu0 0.0
  %9667 = vmatprep.subr.mxu0 0.0
  %9668 = vmatpush1.msra.mxu0 0.0
  %9669 = vmatprep.subr.mxu0 0.0
  %9670 = vmatpush1.msra.mxu0 0.0
  %9671 = vmatprep.subr.mxu0 0.0
  %9672 = vmatpush1.msra.mxu0 0.0
  %9673 = vmatprep.subr.mxu0 0.0
  %9674 = vmatpush1.msra.mxu0 0.0
  %9675 = vmatprep.subr.mxu0 0.0
  %9676 = vmatpush1.msra.mxu0 0.0
  %9677 = vmatprep.mubr.f32.mxu0 0.0
  %v9678 = vand.u32 %v9530, 4294901760
  %9679 = vmatmul.mubr.f32.gmra.mrb[0].mxu0 %v9678
  %v9680 = vpop.f32.mrb[0].mxu0
  %v9681 = vadd.f32 %v9605, %v9680
  %v9682 = vpop.f32.mrb[0].mxu0
  %9683 = vdwg.mxu0
  %9684 = vmatprep.subr.mxu0 0.0
  %v9685 = vand.u32 %v17, 4294901760
  %v9686 = vsub.f32 %v17, %v9685
  %9687 = vmatpush1.msra.mxu0 %v9686
  %9688 = vmatprep.subr.mxu0 0.0
  %9689 = vmatpush1.msra.mxu0 0.0
  %9690 = vmatprep.subr.mxu0 0.0
  %9691 = vmatpush1.msra.mxu0 0.0
  %9692 = vmatprep.subr.mxu0 0.0
  %9693 = vmatpush1.msra.mxu0 0.0
  %9694 = vmatprep.subr.mxu0 0.0
  %9695 = vmatpush1.msra.mxu0 0.0
  %9696 = vmatprep.subr.mxu0 0.0
  %9697 = vmatpush1.msra.mxu0 0.0
  %9698 = vmatprep.subr.mxu0 0.0
  %9699 = vmatpush1.msra.mxu0 0.0
  %9700 = vmatprep.subr.mxu0 0.0
  %9701 = vmatpush1.msra.mxu0 0.0
  %9702 = vmatprep.subr.mxu0 0.0
  %9703 = vmatpush1.msra.mxu0 0.0
  %9704 = vmatprep.subr.mxu0 0.0
  %9705 = vmatpush1.msra.mxu0 0.0
  %9706 = vmatprep.subr.mxu0 0.0
  %9707 = vmatpush1.msra.mxu0 0.0
  %9708 = vmatprep.subr.mxu0 0.0
  %9709 = vmatpush1.msra.mxu0 0.0
  %9710 = vmatprep.subr.mxu0 0.0
  %9711 = vmatpush1.msra.mxu0 0.0
  %9712 = vmatprep.subr.mxu0 0.0
  %9713 = vmatpush1.msra.mxu0 0.0
  %9714 = vmatprep.subr.mxu0 0.0
  %9715 = vmatpush1.msra.mxu0 0.0
  %9716 = vmatprep.subr.mxu0 0.0
  %9717 = vmatpush1.msra.mxu0 0.0
  %9718 = vmatprep.subr.mxu0 0.0
  %9719 = vmatpush1.msra.mxu0 0.0
  %9720 = vmatprep.subr.mxu0 0.0
  %9721 = vmatpush1.msra.mxu0 0.0
  %9722 = vmatprep.subr.mxu0 0.0
  %9723 = vmatpush1.msra.mxu0 0.0
  %9724 = vmatprep.subr.mxu0 0.0
  %9725 = vmatpush1.msra.mxu0 0.0
  %9726 = vmatprep.subr.mxu0 0.0
  %9727 = vmatpush1.msra.mxu0 0.0
  %9728 = vmatprep.subr.mxu0 0.0
  %9729 = vmatpush1.msra.mxu0 0.0
  %9730 = vmatprep.subr.mxu0 0.0
  %9731 = vmatpush1.msra.mxu0 0.0
  %9732 = vmatprep.subr.mxu0 0.0
  %9733 = vmatpush1.msra.mxu0 0.0
  %9734 = vmatprep.subr.mxu0 0.0
  %9735 = vmatpush1.msra.mxu0 0.0
  %9736 = vmatprep.subr.mxu0 0.0
  %9737 = vmatpush1.msra.mxu0 0.0
  %9738 = vmatprep.subr.mxu0 0.0
  %9739 = vmatpush1.msra.mxu0 0.0
  %9740 = vmatprep.subr.mxu0 0.0
  %9741 = vmatpush1.msra.mxu0 0.0
  %9742 = vmatprep.subr.mxu0 0.0
  %9743 = vmatpush1.msra.mxu0 0.0
  %9744 = vmatprep.subr.mxu0 0.0
  %9745 = vmatpush1.msra.mxu0 0.0
  %9746 = vmatprep.subr.mxu0 0.0
  %9747 = vmatpush1.msra.mxu0 0.0
  %9748 = vmatprep.subr.mxu0 0.0
  %9749 = vmatpush1.msra.mxu0 0.0
  %9750 = vmatprep.mubr.f32.mxu0 0.0
  %v9751 = vand.u32 %v9530, 4294901760
  %v9752 = vsub.f32 %v9530, %v9751
  %9753 = vmatmul.mubr.f32.gmra.mrb[0].mxu0 %v9752
  %v9754 = vpop.f32.mrb[0].mxu0
  %v9755 = vadd.f32 %v9681, %v9754
  %v9756 = vpop.f32.mrb[0].mxu0
  %9757 = vdwg.mxu0
  %9758 = vmatprep.subr.mxu0 0.0
  %v9759 = vand.u32 %v17, 4294901760
  %9760 = vmatpush1.msra.mxu0 %v9759
  %9761 = vmatprep.subr.mxu0 0.0
  %9762 = vmatpush1.msra.mxu0 0.0
  %9763 = vmatprep.subr.mxu0 0.0
  %9764 = vmatpush1.msra.mxu0 0.0
  %9765 = vmatprep.subr.mxu0 0.0
  %9766 = vmatpush1.msra.mxu0 0.0
  %9767 = vmatprep.subr.mxu0 0.0
  %9768 = vmatpush1.msra.mxu0 0.0
  %9769 = vmatprep.subr.mxu0 0.0
  %9770 = vmatpush1.msra.mxu0 0.0
  %9771 = vmatprep.subr.mxu0 0.0
  %9772 = vmatpush1.msra.mxu0 0.0
  %9773 = vmatprep.subr.mxu0 0.0
  %9774 = vmatpush1.msra.mxu0 0.0
  %9775 = vmatprep.subr.mxu0 0.0
  %9776 = vmatpush1.msra.mxu0 0.0
  %9777 = vmatprep.subr.mxu0 0.0
  %9778 = vmatpush1.msra.mxu0 0.0
  %9779 = vmatprep.subr.mxu0 0.0
  %9780 = vmatpush1.msra.mxu0 0.0
  %9781 = vmatprep.subr.mxu0 0.0
  %9782 = vmatpush1.msra.mxu0 0.0
  %9783 = vmatprep.subr.mxu0 0.0
  %9784 = vmatpush1.msra.mxu0 0.0
  %9785 = vmatprep.subr.mxu0 0.0
  %9786 = vmatpush1.msra.mxu0 0.0
  %9787 = vmatprep.subr.mxu0 0.0
  %9788 = vmatpush1.msra.mxu0 0.0
  %9789 = vmatprep.subr.mxu0 0.0
  %9790 = vmatpush1.msra.mxu0 0.0
  %9791 = vmatprep.subr.mxu0 0.0
  %9792 = vmatpush1.msra.mxu0 0.0
  %9793 = vmatprep.subr.mxu0 0.0
  %9794 = vmatpush1.msra.mxu0 0.0
  %9795 = vmatprep.subr.mxu0 0.0
  %9796 = vmatpush1.msra.mxu0 0.0
  %9797 = vmatprep.subr.mxu0 0.0
  %9798 = vmatpush1.msra.mxu0 0.0
  %9799 = vmatprep.subr.mxu0 0.0
  %9800 = vmatpush1.msra.mxu0 0.0
  %9801 = vmatprep.subr.mxu0 0.0
  %9802 = vmatpush1.msra.mxu0 0.0
  %9803 = vmatprep.subr.mxu0 0.0
  %9804 = vmatpush1.msra.mxu0 0.0
  %9805 = vmatprep.subr.mxu0 0.0
  %9806 = vmatpush1.msra.mxu0 0.0
  %9807 = vmatprep.subr.mxu0 0.0
  %9808 = vmatpush1.msra.mxu0 0.0
  %9809 = vmatprep.subr.mxu0 0.0
  %9810 = vmatpush1.msra.mxu0 0.0
  %9811 = vmatprep.subr.mxu0 0.0
  %9812 = vmatpush1.msra.mxu0 0.0
  %9813 = vmatprep.subr.mxu0 0.0
  %9814 = vmatpush1.msra.mxu0 0.0
  %9815 = vmatprep.subr.mxu0 0.0
  %9816 = vmatpush1.msra.mxu0 0.0
  %9817 = vmatprep.subr.mxu0 0.0
  %9818 = vmatpush1.msra.mxu0 0.0
  %9819 = vmatprep.subr.mxu0 0.0
  %9820 = vmatpush1.msra.mxu0 0.0
  %9821 = vmatprep.subr.mxu0 0.0
  %9822 = vmatpush1.msra.mxu0 0.0
  %9823 = vmatprep.mubr.f32.mxu0 0.0
  %v9824 = vand.u32 %v9530, 4294901760
  %v9825 = vsub.f32 %v9530, %v9824
  %v9826 = vand.u32 %v9825, 4294901760
  %9827 = vmatmul.mubr.f32.gmra.mrb[0].mxu0 %v9826
  %v9828 = vpop.f32.mrb[0].mxu0
  %v9829 = vadd.f32 %v9755, %v9828
  %v9830 = vpop.f32.mrb[0].mxu0
  %9831 = vdwg.mxu0
  %9832 = vmatprep.subr.mxu0 0.0
  %v9833 = vand.u32 %v17, 4294901760
  %v9834 = vsub.f32 %v17, %v9833
  %v9835 = vand.u32 %v9834, 4294901760
  %9836 = vmatpush1.msra.mxu0 %v9835
  %9837 = vmatprep.subr.mxu0 0.0
  %9838 = vmatpush1.msra.mxu0 0.0
  %9839 = vmatprep.subr.mxu0 0.0
  %9840 = vmatpush1.msra.mxu0 0.0
  %9841 = vmatprep.subr.mxu0 0.0
  %9842 = vmatpush1.msra.mxu0 0.0
  %9843 = vmatprep.subr.mxu0 0.0
  %9844 = vmatpush1.msra.mxu0 0.0
  %9845 = vmatprep.subr.mxu0 0.0
  %9846 = vmatpush1.msra.mxu0 0.0
  %9847 = vmatprep.subr.mxu0 0.0
  %9848 = vmatpush1.msra.mxu0 0.0
  %9849 = vmatprep.subr.mxu0 0.0
  %9850 = vmatpush1.msra.mxu0 0.0
  %9851 = vmatprep.subr.mxu0 0.0
  %9852 = vmatpush1.msra.mxu0 0.0
  %9853 = vmatprep.subr.mxu0 0.0
  %9854 = vmatpush1.msra.mxu0 0.0
  %9855 = vmatprep.subr.mxu0 0.0
  %9856 = vmatpush1.msra.mxu0 0.0
  %9857 = vmatprep.subr.mxu0 0.0
  %9858 = vmatpush1.msra.mxu0 0.0
  %9859 = vmatprep.subr.mxu0 0.0
  %9860 = vmatpush1.msra.mxu0 0.0
  %9861 = vmatprep.subr.mxu0 0.0
  %9862 = vmatpush1.msra.mxu0 0.0
  %9863 = vmatprep.subr.mxu0 0.0
  %9864 = vmatpush1.msra.mxu0 0.0
  %9865 = vmatprep.subr.mxu0 0.0
  %9866 = vmatpush1.msra.mxu0 0.0
  %9867 = vmatprep.subr.mxu0 0.0
  %9868 = vmatpush1.msra.mxu0 0.0
  %9869 = vmatprep.subr.mxu0 0.0
  %9870 = vmatpush1.msra.mxu0 0.0
  %9871 = vmatprep.subr.mxu0 0.0
  %9872 = vmatpush1.msra.mxu0 0.0
  %9873 = vmatprep.subr.mxu0 0.0
  %9874 = vmatpush1.msra.mxu0 0.0
  %9875 = vmatprep.subr.mxu0 0.0
  %9876 = vmatpush1.msra.mxu0 0.0
  %9877 = vmatprep.subr.mxu0 0.0
  %9878 = vmatpush1.msra.mxu0 0.0
  %9879 = vmatprep.subr.mxu0 0.0
  %9880 = vmatpush1.msra.mxu0 0.0
  %9881 = vmatprep.subr.mxu0 0.0
  %9882 = vmatpush1.msra.mxu0 0.0
  %9883 = vmatprep.subr.mxu0 0.0
  %9884 = vmatpush1.msra.mxu0 0.0
  %9885 = vmatprep.subr.mxu0 0.0
  %9886 = vmatpush1.msra.mxu0 0.0
  %9887 = vmatprep.subr.mxu0 0.0
  %9888 = vmatpush1.msra.mxu0 0.0
  %9889 = vmatprep.subr.mxu0 0.0
  %9890 = vmatpush1.msra.mxu0 0.0
  %9891 = vmatprep.subr.mxu0 0.0
  %9892 = vmatpush1.msra.mxu0 0.0
  %9893 = vmatprep.subr.mxu0 0.0
  %9894 = vmatpush1.msra.mxu0 0.0
  %9895 = vmatprep.subr.mxu0 0.0
  %9896 = vmatpush1.msra.mxu0 0.0
  %9897 = vmatprep.subr.mxu0 0.0
  %9898 = vmatpush1.msra.mxu0 0.0
  %9899 = vmatprep.mubr.f32.mxu0 0.0
  %v9900 = vand.u32 %v9530, 4294901760
  %9901 = vmatmul.mubr.f32.gmra.mrb[0].mxu0 %v9900
  %v9902 = vpop.f32.mrb[0].mxu0
  %v9903 = vadd.f32 %v9829, %v9902
  %v9904 = vpop.f32.mrb[0].mxu0
  %9905 = vdwg.mxu0
  %9906 = vmatprep.subr.mxu0 0.0
  %v9907 = vand.u32 %v17, 4294901760
  %9908 = vmatpush1.msra.mxu0 %v9907
  %9909 = vmatprep.subr.mxu0 0.0
  %9910 = vmatpush1.msra.mxu0 0.0
  %9911 = vmatprep.subr.mxu0 0.0
  %9912 = vmatpush1.msra.mxu0 0.0
  %9913 = vmatprep.subr.mxu0 0.0
  %9914 = vmatpush1.msra.mxu0 0.0
  %9915 = vmatprep.subr.mxu0 0.0
  %9916 = vmatpush1.msra.mxu0 0.0
  %9917 = vmatprep.subr.mxu0 0.0
  %9918 = vmatpush1.msra.mxu0 0.0
  %9919 = vmatprep.subr.mxu0 0.0
  %9920 = vmatpush1.msra.mxu0 0.0
  %9921 = vmatprep.subr.mxu0 0.0
  %9922 = vmatpush1.msra.mxu0 0.0
  %9923 = vmatprep.subr.mxu0 0.0
  %9924 = vmatpush1.msra.mxu0 0.0
  %9925 = vmatprep.subr.mxu0 0.0
  %9926 = vmatpush1.msra.mxu0 0.0
  %9927 = vmatprep.subr.mxu0 0.0
  %9928 = vmatpush1.msra.mxu0 0.0
  %9929 = vmatprep.subr.mxu0 0.0
  %9930 = vmatpush1.msra.mxu0 0.0
  %9931 = vmatprep.subr.mxu0 0.0
  %9932 = vmatpush1.msra.mxu0 0.0
  %9933 = vmatprep.subr.mxu0 0.0
  %9934 = vmatpush1.msra.mxu0 0.0
  %9935 = vmatprep.subr.mxu0 0.0
  %9936 = vmatpush1.msra.mxu0 0.0
  %9937 = vmatprep.subr.mxu0 0.0
  %9938 = vmatpush1.msra.mxu0 0.0
  %9939 = vmatprep.subr.mxu0 0.0
  %9940 = vmatpush1.msra.mxu0 0.0
  %9941 = vmatprep.subr.mxu0 0.0
  %9942 = vmatpush1.msra.mxu0 0.0
  %9943 = vmatprep.subr.mxu0 0.0
  %9944 = vmatpush1.msra.mxu0 0.0
  %9945 = vmatprep.subr.mxu0 0.0
  %9946 = vmatpush1.msra.mxu0 0.0
  %9947 = vmatprep.subr.mxu0 0.0
  %9948 = vmatpush1.msra.mxu0 0.0
  %9949 = vmatprep.subr.mxu0 0.0
  %9950 = vmatpush1.msra.mxu0 0.0
  %9951 = vmatprep.subr.mxu0 0.0
  %9952 = vmatpush1.msra.mxu0 0.0
  %9953 = vmatprep.subr.mxu0 0.0
  %9954 = vmatpush1.msra.mxu0 0.0
  %9955 = vmatprep.subr.mxu0 0.0
  %9956 = vmatpush1.msra.mxu0 0.0
  %9957 = vmatprep.subr.mxu0 0.0
  %9958 = vmatpush1.msra.mxu0 0.0
  %9959 = vmatprep.subr.mxu0 0.0
  %9960 = vmatpush1.msra.mxu0 0.0
  %9961 = vmatprep.subr.mxu0 0.0
  %9962 = vmatpush1.msra.mxu0 0.0
  %9963 = vmatprep.subr.mxu0 0.0
  %9964 = vmatpush1.msra.mxu0 0.0
  %9965 = vmatprep.subr.mxu0 0.0
  %9966 = vmatpush1.msra.mxu0 0.0
  %9967 = vmatprep.subr.mxu0 0.0
  %9968 = vmatpush1.msra.mxu0 0.0
  %9969 = vmatprep.subr.mxu0 0.0
  %9970 = vmatpush1.msra.mxu0 0.0
  %9971 = vmatprep.mubr.f32.mxu0 0.0
  %v9972 = vand.u32 %v9530, 4294901760
  %9973 = vmatmul.mubr.f32.gmra.mrb[0].mxu0 %v9972
  %v9974 = vpop.f32.mrb[0].mxu0
  %v9975 = vadd.f32 %v9903, %v9974
  %v9976 = vpop.f32.mrb[0].mxu0
  %9977 = vdwg.mxu0
  %v9978 = vmul.f32 %v9975, 0.1
  %v9979 = vadd.f32 %v9519, %v9978
  %9981 = vrot.lane.b32.xlu0 %v9979, 48
  %v9982 = vpop.permute.xlu0 %9981
  %vm9984 = vcmask 450944
  %9985 = vst.msk [vmem:[%s2] sm:$0x1] %vm9984, %v9982
  %9986 = vrot.lane.b32.xlu0 %v9061, 112
  %v9987 = vpop.permute.xlu0 %9986
  %v9989 = vsel %vm1795, %v9979, 0
  %9991 = vmatprep.subr.mxu0 0.0
  %v9992 = vand.u32 %v17, 4294901760
  %9993 = vmatpush1.msra.mxu0 %v9992
  %9994 = vmatprep.subr.mxu0 0.0
  %9995 = vmatpush1.msra.mxu0 0.0
  %9996 = vmatprep.subr.mxu0 0.0
  %9997 = vmatpush1.msra.mxu0 0.0
  %9998 = vmatprep.subr.mxu0 0.0
  %9999 = vmatpush1.msra.mxu0 0.0
  %10000 = vmatprep.subr.mxu0 0.0
  %10001 = vmatpush1.msra.mxu0 0.0
  %10002 = vmatprep.subr.mxu0 0.0
  %10003 = vmatpush1.msra.mxu0 0.0
  %10004 = vmatprep.subr.mxu0 0.0
  %10005 = vmatpush1.msra.mxu0 0.0
  %10006 = vmatprep.subr.mxu0 0.0
  %10007 = vmatpush1.msra.mxu0 0.0
  %10008 = vmatprep.subr.mxu0 0.0
  %10009 = vmatpush1.msra.mxu0 0.0
  %10010 = vmatprep.subr.mxu0 0.0
  %10011 = vmatpush1.msra.mxu0 0.0
  %10012 = vmatprep.subr.mxu0 0.0
  %10013 = vmatpush1.msra.mxu0 0.0
  %10014 = vmatprep.subr.mxu0 0.0
  %10015 = vmatpush1.msra.mxu0 0.0
  %10016 = vmatprep.subr.mxu0 0.0
  %10017 = vmatpush1.msra.mxu0 0.0
  %10018 = vmatprep.subr.mxu0 0.0
  %10019 = vmatpush1.msra.mxu0 0.0
  %10020 = vmatprep.subr.mxu0 0.0
  %10021 = vmatpush1.msra.mxu0 0.0
  %10022 = vmatprep.subr.mxu0 0.0
  %10023 = vmatpush1.msra.mxu0 0.0
  %10024 = vmatprep.subr.mxu0 0.0
  %10025 = vmatpush1.msra.mxu0 0.0
  %10026 = vmatprep.subr.mxu0 0.0
  %10027 = vmatpush1.msra.mxu0 0.0
  %10028 = vmatprep.subr.mxu0 0.0
  %10029 = vmatpush1.msra.mxu0 0.0
  %10030 = vmatprep.subr.mxu0 0.0
  %10031 = vmatpush1.msra.mxu0 0.0
  %10032 = vmatprep.subr.mxu0 0.0
  %10033 = vmatpush1.msra.mxu0 0.0
  %10034 = vmatprep.subr.mxu0 0.0
  %10035 = vmatpush1.msra.mxu0 0.0
  %10036 = vmatprep.subr.mxu0 0.0
  %10037 = vmatpush1.msra.mxu0 0.0
  %10038 = vmatprep.subr.mxu0 0.0
  %10039 = vmatpush1.msra.mxu0 0.0
  %10040 = vmatprep.subr.mxu0 0.0
  %10041 = vmatpush1.msra.mxu0 0.0
  %10042 = vmatprep.subr.mxu0 0.0
  %10043 = vmatpush1.msra.mxu0 0.0
  %10044 = vmatprep.subr.mxu0 0.0
  %10045 = vmatpush1.msra.mxu0 0.0
  %10046 = vmatprep.subr.mxu0 0.0
  %10047 = vmatpush1.msra.mxu0 0.0
  %10048 = vmatprep.subr.mxu0 0.0
  %10049 = vmatpush1.msra.mxu0 0.0
  %10050 = vmatprep.subr.mxu0 0.0
  %10051 = vmatpush1.msra.mxu0 0.0
  %10052 = vmatprep.subr.mxu0 0.0
  %10053 = vmatpush1.msra.mxu0 0.0
  %10054 = vmatprep.subr.mxu0 0.0
  %10055 = vmatpush1.msra.mxu0 0.0
  %10056 = vmatprep.mubr.f32.mxu0 0.0
  %v10057 = vand.u32 %v9989, 4294901760
  %v10058 = vsub.f32 %v9989, %v10057
  %v10059 = vand.u32 %v10058, 4294901760
  %v10060 = vsub.f32 %v10058, %v10059
  %v10061 = vand.u32 %v10060, 4294901760
  %10062 = vmatmul.mubr.f32.gmra.mrb[0].mxu0 %v10061
  %v10063 = vpop.f32.mrb[0].mxu0
  %v10064 = vadd.f32 %v9987, %v10063
  %v10065 = vpop.f32.mrb[0].mxu0
  %10066 = vdwg.mxu0
  %10067 = vmatprep.subr.mxu0 0.0
  %v10068 = vand.u32 %v17, 4294901760
  %v10069 = vsub.f32 %v17, %v10068
  %v10070 = vand.u32 %v10069, 4294901760
  %v10071 = vsub.f32 %v10069, %v10070
  %v10072 = vand.u32 %v10071, 4294901760
  %10073 = vmatpush1.msra.mxu0 %v10072
  %10074 = vmatprep.subr.mxu0 0.0
  %10075 = vmatpush1.msra.mxu0 0.0
  %10076 = vmatprep.subr.mxu0 0.0
  %10077 = vmatpush1.msra.mxu0 0.0
  %10078 = vmatprep.subr.mxu0 0.0
  %10079 = vmatpush1.msra.mxu0 0.0
  %10080 = vmatprep.subr.mxu0 0.0
  %10081 = vmatpush1.msra.mxu0 0.0
  %10082 = vmatprep.subr.mxu0 0.0
  %10083 = vmatpush1.msra.mxu0 0.0
  %10084 = vmatprep.subr.mxu0 0.0
  %10085 = vmatpush1.msra.mxu0 0.0
  %10086 = vmatprep.subr.mxu0 0.0
  %10087 = vmatpush1.msra.mxu0 0.0
  %10088 = vmatprep.subr.mxu0 0.0
  %10089 = vmatpush1.msra.mxu0 0.0
  %10090 = vmatprep.subr.mxu0 0.0
  %10091 = vmatpush1.msra.mxu0 0.0
  %10092 = vmatprep.subr.mxu0 0.0
  %10093 = vmatpush1.msra.mxu0 0.0
  %10094 = vmatprep.subr.mxu0 0.0
  %10095 = vmatpush1.msra.mxu0 0.0
  %10096 = vmatprep.subr.mxu0 0.0
  %10097 = vmatpush1.msra.mxu0 0.0
  %10098 = vmatprep.subr.mxu0 0.0
  %10099 = vmatpush1.msra.mxu0 0.0
  %10100 = vmatprep.subr.mxu0 0.0
  %10101 = vmatpush1.msra.mxu0 0.0
  %10102 = vmatprep.subr.mxu0 0.0
  %10103 = vmatpush1.msra.mxu0 0.0
  %10104 = vmatprep.subr.mxu0 0.0
  %10105 = vmatpush1.msra.mxu0 0.0
  %10106 = vmatprep.subr.mxu0 0.0
  %10107 = vmatpush1.msra.mxu0 0.0
  %10108 = vmatprep.subr.mxu0 0.0
  %10109 = vmatpush1.msra.mxu0 0.0
  %10110 = vmatprep.subr.mxu0 0.0
  %10111 = vmatpush1.msra.mxu0 0.0
  %10112 = vmatprep.subr.mxu0 0.0
  %10113 = vmatpush1.msra.mxu0 0.0
  %10114 = vmatprep.subr.mxu0 0.0
  %10115 = vmatpush1.msra.mxu0 0.0
  %10116 = vmatprep.subr.mxu0 0.0
  %10117 = vmatpush1.msra.mxu0 0.0
  %10118 = vmatprep.subr.mxu0 0.0
  %10119 = vmatpush1.msra.mxu0 0.0
  %10120 = vmatprep.subr.mxu0 0.0
  %10121 = vmatpush1.msra.mxu0 0.0
  %10122 = vmatprep.subr.mxu0 0.0
  %10123 = vmatpush1.msra.mxu0 0.0
  %10124 = vmatprep.subr.mxu0 0.0
  %10125 = vmatpush1.msra.mxu0 0.0
  %10126 = vmatprep.subr.mxu0 0.0
  %10127 = vmatpush1.msra.mxu0 0.0
  %10128 = vmatprep.subr.mxu0 0.0
  %10129 = vmatpush1.msra.mxu0 0.0
  %10130 = vmatprep.subr.mxu0 0.0
  %10131 = vmatpush1.msra.mxu0 0.0
  %10132 = vmatprep.subr.mxu0 0.0
  %10133 = vmatpush1.msra.mxu0 0.0
  %10134 = vmatprep.subr.mxu0 0.0
  %10135 = vmatpush1.msra.mxu0 0.0
  %10136 = vmatprep.mubr.f32.mxu0 0.0
  %v10137 = vand.u32 %v9989, 4294901760
  %10138 = vmatmul.mubr.f32.gmra.mrb[0].mxu0 %v10137
  %v10139 = vpop.f32.mrb[0].mxu0
  %v10140 = vadd.f32 %v10064, %v10139
  %v10141 = vpop.f32.mrb[0].mxu0
  %10142 = vdwg.mxu0
  %10143 = vmatprep.subr.mxu0 0.0
  %v10144 = vand.u32 %v17, 4294901760
  %v10145 = vsub.f32 %v17, %v10144
  %10146 = vmatpush1.msra.mxu0 %v10145
  %10147 = vmatprep.subr.mxu0 0.0
  %10148 = vmatpush1.msra.mxu0 0.0
  %10149 = vmatprep.subr.mxu0 0.0
  %10150 = vmatpush1.msra.mxu0 0.0
  %10151 = vmatprep.subr.mxu0 0.0
  %10152 = vmatpush1.msra.mxu0 0.0
  %10153 = vmatprep.subr.mxu0 0.0
  %10154 = vmatpush1.msra.mxu0 0.0
  %10155 = vmatprep.subr.mxu0 0.0
  %10156 = vmatpush1.msra.mxu0 0.0
  %10157 = vmatprep.subr.mxu0 0.0
  %10158 = vmatpush1.msra.mxu0 0.0
  %10159 = vmatprep.subr.mxu0 0.0
  %10160 = vmatpush1.msra.mxu0 0.0
  %10161 = vmatprep.subr.mxu0 0.0
  %10162 = vmatpush1.msra.mxu0 0.0
  %10163 = vmatprep.subr.mxu0 0.0
  %10164 = vmatpush1.msra.mxu0 0.0
  %10165 = vmatprep.subr.mxu0 0.0
  %10166 = vmatpush1.msra.mxu0 0.0
  %10167 = vmatprep.subr.mxu0 0.0
  %10168 = vmatpush1.msra.mxu0 0.0
  %10169 = vmatprep.subr.mxu0 0.0
  %10170 = vmatpush1.msra.mxu0 0.0
  %10171 = vmatprep.subr.mxu0 0.0
  %10172 = vmatpush1.msra.mxu0 0.0
  %10173 = vmatprep.subr.mxu0 0.0
  %10174 = vmatpush1.msra.mxu0 0.0
  %10175 = vmatprep.subr.mxu0 0.0
  %10176 = vmatpush1.msra.mxu0 0.0
  %10177 = vmatprep.subr.mxu0 0.0
  %10178 = vmatpush1.msra.mxu0 0.0
  %10179 = vmatprep.subr.mxu0 0.0
  %10180 = vmatpush1.msra.mxu0 0.0
  %10181 = vmatprep.subr.mxu0 0.0
  %10182 = vmatpush1.msra.mxu0 0.0
  %10183 = vmatprep.subr.mxu0 0.0
  %10184 = vmatpush1.msra.mxu0 0.0
  %10185 = vmatprep.subr.mxu0 0.0
  %10186 = vmatpush1.msra.mxu0 0.0
  %10187 = vmatprep.subr.mxu0 0.0
  %10188 = vmatpush1.msra.mxu0 0.0
  %10189 = vmatprep.subr.mxu0 0.0
  %10190 = vmatpush1.msra.mxu0 0.0
  %10191 = vmatprep.subr.mxu0 0.0
  %10192 = vmatpush1.msra.mxu0 0.0
  %10193 = vmatprep.subr.mxu0 0.0
  %10194 = vmatpush1.msra.mxu0 0.0
  %10195 = vmatprep.subr.mxu0 0.0
  %10196 = vmatpush1.msra.mxu0 0.0
  %10197 = vmatprep.subr.mxu0 0.0
  %10198 = vmatpush1.msra.mxu0 0.0
  %10199 = vmatprep.subr.mxu0 0.0
  %10200 = vmatpush1.msra.mxu0 0.0
  %10201 = vmatprep.subr.mxu0 0.0
  %10202 = vmatpush1.msra.mxu0 0.0
  %10203 = vmatprep.subr.mxu0 0.0
  %10204 = vmatpush1.msra.mxu0 0.0
  %10205 = vmatprep.subr.mxu0 0.0
  %10206 = vmatpush1.msra.mxu0 0.0
  %10207 = vmatprep.subr.mxu0 0.0
  %10208 = vmatpush1.msra.mxu0 0.0
  %10209 = vmatprep.mubr.f32.mxu0 0.0
  %v10210 = vand.u32 %v9989, 4294901760
  %v10211 = vsub.f32 %v9989, %v10210
  %10212 = vmatmul.mubr.f32.gmra.mrb[0].mxu0 %v10211
  %v10213 = vpop.f32.mrb[0].mxu0
  %v10214 = vadd.f32 %v10140, %v10213
  %v10215 = vpop.f32.mrb[0].mxu0
  %10216 = vdwg.mxu0
  %10217 = vmatprep.subr.mxu0 0.0
  %v10218 = vand.u32 %v17, 4294901760
  %10219 = vmatpush1.msra.mxu0 %v10218
  %10220 = vmatprep.subr.mxu0 0.0
  %10221 = vmatpush1.msra.mxu0 0.0
  %10222 = vmatprep.subr.mxu0 0.0
  %10223 = vmatpush1.msra.mxu0 0.0
  %10224 = vmatprep.subr.mxu0 0.0
  %10225 = vmatpush1.msra.mxu0 0.0
  %10226 = vmatprep.subr.mxu0 0.0
  %10227 = vmatpush1.msra.mxu0 0.0
  %10228 = vmatprep.subr.mxu0 0.0
  %10229 = vmatpush1.msra.mxu0 0.0
  %10230 = vmatprep.subr.mxu0 0.0
  %10231 = vmatpush1.msra.mxu0 0.0
  %10232 = vmatprep.subr.mxu0 0.0
  %10233 = vmatpush1.msra.mxu0 0.0
  %10234 = vmatprep.subr.mxu0 0.0
  %10235 = vmatpush1.msra.mxu0 0.0
  %10236 = vmatprep.subr.mxu0 0.0
  %10237 = vmatpush1.msra.mxu0 0.0
  %10238 = vmatprep.subr.mxu0 0.0
  %10239 = vmatpush1.msra.mxu0 0.0
  %10240 = vmatprep.subr.mxu0 0.0
  %10241 = vmatpush1.msra.mxu0 0.0
  %10242 = vmatprep.subr.mxu0 0.0
  %10243 = vmatpush1.msra.mxu0 0.0
  %10244 = vmatprep.subr.mxu0 0.0
  %10245 = vmatpush1.msra.mxu0 0.0
  %10246 = vmatprep.subr.mxu0 0.0
  %10247 = vmatpush1.msra.mxu0 0.0
  %10248 = vmatprep.subr.mxu0 0.0
  %10249 = vmatpush1.msra.mxu0 0.0
  %10250 = vmatprep.subr.mxu0 0.0
  %10251 = vmatpush1.msra.mxu0 0.0
  %10252 = vmatprep.subr.mxu0 0.0
  %10253 = vmatpush1.msra.mxu0 0.0
  %10254 = vmatprep.subr.mxu0 0.0
  %10255 = vmatpush1.msra.mxu0 0.0
  %10256 = vmatprep.subr.mxu0 0.0
  %10257 = vmatpush1.msra.mxu0 0.0
  %10258 = vmatprep.subr.mxu0 0.0
  %10259 = vmatpush1.msra.mxu0 0.0
  %10260 = vmatprep.subr.mxu0 0.0
  %10261 = vmatpush1.msra.mxu0 0.0
  %10262 = vmatprep.subr.mxu0 0.0
  %10263 = vmatpush1.msra.mxu0 0.0
  %10264 = vmatprep.subr.mxu0 0.0
  %10265 = vmatpush1.msra.mxu0 0.0
  %10266 = vmatprep.subr.mxu0 0.0
  %10267 = vmatpush1.msra.mxu0 0.0
  %10268 = vmatprep.subr.mxu0 0.0
  %10269 = vmatpush1.msra.mxu0 0.0
  %10270 = vmatprep.subr.mxu0 0.0
  %10271 = vmatpush1.msra.mxu0 0.0
  %10272 = vmatprep.subr.mxu0 0.0
  %10273 = vmatpush1.msra.mxu0 0.0
  %10274 = vmatprep.subr.mxu0 0.0
  %10275 = vmatpush1.msra.mxu0 0.0
  %10276 = vmatprep.subr.mxu0 0.0
  %10277 = vmatpush1.msra.mxu0 0.0
  %10278 = vmatprep.subr.mxu0 0.0
  %10279 = vmatpush1.msra.mxu0 0.0
  %10280 = vmatprep.subr.mxu0 0.0
  %10281 = vmatpush1.msra.mxu0 0.0
  %10282 = vmatprep.mubr.f32.mxu0 0.0
  %v10283 = vand.u32 %v9989, 4294901760
  %v10284 = vsub.f32 %v9989, %v10283
  %v10285 = vand.u32 %v10284, 4294901760
  %10286 = vmatmul.mubr.f32.gmra.mrb[0].mxu0 %v10285
  %v10287 = vpop.f32.mrb[0].mxu0
  %v10288 = vadd.f32 %v10214, %v10287
  %v10289 = vpop.f32.mrb[0].mxu0
  %10290 = vdwg.mxu0
  %10291 = vmatprep.subr.mxu0 0.0
  %v10292 = vand.u32 %v17, 4294901760
  %v10293 = vsub.f32 %v17, %v10292
  %v10294 = vand.u32 %v10293, 4294901760
  %10295 = vmatpush1.msra.mxu0 %v10294
  %10296 = vmatprep.subr.mxu0 0.0
  %10297 = vmatpush1.msra.mxu0 0.0
  %10298 = vmatprep.subr.mxu0 0.0
  %10299 = vmatpush1.msra.mxu0 0.0
  %10300 = vmatprep.subr.mxu0 0.0
  %10301 = vmatpush1.msra.mxu0 0.0
  %10302 = vmatprep.subr.mxu0 0.0
  %10303 = vmatpush1.msra.mxu0 0.0
  %10304 = vmatprep.subr.mxu0 0.0
  %10305 = vmatpush1.msra.mxu0 0.0
  %10306 = vmatprep.subr.mxu0 0.0
  %10307 = vmatpush1.msra.mxu0 0.0
  %10308 = vmatprep.subr.mxu0 0.0
  %10309 = vmatpush1.msra.mxu0 0.0
  %10310 = vmatprep.subr.mxu0 0.0
  %10311 = vmatpush1.msra.mxu0 0.0
  %10312 = vmatprep.subr.mxu0 0.0
  %10313 = vmatpush1.msra.mxu0 0.0
  %10314 = vmatprep.subr.mxu0 0.0
  %10315 = vmatpush1.msra.mxu0 0.0
  %10316 = vmatprep.subr.mxu0 0.0
  %10317 = vmatpush1.msra.mxu0 0.0
  %10318 = vmatprep.subr.mxu0 0.0
  %10319 = vmatpush1.msra.mxu0 0.0
  %10320 = vmatprep.subr.mxu0 0.0
  %10321 = vmatpush1.msra.mxu0 0.0
  %10322 = vmatprep.subr.mxu0 0.0
  %10323 = vmatpush1.msra.mxu0 0.0
  %10324 = vmatprep.subr.mxu0 0.0
  %10325 = vmatpush1.msra.mxu0 0.0
  %10326 = vmatprep.subr.mxu0 0.0
  %10327 = vmatpush1.msra.mxu0 0.0
  %10328 = vmatprep.subr.mxu0 0.0
  %10329 = vmatpush1.msra.mxu0 0.0
  %10330 = vmatprep.subr.mxu0 0.0
  %10331 = vmatpush1.msra.mxu0 0.0
  %10332 = vmatprep.subr.mxu0 0.0
  %10333 = vmatpush1.msra.mxu0 0.0
  %10334 = vmatprep.subr.mxu0 0.0
  %10335 = vmatpush1.msra.mxu0 0.0
  %10336 = vmatprep.subr.mxu0 0.0
  %10337 = vmatpush1.msra.mxu0 0.0
  %10338 = vmatprep.subr.mxu0 0.0
  %10339 = vmatpush1.msra.mxu0 0.0
  %10340 = vmatprep.subr.mxu0 0.0
  %10341 = vmatpush1.msra.mxu0 0.0
  %10342 = vmatprep.subr.mxu0 0.0
  %10343 = vmatpush1.msra.mxu0 0.0
  %10344 = vmatprep.subr.mxu0 0.0
  %10345 = vmatpush1.msra.mxu0 0.0
  %10346 = vmatprep.subr.mxu0 0.0
  %10347 = vmatpush1.msra.mxu0 0.0
  %10348 = vmatprep.subr.mxu0 0.0
  %10349 = vmatpush1.msra.mxu0 0.0
  %10350 = vmatprep.subr.mxu0 0.0
  %10351 = vmatpush1.msra.mxu0 0.0
  %10352 = vmatprep.subr.mxu0 0.0
  %10353 = vmatpush1.msra.mxu0 0.0
  %10354 = vmatprep.subr.mxu0 0.0
  %10355 = vmatpush1.msra.mxu0 0.0
  %10356 = vmatprep.subr.mxu0 0.0
  %10357 = vmatpush1.msra.mxu0 0.0
  %10358 = vmatprep.mubr.f32.mxu0 0.0
  %v10359 = vand.u32 %v9989, 4294901760
  %10360 = vmatmul.mubr.f32.gmra.mrb[0].mxu0 %v10359
  %v10361 = vpop.f32.mrb[0].mxu0
  %v10362 = vadd.f32 %v10288, %v10361
  %v10363 = vpop.f32.mrb[0].mxu0
  %10364 = vdwg.mxu0
  %10365 = vmatprep.subr.mxu0 0.0
  %v10366 = vand.u32 %v17, 4294901760
  %10367 = vmatpush1.msra.mxu0 %v10366
  %10368 = vmatprep.subr.mxu0 0.0
  %10369 = vmatpush1.msra.mxu0 0.0
  %10370 = vmatprep.subr.mxu0 0.0
  %10371 = vmatpush1.msra.mxu0 0.0
  %10372 = vmatprep.subr.mxu0 0.0
  %10373 = vmatpush1.msra.mxu0 0.0
  %10374 = vmatprep.subr.mxu0 0.0
  %10375 = vmatpush1.msra.mxu0 0.0
  %10376 = vmatprep.subr.mxu0 0.0
  %10377 = vmatpush1.msra.mxu0 0.0
  %10378 = vmatprep.subr.mxu0 0.0
  %10379 = vmatpush1.msra.mxu0 0.0
  %10380 = vmatprep.subr.mxu0 0.0
  %10381 = vmatpush1.msra.mxu0 0.0
  %10382 = vmatprep.subr.mxu0 0.0
  %10383 = vmatpush1.msra.mxu0 0.0
  %10384 = vmatprep.subr.mxu0 0.0
  %10385 = vmatpush1.msra.mxu0 0.0
  %10386 = vmatprep.subr.mxu0 0.0
  %10387 = vmatpush1.msra.mxu0 0.0
  %10388 = vmatprep.subr.mxu0 0.0
  %10389 = vmatpush1.msra.mxu0 0.0
  %10390 = vmatprep.subr.mxu0 0.0
  %10391 = vmatpush1.msra.mxu0 0.0
  %10392 = vmatprep.subr.mxu0 0.0
  %10393 = vmatpush1.msra.mxu0 0.0
  %10394 = vmatprep.subr.mxu0 0.0
  %10395 = vmatpush1.msra.mxu0 0.0
  %10396 = vmatprep.subr.mxu0 0.0
  %10397 = vmatpush1.msra.mxu0 0.0
  %10398 = vmatprep.subr.mxu0 0.0
  %10399 = vmatpush1.msra.mxu0 0.0
  %10400 = vmatprep.subr.mxu0 0.0
  %10401 = vmatpush1.msra.mxu0 0.0
  %10402 = vmatprep.subr.mxu0 0.0
  %10403 = vmatpush1.msra.mxu0 0.0
  %10404 = vmatprep.subr.mxu0 0.0
  %10405 = vmatpush1.msra.mxu0 0.0
  %10406 = vmatprep.subr.mxu0 0.0
  %10407 = vmatpush1.msra.mxu0 0.0
  %10408 = vmatprep.subr.mxu0 0.0
  %10409 = vmatpush1.msra.mxu0 0.0
  %10410 = vmatprep.subr.mxu0 0.0
  %10411 = vmatpush1.msra.mxu0 0.0
  %10412 = vmatprep.subr.mxu0 0.0
  %10413 = vmatpush1.msra.mxu0 0.0
  %10414 = vmatprep.subr.mxu0 0.0
  %10415 = vmatpush1.msra.mxu0 0.0
  %10416 = vmatprep.subr.mxu0 0.0
  %10417 = vmatpush1.msra.mxu0 0.0
  %10418 = vmatprep.subr.mxu0 0.0
  %10419 = vmatpush1.msra.mxu0 0.0
  %10420 = vmatprep.subr.mxu0 0.0
  %10421 = vmatpush1.msra.mxu0 0.0
  %10422 = vmatprep.subr.mxu0 0.0
  %10423 = vmatpush1.msra.mxu0 0.0
  %10424 = vmatprep.subr.mxu0 0.0
  %10425 = vmatpush1.msra.mxu0 0.0
  %10426 = vmatprep.subr.mxu0 0.0
  %10427 = vmatpush1.msra.mxu0 0.0
  %10428 = vmatprep.subr.mxu0 0.0
  %10429 = vmatpush1.msra.mxu0 0.0
  %10430 = vmatprep.mubr.f32.mxu0 0.0
  %v10431 = vand.u32 %v9989, 4294901760
  %10432 = vmatmul.mubr.f32.gmra.mrb[0].mxu0 %v10431
  %v10433 = vpop.f32.mrb[0].mxu0
  %v10434 = vadd.f32 %v10362, %v10433
  %v10435 = vpop.f32.mrb[0].mxu0
  %10436 = vdwg.mxu0
  %v10437 = vmul.f32 %v10434, 0.1
  %v10438 = vadd.f32 %v9979, %v10437
  %10440 = vrot.lane.b32.xlu0 %v10438, 56
  %v10441 = vpop.permute.xlu0 %10440
  %vm10443 = vcmask 516544
  %10444 = vst.msk [vmem:[%s2] sm:$0x1] %vm10443, %v10441
  %10445 = vrot.lane.b32.xlu0 %v9061, 104
  %v10446 = vpop.permute.xlu0 %10445
  %v10448 = vsel %vm1795, %v10438, 0
  %10450 = vmatprep.subr.mxu0 0.0
  %v10451 = vand.u32 %v17, 4294901760
  %10452 = vmatpush1.msra.mxu0 %v10451
  %10453 = vmatprep.subr.mxu0 0.0
  %10454 = vmatpush1.msra.mxu0 0.0
  %10455 = vmatprep.subr.mxu0 0.0
  %10456 = vmatpush1.msra.mxu0 0.0
  %10457 = vmatprep.subr.mxu0 0.0
  %10458 = vmatpush1.msra.mxu0 0.0
  %10459 = vmatprep.subr.mxu0 0.0
  %10460 = vmatpush1.msra.mxu0 0.0
  %10461 = vmatprep.subr.mxu0 0.0
  %10462 = vmatpush1.msra.mxu0 0.0
  %10463 = vmatprep.subr.mxu0 0.0
  %10464 = vmatpush1.msra.mxu0 0.0
  %10465 = vmatprep.subr.mxu0 0.0
  %10466 = vmatpush1.msra.mxu0 0.0
  %10467 = vmatprep.subr.mxu0 0.0
  %10468 = vmatpush1.msra.mxu0 0.0
  %10469 = vmatprep.subr.mxu0 0.0
  %10470 = vmatpush1.msra.mxu0 0.0
  %10471 = vmatprep.subr.mxu0 0.0
  %10472 = vmatpush1.msra.mxu0 0.0
  %10473 = vmatprep.subr.mxu0 0.0
  %10474 = vmatpush1.msra.mxu0 0.0
  %10475 = vmatprep.subr.mxu0 0.0
  %10476 = vmatpush1.msra.mxu0 0.0
  %10477 = vmatprep.subr.mxu0 0.0
  %10478 = vmatpush1.msra.mxu0 0.0
  %10479 = vmatprep.subr.mxu0 0.0
  %10480 = vmatpush1.msra.mxu0 0.0
  %10481 = vmatprep.subr.mxu0 0.0
  %10482 = vmatpush1.msra.mxu0 0.0
  %10483 = vmatprep.subr.mxu0 0.0
  %10484 = vmatpush1.msra.mxu0 0.0
  %10485 = vmatprep.subr.mxu0 0.0
  %10486 = vmatpush1.msra.mxu0 0.0
  %10487 = vmatprep.subr.mxu0 0.0
  %10488 = vmatpush1.msra.mxu0 0.0
  %10489 = vmatprep.subr.mxu0 0.0
  %10490 = vmatpush1.msra.mxu0 0.0
  %10491 = vmatprep.subr.mxu0 0.0
  %10492 = vmatpush1.msra.mxu0 0.0
  %10493 = vmatprep.subr.mxu0 0.0
  %10494 = vmatpush1.msra.mxu0 0.0
  %10495 = vmatprep.subr.mxu0 0.0
  %10496 = vmatpush1.msra.mxu0 0.0
  %10497 = vmatprep.subr.mxu0 0.0
  %10498 = vmatpush1.msra.mxu0 0.0
  %10499 = vmatprep.subr.mxu0 0.0
  %10500 = vmatpush1.msra.mxu0 0.0
  %10501 = vmatprep.subr.mxu0 0.0
  %10502 = vmatpush1.msra.mxu0 0.0
  %10503 = vmatprep.subr.mxu0 0.0
  %10504 = vmatpush1.msra.mxu0 0.0
  %10505 = vmatprep.subr.mxu0 0.0
  %10506 = vmatpush1.msra.mxu0 0.0
  %10507 = vmatprep.subr.mxu0 0.0
  %10508 = vmatpush1.msra.mxu0 0.0
  %10509 = vmatprep.subr.mxu0 0.0
  %10510 = vmatpush1.msra.mxu0 0.0
  %10511 = vmatprep.subr.mxu0 0.0
  %10512 = vmatpush1.msra.mxu0 0.0
  %10513 = vmatprep.subr.mxu0 0.0
  %10514 = vmatpush1.msra.mxu0 0.0
  %10515 = vmatprep.mubr.f32.mxu0 0.0
  %v10516 = vand.u32 %v10448, 4294901760
  %v10517 = vsub.f32 %v10448, %v10516
  %v10518 = vand.u32 %v10517, 4294901760
  %v10519 = vsub.f32 %v10517, %v10518
  %v10520 = vand.u32 %v10519, 4294901760
  %10521 = vmatmul.mubr.f32.gmra.mrb[0].mxu0 %v10520
  %v10522 = vpop.f32.mrb[0].mxu0
  %v10523 = vadd.f32 %v10446, %v10522
  %v10524 = vpop.f32.mrb[0].mxu0
  %10525 = vdwg.mxu0
  %10526 = vmatprep.subr.mxu0 0.0
  %v10527 = vand.u32 %v17, 4294901760
  %v10528 = vsub.f32 %v17, %v10527
  %v10529 = vand.u32 %v10528, 4294901760
  %v10530 = vsub.f32 %v10528, %v10529
  %v10531 = vand.u32 %v10530, 4294901760
  %10532 = vmatpush1.msra.mxu0 %v10531
  %10533 = vmatprep.subr.mxu0 0.0
  %10534 = vmatpush1.msra.mxu0 0.0
  %10535 = vmatprep.subr.mxu0 0.0
  %10536 = vmatpush1.msra.mxu0 0.0
  %10537 = vmatprep.subr.mxu0 0.0
  %10538 = vmatpush1.msra.mxu0 0.0
  %10539 = vmatprep.subr.mxu0 0.0
  %10540 = vmatpush1.msra.mxu0 0.0
  %10541 = vmatprep.subr.mxu0 0.0
  %10542 = vmatpush1.msra.mxu0 0.0
  %10543 = vmatprep.subr.mxu0 0.0
  %10544 = vmatpush1.msra.mxu0 0.0
  %10545 = vmatprep.subr.mxu0 0.0
  %10546 = vmatpush1.msra.mxu0 0.0
  %10547 = vmatprep.subr.mxu0 0.0
  %10548 = vmatpush1.msra.mxu0 0.0
  %10549 = vmatprep.subr.mxu0 0.0
  %10550 = vmatpush1.msra.mxu0 0.0
  %10551 = vmatprep.subr.mxu0 0.0
  %10552 = vmatpush1.msra.mxu0 0.0
  %10553 = vmatprep.subr.mxu0 0.0
  %10554 = vmatpush1.msra.mxu0 0.0
  %10555 = vmatprep.subr.mxu0 0.0
  %10556 = vmatpush1.msra.mxu0 0.0
  %10557 = vmatprep.subr.mxu0 0.0
  %10558 = vmatpush1.msra.mxu0 0.0
  %10559 = vmatprep.subr.mxu0 0.0
  %10560 = vmatpush1.msra.mxu0 0.0
  %10561 = vmatprep.subr.mxu0 0.0
  %10562 = vmatpush1.msra.mxu0 0.0
  %10563 = vmatprep.subr.mxu0 0.0
  %10564 = vmatpush1.msra.mxu0 0.0
  %10565 = vmatprep.subr.mxu0 0.0
  %10566 = vmatpush1.msra.mxu0 0.0
  %10567 = vmatprep.subr.mxu0 0.0
  %10568 = vmatpush1.msra.mxu0 0.0
  %10569 = vmatprep.subr.mxu0 0.0
  %10570 = vmatpush1.msra.mxu0 0.0
  %10571 = vmatprep.subr.mxu0 0.0
  %10572 = vmatpush1.msra.mxu0 0.0
  %10573 = vmatprep.subr.mxu0 0.0
  %10574 = vmatpush1.msra.mxu0 0.0
  %10575 = vmatprep.subr.mxu0 0.0
  %10576 = vmatpush1.msra.mxu0 0.0
  %10577 = vmatprep.subr.mxu0 0.0
  %10578 = vmatpush1.msra.mxu0 0.0
  %10579 = vmatprep.subr.mxu0 0.0
  %10580 = vmatpush1.msra.mxu0 0.0
  %10581 = vmatprep.subr.mxu0 0.0
  %10582 = vmatpush1.msra.mxu0 0.0
  %10583 = vmatprep.subr.mxu0 0.0
  %10584 = vmatpush1.msra.mxu0 0.0
  %10585 = vmatprep.subr.mxu0 0.0
  %10586 = vmatpush1.msra.mxu0 0.0
  %10587 = vmatprep.subr.mxu0 0.0
  %10588 = vmatpush1.msra.mxu0 0.0
  %10589 = vmatprep.subr.mxu0 0.0
  %10590 = vmatpush1.msra.mxu0 0.0
  %10591 = vmatprep.subr.mxu0 0.0
  %10592 = vmatpush1.msra.mxu0 0.0
  %10593 = vmatprep.subr.mxu0 0.0
  %10594 = vmatpush1.msra.mxu0 0.0
  %10595 = vmatprep.mubr.f32.mxu0 0.0
  %v10596 = vand.u32 %v10448, 4294901760
  %10597 = vmatmul.mubr.f32.gmra.mrb[0].mxu0 %v10596
  %v10598 = vpop.f32.mrb[0].mxu0
  %v10599 = vadd.f32 %v10523, %v10598
  %v10600 = vpop.f32.mrb[0].mxu0
  %10601 = vdwg.mxu0
  %10602 = vmatprep.subr.mxu0 0.0
  %v10603 = vand.u32 %v17, 4294901760
  %v10604 = vsub.f32 %v17, %v10603
  %10605 = vmatpush1.msra.mxu0 %v10604
  %10606 = vmatprep.subr.mxu0 0.0
  %10607 = vmatpush1.msra.mxu0 0.0
  %10608 = vmatprep.subr.mxu0 0.0
  %10609 = vmatpush1.msra.mxu0 0.0
  %10610 = vmatprep.subr.mxu0 0.0
  %10611 = vmatpush1.msra.mxu0 0.0
  %10612 = vmatprep.subr.mxu0 0.0
  %10613 = vmatpush1.msra.mxu0 0.0
  %10614 = vmatprep.subr.mxu0 0.0
  %10615 = vmatpush1.msra.mxu0 0.0
  %10616 = vmatprep.subr.mxu0 0.0
  %10617 = vmatpush1.msra.mxu0 0.0
  %10618 = vmatprep.subr.mxu0 0.0
  %10619 = vmatpush1.msra.mxu0 0.0
  %10620 = vmatprep.subr.mxu0 0.0
  %10621 = vmatpush1.msra.mxu0 0.0
  %10622 = vmatprep.subr.mxu0 0.0
  %10623 = vmatpush1.msra.mxu0 0.0
  %10624 = vmatprep.subr.mxu0 0.0
  %10625 = vmatpush1.msra.mxu0 0.0
  %10626 = vmatprep.subr.mxu0 0.0
  %10627 = vmatpush1.msra.mxu0 0.0
  %10628 = vmatprep.subr.mxu0 0.0
  %10629 = vmatpush1.msra.mxu0 0.0
  %10630 = vmatprep.subr.mxu0 0.0
  %10631 = vmatpush1.msra.mxu0 0.0
  %10632 = vmatprep.subr.mxu0 0.0
  %10633 = vmatpush1.msra.mxu0 0.0
  %10634 = vmatprep.subr.mxu0 0.0
  %10635 = vmatpush1.msra.mxu0 0.0
  %10636 = vmatprep.subr.mxu0 0.0
  %10637 = vmatpush1.msra.mxu0 0.0
  %10638 = vmatprep.subr.mxu0 0.0
  %10639 = vmatpush1.msra.mxu0 0.0
  %10640 = vmatprep.subr.mxu0 0.0
  %10641 = vmatpush1.msra.mxu0 0.0
  %10642 = vmatprep.subr.mxu0 0.0
  %10643 = vmatpush1.msra.mxu0 0.0
  %10644 = vmatprep.subr.mxu0 0.0
  %10645 = vmatpush1.msra.mxu0 0.0
  %10646 = vmatprep.subr.mxu0 0.0
  %10647 = vmatpush1.msra.mxu0 0.0
  %10648 = vmatprep.subr.mxu0 0.0
  %10649 = vmatpush1.msra.mxu0 0.0
  %10650 = vmatprep.subr.mxu0 0.0
  %10651 = vmatpush1.msra.mxu0 0.0
  %10652 = vmatprep.subr.mxu0 0.0
  %10653 = vmatpush1.msra.mxu0 0.0
  %10654 = vmatprep.subr.mxu0 0.0
  %10655 = vmatpush1.msra.mxu0 0.0
  %10656 = vmatprep.subr.mxu0 0.0
  %10657 = vmatpush1.msra.mxu0 0.0
  %10658 = vmatprep.subr.mxu0 0.0
  %10659 = vmatpush1.msra.mxu0 0.0
  %10660 = vmatprep.subr.mxu0 0.0
  %10661 = vmatpush1.msra.mxu0 0.0
  %10662 = vmatprep.subr.mxu0 0.0
  %10663 = vmatpush1.msra.mxu0 0.0
  %10664 = vmatprep.subr.mxu0 0.0
  %10665 = vmatpush1.msra.mxu0 0.0
  %10666 = vmatprep.subr.mxu0 0.0
  %10667 = vmatpush1.msra.mxu0 0.0
  %10668 = vmatprep.mubr.f32.mxu0 0.0
  %v10669 = vand.u32 %v10448, 4294901760
  %v10670 = vsub.f32 %v10448, %v10669
  %10671 = vmatmul.mubr.f32.gmra.mrb[0].mxu0 %v10670
  %v10672 = vpop.f32.mrb[0].mxu0
  %v10673 = vadd.f32 %v10599, %v10672
  %v10674 = vpop.f32.mrb[0].mxu0
  %10675 = vdwg.mxu0
  %10676 = vmatprep.subr.mxu0 0.0
  %v10677 = vand.u32 %v17, 4294901760
  %10678 = vmatpush1.msra.mxu0 %v10677
  %10679 = vmatprep.subr.mxu0 0.0
  %10680 = vmatpush1.msra.mxu0 0.0
  %10681 = vmatprep.subr.mxu0 0.0
  %10682 = vmatpush1.msra.mxu0 0.0
  %10683 = vmatprep.subr.mxu0 0.0
  %10684 = vmatpush1.msra.mxu0 0.0
  %10685 = vmatprep.subr.mxu0 0.0
  %10686 = vmatpush1.msra.mxu0 0.0
  %10687 = vmatprep.subr.mxu0 0.0
  %10688 = vmatpush1.msra.mxu0 0.0
  %10689 = vmatprep.subr.mxu0 0.0
  %10690 = vmatpush1.msra.mxu0 0.0
  %10691 = vmatprep.subr.mxu0 0.0
  %10692 = vmatpush1.msra.mxu0 0.0
  %10693 = vmatprep.subr.mxu0 0.0
  %10694 = vmatpush1.msra.mxu0 0.0
  %10695 = vmatprep.subr.mxu0 0.0
  %10696 = vmatpush1.msra.mxu0 0.0
  %10697 = vmatprep.subr.mxu0 0.0
  %10698 = vmatpush1.msra.mxu0 0.0
  %10699 = vmatprep.subr.mxu0 0.0
  %10700 = vmatpush1.msra.mxu0 0.0
  %10701 = vmatprep.subr.mxu0 0.0
  %10702 = vmatpush1.msra.mxu0 0.0
  %10703 = vmatprep.subr.mxu0 0.0
  %10704 = vmatpush1.msra.mxu0 0.0
  %10705 = vmatprep.subr.mxu0 0.0
  %10706 = vmatpush1.msra.mxu0 0.0
  %10707 = vmatprep.subr.mxu0 0.0
  %10708 = vmatpush1.msra.mxu0 0.0
  %10709 = vmatprep.subr.mxu0 0.0
  %10710 = vmatpush1.msra.mxu0 0.0
  %10711 = vmatprep.subr.mxu0 0.0
  %10712 = vmatpush1.msra.mxu0 0.0
  %10713 = vmatprep.subr.mxu0 0.0
  %10714 = vmatpush1.msra.mxu0 0.0
  %10715 = vmatprep.subr.mxu0 0.0
  %10716 = vmatpush1.msra.mxu0 0.0
  %10717 = vmatprep.subr.mxu0 0.0
  %10718 = vmatpush1.msra.mxu0 0.0
  %10719 = vmatprep.subr.mxu0 0.0
  %10720 = vmatpush1.msra.mxu0 0.0
  %10721 = vmatprep.subr.mxu0 0.0
  %10722 = vmatpush1.msra.mxu0 0.0
  %10723 = vmatprep.subr.mxu0 0.0
  %10724 = vmatpush1.msra.mxu0 0.0
  %10725 = vmatprep.subr.mxu0 0.0
  %10726 = vmatpush1.msra.mxu0 0.0
  %10727 = vmatprep.subr.mxu0 0.0
  %10728 = vmatpush1.msra.mxu0 0.0
  %10729 = vmatprep.subr.mxu0 0.0
  %10730 = vmatpush1.msra.mxu0 0.0
  %10731 = vmatprep.subr.mxu0 0.0
  %10732 = vmatpush1.msra.mxu0 0.0
  %10733 = vmatprep.subr.mxu0 0.0
  %10734 = vmatpush1.msra.mxu0 0.0
  %10735 = vmatprep.subr.mxu0 0.0
  %10736 = vmatpush1.msra.mxu0 0.0
  %10737 = vmatprep.subr.mxu0 0.0
  %10738 = vmatpush1.msra.mxu0 0.0
  %10739 = vmatprep.subr.mxu0 0.0
  %10740 = vmatpush1.msra.mxu0 0.0
  %10741 = vmatprep.mubr.f32.mxu0 0.0
  %v10742 = vand.u32 %v10448, 4294901760
  %v10743 = vsub.f32 %v10448, %v10742
  %v10744 = vand.u32 %v10743, 4294901760
  %10745 = vmatmul.mubr.f32.gmra.mrb[0].mxu0 %v10744
  %v10746 = vpop.f32.mrb[0].mxu0
  %v10747 = vadd.f32 %v10673, %v10746
  %v10748 = vpop.f32.mrb[0].mxu0
  %10749 = vdwg.mxu0
  %10750 = vmatprep.subr.mxu0 0.0
  %v10751 = vand.u32 %v17, 4294901760
  %v10752 = vsub.f32 %v17, %v10751
  %v10753 = vand.u32 %v10752, 4294901760
  %10754 = vmatpush1.msra.mxu0 %v10753
  %10755 = vmatprep.subr.mxu0 0.0
  %10756 = vmatpush1.msra.mxu0 0.0
  %10757 = vmatprep.subr.mxu0 0.0
  %10758 = vmatpush1.msra.mxu0 0.0
  %10759 = vmatprep.subr.mxu0 0.0
  %10760 = vmatpush1.msra.mxu0 0.0
  %10761 = vmatprep.subr.mxu0 0.0
  %10762 = vmatpush1.msra.mxu0 0.0
  %10763 = vmatprep.subr.mxu0 0.0
  %10764 = vmatpush1.msra.mxu0 0.0
  %10765 = vmatprep.subr.mxu0 0.0
  %10766 = vmatpush1.msra.mxu0 0.0
  %10767 = vmatprep.subr.mxu0 0.0
  %10768 = vmatpush1.msra.mxu0 0.0
  %10769 = vmatprep.subr.mxu0 0.0
  %10770 = vmatpush1.msra.mxu0 0.0
  %10771 = vmatprep.subr.mxu0 0.0
  %10772 = vmatpush1.msra.mxu0 0.0
  %10773 = vmatprep.subr.mxu0 0.0
  %10774 = vmatpush1.msra.mxu0 0.0
  %10775 = vmatprep.subr.mxu0 0.0
  %10776 = vmatpush1.msra.mxu0 0.0
  %10777 = vmatprep.subr.mxu0 0.0
  %10778 = vmatpush1.msra.mxu0 0.0
  %10779 = vmatprep.subr.mxu0 0.0
  %10780 = vmatpush1.msra.mxu0 0.0
  %10781 = vmatprep.subr.mxu0 0.0
  %10782 = vmatpush1.msra.mxu0 0.0
  %10783 = vmatprep.subr.mxu0 0.0
  %10784 = vmatpush1.msra.mxu0 0.0
  %10785 = vmatprep.subr.mxu0 0.0
  %10786 = vmatpush1.msra.mxu0 0.0
  %10787 = vmatprep.subr.mxu0 0.0
  %10788 = vmatpush1.msra.mxu0 0.0
  %10789 = vmatprep.subr.mxu0 0.0
  %10790 = vmatpush1.msra.mxu0 0.0
  %10791 = vmatprep.subr.mxu0 0.0
  %10792 = vmatpush1.msra.mxu0 0.0
  %10793 = vmatprep.subr.mxu0 0.0
  %10794 = vmatpush1.msra.mxu0 0.0
  %10795 = vmatprep.subr.mxu0 0.0
  %10796 = vmatpush1.msra.mxu0 0.0
  %10797 = vmatprep.subr.mxu0 0.0
  %10798 = vmatpush1.msra.mxu0 0.0
  %10799 = vmatprep.subr.mxu0 0.0
  %10800 = vmatpush1.msra.mxu0 0.0
  %10801 = vmatprep.subr.mxu0 0.0
  %10802 = vmatpush1.msra.mxu0 0.0
  %10803 = vmatprep.subr.mxu0 0.0
  %10804 = vmatpush1.msra.mxu0 0.0
  %10805 = vmatprep.subr.mxu0 0.0
  %10806 = vmatpush1.msra.mxu0 0.0
  %10807 = vmatprep.subr.mxu0 0.0
  %10808 = vmatpush1.msra.mxu0 0.0
  %10809 = vmatprep.subr.mxu0 0.0
  %10810 = vmatpush1.msra.mxu0 0.0
  %10811 = vmatprep.subr.mxu0 0.0
  %10812 = vmatpush1.msra.mxu0 0.0
  %10813 = vmatprep.subr.mxu0 0.0
  %10814 = vmatpush1.msra.mxu0 0.0
  %10815 = vmatprep.subr.mxu0 0.0
  %10816 = vmatpush1.msra.mxu0 0.0
  %10817 = vmatprep.mubr.f32.mxu0 0.0
  %v10818 = vand.u32 %v10448, 4294901760
  %10819 = vmatmul.mubr.f32.gmra.mrb[0].mxu0 %v10818
  %v10820 = vpop.f32.mrb[0].mxu0
  %v10821 = vadd.f32 %v10747, %v10820
  %v10822 = vpop.f32.mrb[0].mxu0
  %10823 = vdwg.mxu0
  %10824 = vmatprep.subr.mxu0 0.0
  %v10825 = vand.u32 %v17, 4294901760
  %10826 = vmatpush1.msra.mxu0 %v10825
  %10827 = vmatprep.subr.mxu0 0.0
  %10828 = vmatpush1.msra.mxu0 0.0
  %10829 = vmatprep.subr.mxu0 0.0
  %10830 = vmatpush1.msra.mxu0 0.0
  %10831 = vmatprep.subr.mxu0 0.0
  %10832 = vmatpush1.msra.mxu0 0.0
  %10833 = vmatprep.subr.mxu0 0.0
  %10834 = vmatpush1.msra.mxu0 0.0
  %10835 = vmatprep.subr.mxu0 0.0
  %10836 = vmatpush1.msra.mxu0 0.0
  %10837 = vmatprep.subr.mxu0 0.0
  %10838 = vmatpush1.msra.mxu0 0.0
  %10839 = vmatprep.subr.mxu0 0.0
  %10840 = vmatpush1.msra.mxu0 0.0
  %10841 = vmatprep.subr.mxu0 0.0
  %10842 = vmatpush1.msra.mxu0 0.0
  %10843 = vmatprep.subr.mxu0 0.0
  %10844 = vmatpush1.msra.mxu0 0.0
  %10845 = vmatprep.subr.mxu0 0.0
  %10846 = vmatpush1.msra.mxu0 0.0
  %10847 = vmatprep.subr.mxu0 0.0
  %10848 = vmatpush1.msra.mxu0 0.0
  %10849 = vmatprep.subr.mxu0 0.0
  %10850 = vmatpush1.msra.mxu0 0.0
  %10851 = vmatprep.subr.mxu0 0.0
  %10852 = vmatpush1.msra.mxu0 0.0
  %10853 = vmatprep.subr.mxu0 0.0
  %10854 = vmatpush1.msra.mxu0 0.0
  %10855 = vmatprep.subr.mxu0 0.0
  %10856 = vmatpush1.msra.mxu0 0.0
  %10857 = vmatprep.subr.mxu0 0.0
  %10858 = vmatpush1.msra.mxu0 0.0
  %10859 = vmatprep.subr.mxu0 0.0
  %10860 = vmatpush1.msra.mxu0 0.0
  %10861 = vmatprep.subr.mxu0 0.0
  %10862 = vmatpush1.msra.mxu0 0.0
  %10863 = vmatprep.subr.mxu0 0.0
  %10864 = vmatpush1.msra.mxu0 0.0
  %10865 = vmatprep.subr.mxu0 0.0
  %10866 = vmatpush1.msra.mxu0 0.0
  %10867 = vmatprep.subr.mxu0 0.0
  %10868 = vmatpush1.msra.mxu0 0.0
  %10869 = vmatprep.subr.mxu0 0.0
  %10870 = vmatpush1.msra.mxu0 0.0
  %10871 = vmatprep.subr.mxu0 0.0
  %10872 = vmatpush1.msra.mxu0 0.0
  %10873 = vmatprep.subr.mxu0 0.0
  %10874 = vmatpush1.msra.mxu0 0.0
  %10875 = vmatprep.subr.mxu0 0.0
  %10876 = vmatpush1.msra.mxu0 0.0
  %10877 = vmatprep.subr.mxu0 0.0
  %10878 = vmatpush1.msra.mxu0 0.0
  %10879 = vmatprep.subr.mxu0 0.0
  %10880 = vmatpush1.msra.mxu0 0.0
  %10881 = vmatprep.subr.mxu0 0.0
  %10882 = vmatpush1.msra.mxu0 0.0
  %10883 = vmatprep.subr.mxu0 0.0
  %10884 = vmatpush1.msra.mxu0 0.0
  %10885 = vmatprep.subr.mxu0 0.0
  %10886 = vmatpush1.msra.mxu0 0.0
  %10887 = vmatprep.subr.mxu0 0.0
  %10888 = vmatpush1.msra.mxu0 0.0
  %10889 = vmatprep.mubr.f32.mxu0 0.0
  %v10890 = vand.u32 %v10448, 4294901760
  %10891 = vmatmul.mubr.f32.gmra.mrb[0].mxu0 %v10890
  %v10892 = vpop.f32.mrb[0].mxu0
  %v10893 = vadd.f32 %v10821, %v10892
  %v10894 = vpop.f32.mrb[0].mxu0
  %10895 = vdwg.mxu0
  %v10896 = vmul.f32 %v10893, 0.1
  %v10897 = vadd.f32 %v10438, %v10896
  %10899 = vrot.lane.b32.xlu0 %v10897, 64
  %v10900 = vpop.permute.xlu0 %10899
  %vm10902 = vcmask 582144
  %10903 = vst.msk [vmem:[%s2] sm:$0x1] %vm10902, %v10900
  %10904 = vrot.lane.b32.xlu0 %v9061, 96
  %v10905 = vpop.permute.xlu0 %10904
  %v10907 = vsel %vm1795, %v10897, 0
  %10909 = vmatprep.subr.mxu0 0.0
  %v10910 = vand.u32 %v17, 4294901760
  %10911 = vmatpush1.msra.mxu0 %v10910
  %10912 = vmatprep.subr.mxu0 0.0
  %10913 = vmatpush1.msra.mxu0 0.0
  %10914 = vmatprep.subr.mxu0 0.0
  %10915 = vmatpush1.msra.mxu0 0.0
  %10916 = vmatprep.subr.mxu0 0.0
  %10917 = vmatpush1.msra.mxu0 0.0
  %10918 = vmatprep.subr.mxu0 0.0
  %10919 = vmatpush1.msra.mxu0 0.0
  %10920 = vmatprep.subr.mxu0 0.0
  %10921 = vmatpush1.msra.mxu0 0.0
  %10922 = vmatprep.subr.mxu0 0.0
  %10923 = vmatpush1.msra.mxu0 0.0
  %10924 = vmatprep.subr.mxu0 0.0
  %10925 = vmatpush1.msra.mxu0 0.0
  %10926 = vmatprep.subr.mxu0 0.0
  %10927 = vmatpush1.msra.mxu0 0.0
  %10928 = vmatprep.subr.mxu0 0.0
  %10929 = vmatpush1.msra.mxu0 0.0
  %10930 = vmatprep.subr.mxu0 0.0
  %10931 = vmatpush1.msra.mxu0 0.0
  %10932 = vmatprep.subr.mxu0 0.0
  %10933 = vmatpush1.msra.mxu0 0.0
  %10934 = vmatprep.subr.mxu0 0.0
  %10935 = vmatpush1.msra.mxu0 0.0
  %10936 = vmatprep.subr.mxu0 0.0
  %10937 = vmatpush1.msra.mxu0 0.0
  %10938 = vmatprep.subr.mxu0 0.0
  %10939 = vmatpush1.msra.mxu0 0.0
  %10940 = vmatprep.subr.mxu0 0.0
  %10941 = vmatpush1.msra.mxu0 0.0
  %10942 = vmatprep.subr.mxu0 0.0
  %10943 = vmatpush1.msra.mxu0 0.0
  %10944 = vmatprep.subr.mxu0 0.0
  %10945 = vmatpush1.msra.mxu0 0.0
  %10946 = vmatprep.subr.mxu0 0.0
  %10947 = vmatpush1.msra.mxu0 0.0
  %10948 = vmatprep.subr.mxu0 0.0
  %10949 = vmatpush1.msra.mxu0 0.0
  %10950 = vmatprep.subr.mxu0 0.0
  %10951 = vmatpush1.msra.mxu0 0.0
  %10952 = vmatprep.subr.mxu0 0.0
  %10953 = vmatpush1.msra.mxu0 0.0
  %10954 = vmatprep.subr.mxu0 0.0
  %10955 = vmatpush1.msra.mxu0 0.0
  %10956 = vmatprep.subr.mxu0 0.0
  %10957 = vmatpush1.msra.mxu0 0.0
  %10958 = vmatprep.subr.mxu0 0.0
  %10959 = vmatpush1.msra.mxu0 0.0
  %10960 = vmatprep.subr.mxu0 0.0
  %10961 = vmatpush1.msra.mxu0 0.0
  %10962 = vmatprep.subr.mxu0 0.0
  %10963 = vmatpush1.msra.mxu0 0.0
  %10964 = vmatprep.subr.mxu0 0.0
  %10965 = vmatpush1.msra.mxu0 0.0
  %10966 = vmatprep.subr.mxu0 0.0
  %10967 = vmatpush1.msra.mxu0 0.0
  %10968 = vmatprep.subr.mxu0 0.0
  %10969 = vmatpush1.msra.mxu0 0.0
  %10970 = vmatprep.subr.mxu0 0.0
  %10971 = vmatpush1.msra.mxu0 0.0
  %10972 = vmatprep.subr.mxu0 0.0
  %10973 = vmatpush1.msra.mxu0 0.0
  %10974 = vmatprep.mubr.f32.mxu0 0.0
  %v10975 = vand.u32 %v10907, 4294901760
  %v10976 = vsub.f32 %v10907, %v10975
  %v10977 = vand.u32 %v10976, 4294901760
  %v10978 = vsub.f32 %v10976, %v10977
  %v10979 = vand.u32 %v10978, 4294901760
  %10980 = vmatmul.mubr.f32.gmra.mrb[0].mxu0 %v10979
  %v10981 = vpop.f32.mrb[0].mxu0
  %v10982 = vadd.f32 %v10905, %v10981
  %v10983 = vpop.f32.mrb[0].mxu0
  %10984 = vdwg.mxu0
  %10985 = vmatprep.subr.mxu0 0.0
  %v10986 = vand.u32 %v17, 4294901760
  %v10987 = vsub.f32 %v17, %v10986
  %v10988 = vand.u32 %v10987, 4294901760
  %v10989 = vsub.f32 %v10987, %v10988
  %v10990 = vand.u32 %v10989, 4294901760
  %10991 = vmatpush1.msra.mxu0 %v10990
  %10992 = vmatprep.subr.mxu0 0.0
  %10993 = vmatpush1.msra.mxu0 0.0
  %10994 = vmatprep.subr.mxu0 0.0
  %10995 = vmatpush1.msra.mxu0 0.0
  %10996 = vmatprep.subr.mxu0 0.0
  %10997 = vmatpush1.msra.mxu0 0.0
  %10998 = vmatprep.subr.mxu0 0.0
  %10999 = vmatpush1.msra.mxu0 0.0
  %11000 = vmatprep.subr.mxu0 0.0
  %11001 = vmatpush1.msra.mxu0 0.0
  %11002 = vmatprep.subr.mxu0 0.0
  %11003 = vmatpush1.msra.mxu0 0.0
  %11004 = vmatprep.subr.mxu0 0.0
  %11005 = vmatpush1.msra.mxu0 0.0
  %11006 = vmatprep.subr.mxu0 0.0
  %11007 = vmatpush1.msra.mxu0 0.0
  %11008 = vmatprep.subr.mxu0 0.0
  %11009 = vmatpush1.msra.mxu0 0.0
  %11010 = vmatprep.subr.mxu0 0.0
  %11011 = vmatpush1.msra.mxu0 0.0
  %11012 = vmatprep.subr.mxu0 0.0
  %11013 = vmatpush1.msra.mxu0 0.0
  %11014 = vmatprep.subr.mxu0 0.0
  %11015 = vmatpush1.msra.mxu0 0.0
  %11016 = vmatprep.subr.mxu0 0.0
  %11017 = vmatpush1.msra.mxu0 0.0
  %11018 = vmatprep.subr.mxu0 0.0
  %11019 = vmatpush1.msra.mxu0 0.0
  %11020 = vmatprep.subr.mxu0 0.0
  %11021 = vmatpush1.msra.mxu0 0.0
  %11022 = vmatprep.subr.mxu0 0.0
  %11023 = vmatpush1.msra.mxu0 0.0
  %11024 = vmatprep.subr.mxu0 0.0
  %11025 = vmatpush1.msra.mxu0 0.0
  %11026 = vmatprep.subr.mxu0 0.0
  %11027 = vmatpush1.msra.mxu0 0.0
  %11028 = vmatprep.subr.mxu0 0.0
  %11029 = vmatpush1.msra.mxu0 0.0
  %11030 = vmatprep.subr.mxu0 0.0
  %11031 = vmatpush1.msra.mxu0 0.0
  %11032 = vmatprep.subr.mxu0 0.0
  %11033 = vmatpush1.msra.mxu0 0.0
  %11034 = vmatprep.subr.mxu0 0.0
  %11035 = vmatpush1.msra.mxu0 0.0
  %11036 = vmatprep.subr.mxu0 0.0
  %11037 = vmatpush1.msra.mxu0 0.0
  %11038 = vmatprep.subr.mxu0 0.0
  %11039 = vmatpush1.msra.mxu0 0.0
  %11040 = vmatprep.subr.mxu0 0.0
  %11041 = vmatpush1.msra.mxu0 0.0
  %11042 = vmatprep.subr.mxu0 0.0
  %11043 = vmatpush1.msra.mxu0 0.0
  %11044 = vmatprep.subr.mxu0 0.0
  %11045 = vmatpush1.msra.mxu0 0.0
  %11046 = vmatprep.subr.mxu0 0.0
  %11047 = vmatpush1.msra.mxu0 0.0
  %11048 = vmatprep.subr.mxu0 0.0
  %11049 = vmatpush1.msra.mxu0 0.0
  %11050 = vmatprep.subr.mxu0 0.0
  %11051 = vmatpush1.msra.mxu0 0.0
  %11052 = vmatprep.subr.mxu0 0.0
  %11053 = vmatpush1.msra.mxu0 0.0
  %11054 = vmatprep.mubr.f32.mxu0 0.0
  %v11055 = vand.u32 %v10907, 4294901760
  %11056 = vmatmul.mubr.f32.gmra.mrb[0].mxu0 %v11055
  %v11057 = vpop.f32.mrb[0].mxu0
  %v11058 = vadd.f32 %v10982, %v11057
  %v11059 = vpop.f32.mrb[0].mxu0
  %11060 = vdwg.mxu0
  %11061 = vmatprep.subr.mxu0 0.0
  %v11062 = vand.u32 %v17, 4294901760
  %v11063 = vsub.f32 %v17, %v11062
  %11064 = vmatpush1.msra.mxu0 %v11063
  %11065 = vmatprep.subr.mxu0 0.0
  %11066 = vmatpush1.msra.mxu0 0.0
  %11067 = vmatprep.subr.mxu0 0.0
  %11068 = vmatpush1.msra.mxu0 0.0
  %11069 = vmatprep.subr.mxu0 0.0
  %11070 = vmatpush1.msra.mxu0 0.0
  %11071 = vmatprep.subr.mxu0 0.0
  %11072 = vmatpush1.msra.mxu0 0.0
  %11073 = vmatprep.subr.mxu0 0.0
  %11074 = vmatpush1.msra.mxu0 0.0
  %11075 = vmatprep.subr.mxu0 0.0
  %11076 = vmatpush1.msra.mxu0 0.0
  %11077 = vmatprep.subr.mxu0 0.0
  %11078 = vmatpush1.msra.mxu0 0.0
  %11079 = vmatprep.subr.mxu0 0.0
  %11080 = vmatpush1.msra.mxu0 0.0
  %11081 = vmatprep.subr.mxu0 0.0
  %11082 = vmatpush1.msra.mxu0 0.0
  %11083 = vmatprep.subr.mxu0 0.0
  %11084 = vmatpush1.msra.mxu0 0.0
  %11085 = vmatprep.subr.mxu0 0.0
  %11086 = vmatpush1.msra.mxu0 0.0
  %11087 = vmatprep.subr.mxu0 0.0
  %11088 = vmatpush1.msra.mxu0 0.0
  %11089 = vmatprep.subr.mxu0 0.0
  %11090 = vmatpush1.msra.mxu0 0.0
  %11091 = vmatprep.subr.mxu0 0.0
  %11092 = vmatpush1.msra.mxu0 0.0
  %11093 = vmatprep.subr.mxu0 0.0
  %11094 = vmatpush1.msra.mxu0 0.0
  %11095 = vmatprep.subr.mxu0 0.0
  %11096 = vmatpush1.msra.mxu0 0.0
  %11097 = vmatprep.subr.mxu0 0.0
  %11098 = vmatpush1.msra.mxu0 0.0
  %11099 = vmatprep.subr.mxu0 0.0
  %11100 = vmatpush1.msra.mxu0 0.0
  %11101 = vmatprep.subr.mxu0 0.0
  %11102 = vmatpush1.msra.mxu0 0.0
  %11103 = vmatprep.subr.mxu0 0.0
  %11104 = vmatpush1.msra.mxu0 0.0
  %11105 = vmatprep.subr.mxu0 0.0
  %11106 = vmatpush1.msra.mxu0 0.0
  %11107 = vmatprep.subr.mxu0 0.0
  %11108 = vmatpush1.msra.mxu0 0.0
  %11109 = vmatprep.subr.mxu0 0.0
  %11110 = vmatpush1.msra.mxu0 0.0
  %11111 = vmatprep.subr.mxu0 0.0
  %11112 = vmatpush1.msra.mxu0 0.0
  %11113 = vmatprep.subr.mxu0 0.0
  %11114 = vmatpush1.msra.mxu0 0.0
  %11115 = vmatprep.subr.mxu0 0.0
  %11116 = vmatpush1.msra.mxu0 0.0
  %11117 = vmatprep.subr.mxu0 0.0
  %11118 = vmatpush1.msra.mxu0 0.0
  %11119 = vmatprep.subr.mxu0 0.0
  %11120 = vmatpush1.msra.mxu0 0.0
  %11121 = vmatprep.subr.mxu0 0.0
  %11122 = vmatpush1.msra.mxu0 0.0
  %11123 = vmatprep.subr.mxu0 0.0
  %11124 = vmatpush1.msra.mxu0 0.0
  %11125 = vmatprep.subr.mxu0 0.0
  %11126 = vmatpush1.msra.mxu0 0.0
  %11127 = vmatprep.mubr.f32.mxu0 0.0
  %v11128 = vand.u32 %v10907, 4294901760
  %v11129 = vsub.f32 %v10907, %v11128
  %11130 = vmatmul.mubr.f32.gmra.mrb[0].mxu0 %v11129
  %v11131 = vpop.f32.mrb[0].mxu0
  %v11132 = vadd.f32 %v11058, %v11131
  %v11133 = vpop.f32.mrb[0].mxu0
  %11134 = vdwg.mxu0
  %11135 = vmatprep.subr.mxu0 0.0
  %v11136 = vand.u32 %v17, 4294901760
  %11137 = vmatpush1.msra.mxu0 %v11136
  %11138 = vmatprep.subr.mxu0 0.0
  %11139 = vmatpush1.msra.mxu0 0.0
  %11140 = vmatprep.subr.mxu0 0.0
  %11141 = vmatpush1.msra.mxu0 0.0
  %11142 = vmatprep.subr.mxu0 0.0
  %11143 = vmatpush1.msra.mxu0 0.0
  %11144 = vmatprep.subr.mxu0 0.0
  %11145 = vmatpush1.msra.mxu0 0.0
  %11146 = vmatprep.subr.mxu0 0.0
  %11147 = vmatpush1.msra.mxu0 0.0
  %11148 = vmatprep.subr.mxu0 0.0
  %11149 = vmatpush1.msra.mxu0 0.0
  %11150 = vmatprep.subr.mxu0 0.0
  %11151 = vmatpush1.msra.mxu0 0.0
  %11152 = vmatprep.subr.mxu0 0.0
  %11153 = vmatpush1.msra.mxu0 0.0
  %11154 = vmatprep.subr.mxu0 0.0
  %11155 = vmatpush1.msra.mxu0 0.0
  %11156 = vmatprep.subr.mxu0 0.0
  %11157 = vmatpush1.msra.mxu0 0.0
  %11158 = vmatprep.subr.mxu0 0.0
  %11159 = vmatpush1.msra.mxu0 0.0
  %11160 = vmatprep.subr.mxu0 0.0
  %11161 = vmatpush1.msra.mxu0 0.0
  %11162 = vmatprep.subr.mxu0 0.0
  %11163 = vmatpush1.msra.mxu0 0.0
  %11164 = vmatprep.subr.mxu0 0.0
  %11165 = vmatpush1.msra.mxu0 0.0
  %11166 = vmatprep.subr.mxu0 0.0
  %11167 = vmatpush1.msra.mxu0 0.0
  %11168 = vmatprep.subr.mxu0 0.0
  %11169 = vmatpush1.msra.mxu0 0.0
  %11170 = vmatprep.subr.mxu0 0.0
  %11171 = vmatpush1.msra.mxu0 0.0
  %11172 = vmatprep.subr.mxu0 0.0
  %11173 = vmatpush1.msra.mxu0 0.0
  %11174 = vmatprep.subr.mxu0 0.0
  %11175 = vmatpush1.msra.mxu0 0.0
  %11176 = vmatprep.subr.mxu0 0.0
  %11177 = vmatpush1.msra.mxu0 0.0
  %11178 = vmatprep.subr.mxu0 0.0
  %11179 = vmatpush1.msra.mxu0 0.0
  %11180 = vmatprep.subr.mxu0 0.0
  %11181 = vmatpush1.msra.mxu0 0.0
  %11182 = vmatprep.subr.mxu0 0.0
  %11183 = vmatpush1.msra.mxu0 0.0
  %11184 = vmatprep.subr.mxu0 0.0
  %11185 = vmatpush1.msra.mxu0 0.0
  %11186 = vmatprep.subr.mxu0 0.0
  %11187 = vmatpush1.msra.mxu0 0.0
  %11188 = vmatprep.subr.mxu0 0.0
  %11189 = vmatpush1.msra.mxu0 0.0
  %11190 = vmatprep.subr.mxu0 0.0
  %11191 = vmatpush1.msra.mxu0 0.0
  %11192 = vmatprep.subr.mxu0 0.0
  %11193 = vmatpush1.msra.mxu0 0.0
  %11194 = vmatprep.subr.mxu0 0.0
  %11195 = vmatpush1.msra.mxu0 0.0
  %11196 = vmatprep.subr.mxu0 0.0
  %11197 = vmatpush1.msra.mxu0 0.0
  %11198 = vmatprep.subr.mxu0 0.0
  %11199 = vmatpush1.msra.mxu0 0.0
  %11200 = vmatprep.mubr.f32.mxu0 0.0
  %v11201 = vand.u32 %v10907, 4294901760
  %v11202 = vsub.f32 %v10907, %v11201
  %v11203 = vand.u32 %v11202, 4294901760
  %11204 = vmatmul.mubr.f32.gmra.mrb[0].mxu0 %v11203
  %v11205 = vpop.f32.mrb[0].mxu0
  %v11206 = vadd.f32 %v11132, %v11205
  %v11207 = vpop.f32.mrb[0].mxu0
  %11208 = vdwg.mxu0
  %11209 = vmatprep.subr.mxu0 0.0
  %v11210 = vand.u32 %v17, 4294901760
  %v11211 = vsub.f32 %v17, %v11210
  %v11212 = vand.u32 %v11211, 4294901760
  %11213 = vmatpush1.msra.mxu0 %v11212
  %11214 = vmatprep.subr.mxu0 0.0
  %11215 = vmatpush1.msra.mxu0 0.0
  %11216 = vmatprep.subr.mxu0 0.0
  %11217 = vmatpush1.msra.mxu0 0.0
  %11218 = vmatprep.subr.mxu0 0.0
  %11219 = vmatpush1.msra.mxu0 0.0
  %11220 = vmatprep.subr.mxu0 0.0
  %11221 = vmatpush1.msra.mxu0 0.0
  %11222 = vmatprep.subr.mxu0 0.0
  %11223 = vmatpush1.msra.mxu0 0.0
  %11224 = vmatprep.subr.mxu0 0.0
  %11225 = vmatpush1.msra.mxu0 0.0
  %11226 = vmatprep.subr.mxu0 0.0
  %11227 = vmatpush1.msra.mxu0 0.0
  %11228 = vmatprep.subr.mxu0 0.0
  %11229 = vmatpush1.msra.mxu0 0.0
  %11230 = vmatprep.subr.mxu0 0.0
  %11231 = vmatpush1.msra.mxu0 0.0
  %11232 = vmatprep.subr.mxu0 0.0
  %11233 = vmatpush1.msra.mxu0 0.0
  %11234 = vmatprep.subr.mxu0 0.0
  %11235 = vmatpush1.msra.mxu0 0.0
  %11236 = vmatprep.subr.mxu0 0.0
  %11237 = vmatpush1.msra.mxu0 0.0
  %11238 = vmatprep.subr.mxu0 0.0
  %11239 = vmatpush1.msra.mxu0 0.0
  %11240 = vmatprep.subr.mxu0 0.0
  %11241 = vmatpush1.msra.mxu0 0.0
  %11242 = vmatprep.subr.mxu0 0.0
  %11243 = vmatpush1.msra.mxu0 0.0
  %11244 = vmatprep.subr.mxu0 0.0
  %11245 = vmatpush1.msra.mxu0 0.0
  %11246 = vmatprep.subr.mxu0 0.0
  %11247 = vmatpush1.msra.mxu0 0.0
  %11248 = vmatprep.subr.mxu0 0.0
  %11249 = vmatpush1.msra.mxu0 0.0
  %11250 = vmatprep.subr.mxu0 0.0
  %11251 = vmatpush1.msra.mxu0 0.0
  %11252 = vmatprep.subr.mxu0 0.0
  %11253 = vmatpush1.msra.mxu0 0.0
  %11254 = vmatprep.subr.mxu0 0.0
  %11255 = vmatpush1.msra.mxu0 0.0
  %11256 = vmatprep.subr.mxu0 0.0
  %11257 = vmatpush1.msra.mxu0 0.0
  %11258 = vmatprep.subr.mxu0 0.0
  %11259 = vmatpush1.msra.mxu0 0.0
  %11260 = vmatprep.subr.mxu0 0.0
  %11261 = vmatpush1.msra.mxu0 0.0
  %11262 = vmatprep.subr.mxu0 0.0
  %11263 = vmatpush1.msra.mxu0 0.0
  %11264 = vmatprep.subr.mxu0 0.0
  %11265 = vmatpush1.msra.mxu0 0.0
  %11266 = vmatprep.subr.mxu0 0.0
  %11267 = vmatpush1.msra.mxu0 0.0
  %11268 = vmatprep.subr.mxu0 0.0
  %11269 = vmatpush1.msra.mxu0 0.0
  %11270 = vmatprep.subr.mxu0 0.0
  %11271 = vmatpush1.msra.mxu0 0.0
  %11272 = vmatprep.subr.mxu0 0.0
  %11273 = vmatpush1.msra.mxu0 0.0
  %11274 = vmatprep.subr.mxu0 0.0
  %11275 = vmatpush1.msra.mxu0 0.0
  %11276 = vmatprep.mubr.f32.mxu0 0.0
  %v11277 = vand.u32 %v10907, 4294901760
  %11278 = vmatmul.mubr.f32.gmra.mrb[0].mxu0 %v11277
  %v11279 = vpop.f32.mrb[0].mxu0
  %v11280 = vadd.f32 %v11206, %v11279
  %v11281 = vpop.f32.mrb[0].mxu0
  %11282 = vdwg.mxu0
  %11283 = vmatprep.subr.mxu0 0.0
  %v11284 = vand.u32 %v17, 4294901760
  %11285 = vmatpush1.msra.mxu0 %v11284
  %11286 = vmatprep.subr.mxu0 0.0
  %11287 = vmatpush1.msra.mxu0 0.0
  %11288 = vmatprep.subr.mxu0 0.0
  %11289 = vmatpush1.msra.mxu0 0.0
  %11290 = vmatprep.subr.mxu0 0.0
  %11291 = vmatpush1.msra.mxu0 0.0
  %11292 = vmatprep.subr.mxu0 0.0
  %11293 = vmatpush1.msra.mxu0 0.0
  %11294 = vmatprep.subr.mxu0 0.0
  %11295 = vmatpush1.msra.mxu0 0.0
  %11296 = vmatprep.subr.mxu0 0.0
  %11297 = vmatpush1.msra.mxu0 0.0
  %11298 = vmatprep.subr.mxu0 0.0
  %11299 = vmatpush1.msra.mxu0 0.0
  %11300 = vmatprep.subr.mxu0 0.0
  %11301 = vmatpush1.msra.mxu0 0.0
  %11302 = vmatprep.subr.mxu0 0.0
  %11303 = vmatpush1.msra.mxu0 0.0
  %11304 = vmatprep.subr.mxu0 0.0
  %11305 = vmatpush1.msra.mxu0 0.0
  %11306 = vmatprep.subr.mxu0 0.0
  %11307 = vmatpush1.msra.mxu0 0.0
  %11308 = vmatprep.subr.mxu0 0.0
  %11309 = vmatpush1.msra.mxu0 0.0
  %11310 = vmatprep.subr.mxu0 0.0
  %11311 = vmatpush1.msra.mxu0 0.0
  %11312 = vmatprep.subr.mxu0 0.0
  %11313 = vmatpush1.msra.mxu0 0.0
  %11314 = vmatprep.subr.mxu0 0.0
  %11315 = vmatpush1.msra.mxu0 0.0
  %11316 = vmatprep.subr.mxu0 0.0
  %11317 = vmatpush1.msra.mxu0 0.0
  %11318 = vmatprep.subr.mxu0 0.0
  %11319 = vmatpush1.msra.mxu0 0.0
  %11320 = vmatprep.subr.mxu0 0.0
  %11321 = vmatpush1.msra.mxu0 0.0
  %11322 = vmatprep.subr.mxu0 0.0
  %11323 = vmatpush1.msra.mxu0 0.0
  %11324 = vmatprep.subr.mxu0 0.0
  %11325 = vmatpush1.msra.mxu0 0.0
  %11326 = vmatprep.subr.mxu0 0.0
  %11327 = vmatpush1.msra.mxu0 0.0
  %11328 = vmatprep.subr.mxu0 0.0
  %11329 = vmatpush1.msra.mxu0 0.0
  %11330 = vmatprep.subr.mxu0 0.0
  %11331 = vmatpush1.msra.mxu0 0.0
  %11332 = vmatprep.subr.mxu0 0.0
  %11333 = vmatpush1.msra.mxu0 0.0
  %11334 = vmatprep.subr.mxu0 0.0
  %11335 = vmatpush1.msra.mxu0 0.0
  %11336 = vmatprep.subr.mxu0 0.0
  %11337 = vmatpush1.msra.mxu0 0.0
  %11338 = vmatprep.subr.mxu0 0.0
  %11339 = vmatpush1.msra.mxu0 0.0
  %11340 = vmatprep.subr.mxu0 0.0
  %11341 = vmatpush1.msra.mxu0 0.0
  %11342 = vmatprep.subr.mxu0 0.0
  %11343 = vmatpush1.msra.mxu0 0.0
  %11344 = vmatprep.subr.mxu0 0.0
  %11345 = vmatpush1.msra.mxu0 0.0
  %11346 = vmatprep.subr.mxu0 0.0
  %11347 = vmatpush1.msra.mxu0 0.0
  %11348 = vmatprep.mubr.f32.mxu0 0.0
  %v11349 = vand.u32 %v10907, 4294901760
  %11350 = vmatmul.mubr.f32.gmra.mrb[0].mxu0 %v11349
  %v11351 = vpop.f32.mrb[0].mxu0
  %v11352 = vadd.f32 %v11280, %v11351
  %v11353 = vpop.f32.mrb[0].mxu0
  %11354 = vdwg.mxu0
  %v11355 = vmul.f32 %v11352, 0.1
  %v11356 = vadd.f32 %v10897, %v11355
  %11358 = vrot.lane.b32.xlu0 %v11356, 72
  %v11359 = vpop.permute.xlu0 %11358
  %vm11361 = vcmask 647744
  %11362 = vst.msk [vmem:[%s2] sm:$0x1] %vm11361, %v11359
  %11363 = vrot.lane.b32.xlu0 %v9061, 88
  %v11364 = vpop.permute.xlu0 %11363
  %v11366 = vsel %vm1795, %v11356, 0
  %11368 = vmatprep.subr.mxu0 0.0
  %v11369 = vand.u32 %v17, 4294901760
  %11370 = vmatpush1.msra.mxu0 %v11369
  %11371 = vmatprep.subr.mxu0 0.0
  %11372 = vmatpush1.msra.mxu0 0.0
  %11373 = vmatprep.subr.mxu0 0.0
  %11374 = vmatpush1.msra.mxu0 0.0
  %11375 = vmatprep.subr.mxu0 0.0
  %11376 = vmatpush1.msra.mxu0 0.0
  %11377 = vmatprep.subr.mxu0 0.0
  %11378 = vmatpush1.msra.mxu0 0.0
  %11379 = vmatprep.subr.mxu0 0.0
  %11380 = vmatpush1.msra.mxu0 0.0
  %11381 = vmatprep.subr.mxu0 0.0
  %11382 = vmatpush1.msra.mxu0 0.0
  %11383 = vmatprep.subr.mxu0 0.0
  %11384 = vmatpush1.msra.mxu0 0.0
  %11385 = vmatprep.subr.mxu0 0.0
  %11386 = vmatpush1.msra.mxu0 0.0
  %11387 = vmatprep.subr.mxu0 0.0
  %11388 = vmatpush1.msra.mxu0 0.0
  %11389 = vmatprep.subr.mxu0 0.0
  %11390 = vmatpush1.msra.mxu0 0.0
  %11391 = vmatprep.subr.mxu0 0.0
  %11392 = vmatpush1.msra.mxu0 0.0
  %11393 = vmatprep.subr.mxu0 0.0
  %11394 = vmatpush1.msra.mxu0 0.0
  %11395 = vmatprep.subr.mxu0 0.0
  %11396 = vmatpush1.msra.mxu0 0.0
  %11397 = vmatprep.subr.mxu0 0.0
  %11398 = vmatpush1.msra.mxu0 0.0
  %11399 = vmatprep.subr.mxu0 0.0
  %11400 = vmatpush1.msra.mxu0 0.0
  %11401 = vmatprep.subr.mxu0 0.0
  %11402 = vmatpush1.msra.mxu0 0.0
  %11403 = vmatprep.subr.mxu0 0.0
  %11404 = vmatpush1.msra.mxu0 0.0
  %11405 = vmatprep.subr.mxu0 0.0
  %11406 = vmatpush1.msra.mxu0 0.0
  %11407 = vmatprep.subr.mxu0 0.0
  %11408 = vmatpush1.msra.mxu0 0.0
  %11409 = vmatprep.subr.mxu0 0.0
  %11410 = vmatpush1.msra.mxu0 0.0
  %11411 = vmatprep.subr.mxu0 0.0
  %11412 = vmatpush1.msra.mxu0 0.0
  %11413 = vmatprep.subr.mxu0 0.0
  %11414 = vmatpush1.msra.mxu0 0.0
  %11415 = vmatprep.subr.mxu0 0.0
  %11416 = vmatpush1.msra.mxu0 0.0
  %11417 = vmatprep.subr.mxu0 0.0
  %11418 = vmatpush1.msra.mxu0 0.0
  %11419 = vmatprep.subr.mxu0 0.0
  %11420 = vmatpush1.msra.mxu0 0.0
  %11421 = vmatprep.subr.mxu0 0.0
  %11422 = vmatpush1.msra.mxu0 0.0
  %11423 = vmatprep.subr.mxu0 0.0
  %11424 = vmatpush1.msra.mxu0 0.0
  %11425 = vmatprep.subr.mxu0 0.0
  %11426 = vmatpush1.msra.mxu0 0.0
  %11427 = vmatprep.subr.mxu0 0.0
  %11428 = vmatpush1.msra.mxu0 0.0
  %11429 = vmatprep.subr.mxu0 0.0
  %11430 = vmatpush1.msra.mxu0 0.0
  %11431 = vmatprep.subr.mxu0 0.0
  %11432 = vmatpush1.msra.mxu0 0.0
  %11433 = vmatprep.mubr.f32.mxu0 0.0
  %v11434 = vand.u32 %v11366, 4294901760
  %v11435 = vsub.f32 %v11366, %v11434
  %v11436 = vand.u32 %v11435, 4294901760
  %v11437 = vsub.f32 %v11435, %v11436
  %v11438 = vand.u32 %v11437, 4294901760
  %11439 = vmatmul.mubr.f32.gmra.mrb[0].mxu0 %v11438
  %v11440 = vpop.f32.mrb[0].mxu0
  %v11441 = vadd.f32 %v11364, %v11440
  %v11442 = vpop.f32.mrb[0].mxu0
  %11443 = vdwg.mxu0
  %11444 = vmatprep.subr.mxu0 0.0
  %v11445 = vand.u32 %v17, 4294901760
  %v11446 = vsub.f32 %v17, %v11445
  %v11447 = vand.u32 %v11446, 4294901760
  %v11448 = vsub.f32 %v11446, %v11447
  %v11449 = vand.u32 %v11448, 4294901760
  %11450 = vmatpush1.msra.mxu0 %v11449
  %11451 = vmatprep.subr.mxu0 0.0
  %11452 = vmatpush1.msra.mxu0 0.0
  %11453 = vmatprep.subr.mxu0 0.0
  %11454 = vmatpush1.msra.mxu0 0.0
  %11455 = vmatprep.subr.mxu0 0.0
  %11456 = vmatpush1.msra.mxu0 0.0
  %11457 = vmatprep.subr.mxu0 0.0
  %11458 = vmatpush1.msra.mxu0 0.0
  %11459 = vmatprep.subr.mxu0 0.0
  %11460 = vmatpush1.msra.mxu0 0.0
  %11461 = vmatprep.subr.mxu0 0.0
  %11462 = vmatpush1.msra.mxu0 0.0
  %11463 = vmatprep.subr.mxu0 0.0
  %11464 = vmatpush1.msra.mxu0 0.0
  %11465 = vmatprep.subr.mxu0 0.0
  %11466 = vmatpush1.msra.mxu0 0.0
  %11467 = vmatprep.subr.mxu0 0.0
  %11468 = vmatpush1.msra.mxu0 0.0
  %11469 = vmatprep.subr.mxu0 0.0
  %11470 = vmatpush1.msra.mxu0 0.0
  %11471 = vmatprep.subr.mxu0 0.0
  %11472 = vmatpush1.msra.mxu0 0.0
  %11473 = vmatprep.subr.mxu0 0.0
  %11474 = vmatpush1.msra.mxu0 0.0
  %11475 = vmatprep.subr.mxu0 0.0
  %11476 = vmatpush1.msra.mxu0 0.0
  %11477 = vmatprep.subr.mxu0 0.0
  %11478 = vmatpush1.msra.mxu0 0.0
  %11479 = vmatprep.subr.mxu0 0.0
  %11480 = vmatpush1.msra.mxu0 0.0
  %11481 = vmatprep.subr.mxu0 0.0
  %11482 = vmatpush1.msra.mxu0 0.0
  %11483 = vmatprep.subr.mxu0 0.0
  %11484 = vmatpush1.msra.mxu0 0.0
  %11485 = vmatprep.subr.mxu0 0.0
  %11486 = vmatpush1.msra.mxu0 0.0
  %11487 = vmatprep.subr.mxu0 0.0
  %11488 = vmatpush1.msra.mxu0 0.0
  %11489 = vmatprep.subr.mxu0 0.0
  %11490 = vmatpush1.msra.mxu0 0.0
  %11491 = vmatprep.subr.mxu0 0.0
  %11492 = vmatpush1.msra.mxu0 0.0
  %11493 = vmatprep.subr.mxu0 0.0
  %11494 = vmatpush1.msra.mxu0 0.0
  %11495 = vmatprep.subr.mxu0 0.0
  %11496 = vmatpush1.msra.mxu0 0.0
  %11497 = vmatprep.subr.mxu0 0.0
  %11498 = vmatpush1.msra.mxu0 0.0
  %11499 = vmatprep.subr.mxu0 0.0
  %11500 = vmatpush1.msra.mxu0 0.0
  %11501 = vmatprep.subr.mxu0 0.0
  %11502 = vmatpush1.msra.mxu0 0.0
  %11503 = vmatprep.subr.mxu0 0.0
  %11504 = vmatpush1.msra.mxu0 0.0
  %11505 = vmatprep.subr.mxu0 0.0
  %11506 = vmatpush1.msra.mxu0 0.0
  %11507 = vmatprep.subr.mxu0 0.0
  %11508 = vmatpush1.msra.mxu0 0.0
  %11509 = vmatprep.subr.mxu0 0.0
  %11510 = vmatpush1.msra.mxu0 0.0
  %11511 = vmatprep.subr.mxu0 0.0
  %11512 = vmatpush1.msra.mxu0 0.0
  %11513 = vmatprep.mubr.f32.mxu0 0.0
  %v11514 = vand.u32 %v11366, 4294901760
  %11515 = vmatmul.mubr.f32.gmra.mrb[0].mxu0 %v11514
  %v11516 = vpop.f32.mrb[0].mxu0
  %v11517 = vadd.f32 %v11441, %v11516
  %v11518 = vpop.f32.mrb[0].mxu0
  %11519 = vdwg.mxu0
  %11520 = vmatprep.subr.mxu0 0.0
  %v11521 = vand.u32 %v17, 4294901760
  %v11522 = vsub.f32 %v17, %v11521
  %11523 = vmatpush1.msra.mxu0 %v11522
  %11524 = vmatprep.subr.mxu0 0.0
  %11525 = vmatpush1.msra.mxu0 0.0
  %11526 = vmatprep.subr.mxu0 0.0
  %11527 = vmatpush1.msra.mxu0 0.0
  %11528 = vmatprep.subr.mxu0 0.0
  %11529 = vmatpush1.msra.mxu0 0.0
  %11530 = vmatprep.subr.mxu0 0.0
  %11531 = vmatpush1.msra.mxu0 0.0
  %11532 = vmatprep.subr.mxu0 0.0
  %11533 = vmatpush1.msra.mxu0 0.0
  %11534 = vmatprep.subr.mxu0 0.0
  %11535 = vmatpush1.msra.mxu0 0.0
  %11536 = vmatprep.subr.mxu0 0.0
  %11537 = vmatpush1.msra.mxu0 0.0
  %11538 = vmatprep.subr.mxu0 0.0
  %11539 = vmatpush1.msra.mxu0 0.0
  %11540 = vmatprep.subr.mxu0 0.0
  %11541 = vmatpush1.msra.mxu0 0.0
  %11542 = vmatprep.subr.mxu0 0.0
  %11543 = vmatpush1.msra.mxu0 0.0
  %11544 = vmatprep.subr.mxu0 0.0
  %11545 = vmatpush1.msra.mxu0 0.0
  %11546 = vmatprep.subr.mxu0 0.0
  %11547 = vmatpush1.msra.mxu0 0.0
  %11548 = vmatprep.subr.mxu0 0.0
  %11549 = vmatpush1.msra.mxu0 0.0
  %11550 = vmatprep.subr.mxu0 0.0
  %11551 = vmatpush1.msra.mxu0 0.0
  %11552 = vmatprep.subr.mxu0 0.0
  %11553 = vmatpush1.msra.mxu0 0.0
  %11554 = vmatprep.subr.mxu0 0.0
  %11555 = vmatpush1.msra.mxu0 0.0
  %11556 = vmatprep.subr.mxu0 0.0
  %11557 = vmatpush1.msra.mxu0 0.0
  %11558 = vmatprep.subr.mxu0 0.0
  %11559 = vmatpush1.msra.mxu0 0.0
  %11560 = vmatprep.subr.mxu0 0.0
  %11561 = vmatpush1.msra.mxu0 0.0
  %11562 = vmatprep.subr.mxu0 0.0
  %11563 = vmatpush1.msra.mxu0 0.0
  %11564 = vmatprep.subr.mxu0 0.0
  %11565 = vmatpush1.msra.mxu0 0.0
  %11566 = vmatprep.subr.mxu0 0.0
  %11567 = vmatpush1.msra.mxu0 0.0
  %11568 = vmatprep.subr.mxu0 0.0
  %11569 = vmatpush1.msra.mxu0 0.0
  %11570 = vmatprep.subr.mxu0 0.0
  %11571 = vmatpush1.msra.mxu0 0.0
  %11572 = vmatprep.subr.mxu0 0.0
  %11573 = vmatpush1.msra.mxu0 0.0
  %11574 = vmatprep.subr.mxu0 0.0
  %11575 = vmatpush1.msra.mxu0 0.0
  %11576 = vmatprep.subr.mxu0 0.0
  %11577 = vmatpush1.msra.mxu0 0.0
  %11578 = vmatprep.subr.mxu0 0.0
  %11579 = vmatpush1.msra.mxu0 0.0
  %11580 = vmatprep.subr.mxu0 0.0
  %11581 = vmatpush1.msra.mxu0 0.0
  %11582 = vmatprep.subr.mxu0 0.0
  %11583 = vmatpush1.msra.mxu0 0.0
  %11584 = vmatprep.subr.mxu0 0.0
  %11585 = vmatpush1.msra.mxu0 0.0
  %11586 = vmatprep.mubr.f32.mxu0 0.0
  %v11587 = vand.u32 %v11366, 4294901760
  %v11588 = vsub.f32 %v11366, %v11587
  %11589 = vmatmul.mubr.f32.gmra.mrb[0].mxu0 %v11588
  %v11590 = vpop.f32.mrb[0].mxu0
  %v11591 = vadd.f32 %v11517, %v11590
  %v11592 = vpop.f32.mrb[0].mxu0
  %11593 = vdwg.mxu0
  %11594 = vmatprep.subr.mxu0 0.0
  %v11595 = vand.u32 %v17, 4294901760
  %11596 = vmatpush1.msra.mxu0 %v11595
  %11597 = vmatprep.subr.mxu0 0.0
  %11598 = vmatpush1.msra.mxu0 0.0
  %11599 = vmatprep.subr.mxu0 0.0
  %11600 = vmatpush1.msra.mxu0 0.0
  %11601 = vmatprep.subr.mxu0 0.0
  %11602 = vmatpush1.msra.mxu0 0.0
  %11603 = vmatprep.subr.mxu0 0.0
  %11604 = vmatpush1.msra.mxu0 0.0
  %11605 = vmatprep.subr.mxu0 0.0
  %11606 = vmatpush1.msra.mxu0 0.0
  %11607 = vmatprep.subr.mxu0 0.0
  %11608 = vmatpush1.msra.mxu0 0.0
  %11609 = vmatprep.subr.mxu0 0.0
  %11610 = vmatpush1.msra.mxu0 0.0
  %11611 = vmatprep.subr.mxu0 0.0
  %11612 = vmatpush1.msra.mxu0 0.0
  %11613 = vmatprep.subr.mxu0 0.0
  %11614 = vmatpush1.msra.mxu0 0.0
  %11615 = vmatprep.subr.mxu0 0.0
  %11616 = vmatpush1.msra.mxu0 0.0
  %11617 = vmatprep.subr.mxu0 0.0
  %11618 = vmatpush1.msra.mxu0 0.0
  %11619 = vmatprep.subr.mxu0 0.0
  %11620 = vmatpush1.msra.mxu0 0.0
  %11621 = vmatprep.subr.mxu0 0.0
  %11622 = vmatpush1.msra.mxu0 0.0
  %11623 = vmatprep.subr.mxu0 0.0
  %11624 = vmatpush1.msra.mxu0 0.0
  %11625 = vmatprep.subr.mxu0 0.0
  %11626 = vmatpush1.msra.mxu0 0.0
  %11627 = vmatprep.subr.mxu0 0.0
  %11628 = vmatpush1.msra.mxu0 0.0
  %11629 = vmatprep.subr.mxu0 0.0
  %11630 = vmatpush1.msra.mxu0 0.0
  %11631 = vmatprep.subr.mxu0 0.0
  %11632 = vmatpush1.msra.mxu0 0.0
  %11633 = vmatprep.subr.mxu0 0.0
  %11634 = vmatpush1.msra.mxu0 0.0
  %11635 = vmatprep.subr.mxu0 0.0
  %11636 = vmatpush1.msra.mxu0 0.0
  %11637 = vmatprep.subr.mxu0 0.0
  %11638 = vmatpush1.msra.mxu0 0.0
  %11639 = vmatprep.subr.mxu0 0.0
  %11640 = vmatpush1.msra.mxu0 0.0
  %11641 = vmatprep.subr.mxu0 0.0
  %11642 = vmatpush1.msra.mxu0 0.0
  %11643 = vmatprep.subr.mxu0 0.0
  %11644 = vmatpush1.msra.mxu0 0.0
  %11645 = vmatprep.subr.mxu0 0.0
  %11646 = vmatpush1.msra.mxu0 0.0
  %11647 = vmatprep.subr.mxu0 0.0
  %11648 = vmatpush1.msra.mxu0 0.0
  %11649 = vmatprep.subr.mxu0 0.0
  %11650 = vmatpush1.msra.mxu0 0.0
  %11651 = vmatprep.subr.mxu0 0.0
  %11652 = vmatpush1.msra.mxu0 0.0
  %11653 = vmatprep.subr.mxu0 0.0
  %11654 = vmatpush1.msra.mxu0 0.0
  %11655 = vmatprep.subr.mxu0 0.0
  %11656 = vmatpush1.msra.mxu0 0.0
  %11657 = vmatprep.subr.mxu0 0.0
  %11658 = vmatpush1.msra.mxu0 0.0
  %11659 = vmatprep.mubr.f32.mxu0 0.0
  %v11660 = vand.u32 %v11366, 4294901760
  %v11661 = vsub.f32 %v11366, %v11660
  %v11662 = vand.u32 %v11661, 4294901760
  %11663 = vmatmul.mubr.f32.gmra.mrb[0].mxu0 %v11662
  %v11664 = vpop.f32.mrb[0].mxu0
  %v11665 = vadd.f32 %v11591, %v11664
  %v11666 = vpop.f32.mrb[0].mxu0
  %11667 = vdwg.mxu0
  %11668 = vmatprep.subr.mxu0 0.0
  %v11669 = vand.u32 %v17, 4294901760
  %v11670 = vsub.f32 %v17, %v11669
  %v11671 = vand.u32 %v11670, 4294901760
  %11672 = vmatpush1.msra.mxu0 %v11671
  %11673 = vmatprep.subr.mxu0 0.0
  %11674 = vmatpush1.msra.mxu0 0.0
  %11675 = vmatprep.subr.mxu0 0.0
  %11676 = vmatpush1.msra.mxu0 0.0
  %11677 = vmatprep.subr.mxu0 0.0
  %11678 = vmatpush1.msra.mxu0 0.0
  %11679 = vmatprep.subr.mxu0 0.0
  %11680 = vmatpush1.msra.mxu0 0.0
  %11681 = vmatprep.subr.mxu0 0.0
  %11682 = vmatpush1.msra.mxu0 0.0
  %11683 = vmatprep.subr.mxu0 0.0
  %11684 = vmatpush1.msra.mxu0 0.0
  %11685 = vmatprep.subr.mxu0 0.0
  %11686 = vmatpush1.msra.mxu0 0.0
  %11687 = vmatprep.subr.mxu0 0.0
  %11688 = vmatpush1.msra.mxu0 0.0
  %11689 = vmatprep.subr.mxu0 0.0
  %11690 = vmatpush1.msra.mxu0 0.0
  %11691 = vmatprep.subr.mxu0 0.0
  %11692 = vmatpush1.msra.mxu0 0.0
  %11693 = vmatprep.subr.mxu0 0.0
  %11694 = vmatpush1.msra.mxu0 0.0
  %11695 = vmatprep.subr.mxu0 0.0
  %11696 = vmatpush1.msra.mxu0 0.0
  %11697 = vmatprep.subr.mxu0 0.0
  %11698 = vmatpush1.msra.mxu0 0.0
  %11699 = vmatprep.subr.mxu0 0.0
  %11700 = vmatpush1.msra.mxu0 0.0
  %11701 = vmatprep.subr.mxu0 0.0
  %11702 = vmatpush1.msra.mxu0 0.0
  %11703 = vmatprep.subr.mxu0 0.0
  %11704 = vmatpush1.msra.mxu0 0.0
  %11705 = vmatprep.subr.mxu0 0.0
  %11706 = vmatpush1.msra.mxu0 0.0
  %11707 = vmatprep.subr.mxu0 0.0
  %11708 = vmatpush1.msra.mxu0 0.0
  %11709 = vmatprep.subr.mxu0 0.0
  %11710 = vmatpush1.msra.mxu0 0.0
  %11711 = vmatprep.subr.mxu0 0.0
  %11712 = vmatpush1.msra.mxu0 0.0
  %11713 = vmatprep.subr.mxu0 0.0
  %11714 = vmatpush1.msra.mxu0 0.0
  %11715 = vmatprep.subr.mxu0 0.0
  %11716 = vmatpush1.msra.mxu0 0.0
  %11717 = vmatprep.subr.mxu0 0.0
  %11718 = vmatpush1.msra.mxu0 0.0
  %11719 = vmatprep.subr.mxu0 0.0
  %11720 = vmatpush1.msra.mxu0 0.0
  %11721 = vmatprep.subr.mxu0 0.0
  %11722 = vmatpush1.msra.mxu0 0.0
  %11723 = vmatprep.subr.mxu0 0.0
  %11724 = vmatpush1.msra.mxu0 0.0
  %11725 = vmatprep.subr.mxu0 0.0
  %11726 = vmatpush1.msra.mxu0 0.0
  %11727 = vmatprep.subr.mxu0 0.0
  %11728 = vmatpush1.msra.mxu0 0.0
  %11729 = vmatprep.subr.mxu0 0.0
  %11730 = vmatpush1.msra.mxu0 0.0
  %11731 = vmatprep.subr.mxu0 0.0
  %11732 = vmatpush1.msra.mxu0 0.0
  %11733 = vmatprep.subr.mxu0 0.0
  %11734 = vmatpush1.msra.mxu0 0.0
  %11735 = vmatprep.mubr.f32.mxu0 0.0
  %v11736 = vand.u32 %v11366, 4294901760
  %11737 = vmatmul.mubr.f32.gmra.mrb[0].mxu0 %v11736
  %v11738 = vpop.f32.mrb[0].mxu0
  %v11739 = vadd.f32 %v11665, %v11738
  %v11740 = vpop.f32.mrb[0].mxu0
  %11741 = vdwg.mxu0
  %11742 = vmatprep.subr.mxu0 0.0
  %v11743 = vand.u32 %v17, 4294901760
  %11744 = vmatpush1.msra.mxu0 %v11743
  %11745 = vmatprep.subr.mxu0 0.0
  %11746 = vmatpush1.msra.mxu0 0.0
  %11747 = vmatprep.subr.mxu0 0.0
  %11748 = vmatpush1.msra.mxu0 0.0
  %11749 = vmatprep.subr.mxu0 0.0
  %11750 = vmatpush1.msra.mxu0 0.0
  %11751 = vmatprep.subr.mxu0 0.0
  %11752 = vmatpush1.msra.mxu0 0.0
  %11753 = vmatprep.subr.mxu0 0.0
  %11754 = vmatpush1.msra.mxu0 0.0
  %11755 = vmatprep.subr.mxu0 0.0
  %11756 = vmatpush1.msra.mxu0 0.0
  %11757 = vmatprep.subr.mxu0 0.0
  %11758 = vmatpush1.msra.mxu0 0.0
  %11759 = vmatprep.subr.mxu0 0.0
  %11760 = vmatpush1.msra.mxu0 0.0
  %11761 = vmatprep.subr.mxu0 0.0
  %11762 = vmatpush1.msra.mxu0 0.0
  %11763 = vmatprep.subr.mxu0 0.0
  %11764 = vmatpush1.msra.mxu0 0.0
  %11765 = vmatprep.subr.mxu0 0.0
  %11766 = vmatpush1.msra.mxu0 0.0
  %11767 = vmatprep.subr.mxu0 0.0
  %11768 = vmatpush1.msra.mxu0 0.0
  %11769 = vmatprep.subr.mxu0 0.0
  %11770 = vmatpush1.msra.mxu0 0.0
  %11771 = vmatprep.subr.mxu0 0.0
  %11772 = vmatpush1.msra.mxu0 0.0
  %11773 = vmatprep.subr.mxu0 0.0
  %11774 = vmatpush1.msra.mxu0 0.0
  %11775 = vmatprep.subr.mxu0 0.0
  %11776 = vmatpush1.msra.mxu0 0.0
  %11777 = vmatprep.subr.mxu0 0.0
  %11778 = vmatpush1.msra.mxu0 0.0
  %11779 = vmatprep.subr.mxu0 0.0
  %11780 = vmatpush1.msra.mxu0 0.0
  %11781 = vmatprep.subr.mxu0 0.0
  %11782 = vmatpush1.msra.mxu0 0.0
  %11783 = vmatprep.subr.mxu0 0.0
  %11784 = vmatpush1.msra.mxu0 0.0
  %11785 = vmatprep.subr.mxu0 0.0
  %11786 = vmatpush1.msra.mxu0 0.0
  %11787 = vmatprep.subr.mxu0 0.0
  %11788 = vmatpush1.msra.mxu0 0.0
  %11789 = vmatprep.subr.mxu0 0.0
  %11790 = vmatpush1.msra.mxu0 0.0
  %11791 = vmatprep.subr.mxu0 0.0
  %11792 = vmatpush1.msra.mxu0 0.0
  %11793 = vmatprep.subr.mxu0 0.0
  %11794 = vmatpush1.msra.mxu0 0.0
  %11795 = vmatprep.subr.mxu0 0.0
  %11796 = vmatpush1.msra.mxu0 0.0
  %11797 = vmatprep.subr.mxu0 0.0
  %11798 = vmatpush1.msra.mxu0 0.0
  %11799 = vmatprep.subr.mxu0 0.0
  %11800 = vmatpush1.msra.mxu0 0.0
  %11801 = vmatprep.subr.mxu0 0.0
  %11802 = vmatpush1.msra.mxu0 0.0
  %11803 = vmatprep.subr.mxu0 0.0
  %11804 = vmatpush1.msra.mxu0 0.0
  %11805 = vmatprep.subr.mxu0 0.0
  %11806 = vmatpush1.msra.mxu0 0.0
  %11807 = vmatprep.mubr.f32.mxu0 0.0
  %v11808 = vand.u32 %v11366, 4294901760
  %11809 = vmatmul.mubr.f32.gmra.mrb[0].mxu0 %v11808
  %v11810 = vpop.f32.mrb[0].mxu0
  %v11811 = vadd.f32 %v11739, %v11810
  %v11812 = vpop.f32.mrb[0].mxu0
  %11813 = vdwg.mxu0
  %v11814 = vmul.f32 %v11811, 0.1
  %v11815 = vadd.f32 %v11356, %v11814
  %11817 = vrot.lane.b32.xlu0 %v11815, 80
  %v11818 = vpop.permute.xlu0 %11817
  %vm11820 = vcmask 713344
  %11821 = vst.msk [vmem:[%s2] sm:$0x1] %vm11820, %v11818
  %11822 = vrot.lane.b32.xlu0 %v9061, 80
  %v11823 = vpop.permute.xlu0 %11822
  %v11825 = vsel %vm1795, %v11815, 0
  %11827 = vmatprep.subr.mxu0 0.0
  %v11828 = vand.u32 %v17, 4294901760
  %11829 = vmatpush1.msra.mxu0 %v11828
  %11830 = vmatprep.subr.mxu0 0.0
  %11831 = vmatpush1.msra.mxu0 0.0
  %11832 = vmatprep.subr.mxu0 0.0
  %11833 = vmatpush1.msra.mxu0 0.0
  %11834 = vmatprep.subr.mxu0 0.0
  %11835 = vmatpush1.msra.mxu0 0.0
  %11836 = vmatprep.subr.mxu0 0.0
  %11837 = vmatpush1.msra.mxu0 0.0
  %11838 = vmatprep.subr.mxu0 0.0
  %11839 = vmatpush1.msra.mxu0 0.0
  %11840 = vmatprep.subr.mxu0 0.0
  %11841 = vmatpush1.msra.mxu0 0.0
  %11842 = vmatprep.subr.mxu0 0.0
  %11843 = vmatpush1.msra.mxu0 0.0
  %11844 = vmatprep.subr.mxu0 0.0
  %11845 = vmatpush1.msra.mxu0 0.0
  %11846 = vmatprep.subr.mxu0 0.0
  %11847 = vmatpush1.msra.mxu0 0.0
  %11848 = vmatprep.subr.mxu0 0.0
  %11849 = vmatpush1.msra.mxu0 0.0
  %11850 = vmatprep.subr.mxu0 0.0
  %11851 = vmatpush1.msra.mxu0 0.0
  %11852 = vmatprep.subr.mxu0 0.0
  %11853 = vmatpush1.msra.mxu0 0.0
  %11854 = vmatprep.subr.mxu0 0.0
  %11855 = vmatpush1.msra.mxu0 0.0
  %11856 = vmatprep.subr.mxu0 0.0
  %11857 = vmatpush1.msra.mxu0 0.0
  %11858 = vmatprep.subr.mxu0 0.0
  %11859 = vmatpush1.msra.mxu0 0.0
  %11860 = vmatprep.subr.mxu0 0.0
  %11861 = vmatpush1.msra.mxu0 0.0
  %11862 = vmatprep.subr.mxu0 0.0
  %11863 = vmatpush1.msra.mxu0 0.0
  %11864 = vmatprep.subr.mxu0 0.0
  %11865 = vmatpush1.msra.mxu0 0.0
  %11866 = vmatprep.subr.mxu0 0.0
  %11867 = vmatpush1.msra.mxu0 0.0
  %11868 = vmatprep.subr.mxu0 0.0
  %11869 = vmatpush1.msra.mxu0 0.0
  %11870 = vmatprep.subr.mxu0 0.0
  %11871 = vmatpush1.msra.mxu0 0.0
  %11872 = vmatprep.subr.mxu0 0.0
  %11873 = vmatpush1.msra.mxu0 0.0
  %11874 = vmatprep.subr.mxu0 0.0
  %11875 = vmatpush1.msra.mxu0 0.0
  %11876 = vmatprep.subr.mxu0 0.0
  %11877 = vmatpush1.msra.mxu0 0.0
  %11878 = vmatprep.subr.mxu0 0.0
  %11879 = vmatpush1.msra.mxu0 0.0
  %11880 = vmatprep.subr.mxu0 0.0
  %11881 = vmatpush1.msra.mxu0 0.0
  %11882 = vmatprep.subr.mxu0 0.0
  %11883 = vmatpush1.msra.mxu0 0.0
  %11884 = vmatprep.subr.mxu0 0.0
  %11885 = vmatpush1.msra.mxu0 0.0
  %11886 = vmatprep.subr.mxu0 0.0
  %11887 = vmatpush1.msra.mxu0 0.0
  %11888 = vmatprep.subr.mxu0 0.0
  %11889 = vmatpush1.msra.mxu0 0.0
  %11890 = vmatprep.subr.mxu0 0.0
  %11891 = vmatpush1.msra.mxu0 0.0
  %11892 = vmatprep.mubr.f32.mxu0 0.0
  %v11893 = vand.u32 %v11825, 4294901760
  %v11894 = vsub.f32 %v11825, %v11893
  %v11895 = vand.u32 %v11894, 4294901760
  %v11896 = vsub.f32 %v11894, %v11895
  %v11897 = vand.u32 %v11896, 4294901760
  %11898 = vmatmul.mubr.f32.gmra.mrb[0].mxu0 %v11897
  %v11899 = vpop.f32.mrb[0].mxu0
  %v11900 = vadd.f32 %v11823, %v11899
  %v11901 = vpop.f32.mrb[0].mxu0
  %11902 = vdwg.mxu0
  %11903 = vmatprep.subr.mxu0 0.0
  %v11904 = vand.u32 %v17, 4294901760
  %v11905 = vsub.f32 %v17, %v11904
  %v11906 = vand.u32 %v11905, 4294901760
  %v11907 = vsub.f32 %v11905, %v11906
  %v11908 = vand.u32 %v11907, 4294901760
  %11909 = vmatpush1.msra.mxu0 %v11908
  %11910 = vmatprep.subr.mxu0 0.0
  %11911 = vmatpush1.msra.mxu0 0.0
  %11912 = vmatprep.subr.mxu0 0.0
  %11913 = vmatpush1.msra.mxu0 0.0
  %11914 = vmatprep.subr.mxu0 0.0
  %11915 = vmatpush1.msra.mxu0 0.0
  %11916 = vmatprep.subr.mxu0 0.0
  %11917 = vmatpush1.msra.mxu0 0.0
  %11918 = vmatprep.subr.mxu0 0.0
  %11919 = vmatpush1.msra.mxu0 0.0
  %11920 = vmatprep.subr.mxu0 0.0
  %11921 = vmatpush1.msra.mxu0 0.0
  %11922 = vmatprep.subr.mxu0 0.0
  %11923 = vmatpush1.msra.mxu0 0.0
  %11924 = vmatprep.subr.mxu0 0.0
  %11925 = vmatpush1.msra.mxu0 0.0
  %11926 = vmatprep.subr.mxu0 0.0
  %11927 = vmatpush1.msra.mxu0 0.0
  %11928 = vmatprep.subr.mxu0 0.0
  %11929 = vmatpush1.msra.mxu0 0.0
  %11930 = vmatprep.subr.mxu0 0.0
  %11931 = vmatpush1.msra.mxu0 0.0
  %11932 = vmatprep.subr.mxu0 0.0
  %11933 = vmatpush1.msra.mxu0 0.0
  %11934 = vmatprep.subr.mxu0 0.0
  %11935 = vmatpush1.msra.mxu0 0.0
  %11936 = vmatprep.subr.mxu0 0.0
  %11937 = vmatpush1.msra.mxu0 0.0
  %11938 = vmatprep.subr.mxu0 0.0
  %11939 = vmatpush1.msra.mxu0 0.0
  %11940 = vmatprep.subr.mxu0 0.0
  %11941 = vmatpush1.msra.mxu0 0.0
  %11942 = vmatprep.subr.mxu0 0.0
  %11943 = vmatpush1.msra.mxu0 0.0
  %11944 = vmatprep.subr.mxu0 0.0
  %11945 = vmatpush1.msra.mxu0 0.0
  %11946 = vmatprep.subr.mxu0 0.0
  %11947 = vmatpush1.msra.mxu0 0.0
  %11948 = vmatprep.subr.mxu0 0.0
  %11949 = vmatpush1.msra.mxu0 0.0
  %11950 = vmatprep.subr.mxu0 0.0
  %11951 = vmatpush1.msra.mxu0 0.0
  %11952 = vmatprep.subr.mxu0 0.0
  %11953 = vmatpush1.msra.mxu0 0.0
  %11954 = vmatprep.subr.mxu0 0.0
  %11955 = vmatpush1.msra.mxu0 0.0
  %11956 = vmatprep.subr.mxu0 0.0
  %11957 = vmatpush1.msra.mxu0 0.0
  %11958 = vmatprep.subr.mxu0 0.0
  %11959 = vmatpush1.msra.mxu0 0.0
  %11960 = vmatprep.subr.mxu0 0.0
  %11961 = vmatpush1.msra.mxu0 0.0
  %11962 = vmatprep.subr.mxu0 0.0
  %11963 = vmatpush1.msra.mxu0 0.0
  %11964 = vmatprep.subr.mxu0 0.0
  %11965 = vmatpush1.msra.mxu0 0.0
  %11966 = vmatprep.subr.mxu0 0.0
  %11967 = vmatpush1.msra.mxu0 0.0
  %11968 = vmatprep.subr.mxu0 0.0
  %11969 = vmatpush1.msra.mxu0 0.0
  %11970 = vmatprep.subr.mxu0 0.0
  %11971 = vmatpush1.msra.mxu0 0.0
  %11972 = vmatprep.mubr.f32.mxu0 0.0
  %v11973 = vand.u32 %v11825, 4294901760
  %11974 = vmatmul.mubr.f32.gmra.mrb[0].mxu0 %v11973
  %v11975 = vpop.f32.mrb[0].mxu0
  %v11976 = vadd.f32 %v11900, %v11975
  %v11977 = vpop.f32.mrb[0].mxu0
  %11978 = vdwg.mxu0
  %11979 = vmatprep.subr.mxu0 0.0
  %v11980 = vand.u32 %v17, 4294901760
  %v11981 = vsub.f32 %v17, %v11980
  %11982 = vmatpush1.msra.mxu0 %v11981
  %11983 = vmatprep.subr.mxu0 0.0
  %11984 = vmatpush1.msra.mxu0 0.0
  %11985 = vmatprep.subr.mxu0 0.0
  %11986 = vmatpush1.msra.mxu0 0.0
  %11987 = vmatprep.subr.mxu0 0.0
  %11988 = vmatpush1.msra.mxu0 0.0
  %11989 = vmatprep.subr.mxu0 0.0
  %11990 = vmatpush1.msra.mxu0 0.0
  %11991 = vmatprep.subr.mxu0 0.0
  %11992 = vmatpush1.msra.mxu0 0.0
  %11993 = vmatprep.subr.mxu0 0.0
  %11994 = vmatpush1.msra.mxu0 0.0
  %11995 = vmatprep.subr.mxu0 0.0
  %11996 = vmatpush1.msra.mxu0 0.0
  %11997 = vmatprep.subr.mxu0 0.0
  %11998 = vmatpush1.msra.mxu0 0.0
  %11999 = vmatprep.subr.mxu0 0.0
  %12000 = vmatpush1.msra.mxu0 0.0
  %12001 = vmatprep.subr.mxu0 0.0
  %12002 = vmatpush1.msra.mxu0 0.0
  %12003 = vmatprep.subr.mxu0 0.0
  %12004 = vmatpush1.msra.mxu0 0.0
  %12005 = vmatprep.subr.mxu0 0.0
  %12006 = vmatpush1.msra.mxu0 0.0
  %12007 = vmatprep.subr.mxu0 0.0
  %12008 = vmatpush1.msra.mxu0 0.0
  %12009 = vmatprep.subr.mxu0 0.0
  %12010 = vmatpush1.msra.mxu0 0.0
  %12011 = vmatprep.subr.mxu0 0.0
  %12012 = vmatpush1.msra.mxu0 0.0
  %12013 = vmatprep.subr.mxu0 0.0
  %12014 = vmatpush1.msra.mxu0 0.0
  %12015 = vmatprep.subr.mxu0 0.0
  %12016 = vmatpush1.msra.mxu0 0.0
  %12017 = vmatprep.subr.mxu0 0.0
  %12018 = vmatpush1.msra.mxu0 0.0
  %12019 = vmatprep.subr.mxu0 0.0
  %12020 = vmatpush1.msra.mxu0 0.0
  %12021 = vmatprep.subr.mxu0 0.0
  %12022 = vmatpush1.msra.mxu0 0.0
  %12023 = vmatprep.subr.mxu0 0.0
  %12024 = vmatpush1.msra.mxu0 0.0
  %12025 = vmatprep.subr.mxu0 0.0
  %12026 = vmatpush1.msra.mxu0 0.0
  %12027 = vmatprep.subr.mxu0 0.0
  %12028 = vmatpush1.msra.mxu0 0.0
  %12029 = vmatprep.subr.mxu0 0.0
  %12030 = vmatpush1.msra.mxu0 0.0
  %12031 = vmatprep.subr.mxu0 0.0
  %12032 = vmatpush1.msra.mxu0 0.0
  %12033 = vmatprep.subr.mxu0 0.0
  %12034 = vmatpush1.msra.mxu0 0.0
  %12035 = vmatprep.subr.mxu0 0.0
  %12036 = vmatpush1.msra.mxu0 0.0
  %12037 = vmatprep.subr.mxu0 0.0
  %12038 = vmatpush1.msra.mxu0 0.0
  %12039 = vmatprep.subr.mxu0 0.0
  %12040 = vmatpush1.msra.mxu0 0.0
  %12041 = vmatprep.subr.mxu0 0.0
  %12042 = vmatpush1.msra.mxu0 0.0
  %12043 = vmatprep.subr.mxu0 0.0
  %12044 = vmatpush1.msra.mxu0 0.0
  %12045 = vmatprep.mubr.f32.mxu0 0.0
  %v12046 = vand.u32 %v11825, 4294901760
  %v12047 = vsub.f32 %v11825, %v12046
  %12048 = vmatmul.mubr.f32.gmra.mrb[0].mxu0 %v12047
  %v12049 = vpop.f32.mrb[0].mxu0
  %v12050 = vadd.f32 %v11976, %v12049
  %v12051 = vpop.f32.mrb[0].mxu0
  %12052 = vdwg.mxu0
  %12053 = vmatprep.subr.mxu0 0.0
  %v12054 = vand.u32 %v17, 4294901760
  %12055 = vmatpush1.msra.mxu0 %v12054
  %12056 = vmatprep.subr.mxu0 0.0
  %12057 = vmatpush1.msra.mxu0 0.0
  %12058 = vmatprep.subr.mxu0 0.0
  %12059 = vmatpush1.msra.mxu0 0.0
  %12060 = vmatprep.subr.mxu0 0.0
  %12061 = vmatpush1.msra.mxu0 0.0
  %12062 = vmatprep.subr.mxu0 0.0
  %12063 = vmatpush1.msra.mxu0 0.0
  %12064 = vmatprep.subr.mxu0 0.0
  %12065 = vmatpush1.msra.mxu0 0.0
  %12066 = vmatprep.subr.mxu0 0.0
  %12067 = vmatpush1.msra.mxu0 0.0
  %12068 = vmatprep.subr.mxu0 0.0
  %12069 = vmatpush1.msra.mxu0 0.0
  %12070 = vmatprep.subr.mxu0 0.0
  %12071 = vmatpush1.msra.mxu0 0.0
  %12072 = vmatprep.subr.mxu0 0.0
  %12073 = vmatpush1.msra.mxu0 0.0
  %12074 = vmatprep.subr.mxu0 0.0
  %12075 = vmatpush1.msra.mxu0 0.0
  %12076 = vmatprep.subr.mxu0 0.0
  %12077 = vmatpush1.msra.mxu0 0.0
  %12078 = vmatprep.subr.mxu0 0.0
  %12079 = vmatpush1.msra.mxu0 0.0
  %12080 = vmatprep.subr.mxu0 0.0
  %12081 = vmatpush1.msra.mxu0 0.0
  %12082 = vmatprep.subr.mxu0 0.0
  %12083 = vmatpush1.msra.mxu0 0.0
  %12084 = vmatprep.subr.mxu0 0.0
  %12085 = vmatpush1.msra.mxu0 0.0
  %12086 = vmatprep.subr.mxu0 0.0
  %12087 = vmatpush1.msra.mxu0 0.0
  %12088 = vmatprep.subr.mxu0 0.0
  %12089 = vmatpush1.msra.mxu0 0.0
  %12090 = vmatprep.subr.mxu0 0.0
  %12091 = vmatpush1.msra.mxu0 0.0
  %12092 = vmatprep.subr.mxu0 0.0
  %12093 = vmatpush1.msra.mxu0 0.0
  %12094 = vmatprep.subr.mxu0 0.0
  %12095 = vmatpush1.msra.mxu0 0.0
  %12096 = vmatprep.subr.mxu0 0.0
  %12097 = vmatpush1.msra.mxu0 0.0
  %12098 = vmatprep.subr.mxu0 0.0
  %12099 = vmatpush1.msra.mxu0 0.0
  %12100 = vmatprep.subr.mxu0 0.0
  %12101 = vmatpush1.msra.mxu0 0.0
  %12102 = vmatprep.subr.mxu0 0.0
  %12103 = vmatpush1.msra.mxu0 0.0
  %12104 = vmatprep.subr.mxu0 0.0
  %12105 = vmatpush1.msra.mxu0 0.0
  %12106 = vmatprep.subr.mxu0 0.0
  %12107 = vmatpush1.msra.mxu0 0.0
  %12108 = vmatprep.subr.mxu0 0.0
  %12109 = vmatpush1.msra.mxu0 0.0
  %12110 = vmatprep.subr.mxu0 0.0
  %12111 = vmatpush1.msra.mxu0 0.0
  %12112 = vmatprep.subr.mxu0 0.0
  %12113 = vmatpush1.msra.mxu0 0.0
  %12114 = vmatprep.subr.mxu0 0.0
  %12115 = vmatpush1.msra.mxu0 0.0
  %12116 = vmatprep.subr.mxu0 0.0
  %12117 = vmatpush1.msra.mxu0 0.0
  %12118 = vmatprep.mubr.f32.mxu0 0.0
  %v12119 = vand.u32 %v11825, 4294901760
  %v12120 = vsub.f32 %v11825, %v12119
  %v12121 = vand.u32 %v12120, 4294901760
  %12122 = vmatmul.mubr.f32.gmra.mrb[0].mxu0 %v12121
  %v12123 = vpop.f32.mrb[0].mxu0
  %v12124 = vadd.f32 %v12050, %v12123
  %v12125 = vpop.f32.mrb[0].mxu0
  %12126 = vdwg.mxu0
  %12127 = vmatprep.subr.mxu0 0.0
  %v12128 = vand.u32 %v17, 4294901760
  %v12129 = vsub.f32 %v17, %v12128
  %v12130 = vand.u32 %v12129, 4294901760
  %12131 = vmatpush1.msra.mxu0 %v12130
  %12132 = vmatprep.subr.mxu0 0.0
  %12133 = vmatpush1.msra.mxu0 0.0
  %12134 = vmatprep.subr.mxu0 0.0
  %12135 = vmatpush1.msra.mxu0 0.0
  %12136 = vmatprep.subr.mxu0 0.0
  %12137 = vmatpush1.msra.mxu0 0.0
  %12138 = vmatprep.subr.mxu0 0.0
  %12139 = vmatpush1.msra.mxu0 0.0
  %12140 = vmatprep.subr.mxu0 0.0
  %12141 = vmatpush1.msra.mxu0 0.0
  %12142 = vmatprep.subr.mxu0 0.0
  %12143 = vmatpush1.msra.mxu0 0.0
  %12144 = vmatprep.subr.mxu0 0.0
  %12145 = vmatpush1.msra.mxu0 0.0
  %12146 = vmatprep.subr.mxu0 0.0
  %12147 = vmatpush1.msra.mxu0 0.0
  %12148 = vmatprep.subr.mxu0 0.0
  %12149 = vmatpush1.msra.mxu0 0.0
  %12150 = vmatprep.subr.mxu0 0.0
  %12151 = vmatpush1.msra.mxu0 0.0
  %12152 = vmatprep.subr.mxu0 0.0
  %12153 = vmatpush1.msra.mxu0 0.0
  %12154 = vmatprep.subr.mxu0 0.0
  %12155 = vmatpush1.msra.mxu0 0.0
  %12156 = vmatprep.subr.mxu0 0.0
  %12157 = vmatpush1.msra.mxu0 0.0
  %12158 = vmatprep.subr.mxu0 0.0
  %12159 = vmatpush1.msra.mxu0 0.0
  %12160 = vmatprep.subr.mxu0 0.0
  %12161 = vmatpush1.msra.mxu0 0.0
  %12162 = vmatprep.subr.mxu0 0.0
  %12163 = vmatpush1.msra.mxu0 0.0
  %12164 = vmatprep.subr.mxu0 0.0
  %12165 = vmatpush1.msra.mxu0 0.0
  %12166 = vmatprep.subr.mxu0 0.0
  %12167 = vmatpush1.msra.mxu0 0.0
  %12168 = vmatprep.subr.mxu0 0.0
  %12169 = vmatpush1.msra.mxu0 0.0
  %12170 = vmatprep.subr.mxu0 0.0
  %12171 = vmatpush1.msra.mxu0 0.0
  %12172 = vmatprep.subr.mxu0 0.0
  %12173 = vmatpush1.msra.mxu0 0.0
  %12174 = vmatprep.subr.mxu0 0.0
  %12175 = vmatpush1.msra.mxu0 0.0
  %12176 = vmatprep.subr.mxu0 0.0
  %12177 = vmatpush1.msra.mxu0 0.0
  %12178 = vmatprep.subr.mxu0 0.0
  %12179 = vmatpush1.msra.mxu0 0.0
  %12180 = vmatprep.subr.mxu0 0.0
  %12181 = vmatpush1.msra.mxu0 0.0
  %12182 = vmatprep.subr.mxu0 0.0
  %12183 = vmatpush1.msra.mxu0 0.0
  %12184 = vmatprep.subr.mxu0 0.0
  %12185 = vmatpush1.msra.mxu0 0.0
  %12186 = vmatprep.subr.mxu0 0.0
  %12187 = vmatpush1.msra.mxu0 0.0
  %12188 = vmatprep.subr.mxu0 0.0
  %12189 = vmatpush1.msra.mxu0 0.0
  %12190 = vmatprep.subr.mxu0 0.0
  %12191 = vmatpush1.msra.mxu0 0.0
  %12192 = vmatprep.subr.mxu0 0.0
  %12193 = vmatpush1.msra.mxu0 0.0
  %12194 = vmatprep.mubr.f32.mxu0 0.0
  %v12195 = vand.u32 %v11825, 4294901760
  %12196 = vmatmul.mubr.f32.gmra.mrb[0].mxu0 %v12195
  %v12197 = vpop.f32.mrb[0].mxu0
  %v12198 = vadd.f32 %v12124, %v12197
  %v12199 = vpop.f32.mrb[0].mxu0
  %12200 = vdwg.mxu0
  %12201 = vmatprep.subr.mxu0 0.0
  %v12202 = vand.u32 %v17, 4294901760
  %12203 = vmatpush1.msra.mxu0 %v12202
  %12204 = vmatprep.subr.mxu0 0.0
  %12205 = vmatpush1.msra.mxu0 0.0
  %12206 = vmatprep.subr.mxu0 0.0
  %12207 = vmatpush1.msra.mxu0 0.0
  %12208 = vmatprep.subr.mxu0 0.0
  %12209 = vmatpush1.msra.mxu0 0.0
  %12210 = vmatprep.subr.mxu0 0.0
  %12211 = vmatpush1.msra.mxu0 0.0
  %12212 = vmatprep.subr.mxu0 0.0
  %12213 = vmatpush1.msra.mxu0 0.0
  %12214 = vmatprep.subr.mxu0 0.0
  %12215 = vmatpush1.msra.mxu0 0.0
  %12216 = vmatprep.subr.mxu0 0.0
  %12217 = vmatpush1.msra.mxu0 0.0
  %12218 = vmatprep.subr.mxu0 0.0
  %12219 = vmatpush1.msra.mxu0 0.0
  %12220 = vmatprep.subr.mxu0 0.0
  %12221 = vmatpush1.msra.mxu0 0.0
  %12222 = vmatprep.subr.mxu0 0.0
  %12223 = vmatpush1.msra.mxu0 0.0
  %12224 = vmatprep.subr.mxu0 0.0
  %12225 = vmatpush1.msra.mxu0 0.0
  %12226 = vmatprep.subr.mxu0 0.0
  %12227 = vmatpush1.msra.mxu0 0.0
  %12228 = vmatprep.subr.mxu0 0.0
  %12229 = vmatpush1.msra.mxu0 0.0
  %12230 = vmatprep.subr.mxu0 0.0
  %12231 = vmatpush1.msra.mxu0 0.0
  %12232 = vmatprep.subr.mxu0 0.0
  %12233 = vmatpush1.msra.mxu0 0.0
  %12234 = vmatprep.subr.mxu0 0.0
  %12235 = vmatpush1.msra.mxu0 0.0
  %12236 = vmatprep.subr.mxu0 0.0
  %12237 = vmatpush1.msra.mxu0 0.0
  %12238 = vmatprep.subr.mxu0 0.0
  %12239 = vmatpush1.msra.mxu0 0.0
  %12240 = vmatprep.subr.mxu0 0.0
  %12241 = vmatpush1.msra.mxu0 0.0
  %12242 = vmatprep.subr.mxu0 0.0
  %12243 = vmatpush1.msra.mxu0 0.0
  %12244 = vmatprep.subr.mxu0 0.0
  %12245 = vmatpush1.msra.mxu0 0.0
  %12246 = vmatprep.subr.mxu0 0.0
  %12247 = vmatpush1.msra.mxu0 0.0
  %12248 = vmatprep.subr.mxu0 0.0
  %12249 = vmatpush1.msra.mxu0 0.0
  %12250 = vmatprep.subr.mxu0 0.0
  %12251 = vmatpush1.msra.mxu0 0.0
  %12252 = vmatprep.subr.mxu0 0.0
  %12253 = vmatpush1.msra.mxu0 0.0
  %12254 = vmatprep.subr.mxu0 0.0
  %12255 = vmatpush1.msra.mxu0 0.0
  %12256 = vmatprep.subr.mxu0 0.0
  %12257 = vmatpush1.msra.mxu0 0.0
  %12258 = vmatprep.subr.mxu0 0.0
  %12259 = vmatpush1.msra.mxu0 0.0
  %12260 = vmatprep.subr.mxu0 0.0
  %12261 = vmatpush1.msra.mxu0 0.0
  %12262 = vmatprep.subr.mxu0 0.0
  %12263 = vmatpush1.msra.mxu0 0.0
  %12264 = vmatprep.subr.mxu0 0.0
  %12265 = vmatpush1.msra.mxu0 0.0
  %12266 = vmatprep.mubr.f32.mxu0 0.0
  %v12267 = vand.u32 %v11825, 4294901760
  %12268 = vmatmul.mubr.f32.gmra.mrb[0].mxu0 %v12267
  %v12269 = vpop.f32.mrb[0].mxu0
  %v12270 = vadd.f32 %v12198, %v12269
  %v12271 = vpop.f32.mrb[0].mxu0
  %12272 = vdwg.mxu0
  %v12273 = vmul.f32 %v12270, 0.1
  %v12274 = vadd.f32 %v11815, %v12273
  %12276 = vrot.lane.b32.xlu0 %v12274, 88
  %v12277 = vpop.permute.xlu0 %12276
  %vm12279 = vcmask 778944
  %12280 = vst.msk [vmem:[%s2] sm:$0x1] %vm12279, %v12277
  %12281 = vrot.lane.b32.xlu0 %v9061, 72
  %v12282 = vpop.permute.xlu0 %12281
  %v12284 = vsel %vm1795, %v12274, 0
  %12286 = vmatprep.subr.mxu0 0.0
  %v12287 = vand.u32 %v17, 4294901760
  %12288 = vmatpush1.msra.mxu0 %v12287
  %12289 = vmatprep.subr.mxu0 0.0
  %12290 = vmatpush1.msra.mxu0 0.0
  %12291 = vmatprep.subr.mxu0 0.0
  %12292 = vmatpush1.msra.mxu0 0.0
  %12293 = vmatprep.subr.mxu0 0.0
  %12294 = vmatpush1.msra.mxu0 0.0
  %12295 = vmatprep.subr.mxu0 0.0
  %12296 = vmatpush1.msra.mxu0 0.0
  %12297 = vmatprep.subr.mxu0 0.0
  %12298 = vmatpush1.msra.mxu0 0.0
  %12299 = vmatprep.subr.mxu0 0.0
  %12300 = vmatpush1.msra.mxu0 0.0
  %12301 = vmatprep.subr.mxu0 0.0
  %12302 = vmatpush1.msra.mxu0 0.0
  %12303 = vmatprep.subr.mxu0 0.0
  %12304 = vmatpush1.msra.mxu0 0.0
  %12305 = vmatprep.subr.mxu0 0.0
  %12306 = vmatpush1.msra.mxu0 0.0
  %12307 = vmatprep.subr.mxu0 0.0
  %12308 = vmatpush1.msra.mxu0 0.0
  %12309 = vmatprep.subr.mxu0 0.0
  %12310 = vmatpush1.msra.mxu0 0.0
  %12311 = vmatprep.subr.mxu0 0.0
  %12312 = vmatpush1.msra.mxu0 0.0
  %12313 = vmatprep.subr.mxu0 0.0
  %12314 = vmatpush1.msra.mxu0 0.0
  %12315 = vmatprep.subr.mxu0 0.0
  %12316 = vmatpush1.msra.mxu0 0.0
  %12317 = vmatprep.subr.mxu0 0.0
  %12318 = vmatpush1.msra.mxu0 0.0
  %12319 = vmatprep.subr.mxu0 0.0
  %12320 = vmatpush1.msra.mxu0 0.0
  %12321 = vmatprep.subr.mxu0 0.0
  %12322 = vmatpush1.msra.mxu0 0.0
  %12323 = vmatprep.subr.mxu0 0.0
  %12324 = vmatpush1.msra.mxu0 0.0
  %12325 = vmatprep.subr.mxu0 0.0
  %12326 = vmatpush1.msra.mxu0 0.0
  %12327 = vmatprep.subr.mxu0 0.0
  %12328 = vmatpush1.msra.mxu0 0.0
  %12329 = vmatprep.subr.mxu0 0.0
  %12330 = vmatpush1.msra.mxu0 0.0
  %12331 = vmatprep.subr.mxu0 0.0
  %12332 = vmatpush1.msra.mxu0 0.0
  %12333 = vmatprep.subr.mxu0 0.0
  %12334 = vmatpush1.msra.mxu0 0.0
  %12335 = vmatprep.subr.mxu0 0.0
  %12336 = vmatpush1.msra.mxu0 0.0
  %12337 = vmatprep.subr.mxu0 0.0
  %12338 = vmatpush1.msra.mxu0 0.0
  %12339 = vmatprep.subr.mxu0 0.0
  %12340 = vmatpush1.msra.mxu0 0.0
  %12341 = vmatprep.subr.mxu0 0.0
  %12342 = vmatpush1.msra.mxu0 0.0
  %12343 = vmatprep.subr.mxu0 0.0
  %12344 = vmatpush1.msra.mxu0 0.0
  %12345 = vmatprep.subr.mxu0 0.0
  %12346 = vmatpush1.msra.mxu0 0.0
  %12347 = vmatprep.subr.mxu0 0.0
  %12348 = vmatpush1.msra.mxu0 0.0
  %12349 = vmatprep.subr.mxu0 0.0
  %12350 = vmatpush1.msra.mxu0 0.0
  %12351 = vmatprep.mubr.f32.mxu0 0.0
  %v12352 = vand.u32 %v12284, 4294901760
  %v12353 = vsub.f32 %v12284, %v12352
  %v12354 = vand.u32 %v12353, 4294901760
  %v12355 = vsub.f32 %v12353, %v12354
  %v12356 = vand.u32 %v12355, 4294901760
  %12357 = vmatmul.mubr.f32.gmra.mrb[0].mxu0 %v12356
  %v12358 = vpop.f32.mrb[0].mxu0
  %v12359 = vadd.f32 %v12282, %v12358
  %v12360 = vpop.f32.mrb[0].mxu0
  %12361 = vdwg.mxu0
  %12362 = vmatprep.subr.mxu0 0.0
  %v12363 = vand.u32 %v17, 4294901760
  %v12364 = vsub.f32 %v17, %v12363
  %v12365 = vand.u32 %v12364, 4294901760
  %v12366 = vsub.f32 %v12364, %v12365
  %v12367 = vand.u32 %v12366, 4294901760
  %12368 = vmatpush1.msra.mxu0 %v12367
  %12369 = vmatprep.subr.mxu0 0.0
  %12370 = vmatpush1.msra.mxu0 0.0
  %12371 = vmatprep.subr.mxu0 0.0
  %12372 = vmatpush1.msra.mxu0 0.0
  %12373 = vmatprep.subr.mxu0 0.0
  %12374 = vmatpush1.msra.mxu0 0.0
  %12375 = vmatprep.subr.mxu0 0.0
  %12376 = vmatpush1.msra.mxu0 0.0
  %12377 = vmatprep.subr.mxu0 0.0
  %12378 = vmatpush1.msra.mxu0 0.0
  %12379 = vmatprep.subr.mxu0 0.0
  %12380 = vmatpush1.msra.mxu0 0.0
  %12381 = vmatprep.subr.mxu0 0.0
  %12382 = vmatpush1.msra.mxu0 0.0
  %12383 = vmatprep.subr.mxu0 0.0
  %12384 = vmatpush1.msra.mxu0 0.0
  %12385 = vmatprep.subr.mxu0 0.0
  %12386 = vmatpush1.msra.mxu0 0.0
  %12387 = vmatprep.subr.mxu0 0.0
  %12388 = vmatpush1.msra.mxu0 0.0
  %12389 = vmatprep.subr.mxu0 0.0
  %12390 = vmatpush1.msra.mxu0 0.0
  %12391 = vmatprep.subr.mxu0 0.0
  %12392 = vmatpush1.msra.mxu0 0.0
  %12393 = vmatprep.subr.mxu0 0.0
  %12394 = vmatpush1.msra.mxu0 0.0
  %12395 = vmatprep.subr.mxu0 0.0
  %12396 = vmatpush1.msra.mxu0 0.0
  %12397 = vmatprep.subr.mxu0 0.0
  %12398 = vmatpush1.msra.mxu0 0.0
  %12399 = vmatprep.subr.mxu0 0.0
  %12400 = vmatpush1.msra.mxu0 0.0
  %12401 = vmatprep.subr.mxu0 0.0
  %12402 = vmatpush1.msra.mxu0 0.0
  %12403 = vmatprep.subr.mxu0 0.0
  %12404 = vmatpush1.msra.mxu0 0.0
  %12405 = vmatprep.subr.mxu0 0.0
  %12406 = vmatpush1.msra.mxu0 0.0
  %12407 = vmatprep.subr.mxu0 0.0
  %12408 = vmatpush1.msra.mxu0 0.0
  %12409 = vmatprep.subr.mxu0 0.0
  %12410 = vmatpush1.msra.mxu0 0.0
  %12411 = vmatprep.subr.mxu0 0.0
  %12412 = vmatpush1.msra.mxu0 0.0
  %12413 = vmatprep.subr.mxu0 0.0
  %12414 = vmatpush1.msra.mxu0 0.0
  %12415 = vmatprep.subr.mxu0 0.0
  %12416 = vmatpush1.msra.mxu0 0.0
  %12417 = vmatprep.subr.mxu0 0.0
  %12418 = vmatpush1.msra.mxu0 0.0
  %12419 = vmatprep.subr.mxu0 0.0
  %12420 = vmatpush1.msra.mxu0 0.0
  %12421 = vmatprep.subr.mxu0 0.0
  %12422 = vmatpush1.msra.mxu0 0.0
  %12423 = vmatprep.subr.mxu0 0.0
  %12424 = vmatpush1.msra.mxu0 0.0
  %12425 = vmatprep.subr.mxu0 0.0
  %12426 = vmatpush1.msra.mxu0 0.0
  %12427 = vmatprep.subr.mxu0 0.0
  %12428 = vmatpush1.msra.mxu0 0.0
  %12429 = vmatprep.subr.mxu0 0.0
  %12430 = vmatpush1.msra.mxu0 0.0
  %12431 = vmatprep.mubr.f32.mxu0 0.0
  %v12432 = vand.u32 %v12284, 4294901760
  %12433 = vmatmul.mubr.f32.gmra.mrb[0].mxu0 %v12432
  %v12434 = vpop.f32.mrb[0].mxu0
  %v12435 = vadd.f32 %v12359, %v12434
  %v12436 = vpop.f32.mrb[0].mxu0
  %12437 = vdwg.mxu0
  %12438 = vmatprep.subr.mxu0 0.0
  %v12439 = vand.u32 %v17, 4294901760
  %v12440 = vsub.f32 %v17, %v12439
  %12441 = vmatpush1.msra.mxu0 %v12440
  %12442 = vmatprep.subr.mxu0 0.0
  %12443 = vmatpush1.msra.mxu0 0.0
  %12444 = vmatprep.subr.mxu0 0.0
  %12445 = vmatpush1.msra.mxu0 0.0
  %12446 = vmatprep.subr.mxu0 0.0
  %12447 = vmatpush1.msra.mxu0 0.0
  %12448 = vmatprep.subr.mxu0 0.0
  %12449 = vmatpush1.msra.mxu0 0.0
  %12450 = vmatprep.subr.mxu0 0.0
  %12451 = vmatpush1.msra.mxu0 0.0
  %12452 = vmatprep.subr.mxu0 0.0
  %12453 = vmatpush1.msra.mxu0 0.0
  %12454 = vmatprep.subr.mxu0 0.0
  %12455 = vmatpush1.msra.mxu0 0.0
  %12456 = vmatprep.subr.mxu0 0.0
  %12457 = vmatpush1.msra.mxu0 0.0
  %12458 = vmatprep.subr.mxu0 0.0
  %12459 = vmatpush1.msra.mxu0 0.0
  %12460 = vmatprep.subr.mxu0 0.0
  %12461 = vmatpush1.msra.mxu0 0.0
  %12462 = vmatprep.subr.mxu0 0.0
  %12463 = vmatpush1.msra.mxu0 0.0
  %12464 = vmatprep.subr.mxu0 0.0
  %12465 = vmatpush1.msra.mxu0 0.0
  %12466 = vmatprep.subr.mxu0 0.0
  %12467 = vmatpush1.msra.mxu0 0.0
  %12468 = vmatprep.subr.mxu0 0.0
  %12469 = vmatpush1.msra.mxu0 0.0
  %12470 = vmatprep.subr.mxu0 0.0
  %12471 = vmatpush1.msra.mxu0 0.0
  %12472 = vmatprep.subr.mxu0 0.0
  %12473 = vmatpush1.msra.mxu0 0.0
  %12474 = vmatprep.subr.mxu0 0.0
  %12475 = vmatpush1.msra.mxu0 0.0
  %12476 = vmatprep.subr.mxu0 0.0
  %12477 = vmatpush1.msra.mxu0 0.0
  %12478 = vmatprep.subr.mxu0 0.0
  %12479 = vmatpush1.msra.mxu0 0.0
  %12480 = vmatprep.subr.mxu0 0.0
  %12481 = vmatpush1.msra.mxu0 0.0
  %12482 = vmatprep.subr.mxu0 0.0
  %12483 = vmatpush1.msra.mxu0 0.0
  %12484 = vmatprep.subr.mxu0 0.0
  %12485 = vmatpush1.msra.mxu0 0.0
  %12486 = vmatprep.subr.mxu0 0.0
  %12487 = vmatpush1.msra.mxu0 0.0
  %12488 = vmatprep.subr.mxu0 0.0
  %12489 = vmatpush1.msra.mxu0 0.0
  %12490 = vmatprep.subr.mxu0 0.0
  %12491 = vmatpush1.msra.mxu0 0.0
  %12492 = vmatprep.subr.mxu0 0.0
  %12493 = vmatpush1.msra.mxu0 0.0
  %12494 = vmatprep.subr.mxu0 0.0
  %12495 = vmatpush1.msra.mxu0 0.0
  %12496 = vmatprep.subr.mxu0 0.0
  %12497 = vmatpush1.msra.mxu0 0.0
  %12498 = vmatprep.subr.mxu0 0.0
  %12499 = vmatpush1.msra.mxu0 0.0
  %12500 = vmatprep.subr.mxu0 0.0
  %12501 = vmatpush1.msra.mxu0 0.0
  %12502 = vmatprep.subr.mxu0 0.0
  %12503 = vmatpush1.msra.mxu0 0.0
  %12504 = vmatprep.mubr.f32.mxu0 0.0
  %v12505 = vand.u32 %v12284, 4294901760
  %v12506 = vsub.f32 %v12284, %v12505
  %12507 = vmatmul.mubr.f32.gmra.mrb[0].mxu0 %v12506
  %v12508 = vpop.f32.mrb[0].mxu0
  %v12509 = vadd.f32 %v12435, %v12508
  %v12510 = vpop.f32.mrb[0].mxu0
  %12511 = vdwg.mxu0
  %12512 = vmatprep.subr.mxu0 0.0
  %v12513 = vand.u32 %v17, 4294901760
  %12514 = vmatpush1.msra.mxu0 %v12513
  %12515 = vmatprep.subr.mxu0 0.0
  %12516 = vmatpush1.msra.mxu0 0.0
  %12517 = vmatprep.subr.mxu0 0.0
  %12518 = vmatpush1.msra.mxu0 0.0
  %12519 = vmatprep.subr.mxu0 0.0
  %12520 = vmatpush1.msra.mxu0 0.0
  %12521 = vmatprep.subr.mxu0 0.0
  %12522 = vmatpush1.msra.mxu0 0.0
  %12523 = vmatprep.subr.mxu0 0.0
  %12524 = vmatpush1.msra.mxu0 0.0
  %12525 = vmatprep.subr.mxu0 0.0
  %12526 = vmatpush1.msra.mxu0 0.0
  %12527 = vmatprep.subr.mxu0 0.0
  %12528 = vmatpush1.msra.mxu0 0.0
  %12529 = vmatprep.subr.mxu0 0.0
  %12530 = vmatpush1.msra.mxu0 0.0
  %12531 = vmatprep.subr.mxu0 0.0
  %12532 = vmatpush1.msra.mxu0 0.0
  %12533 = vmatprep.subr.mxu0 0.0
  %12534 = vmatpush1.msra.mxu0 0.0
  %12535 = vmatprep.subr.mxu0 0.0
  %12536 = vmatpush1.msra.mxu0 0.0
  %12537 = vmatprep.subr.mxu0 0.0
  %12538 = vmatpush1.msra.mxu0 0.0
  %12539 = vmatprep.subr.mxu0 0.0
  %12540 = vmatpush1.msra.mxu0 0.0
  %12541 = vmatprep.subr.mxu0 0.0
  %12542 = vmatpush1.msra.mxu0 0.0
  %12543 = vmatprep.subr.mxu0 0.0
  %12544 = vmatpush1.msra.mxu0 0.0
  %12545 = vmatprep.subr.mxu0 0.0
  %12546 = vmatpush1.msra.mxu0 0.0
  %12547 = vmatprep.subr.mxu0 0.0
  %12548 = vmatpush1.msra.mxu0 0.0
  %12549 = vmatprep.subr.mxu0 0.0
  %12550 = vmatpush1.msra.mxu0 0.0
  %12551 = vmatprep.subr.mxu0 0.0
  %12552 = vmatpush1.msra.mxu0 0.0
  %12553 = vmatprep.subr.mxu0 0.0
  %12554 = vmatpush1.msra.mxu0 0.0
  %12555 = vmatprep.subr.mxu0 0.0
  %12556 = vmatpush1.msra.mxu0 0.0
  %12557 = vmatprep.subr.mxu0 0.0
  %12558 = vmatpush1.msra.mxu0 0.0
  %12559 = vmatprep.subr.mxu0 0.0
  %12560 = vmatpush1.msra.mxu0 0.0
  %12561 = vmatprep.subr.mxu0 0.0
  %12562 = vmatpush1.msra.mxu0 0.0
  %12563 = vmatprep.subr.mxu0 0.0
  %12564 = vmatpush1.msra.mxu0 0.0
  %12565 = vmatprep.subr.mxu0 0.0
  %12566 = vmatpush1.msra.mxu0 0.0
  %12567 = vmatprep.subr.mxu0 0.0
  %12568 = vmatpush1.msra.mxu0 0.0
  %12569 = vmatprep.subr.mxu0 0.0
  %12570 = vmatpush1.msra.mxu0 0.0
  %12571 = vmatprep.subr.mxu0 0.0
  %12572 = vmatpush1.msra.mxu0 0.0
  %12573 = vmatprep.subr.mxu0 0.0
  %12574 = vmatpush1.msra.mxu0 0.0
  %12575 = vmatprep.subr.mxu0 0.0
  %12576 = vmatpush1.msra.mxu0 0.0
  %12577 = vmatprep.mubr.f32.mxu0 0.0
  %v12578 = vand.u32 %v12284, 4294901760
  %v12579 = vsub.f32 %v12284, %v12578
  %v12580 = vand.u32 %v12579, 4294901760
  %12581 = vmatmul.mubr.f32.gmra.mrb[0].mxu0 %v12580
  %v12582 = vpop.f32.mrb[0].mxu0
  %v12583 = vadd.f32 %v12509, %v12582
  %v12584 = vpop.f32.mrb[0].mxu0
  %12585 = vdwg.mxu0
  %12586 = vmatprep.subr.mxu0 0.0
  %v12587 = vand.u32 %v17, 4294901760
  %v12588 = vsub.f32 %v17, %v12587
  %v12589 = vand.u32 %v12588, 4294901760
  %12590 = vmatpush1.msra.mxu0 %v12589
  %12591 = vmatprep.subr.mxu0 0.0
  %12592 = vmatpush1.msra.mxu0 0.0
  %12593 = vmatprep.subr.mxu0 0.0
  %12594 = vmatpush1.msra.mxu0 0.0
  %12595 = vmatprep.subr.mxu0 0.0
  %12596 = vmatpush1.msra.mxu0 0.0
  %12597 = vmatprep.subr.mxu0 0.0
  %12598 = vmatpush1.msra.mxu0 0.0
  %12599 = vmatprep.subr.mxu0 0.0
  %12600 = vmatpush1.msra.mxu0 0.0
  %12601 = vmatprep.subr.mxu0 0.0
  %12602 = vmatpush1.msra.mxu0 0.0
  %12603 = vmatprep.subr.mxu0 0.0
  %12604 = vmatpush1.msra.mxu0 0.0
  %12605 = vmatprep.subr.mxu0 0.0
  %12606 = vmatpush1.msra.mxu0 0.0
  %12607 = vmatprep.subr.mxu0 0.0
  %12608 = vmatpush1.msra.mxu0 0.0
  %12609 = vmatprep.subr.mxu0 0.0
  %12610 = vmatpush1.msra.mxu0 0.0
  %12611 = vmatprep.subr.mxu0 0.0
  %12612 = vmatpush1.msra.mxu0 0.0
  %12613 = vmatprep.subr.mxu0 0.0
  %12614 = vmatpush1.msra.mxu0 0.0
  %12615 = vmatprep.subr.mxu0 0.0
  %12616 = vmatpush1.msra.mxu0 0.0
  %12617 = vmatprep.subr.mxu0 0.0
  %12618 = vmatpush1.msra.mxu0 0.0
  %12619 = vmatprep.subr.mxu0 0.0
  %12620 = vmatpush1.msra.mxu0 0.0
  %12621 = vmatprep.subr.mxu0 0.0
  %12622 = vmatpush1.msra.mxu0 0.0
  %12623 = vmatprep.subr.mxu0 0.0
  %12624 = vmatpush1.msra.mxu0 0.0
  %12625 = vmatprep.subr.mxu0 0.0
  %12626 = vmatpush1.msra.mxu0 0.0
  %12627 = vmatprep.subr.mxu0 0.0
  %12628 = vmatpush1.msra.mxu0 0.0
  %12629 = vmatprep.subr.mxu0 0.0
  %12630 = vmatpush1.msra.mxu0 0.0
  %12631 = vmatprep.subr.mxu0 0.0
  %12632 = vmatpush1.msra.mxu0 0.0
  %12633 = vmatprep.subr.mxu0 0.0
  %12634 = vmatpush1.msra.mxu0 0.0
  %12635 = vmatprep.subr.mxu0 0.0
  %12636 = vmatpush1.msra.mxu0 0.0
  %12637 = vmatprep.subr.mxu0 0.0
  %12638 = vmatpush1.msra.mxu0 0.0
  %12639 = vmatprep.subr.mxu0 0.0
  %12640 = vmatpush1.msra.mxu0 0.0
  %12641 = vmatprep.subr.mxu0 0.0
  %12642 = vmatpush1.msra.mxu0 0.0
  %12643 = vmatprep.subr.mxu0 0.0
  %12644 = vmatpush1.msra.mxu0 0.0
  %12645 = vmatprep.subr.mxu0 0.0
  %12646 = vmatpush1.msra.mxu0 0.0
  %12647 = vmatprep.subr.mxu0 0.0
  %12648 = vmatpush1.msra.mxu0 0.0
  %12649 = vmatprep.subr.mxu0 0.0
  %12650 = vmatpush1.msra.mxu0 0.0
  %12651 = vmatprep.subr.mxu0 0.0
  %12652 = vmatpush1.msra.mxu0 0.0
  %12653 = vmatprep.mubr.f32.mxu0 0.0
  %v12654 = vand.u32 %v12284, 4294901760
  %12655 = vmatmul.mubr.f32.gmra.mrb[0].mxu0 %v12654
  %v12656 = vpop.f32.mrb[0].mxu0
  %v12657 = vadd.f32 %v12583, %v12656
  %v12658 = vpop.f32.mrb[0].mxu0
  %12659 = vdwg.mxu0
  %12660 = vmatprep.subr.mxu0 0.0
  %v12661 = vand.u32 %v17, 4294901760
  %12662 = vmatpush1.msra.mxu0 %v12661
  %12663 = vmatprep.subr.mxu0 0.0
  %12664 = vmatpush1.msra.mxu0 0.0
  %12665 = vmatprep.subr.mxu0 0.0
  %12666 = vmatpush1.msra.mxu0 0.0
  %12667 = vmatprep.subr.mxu0 0.0
  %12668 = vmatpush1.msra.mxu0 0.0
  %12669 = vmatprep.subr.mxu0 0.0
  %12670 = vmatpush1.msra.mxu0 0.0
  %12671 = vmatprep.subr.mxu0 0.0
  %12672 = vmatpush1.msra.mxu0 0.0
  %12673 = vmatprep.subr.mxu0 0.0
  %12674 = vmatpush1.msra.mxu0 0.0
  %12675 = vmatprep.subr.mxu0 0.0
  %12676 = vmatpush1.msra.mxu0 0.0
  %12677 = vmatprep.subr.mxu0 0.0
  %12678 = vmatpush1.msra.mxu0 0.0
  %12679 = vmatprep.subr.mxu0 0.0
  %12680 = vmatpush1.msra.mxu0 0.0
  %12681 = vmatprep.subr.mxu0 0.0
  %12682 = vmatpush1.msra.mxu0 0.0
  %12683 = vmatprep.subr.mxu0 0.0
  %12684 = vmatpush1.msra.mxu0 0.0
  %12685 = vmatprep.subr.mxu0 0.0
  %12686 = vmatpush1.msra.mxu0 0.0
  %12687 = vmatprep.subr.mxu0 0.0
  %12688 = vmatpush1.msra.mxu0 0.0
  %12689 = vmatprep.subr.mxu0 0.0
  %12690 = vmatpush1.msra.mxu0 0.0
  %12691 = vmatprep.subr.mxu0 0.0
  %12692 = vmatpush1.msra.mxu0 0.0
  %12693 = vmatprep.subr.mxu0 0.0
  %12694 = vmatpush1.msra.mxu0 0.0
  %12695 = vmatprep.subr.mxu0 0.0
  %12696 = vmatpush1.msra.mxu0 0.0
  %12697 = vmatprep.subr.mxu0 0.0
  %12698 = vmatpush1.msra.mxu0 0.0
  %12699 = vmatprep.subr.mxu0 0.0
  %12700 = vmatpush1.msra.mxu0 0.0
  %12701 = vmatprep.subr.mxu0 0.0
  %12702 = vmatpush1.msra.mxu0 0.0
  %12703 = vmatprep.subr.mxu0 0.0
  %12704 = vmatpush1.msra.mxu0 0.0
  %12705 = vmatprep.subr.mxu0 0.0
  %12706 = vmatpush1.msra.mxu0 0.0
  %12707 = vmatprep.subr.mxu0 0.0
  %12708 = vmatpush1.msra.mxu0 0.0
  %12709 = vmatprep.subr.mxu0 0.0
  %12710 = vmatpush1.msra.mxu0 0.0
  %12711 = vmatprep.subr.mxu0 0.0
  %12712 = vmatpush1.msra.mxu0 0.0
  %12713 = vmatprep.subr.mxu0 0.0
  %12714 = vmatpush1.msra.mxu0 0.0
  %12715 = vmatprep.subr.mxu0 0.0
  %12716 = vmatpush1.msra.mxu0 0.0
  %12717 = vmatprep.subr.mxu0 0.0
  %12718 = vmatpush1.msra.mxu0 0.0
  %12719 = vmatprep.subr.mxu0 0.0
  %12720 = vmatpush1.msra.mxu0 0.0
  %12721 = vmatprep.subr.mxu0 0.0
  %12722 = vmatpush1.msra.mxu0 0.0
  %12723 = vmatprep.subr.mxu0 0.0
  %12724 = vmatpush1.msra.mxu0 0.0
  %12725 = vmatprep.mubr.f32.mxu0 0.0
  %v12726 = vand.u32 %v12284, 4294901760
  %12727 = vmatmul.mubr.f32.gmra.mrb[0].mxu0 %v12726
  %v12728 = vpop.f32.mrb[0].mxu0
  %v12729 = vadd.f32 %v12657, %v12728
  %v12730 = vpop.f32.mrb[0].mxu0
  %12731 = vdwg.mxu0
  %v12732 = vmul.f32 %v12729, 0.1
  %v12733 = vadd.f32 %v12274, %v12732
  %12735 = vrot.lane.b32.xlu0 %v12733, 96
  %v12736 = vpop.permute.xlu0 %12735
  %vm12738 = vcmask 844544
  %12739 = vst.msk [vmem:[%s2] sm:$0x1] %vm12738, %v12736
  // Predicated region
  $region10: #{mppi_forward.1} parent=0 // pred_check
    _
  $region11: #{mppi_forward.1} parent=0 // pred_check_branch
    %12741 = sbr.rel (0) target = $region13
  $region12: #{mppi_forward.1} parent=0 // pred_region
    _
  $region13: #{mppi_forward.1} parent=0 // pred_fallthru
    _
  // Predicated region
  $region14: #{mppi_forward.1} parent=0 // pred_check
    _
  $region15: #{mppi_forward.1} parent=0 // pred_check_branch
    %12743 = sbr.rel (0) target = $region17
  $region16: #{mppi_forward.1} parent=0 // pred_region
    _
  $region17: #{mppi_forward.1} parent=0 // pred_fallthru
    _

</llo_original>
